<compile_context>
chip_gen: v7x
topology: tpu7x:2x2x1
jax: 0.10.0
libtpu: 0.0.40
codegen_flags: <defaults>
</compile_context>

<pallas_src>
import functools

import jax
import jax.numpy as jnp
from jax.experimental import pallas as pl
from jax.experimental.pallas import tpu as pltpu

INPUT_SIZE = 3
OUTPUT_SIZE = 4
NUM_LAYERS = 12
HIDDEN = 256
NUM_HIDDEN_LAYERS = NUM_LAYERS - 2   # 10 Linear(256, 256) layers

IN_PAD = 8      # padded input feature dim (>= 3); one sublane, tiny HBM slab
PAD_OUT = 128   # padded output feature dim (>= 4); lane-dense stores
TM_LARGE = 512  # batch tile for large batches (sweepable: 512 / 1024)
TM_SMALL = 256  # batch tile for small batches (single grid step)


def _device_kind() -> str:
    try:
        return jax.devices()[0].device_kind.lower()
    except Exception:  # pragma: no cover - be robust on exotic setups
        return ""


_KIND = _device_kind()
# bf16 VPU/EUP exists on v6e / v7x; v5e and older run tanh in f32.
_HAS_BF16_EUP = ("v6" in _KIND) or ("v7" in _KIND)
_IS_V7 = "v7" in _KIND


def mlp_kernel(x_ref, w0_ref, b0_ref, wh_ref, bh_ref, wl_ref, bl_ref, o_ref,
               *, tm, compute_dtype, act_dtype):
    """Whole 12-layer MLP for one (tm, ...) batch tile; all weights in VMEM.

    The tile is split into two independent row groups of tm//2 whose layer
    computations are interleaved (fully unrolled), so the MXU work of one
    group overlaps the bias-add (VPU) / tanh (EUP) / cast of the other.
    """
    half = tm // 2

    def layer0(xg):
        # Layer 0 on the VPU: only 3 real input features, so an MXU pass with
        # K=8 is wasteful.  Kept in f32 regardless of compute_dtype.
        acc = (xg[:, 0:1] * w0_ref[0:1, :]
               + xg[:, 1:2] * w0_ref[1:2, :]
               + xg[:, 2:3] * w0_ref[2:3, :]
               + b0_ref[...])
        return jnp.tanh(acc.astype(act_dtype))

    def dense(h, w, b, activate):
        acc = jnp.dot(h.astype(compute_dtype), w,
                      preferred_element_type=jnp.float32) + b
        if activate:
            return jnp.tanh(acc.astype(act_dtype))
        return acc

    ha = layer0(x_ref[0:half, :])
    hb = layer0(x_ref[half:tm, :])

    # Hidden layers 1..10, fully unrolled (static trip count): static-index
    # weight loads, shared between the two independent MXU/VPU/EUP chains.
    for l in range(NUM_HIDDEN_LAYERS):
        w = wh_ref[l]
        b = bh_ref[l]
        ha = dense(ha, w, b, activate=True)
        hb = dense(hb, w, b, activate=True)

    # Output layer (no activation): f32 accumulation, f32 lane-dense stores.
    wl = wl_ref[...]
    bl = bl_ref[...]
    o_ref[0:half, :] = dense(ha, wl, bl, activate=False).astype(o_ref.dtype)
    o_ref[half:tm, :] = dense(hb, wl, bl, activate=False).astype(o_ref.dtype)


@functools.partial(jax.jit, static_argnames=("compute_dtype",))
def mlp_forward(x, y, z, params, compute_dtype=jnp.bfloat16):
    """x, y, z: (N, 1) float32 arrays. Returns (N, 4) float32."""
    w0, b0, wh, bh, wl, bl = params

    # bf16 tanh only where the EUP supports it (v6e/v7x); f32 on v5e.
    act_dtype = (jnp.bfloat16
                 if (compute_dtype == jnp.bfloat16 and _HAS_BF16_EUP)
                 else jnp.float32)

    inp = jnp.concatenate([x, y, z], axis=1)            # (N, 3) f32
    n = inp.shape[0]

    tm = TM_LARGE if n > TM_SMALL else TM_SMALL
    n_tiles = -(-n // tm)
    if _IS_V7 and n_tiles > 1 and n_tiles % 2 == 1:
        n_tiles += 1                                     # even tiles -> both TCs busy
    n_pad = n_tiles * tm

    # Pad batch rows to a multiple of tm and features 3 -> IN_PAD (zeros are
    # mathematically neutral; padded rows are sliced away below).  Input and
    # layer 0 stay f32 even on the bf16 path.
    inp_pad = jnp.zeros((n_pad, IN_PAD), jnp.float32)
    inp_pad = inp_pad.at[:n, :INPUT_SIZE].set(inp)

    # Layer-0 weights stay f32 (VPU path); hidden / output weights go to the
    # MXU in compute_dtype.  Biases are always f32.
    w0_pad = jnp.zeros((IN_PAD, HIDDEN), jnp.float32).at[:INPUT_SIZE, :].set(w0)
    wh_c = wh.astype(compute_dtype)
    wl_pad = jnp.zeros((HIDDEN, PAD_OUT), compute_dtype)
    wl_pad = wl_pad.at[:, :OUTPUT_SIZE].set(wl.astype(compute_dtype))
    bl_pad = jnp.zeros((1, PAD_OUT), jnp.float32).at[:, :OUTPUT_SIZE].set(bl)

    kernel = functools.partial(mlp_kernel, tm=tm, compute_dtype=compute_dtype,
                               act_dtype=act_dtype)

    out_pad = pl.pallas_call(
        kernel,
        out_shape=jax.ShapeDtypeStruct((n_pad, PAD_OUT), jnp.float32),
        grid_spec=pltpu.PrefetchScalarGridSpec(
            num_scalar_prefetch=0,
            grid=(n_tiles,),
            in_specs=[
                pl.BlockSpec((tm, IN_PAD), lambda i: (i, 0)),           # x tile (f32)
                # Constant-index operands: whole network resident in VMEM
                # (~1.4 MiB bf16 / ~2.8 MiB f32 per buffer).
                pl.BlockSpec((IN_PAD, HIDDEN), lambda i: (0, 0)),       # W0 (f32)
                pl.BlockSpec((1, HIDDEN), lambda i: (0, 0)),            # b0
                pl.BlockSpec((NUM_HIDDEN_LAYERS, HIDDEN, HIDDEN),
                             lambda i: (0, 0, 0)),                      # W hidden
                pl.BlockSpec((NUM_HIDDEN_LAYERS, 1, HIDDEN),
                             lambda i: (0, 0, 0)),                      # b hidden
                pl.BlockSpec((HIDDEN, PAD_OUT), lambda i: (0, 0)),      # W last
                pl.BlockSpec((1, PAD_OUT), lambda i: (0, 0)),           # b last
            ],
            out_specs=pl.BlockSpec((tm, PAD_OUT), lambda i: (i, 0)),
        ),
        compiler_params=pltpu.CompilerParams(
            dimension_semantics=("parallel",),
            # Derived need: ~2.8 MiB double-buffered weights + ~0.6 MiB in/out
            # tiles + a few MiB internal scratch for the (tm/2, 256)
            # activations; 32 MiB leaves ample headroom on v5e/v6e/v7x.
            vmem_limit_bytes=32 * 1024 * 1024,
        ),
    )(inp_pad, w0_pad, b0, wh_c, bh, wl_pad, bl_pad)

    return out_pad[:n, :OUTPUT_SIZE]


def init_params(key):
    """Deterministic init matching nn.Linear shapes (uniform +/- 1/sqrt(fan_in))."""
    keys = jax.random.split(key, 2 * NUM_LAYERS)

    def linear(kw, kb, fan_in, fan_out):
        bound = 1.0 / jnp.sqrt(fan_in)
        w = jax.random.uniform(kw, (fan_in, fan_out), jnp.float32, -bound, bound)
        b = jax.random.uniform(kb, (1, fan_out), jnp.float32, -bound, bound)
        return w, b

    w0, b0 = linear(keys[0], keys[1], INPUT_SIZE, HIDDEN)

    wh_list, bh_list = [], []
    for l in range(NUM_HIDDEN_LAYERS):
        w, b = linear(keys[2 + 2 * l], keys[3 + 2 * l], HIDDEN, HIDDEN)
        wh_list.append(w)
        bh_list.append(b)
    wh = jnp.stack(wh_list, axis=0)                    # (10, 256, 256)
    bh = jnp.stack(bh_list, axis=0)                    # (10, 1, 256)

    wl, bl = linear(keys[-2], keys[-1], HIDDEN, OUTPUT_SIZE)

    # TODO(synk): rho / mu nn.Parameters are not used in forward; omitted.
    return (w0, b0, wh, bh, wl, bl)


def reference_forward(x, y, z, params):
    w0, b0, wh, bh, wl, bl = params
    h = jnp.concatenate([x, y, z], axis=1)
    h = jnp.tanh(h @ w0 + b0)
    for l in range(NUM_HIDDEN_LAYERS):
        h = jnp.tanh(h @ wh[l] + bh[l])
    return h @ wl + bl


if __name__ == "__main__":
    key = jax.random.PRNGKey(0)
    kp, kx, ky, kz = jax.random.split(key, 4)

    params = init_params(kp)

    # --- small batch: single grid step -------------------------------------
    N = 8
    x = jax.random.normal(kx, (N, 1), jnp.float32)
    y = jax.random.normal(ky, (N, 1), jnp.float32)
    z = jax.random.normal(kz, (N, 1), jnp.float32)
    ref = reference_forward(x, y, z, params)

    # f32 accuracy-fallback path: tight check.
    out_f32 = jax.block_until_ready(
        mlp_forward(x, y, z, params, compute_dtype=jnp.float32))
    assert out_f32.shape == (N, OUTPUT_SIZE), out_f32.shape
    assert jnp.allclose(out_f32, ref, atol=1e-4, rtol=1e-4), (
        float(jnp.max(jnp.abs(out_f32 - ref))))

    # Default bf16 MXU path: loose check (bf16 rounding across 11 layers).
    out_bf16 = jax.block_until_ready(mlp_forward(x, y, z, params))
    assert out_bf16.shape == (N, OUTPUT_SIZE), out_bf16.shape
    assert bool(jnp.all(jnp.isfinite(out_bf16)))
    assert float(jnp.max(jnp.abs(out_bf16 - ref))) < 1e-1

    # --- larger batch: exercises TM=512, grid > 1, batch-row padding -------
    N2 = 600
    k2x, k2y, k2z = jax.random.split(jax.random.PRNGKey(1), 3)
    x2 = jax.random.normal(k2x, (N2, 1), jnp.float32)
    y2 = jax.random.normal(k2y, (N2, 1), jnp.float32)
    z2 = jax.random.normal(k2z, (N2, 1), jnp.float32)
    ref2 = reference_forward(x2, y2, z2, params)

    out2_f32 = jax.block_until_ready(
        mlp_forward(x2, y2, z2, params, compute_dtype=jnp.float32))
    assert out2_f32.shape == (N2, OUTPUT_SIZE), out2_f32.shape
    assert jnp.allclose(out2_f32, ref2, atol=1e-4, rtol=1e-4), (
        float(jnp.max(jnp.abs(out2_f32 - ref2))))

    out2_bf16 = jax.block_until_ready(mlp_forward(x2, y2, z2, params))
    assert out2_bf16.shape == (N2, OUTPUT_SIZE), out2_bf16.shape
    assert float(jnp.max(jnp.abs(out2_bf16 - ref2))) < 1e-1

    print("KERNEL_OK")
</pallas_src>

<mosaic_0001>
module attributes {stable_mosaic.version = 11 : i64} {
  func.func @mlp_kernel(%arg0: i32, %arg1: memref<256x8xf32, #tpu.memory_space<vmem>>, %arg2: memref<8x256xf32, #tpu.memory_space<vmem>>, %arg3: memref<1x256xf32, #tpu.memory_space<vmem>>, %arg4: memref<10x256x256xf32, #tpu.memory_space<vmem>>, %arg5: memref<10x1x256xf32, #tpu.memory_space<vmem>>, %arg6: memref<256x128xf32, #tpu.memory_space<vmem>>, %arg7: memref<1x128xf32, #tpu.memory_space<vmem>>, %arg8: memref<256x128xf32, #tpu.memory_space<vmem>>) attributes {dimension_semantics = [#tpu.dimension_semantics<parallel>], iteration_bounds = array<i64: 1>, scalar_prefetch = 0 : i64, scratch_operands = 0 : i64, tpu.core_type = #tpu.core_type<tc>, window_params = [{transform_indices = @transform_0, window_bounds = array<i64: 256, 8>}, {pipeline_mode = #tpu.pipeline_mode<synchronous>, transform_indices = @transform_1, window_bounds = array<i64: 8, 256>}, {pipeline_mode = #tpu.pipeline_mode<synchronous>, transform_indices = @transform_2, window_bounds = array<i64: 1, 256>}, {pipeline_mode = #tpu.pipeline_mode<synchronous>, transform_indices = @transform_3, window_bounds = array<i64: 10, 256, 256>}, {pipeline_mode = #tpu.pipeline_mode<synchronous>, transform_indices = @transform_4, window_bounds = array<i64: 10, 1, 256>}, {pipeline_mode = #tpu.pipeline_mode<synchronous>, transform_indices = @transform_5, window_bounds = array<i64: 256, 128>}, {pipeline_mode = #tpu.pipeline_mode<synchronous>, transform_indices = @transform_6, window_bounds = array<i64: 1, 128>}, {transform_indices = @transform_7, window_bounds = array<i64: 256, 128>}]} {
    %c0 = arith.constant 0 : index
    %c0_0 = arith.constant 0 : index
    %0 = vector.load %arg1[%c0, %c0_0] : memref<256x8xf32, #tpu.memory_space<vmem>>, vector<128x8xf32>
    %1 = vector.extract_strided_slice %0 {offsets = [0, 0], sizes = [128, 1], strides = [1, 1]} : vector<128x8xf32> to vector<128x1xf32>
    %c0_1 = arith.constant 0 : index
    %c0_2 = arith.constant 0 : index
    %2 = vector.load %arg2[%c0_1, %c0_2] : memref<8x256xf32, #tpu.memory_space<vmem>>, vector<1x256xf32>
    %3 = vector.broadcast %1 : vector<128x1xf32> to vector<128x256xf32>
    %4 = vector.broadcast %2 : vector<1x256xf32> to vector<128x256xf32>
    %5 = arith.mulf %3, %4 : vector<128x256xf32>
    %6 = vector.extract_strided_slice %0 {offsets = [0, 1], sizes = [128, 1], strides = [1, 1]} : vector<128x8xf32> to vector<128x1xf32>
    %c1 = arith.constant 1 : index
    %c0_3 = arith.constant 0 : index
    %7 = vector.load %arg2[%c1, %c0_3] : memref<8x256xf32, #tpu.memory_space<vmem>>, vector<1x256xf32>
    %8 = vector.broadcast %6 : vector<128x1xf32> to vector<128x256xf32>
    %9 = vector.broadcast %7 : vector<1x256xf32> to vector<128x256xf32>
    %10 = arith.mulf %8, %9 : vector<128x256xf32>
    %11 = arith.addf %5, %10 : vector<128x256xf32>
    %12 = vector.extract_strided_slice %0 {offsets = [0, 2], sizes = [128, 1], strides = [1, 1]} : vector<128x8xf32> to vector<128x1xf32>
    %c2 = arith.constant 2 : index
    %c0_4 = arith.constant 0 : index
    %13 = vector.load %arg2[%c2, %c0_4] : memref<8x256xf32, #tpu.memory_space<vmem>>, vector<1x256xf32>
    %14 = vector.broadcast %12 : vector<128x1xf32> to vector<128x256xf32>
    %15 = vector.broadcast %13 : vector<1x256xf32> to vector<128x256xf32>
    %16 = arith.mulf %14, %15 : vector<128x256xf32>
    %17 = arith.addf %11, %16 : vector<128x256xf32>
    %c0_5 = arith.constant 0 : index
    %c0_6 = arith.constant 0 : index
    %18 = vector.load %arg3[%c0_5, %c0_6] : memref<1x256xf32, #tpu.memory_space<vmem>>, vector<1x256xf32>
    %19 = vector.broadcast %18 : vector<1x256xf32> to vector<128x256xf32>
    %20 = arith.addf %17, %19 : vector<128x256xf32>
    %21 = math.tanh %20 : vector<128x256xf32>
    %c128 = arith.constant 128 : index
    %c0_7 = arith.constant 0 : index
    %22 = vector.load %arg1[%c128, %c0_7] : memref<256x8xf32, #tpu.memory_space<vmem>>, vector<128x8xf32>
    %23 = vector.extract_strided_slice %22 {offsets = [0, 0], sizes = [128, 1], strides = [1, 1]} : vector<128x8xf32> to vector<128x1xf32>
    %c0_8 = arith.constant 0 : index
    %c0_9 = arith.constant 0 : index
    %24 = vector.load %arg2[%c0_8, %c0_9] : memref<8x256xf32, #tpu.memory_space<vmem>>, vector<1x256xf32>
    %25 = vector.broadcast %23 : vector<128x1xf32> to vector<128x256xf32>
    %26 = vector.broadcast %24 : vector<1x256xf32> to vector<128x256xf32>
    %27 = arith.mulf %25, %26 : vector<128x256xf32>
    %28 = vector.extract_strided_slice %22 {offsets = [0, 1], sizes = [128, 1], strides = [1, 1]} : vector<128x8xf32> to vector<128x1xf32>
    %c1_10 = arith.constant 1 : index
    %c0_11 = arith.constant 0 : index
    %29 = vector.load %arg2[%c1_10, %c0_11] : memref<8x256xf32, #tpu.memory_space<vmem>>, vector<1x256xf32>
    %30 = vector.broadcast %28 : vector<128x1xf32> to vector<128x256xf32>
    %31 = vector.broadcast %29 : vector<1x256xf32> to vector<128x256xf32>
    %32 = arith.mulf %30, %31 : vector<128x256xf32>
    %33 = arith.addf %27, %32 : vector<128x256xf32>
    %34 = vector.extract_strided_slice %22 {offsets = [0, 2], sizes = [128, 1], strides = [1, 1]} : vector<128x8xf32> to vector<128x1xf32>
    %c2_12 = arith.constant 2 : index
    %c0_13 = arith.constant 0 : index
    %35 = vector.load %arg2[%c2_12, %c0_13] : memref<8x256xf32, #tpu.memory_space<vmem>>, vector<1x256xf32>
    %36 = vector.broadcast %34 : vector<128x1xf32> to vector<128x256xf32>
    %37 = vector.broadcast %35 : vector<1x256xf32> to vector<128x256xf32>
    %38 = arith.mulf %36, %37 : vector<128x256xf32>
    %39 = arith.addf %33, %38 : vector<128x256xf32>
    %c0_14 = arith.constant 0 : index
    %c0_15 = arith.constant 0 : index
    %40 = vector.load %arg3[%c0_14, %c0_15] : memref<1x256xf32, #tpu.memory_space<vmem>>, vector<1x256xf32>
    %41 = vector.broadcast %40 : vector<1x256xf32> to vector<128x256xf32>
    %42 = arith.addf %39, %41 : vector<128x256xf32>
    %43 = math.tanh %42 : vector<128x256xf32>
    %c0_16 = arith.constant 0 : index
    %c0_17 = arith.constant 0 : index
    %c0_18 = arith.constant 0 : index
    %44 = vector.load %arg4[%c0_16, %c0_17, %c0_18] : memref<10x256x256xf32, #tpu.memory_space<vmem>>, vector<1x256x256xf32>
    %45 = vector.shape_cast %44 : vector<1x256x256xf32> to vector<256x256xf32>
    %c0_19 = arith.constant 0 : index
    %c0_20 = arith.constant 0 : index
    %c0_21 = arith.constant 0 : index
    %46 = vector.load %arg5[%c0_19, %c0_20, %c0_21] : memref<10x1x256xf32, #tpu.memory_space<vmem>>, vector<1x1x256xf32>
    %47 = vector.shape_cast %46 : vector<1x1x256xf32> to vector<1x256xf32>
    %cst = arith.constant dense<0.000000e+00> : vector<128x256xf32>
    %48 = tpu.matmul %21, %45, %cst {dimension_numbers = #tpu.dot_dimension_numbers<[1], [0], [0], [1], [0, 0, 1, 1], [], []>} : vector<128x256xf32>, vector<256x256xf32>, vector<128x256xf32> -> vector<128x256xf32>
    %49 = vector.broadcast %47 : vector<1x256xf32> to vector<128x256xf32>
    %50 = arith.addf %48, %49 : vector<128x256xf32>
    %51 = math.tanh %50 : vector<128x256xf32>
    %cst_22 = arith.constant dense<0.000000e+00> : vector<128x256xf32>
    %52 = tpu.matmul %43, %45, %cst_22 {dimension_numbers = #tpu.dot_dimension_numbers<[1], [0], [0], [1], [0, 0, 1, 1], [], []>} : vector<128x256xf32>, vector<256x256xf32>, vector<128x256xf32> -> vector<128x256xf32>
    %53 = vector.broadcast %47 : vector<1x256xf32> to vector<128x256xf32>
    %54 = arith.addf %52, %53 : vector<128x256xf32>
    %55 = math.tanh %54 : vector<128x256xf32>
    %c1_23 = arith.constant 1 : index
    %c0_24 = arith.constant 0 : index
    %c0_25 = arith.constant 0 : index
    %56 = vector.load %arg4[%c1_23, %c0_24, %c0_25] : memref<10x256x256xf32, #tpu.memory_space<vmem>>, vector<1x256x256xf32>
    %57 = vector.shape_cast %56 : vector<1x256x256xf32> to vector<256x256xf32>
    %c1_26 = arith.constant 1 : index
    %c0_27 = arith.constant 0 : index
    %c0_28 = arith.constant 0 : index
    %58 = vector.load %arg5[%c1_26, %c0_27, %c0_28] : memref<10x1x256xf32, #tpu.memory_space<vmem>>, vector<1x1x256xf32>
    %59 = vector.shape_cast %58 : vector<1x1x256xf32> to vector<1x256xf32>
    %cst_29 = arith.constant dense<0.000000e+00> : vector<128x256xf32>
    %60 = tpu.matmul %51, %57, %cst_29 {dimension_numbers = #tpu.dot_dimension_numbers<[1], [0], [0], [1], [0, 0, 1, 1], [], []>} : vector<128x256xf32>, vector<256x256xf32>, vector<128x256xf32> -> vector<128x256xf32>
    %61 = vector.broadcast %59 : vector<1x256xf32> to vector<128x256xf32>
    %62 = arith.addf %60, %61 : vector<128x256xf32>
    %63 = math.tanh %62 : vector<128x256xf32>
    %cst_30 = arith.constant dense<0.000000e+00> : vector<128x256xf32>
    %64 = tpu.matmul %55, %57, %cst_30 {dimension_numbers = #tpu.dot_dimension_numbers<[1], [0], [0], [1], [0, 0, 1, 1], [], []>} : vector<128x256xf32>, vector<256x256xf32>, vector<128x256xf32> -> vector<128x256xf32>
    %65 = vector.broadcast %59 : vector<1x256xf32> to vector<128x256xf32>
    %66 = arith.addf %64, %65 : vector<128x256xf32>
    %67 = math.tanh %66 : vector<128x256xf32>
    %c2_31 = arith.constant 2 : index
    %c0_32 = arith.constant 0 : index
    %c0_33 = arith.constant 0 : index
    %68 = vector.load %arg4[%c2_31, %c0_32, %c0_33] : memref<10x256x256xf32, #tpu.memory_space<vmem>>, vector<1x256x256xf32>
    %69 = vector.shape_cast %68 : vector<1x256x256xf32> to vector<256x256xf32>
    %c2_34 = arith.constant 2 : index
    %c0_35 = arith.constant 0 : index
    %c0_36 = arith.constant 0 : index
    %70 = vector.load %arg5[%c2_34, %c0_35, %c0_36] : memref<10x1x256xf32, #tpu.memory_space<vmem>>, vector<1x1x256xf32>
    %71 = vector.shape_cast %70 : vector<1x1x256xf32> to vector<1x256xf32>
    %cst_37 = arith.constant dense<0.000000e+00> : vector<128x256xf32>
    %72 = tpu.matmul %63, %69, %cst_37 {dimension_numbers = #tpu.dot_dimension_numbers<[1], [0], [0], [1], [0, 0, 1, 1], [], []>} : vector<128x256xf32>, vector<256x256xf32>, vector<128x256xf32> -> vector<128x256xf32>
    %73 = vector.broadcast %71 : vector<1x256xf32> to vector<128x256xf32>
    %74 = arith.addf %72, %73 : vector<128x256xf32>
    %75 = math.tanh %74 : vector<128x256xf32>
    %cst_38 = arith.constant dense<0.000000e+00> : vector<128x256xf32>
    %76 = tpu.matmul %67, %69, %cst_38 {dimension_numbers = #tpu.dot_dimension_numbers<[1], [0], [0], [1], [0, 0, 1, 1], [], []>} : vector<128x256xf32>, vector<256x256xf32>, vector<128x256xf32> -> vector<128x256xf32>
    %77 = vector.broadcast %71 : vector<1x256xf32> to vector<128x256xf32>
    %78 = arith.addf %76, %77 : vector<128x256xf32>
    %79 = math.tanh %78 : vector<128x256xf32>
    %c3 = arith.constant 3 : index
    %c0_39 = arith.constant 0 : index
    %c0_40 = arith.constant 0 : index
    %80 = vector.load %arg4[%c3, %c0_39, %c0_40] : memref<10x256x256xf32, #tpu.memory_space<vmem>>, vector<1x256x256xf32>
    %81 = vector.shape_cast %80 : vector<1x256x256xf32> to vector<256x256xf32>
    %c3_41 = arith.constant 3 : index
    %c0_42 = arith.constant 0 : index
    %c0_43 = arith.constant 0 : index
    %82 = vector.load %arg5[%c3_41, %c0_42, %c0_43] : memref<10x1x256xf32, #tpu.memory_space<vmem>>, vector<1x1x256xf32>
    %83 = vector.shape_cast %82 : vector<1x1x256xf32> to vector<1x256xf32>
    %cst_44 = arith.constant dense<0.000000e+00> : vector<128x256xf32>
    %84 = tpu.matmul %75, %81, %cst_44 {dimension_numbers = #tpu.dot_dimension_numbers<[1], [0], [0], [1], [0, 0, 1, 1], [], []>} : vector<128x256xf32>, vector<256x256xf32>, vector<128x256xf32> -> vector<128x256xf32>
    %85 = vector.broadcast %83 : vector<1x256xf32> to vector<128x256xf32>
    %86 = arith.addf %84, %85 : vector<128x256xf32>
    %87 = math.tanh %86 : vector<128x256xf32>
    %cst_45 = arith.constant dense<0.000000e+00> : vector<128x256xf32>
    %88 = tpu.matmul %79, %81, %cst_45 {dimension_numbers = #tpu.dot_dimension_numbers<[1], [0], [0], [1], [0, 0, 1, 1], [], []>} : vector<128x256xf32>, vector<256x256xf32>, vector<128x256xf32> -> vector<128x256xf32>
    %89 = vector.broadcast %83 : vector<1x256xf32> to vector<128x256xf32>
    %90 = arith.addf %88, %89 : vector<128x256xf32>
    %91 = math.tanh %90 : vector<128x256xf32>
    %c4 = arith.constant 4 : index
    %c0_46 = arith.constant 0 : index
    %c0_47 = arith.constant 0 : index
    %92 = vector.load %arg4[%c4, %c0_46, %c0_47] : memref<10x256x256xf32, #tpu.memory_space<vmem>>, vector<1x256x256xf32>
    %93 = vector.shape_cast %92 : vector<1x256x256xf32> to vector<256x256xf32>
    %c4_48 = arith.constant 4 : index
    %c0_49 = arith.constant 0 : index
    %c0_50 = arith.constant 0 : index
    %94 = vector.load %arg5[%c4_48, %c0_49, %c0_50] : memref<10x1x256xf32, #tpu.memory_space<vmem>>, vector<1x1x256xf32>
    %95 = vector.shape_cast %94 : vector<1x1x256xf32> to vector<1x256xf32>
    %cst_51 = arith.constant dense<0.000000e+00> : vector<128x256xf32>
    %96 = tpu.matmul %87, %93, %cst_51 {dimension_numbers = #tpu.dot_dimension_numbers<[1], [0], [0], [1], [0, 0, 1, 1], [], []>} : vector<128x256xf32>, vector<256x256xf32>, vector<128x256xf32> -> vector<128x256xf32>
    %97 = vector.broadcast %95 : vector<1x256xf32> to vector<128x256xf32>
    %98 = arith.addf %96, %97 : vector<128x256xf32>
    %99 = math.tanh %98 : vector<128x256xf32>
    %cst_52 = arith.constant dense<0.000000e+00> : vector<128x256xf32>
    %100 = tpu.matmul %91, %93, %cst_52 {dimension_numbers = #tpu.dot_dimension_numbers<[1], [0], [0], [1], [0, 0, 1, 1], [], []>} : vector<128x256xf32>, vector<256x256xf32>, vector<128x256xf32> -> vector<128x256xf32>
    %101 = vector.broadcast %95 : vector<1x256xf32> to vector<128x256xf32>
    %102 = arith.addf %100, %101 : vector<128x256xf32>
    %103 = math.tanh %102 : vector<128x256xf32>
    %c5 = arith.constant 5 : index
    %c0_53 = arith.constant 0 : index
    %c0_54 = arith.constant 0 : index
    %104 = vector.load %arg4[%c5, %c0_53, %c0_54] : memref<10x256x256xf32, #tpu.memory_space<vmem>>, vector<1x256x256xf32>
    %105 = vector.shape_cast %104 : vector<1x256x256xf32> to vector<256x256xf32>
    %c5_55 = arith.constant 5 : index
    %c0_56 = arith.constant 0 : index
    %c0_57 = arith.constant 0 : index
    %106 = vector.load %arg5[%c5_55, %c0_56, %c0_57] : memref<10x1x256xf32, #tpu.memory_space<vmem>>, vector<1x1x256xf32>
    %107 = vector.shape_cast %106 : vector<1x1x256xf32> to vector<1x256xf32>
    %cst_58 = arith.constant dense<0.000000e+00> : vector<128x256xf32>
    %108 = tpu.matmul %99, %105, %cst_58 {dimension_numbers = #tpu.dot_dimension_numbers<[1], [0], [0], [1], [0, 0, 1, 1], [], []>} : vector<128x256xf32>, vector<256x256xf32>, vector<128x256xf32> -> vector<128x256xf32>
    %109 = vector.broadcast %107 : vector<1x256xf32> to vector<128x256xf32>
    %110 = arith.addf %108, %109 : vector<128x256xf32>
    %111 = math.tanh %110 : vector<128x256xf32>
    %cst_59 = arith.constant dense<0.000000e+00> : vector<128x256xf32>
    %112 = tpu.matmul %103, %105, %cst_59 {dimension_numbers = #tpu.dot_dimension_numbers<[1], [0], [0], [1], [0, 0, 1, 1], [], []>} : vector<128x256xf32>, vector<256x256xf32>, vector<128x256xf32> -> vector<128x256xf32>
    %113 = vector.broadcast %107 : vector<1x256xf32> to vector<128x256xf32>
    %114 = arith.addf %112, %113 : vector<128x256xf32>
    %115 = math.tanh %114 : vector<128x256xf32>
    %c6 = arith.constant 6 : index
    %c0_60 = arith.constant 0 : index
    %c0_61 = arith.constant 0 : index
    %116 = vector.load %arg4[%c6, %c0_60, %c0_61] : memref<10x256x256xf32, #tpu.memory_space<vmem>>, vector<1x256x256xf32>
    %117 = vector.shape_cast %116 : vector<1x256x256xf32> to vector<256x256xf32>
    %c6_62 = arith.constant 6 : index
    %c0_63 = arith.constant 0 : index
    %c0_64 = arith.constant 0 : index
    %118 = vector.load %arg5[%c6_62, %c0_63, %c0_64] : memref<10x1x256xf32, #tpu.memory_space<vmem>>, vector<1x1x256xf32>
    %119 = vector.shape_cast %118 : vector<1x1x256xf32> to vector<1x256xf32>
    %cst_65 = arith.constant dense<0.000000e+00> : vector<128x256xf32>
    %120 = tpu.matmul %111, %117, %cst_65 {dimension_numbers = #tpu.dot_dimension_numbers<[1], [0], [0], [1], [0, 0, 1, 1], [], []>} : vector<128x256xf32>, vector<256x256xf32>, vector<128x256xf32> -> vector<128x256xf32>
    %121 = vector.broadcast %119 : vector<1x256xf32> to vector<128x256xf32>
    %122 = arith.addf %120, %121 : vector<128x256xf32>
    %123 = math.tanh %122 : vector<128x256xf32>
    %cst_66 = arith.constant dense<0.000000e+00> : vector<128x256xf32>
    %124 = tpu.matmul %115, %117, %cst_66 {dimension_numbers = #tpu.dot_dimension_numbers<[1], [0], [0], [1], [0, 0, 1, 1], [], []>} : vector<128x256xf32>, vector<256x256xf32>, vector<128x256xf32> -> vector<128x256xf32>
    %125 = vector.broadcast %119 : vector<1x256xf32> to vector<128x256xf32>
    %126 = arith.addf %124, %125 : vector<128x256xf32>
    %127 = math.tanh %126 : vector<128x256xf32>
    %c7 = arith.constant 7 : index
    %c0_67 = arith.constant 0 : index
    %c0_68 = arith.constant 0 : index
    %128 = vector.load %arg4[%c7, %c0_67, %c0_68] : memref<10x256x256xf32, #tpu.memory_space<vmem>>, vector<1x256x256xf32>
    %129 = vector.shape_cast %128 : vector<1x256x256xf32> to vector<256x256xf32>
    %c7_69 = arith.constant 7 : index
    %c0_70 = arith.constant 0 : index
    %c0_71 = arith.constant 0 : index
    %130 = vector.load %arg5[%c7_69, %c0_70, %c0_71] : memref<10x1x256xf32, #tpu.memory_space<vmem>>, vector<1x1x256xf32>
    %131 = vector.shape_cast %130 : vector<1x1x256xf32> to vector<1x256xf32>
    %cst_72 = arith.constant dense<0.000000e+00> : vector<128x256xf32>
    %132 = tpu.matmul %123, %129, %cst_72 {dimension_numbers = #tpu.dot_dimension_numbers<[1], [0], [0], [1], [0, 0, 1, 1], [], []>} : vector<128x256xf32>, vector<256x256xf32>, vector<128x256xf32> -> vector<128x256xf32>
    %133 = vector.broadcast %131 : vector<1x256xf32> to vector<128x256xf32>
    %134 = arith.addf %132, %133 : vector<128x256xf32>
    %135 = math.tanh %134 : vector<128x256xf32>
    %cst_73 = arith.constant dense<0.000000e+00> : vector<128x256xf32>
    %136 = tpu.matmul %127, %129, %cst_73 {dimension_numbers = #tpu.dot_dimension_numbers<[1], [0], [0], [1], [0, 0, 1, 1], [], []>} : vector<128x256xf32>, vector<256x256xf32>, vector<128x256xf32> -> vector<128x256xf32>
    %137 = vector.broadcast %131 : vector<1x256xf32> to vector<128x256xf32>
    %138 = arith.addf %136, %137 : vector<128x256xf32>
    %139 = math.tanh %138 : vector<128x256xf32>
    %c8 = arith.constant 8 : index
    %c0_74 = arith.constant 0 : index
    %c0_75 = arith.constant 0 : index
    %140 = vector.load %arg4[%c8, %c0_74, %c0_75] : memref<10x256x256xf32, #tpu.memory_space<vmem>>, vector<1x256x256xf32>
    %141 = vector.shape_cast %140 : vector<1x256x256xf32> to vector<256x256xf32>
    %c8_76 = arith.constant 8 : index
    %c0_77 = arith.constant 0 : index
    %c0_78 = arith.constant 0 : index
    %142 = vector.load %arg5[%c8_76, %c0_77, %c0_78] : memref<10x1x256xf32, #tpu.memory_space<vmem>>, vector<1x1x256xf32>
    %143 = vector.shape_cast %142 : vector<1x1x256xf32> to vector<1x256xf32>
    %cst_79 = arith.constant dense<0.000000e+00> : vector<128x256xf32>
    %144 = tpu.matmul %135, %141, %cst_79 {dimension_numbers = #tpu.dot_dimension_numbers<[1], [0], [0], [1], [0, 0, 1, 1], [], []>} : vector<128x256xf32>, vector<256x256xf32>, vector<128x256xf32> -> vector<128x256xf32>
    %145 = vector.broadcast %143 : vector<1x256xf32> to vector<128x256xf32>
    %146 = arith.addf %144, %145 : vector<128x256xf32>
    %147 = math.tanh %146 : vector<128x256xf32>
    %cst_80 = arith.constant dense<0.000000e+00> : vector<128x256xf32>
    %148 = tpu.matmul %139, %141, %cst_80 {dimension_numbers = #tpu.dot_dimension_numbers<[1], [0], [0], [1], [0, 0, 1, 1], [], []>} : vector<128x256xf32>, vector<256x256xf32>, vector<128x256xf32> -> vector<128x256xf32>
    %149 = vector.broadcast %143 : vector<1x256xf32> to vector<128x256xf32>
    %150 = arith.addf %148, %149 : vector<128x256xf32>
    %151 = math.tanh %150 : vector<128x256xf32>
    %c9 = arith.constant 9 : index
    %c0_81 = arith.constant 0 : index
    %c0_82 = arith.constant 0 : index
    %152 = vector.load %arg4[%c9, %c0_81, %c0_82] : memref<10x256x256xf32, #tpu.memory_space<vmem>>, vector<1x256x256xf32>
    %153 = vector.shape_cast %152 : vector<1x256x256xf32> to vector<256x256xf32>
    %c9_83 = arith.constant 9 : index
    %c0_84 = arith.constant 0 : index
    %c0_85 = arith.constant 0 : index
    %154 = vector.load %arg5[%c9_83, %c0_84, %c0_85] : memref<10x1x256xf32, #tpu.memory_space<vmem>>, vector<1x1x256xf32>
    %155 = vector.shape_cast %154 : vector<1x1x256xf32> to vector<1x256xf32>
    %cst_86 = arith.constant dense<0.000000e+00> : vector<128x256xf32>
    %156 = tpu.matmul %147, %153, %cst_86 {dimension_numbers = #tpu.dot_dimension_numbers<[1], [0], [0], [1], [0, 0, 1, 1], [], []>} : vector<128x256xf32>, vector<256x256xf32>, vector<128x256xf32> -> vector<128x256xf32>
    %157 = vector.broadcast %155 : vector<1x256xf32> to vector<128x256xf32>
    %158 = arith.addf %156, %157 : vector<128x256xf32>
    %159 = math.tanh %158 : vector<128x256xf32>
    %cst_87 = arith.constant dense<0.000000e+00> : vector<128x256xf32>
    %160 = tpu.matmul %151, %153, %cst_87 {dimension_numbers = #tpu.dot_dimension_numbers<[1], [0], [0], [1], [0, 0, 1, 1], [], []>} : vector<128x256xf32>, vector<256x256xf32>, vector<128x256xf32> -> vector<128x256xf32>
    %161 = vector.broadcast %155 : vector<1x256xf32> to vector<128x256xf32>
    %162 = arith.addf %160, %161 : vector<128x256xf32>
    %163 = math.tanh %162 : vector<128x256xf32>
    %c0_88 = arith.constant 0 : index
    %c0_89 = arith.constant 0 : index
    %164 = vector.load %arg6[%c0_88, %c0_89] : memref<256x128xf32, #tpu.memory_space<vmem>>, vector<256x128xf32>
    %c0_90 = arith.constant 0 : index
    %c0_91 = arith.constant 0 : index
    %165 = vector.load %arg7[%c0_90, %c0_91] : memref<1x128xf32, #tpu.memory_space<vmem>>, vector<1x128xf32>
    %cst_92 = arith.constant dense<0.000000e+00> : vector<128x128xf32>
    %166 = tpu.matmul %159, %164, %cst_92 {dimension_numbers = #tpu.dot_dimension_numbers<[1], [0], [0], [1], [0, 0, 1, 1], [], []>} : vector<128x256xf32>, vector<256x128xf32>, vector<128x128xf32> -> vector<128x128xf32>
    %167 = vector.broadcast %165 : vector<1x128xf32> to vector<128x128xf32>
    %168 = arith.addf %166, %167 : vector<128x128xf32>
    %c0_93 = arith.constant 0 : index
    %c0_94 = arith.constant 0 : index
    %169 = vector.load %arg8[%c0_93, %c0_94] : memref<256x128xf32, #tpu.memory_space<vmem>>, vector<128x128xf32>
    tpu.vector_store %arg8[%c0_93, %c0_94], %168 {strides = array<i32>} : memref<256x128xf32, #tpu.memory_space<vmem>>, vector<128x128xf32>,
    %cst_95 = arith.constant dense<0.000000e+00> : vector<128x128xf32>
    %170 = tpu.matmul %163, %164, %cst_95 {dimension_numbers = #tpu.dot_dimension_numbers<[1], [0], [0], [1], [0, 0, 1, 1], [], []>} : vector<128x256xf32>, vector<256x128xf32>, vector<128x128xf32> -> vector<128x128xf32>
    %171 = vector.broadcast %165 : vector<1x128xf32> to vector<128x128xf32>
    %172 = arith.addf %170, %171 : vector<128x128xf32>
    %c128_96 = arith.constant 128 : index
    %c0_97 = arith.constant 0 : index
    %173 = vector.load %arg8[%c128_96, %c0_97] : memref<256x128xf32, #tpu.memory_space<vmem>>, vector<128x128xf32>
    tpu.vector_store %arg8[%c128_96, %c0_97], %172 {strides = array<i32>} : memref<256x128xf32, #tpu.memory_space<vmem>>, vector<128x128xf32>,
    return
  }
  func.func @transform_0(%arg0: i32) -> (i32, i32) {
    %c0_i32 = arith.constant 0 : i32
    %c0_i32_0 = arith.constant 0 : i32
    return %arg0, %c0_i32 : i32, i32
  }
  func.func @transform_1(%arg0: i32) -> (i32, i32) {
    %c0_i32 = arith.constant 0 : i32
    %c0_i32_0 = arith.constant 0 : i32
    %c0_i32_1 = arith.constant 0 : i32
    return %c0_i32, %c0_i32_0 : i32, i32
  }
  func.func @transform_2(%arg0: i32) -> (i32, i32) {
    %c0_i32 = arith.constant 0 : i32
    %c0_i32_0 = arith.constant 0 : i32
    %c0_i32_1 = arith.constant 0 : i32
    return %c0_i32, %c0_i32_0 : i32, i32
  }
  func.func @transform_3(%arg0: i32) -> (i32, i32, i32) {
    %c0_i32 = arith.constant 0 : i32
    %c0_i32_0 = arith.constant 0 : i32
    %c0_i32_1 = arith.constant 0 : i32
    %c0_i32_2 = arith.constant 0 : i32
    return %c0_i32, %c0_i32_0, %c0_i32_1 : i32, i32, i32
  }
  func.func @transform_4(%arg0: i32) -> (i32, i32, i32) {
    %c0_i32 = arith.constant 0 : i32
    %c0_i32_0 = arith.constant 0 : i32
    %c0_i32_1 = arith.constant 0 : i32
    %c0_i32_2 = arith.constant 0 : i32
    return %c0_i32, %c0_i32_0, %c0_i32_1 : i32, i32, i32
  }
  func.func @transform_5(%arg0: i32) -> (i32, i32) {
    %c0_i32 = arith.constant 0 : i32
    %c0_i32_0 = arith.constant 0 : i32
    %c0_i32_1 = arith.constant 0 : i32
    return %c0_i32, %c0_i32_0 : i32, i32
  }
  func.func @transform_6(%arg0: i32) -> (i32, i32) {
    %c0_i32 = arith.constant 0 : i32
    %c0_i32_0 = arith.constant 0 : i32
    %c0_i32_1 = arith.constant 0 : i32
    return %c0_i32, %c0_i32_0 : i32, i32
  }
  func.func @transform_7(%arg0: i32) -> (i32, i32) {
    %c0_i32 = arith.constant 0 : i32
    %c0_i32_0 = arith.constant 0 : i32
    return %arg0, %c0_i32 : i32, i32
  }
}

</mosaic_0001>

<llo_original>
// kernel: mlp_forward.1
$region0: #{mlp_forward.1}
  #allocation0 [shape = 'u32[]', space=smem, size = 0x4, offset = 0x4, fixed_abs, tag = 'smem constant byte address 0x4 - core index']
  #allocation1 [shape = 'u32[144,128]{1,0:T(1,128)}', space=vmem, size = 0x12000, scoped, tag = 'internal scratch']
  %s0 = inlined_call_operand.vmem [shape: f32[256,8], index: 0, kind: input, shape index: {}]
  %s1 = inlined_call_operand.vmem [shape: f32[8,256], index: 1, kind: input, shape index: {}]
  %s2 = inlined_call_operand.hbm [shape: f32[1,256], index: 2, kind: input, shape index: {}]
  %s3 = inlined_call_operand.hbm [shape: f32[10,256,256], index: 3, kind: input, shape index: {}]
  %s4 = inlined_call_operand.hbm [shape: f32[10,1,256], index: 4, kind: input, shape index: {}]
  %s5 = inlined_call_operand.vmem [shape: f32[256,128], index: 5, kind: input, shape index: {}]
  %s6 = inlined_call_operand.vmem [shape: f32[1,128], index: 6, kind: input, shape index: {}]
  %s7 = inlined_call_operand.vmem [shape: f32[256,128], index: 7, kind: output, shape index: {}]
  %s8 = sld [smem:[#allocation0]]
  $region50: #{mlp_forward.1} parent=0
    _
  %s10 = ssub.s32 1, %s8
  %s11 = scalar_select 0, %s10, %s8
  $region1: #{mlp_forward.1} parent=0
    #allocation2 [shape = 'u8[1024]{0}', space=vmem, size = 0x400, scoped, tag = 'input window, operand 2, single buffered']
    #allocation3 [shape = 's32[1]{0}', space=sflag, size = 0x4, scoped, tag = 'scoped memory for mlp_forward.1']
    #allocation4 [shape = 'u8[2621440]{0}', space=vmem, size = 0x280000, scoped, tag = 'input window, operand 3, single buffered']
    #allocation5 [shape = 's32[1]{0}', space=sflag, size = 0x4, scoped, tag = 'scoped memory for mlp_forward.1']
    #allocation6 [shape = 'u8[10240]{0}', space=vmem, size = 0x2800, scoped, tag = 'input window, operand 4, single buffered']
    %12 = vsyncpa [#allocation3], 0
    %13 = vsyncpa [#allocation5], 0
    // Predicated region
    $region2: #{mlp_forward.1} parent=1 // pred_check
      _
    $region3: #{mlp_forward.1} parent=1 // pred_check_branch
      %15 = sbr.rel (0) target = $region5
    $region4: #{mlp_forward.1} parent=1 // pred_region
      _
    $region5: #{mlp_forward.1} parent=1 // pred_fallthru
      _
    // Predicated region
    $region6: #{mlp_forward.1} parent=1 // pred_check
      _
    $region7: #{mlp_forward.1} parent=1 // pred_check_branch
      %17 = sbr.rel (0) target = $region9
    $region8: #{mlp_forward.1} parent=1 // pred_region
      _
    $region9: #{mlp_forward.1} parent=1 // pred_fallthru
      _
    // Predicated region
    $region10: #{mlp_forward.1} parent=1 // pred_check
      _
    $region11: #{mlp_forward.1} parent=1 // pred_check_branch
      %19 = sbr.rel (0) target = $region13
    $region12: #{mlp_forward.1} parent=1 // pred_region
      %s21 = ssub.s32 32, 32
      %22 = vsyncadd [#allocation3], %s21
      %s24 = sshll.u32 [#allocation2], 4
      %s25 = int_to_ptr.vmem [resolvable:$true] %s24
      %27 = dma.hbm_to_vmem [thread:$0]  %s2, 32, %s25, [#allocation3]
    $region13: #{mlp_forward.1} parent=1 // pred_fallthru
      _
    // Predicated region
    $region14: #{mlp_forward.1} parent=1 // pred_check
      _
    $region15: #{mlp_forward.1} parent=1 // pred_check_branch
      %29 = sbr.rel (0) target = $region17
    $region16: #{mlp_forward.1} parent=1 // pred_region
      %s31 = ssub.s32 81920, 81920
      %32 = vsyncadd [#allocation5], %s31
      %s33 = sshll.u32 [#allocation4], 4
      %s34 = int_to_ptr.vmem [resolvable:$true] %s33
      %39 = dma.hbm_to_vmem [thread:$0]  %s3, 81920, %s34, [#allocation5], 256, 256, 16
    $region17: #{mlp_forward.1} parent=1 // pred_fallthru
      _
    // Predicated region
    $region18: #{mlp_forward.1} parent=1 // pred_check
      _
    $region19: #{mlp_forward.1} parent=1 // pred_check_branch
      %41 = sbr.rel (0) target = $region21
    $region20: #{mlp_forward.1} parent=1 // pred_region
      %s43 = ssub.s32 320, 320
      %44 = vsyncadd [#allocation5], %s43
      %s45 = sshll.u32 [#allocation6], 4
      %s46 = int_to_ptr.vmem [resolvable:$true] %s45
      %51 = dma.hbm_to_vmem [thread:$0]  %s4, 320, %s46, [#allocation5], 32, 32, 2
    $region21: #{mlp_forward.1} parent=1 // pred_fallthru
      _
    // Predicated region
    $region22: #{mlp_forward.1} parent=1 // pred_check
      _
    $region23: #{mlp_forward.1} parent=1 // pred_check_branch
      %53 = sbr.rel (0) target = $region25
    $region24: #{mlp_forward.1} parent=1 // pred_region
      _
    $region25: #{mlp_forward.1} parent=1 // pred_fallthru
      _
    // Predicated region
    $region26: #{mlp_forward.1} parent=1 // pred_check
      _
    $region27: #{mlp_forward.1} parent=1 // pred_check_branch
      %55 = sbr.rel (0) target = $region29
    $region28: #{mlp_forward.1} parent=1 // pred_region
      _
    $region29: #{mlp_forward.1} parent=1 // pred_fallthru
      _
    // Predicated region
    $region30: #{mlp_forward.1} parent=1 // pred_check
      _
    $region31: #{mlp_forward.1} parent=1 // pred_check_branch
      %57 = sbr.rel (0) target = $region33
    $region32: #{mlp_forward.1} parent=1 // pred_region
      %58 = dma.done [#allocation3], 32
    $region33: #{mlp_forward.1} parent=1 // pred_fallthru
      _
    // Predicated region
    $region34: #{mlp_forward.1} parent=1 // pred_check
      _
    $region35: #{mlp_forward.1} parent=1 // pred_check_branch
      %60 = sbr.rel (0) target = $region37
    $region36: #{mlp_forward.1} parent=1 // pred_region
      %61 = dma.done [#allocation5], 81920
    $region37: #{mlp_forward.1} parent=1 // pred_fallthru
      _
    // Predicated region
    $region38: #{mlp_forward.1} parent=1 // pred_check
      _
    $region39: #{mlp_forward.1} parent=1 // pred_check_branch
      %63 = sbr.rel (0) target = $region41
    $region40: #{mlp_forward.1} parent=1 // pred_region
      %64 = dma.done [#allocation5], 320
    $region41: #{mlp_forward.1} parent=1 // pred_fallthru
      _
    %v65 = vld [vmem:[%s0] sm:$0xff]
    %v66 = vld [vmem:[%s0 + $0x8] sm:$0xff]
    %v67 = vld [vmem:[%s0 + $0x10] sm:$0xff]
    %v68 = vld [vmem:[%s0 + $0x18] sm:$0xff]
    %v69 = vld [vmem:[%s0 + $0x20] sm:$0xff]
    %v70 = vld [vmem:[%s0 + $0x28] sm:$0xff]
    %v71 = vld [vmem:[%s0 + $0x30] sm:$0xff]
    %v72 = vld [vmem:[%s0 + $0x38] sm:$0xff]
    %v73 = vld [vmem:[%s0 + $0x40] sm:$0xff]
    %v74 = vld [vmem:[%s0 + $0x48] sm:$0xff]
    %v75 = vld [vmem:[%s0 + $0x50] sm:$0xff]
    %v76 = vld [vmem:[%s0 + $0x58] sm:$0xff]
    %v77 = vld [vmem:[%s0 + $0x60] sm:$0xff]
    %v78 = vld [vmem:[%s0 + $0x68] sm:$0xff]
    %v79 = vld [vmem:[%s0 + $0x70] sm:$0xff]
    %v80 = vld [vmem:[%s0 + $0x78] sm:$0xff]
    %v81 = vld [vmem:[%s1] ss:$8 sm:$0x3]
    %83 = vset.pattern.permute.xlu0 0
    %84 = vperm.xlu0 %83, %v65
    %v85 = vpop.permute.xlu0 %84
    %88 = vset.pattern.permute.xlu0 0
    %89 = vperm.xlu0 %88, %v66
    %v90 = vpop.permute.xlu0 %89
    %93 = vset.pattern.permute.xlu0 0
    %94 = vperm.xlu0 %93, %v67
    %v95 = vpop.permute.xlu0 %94
    %98 = vset.pattern.permute.xlu0 0
    %99 = vperm.xlu0 %98, %v68
    %v100 = vpop.permute.xlu0 %99
    %103 = vset.pattern.permute.xlu0 0
    %104 = vperm.xlu0 %103, %v69
    %v105 = vpop.permute.xlu0 %104
    %108 = vset.pattern.permute.xlu0 0
    %109 = vperm.xlu0 %108, %v70
    %v110 = vpop.permute.xlu0 %109
    %113 = vset.pattern.permute.xlu0 0
    %114 = vperm.xlu0 %113, %v71
    %v115 = vpop.permute.xlu0 %114
    %118 = vset.pattern.permute.xlu0 0
    %119 = vperm.xlu0 %118, %v72
    %v120 = vpop.permute.xlu0 %119
    %123 = vset.pattern.permute.xlu0 0
    %124 = vperm.xlu0 %123, %v73
    %v125 = vpop.permute.xlu0 %124
    %128 = vset.pattern.permute.xlu0 0
    %129 = vperm.xlu0 %128, %v74
    %v130 = vpop.permute.xlu0 %129
    %133 = vset.pattern.permute.xlu0 0
    %134 = vperm.xlu0 %133, %v75
    %v135 = vpop.permute.xlu0 %134
    %138 = vset.pattern.permute.xlu0 0
    %139 = vperm.xlu0 %138, %v76
    %v140 = vpop.permute.xlu0 %139
    %143 = vset.pattern.permute.xlu0 0
    %144 = vperm.xlu0 %143, %v77
    %v145 = vpop.permute.xlu0 %144
    %148 = vset.pattern.permute.xlu0 0
    %149 = vperm.xlu0 %148, %v78
    %v150 = vpop.permute.xlu0 %149
    %153 = vset.pattern.permute.xlu0 0
    %154 = vperm.xlu0 %153, %v79
    %v155 = vpop.permute.xlu0 %154
    %158 = vset.pattern.permute.xlu0 0
    %159 = vperm.xlu0 %158, %v80
    %v160 = vpop.permute.xlu0 %159
    %v163 = vlaneseq
    %v164 = vshrl.u32 %v163, 7
    %v165 = vsub.s32 0, %v164
    %v166 = vrot.slane %v81, %v165
    %v167 = vlaneseq
    %v168 = vshrl.u32 %v167, 7
    %v169 = vsub.s32 1, %v168
    %v170 = vrot.slane %v81, %v169
    %v173 = vmul.f32 %v85, %v166
    %v174 = vmul.f32 %v85, %v170
    %v175 = vmul.f32 %v90, %v166
    %v176 = vmul.f32 %v90, %v170
    %v177 = vmul.f32 %v95, %v166
    %v178 = vmul.f32 %v95, %v170
    %v179 = vmul.f32 %v100, %v166
    %v180 = vmul.f32 %v100, %v170
    %v181 = vmul.f32 %v105, %v166
    %v182 = vmul.f32 %v105, %v170
    %v183 = vmul.f32 %v110, %v166
    %v184 = vmul.f32 %v110, %v170
    %v185 = vmul.f32 %v115, %v166
    %v186 = vmul.f32 %v115, %v170
    %v187 = vmul.f32 %v120, %v166
    %v188 = vmul.f32 %v120, %v170
    %v189 = vmul.f32 %v125, %v166
    %v190 = vmul.f32 %v125, %v170
    %v191 = vmul.f32 %v130, %v166
    %v192 = vmul.f32 %v130, %v170
    %v193 = vmul.f32 %v135, %v166
    %v194 = vmul.f32 %v135, %v170
    %v195 = vmul.f32 %v140, %v166
    %v196 = vmul.f32 %v140, %v170
    %v197 = vmul.f32 %v145, %v166
    %v198 = vmul.f32 %v145, %v170
    %v199 = vmul.f32 %v150, %v166
    %v200 = vmul.f32 %v150, %v170
    %v201 = vmul.f32 %v155, %v166
    %v202 = vmul.f32 %v155, %v170
    %v203 = vmul.f32 %v160, %v166
    %v204 = vmul.f32 %v160, %v170
    %s205 = scalar_lea.vmem %s1, 1
    %v206 = vld [vmem:[%s205] ss:$8 sm:$0x3]
    %207 = vset.pattern.permute.xlu0 1
    %208 = vperm.xlu0 %207, %v65
    %v209 = vpop.permute.xlu0 %208
    %211 = vset.pattern.permute.xlu0 1
    %212 = vperm.xlu0 %211, %v66
    %v213 = vpop.permute.xlu0 %212
    %215 = vset.pattern.permute.xlu0 1
    %216 = vperm.xlu0 %215, %v67
    %v217 = vpop.permute.xlu0 %216
    %219 = vset.pattern.permute.xlu0 1
    %220 = vperm.xlu0 %219, %v68
    %v221 = vpop.permute.xlu0 %220
    %223 = vset.pattern.permute.xlu0 1
    %224 = vperm.xlu0 %223, %v69
    %v225 = vpop.permute.xlu0 %224
    %227 = vset.pattern.permute.xlu0 1
    %228 = vperm.xlu0 %227, %v70
    %v229 = vpop.permute.xlu0 %228
    %231 = vset.pattern.permute.xlu0 1
    %232 = vperm.xlu0 %231, %v71
    %v233 = vpop.permute.xlu0 %232
    %235 = vset.pattern.permute.xlu0 1
    %236 = vperm.xlu0 %235, %v72
    %v237 = vpop.permute.xlu0 %236
    %239 = vset.pattern.permute.xlu0 1
    %240 = vperm.xlu0 %239, %v73
    %v241 = vpop.permute.xlu0 %240
    %243 = vset.pattern.permute.xlu0 1
    %244 = vperm.xlu0 %243, %v74
    %v245 = vpop.permute.xlu0 %244
    %247 = vset.pattern.permute.xlu0 1
    %248 = vperm.xlu0 %247, %v75
    %v249 = vpop.permute.xlu0 %248
    %251 = vset.pattern.permute.xlu0 1
    %252 = vperm.xlu0 %251, %v76
    %v253 = vpop.permute.xlu0 %252
    %255 = vset.pattern.permute.xlu0 1
    %256 = vperm.xlu0 %255, %v77
    %v257 = vpop.permute.xlu0 %256
    %259 = vset.pattern.permute.xlu0 1
    %260 = vperm.xlu0 %259, %v78
    %v261 = vpop.permute.xlu0 %260
    %263 = vset.pattern.permute.xlu0 1
    %264 = vperm.xlu0 %263, %v79
    %v265 = vpop.permute.xlu0 %264
    %267 = vset.pattern.permute.xlu0 1
    %268 = vperm.xlu0 %267, %v80
    %v269 = vpop.permute.xlu0 %268
    %v272 = vlaneseq
    %v273 = vshrl.u32 %v272, 7
    %v274 = vsub.s32 0, %v273
    %v275 = vrot.slane %v206, %v274
    %v276 = vlaneseq
    %v277 = vshrl.u32 %v276, 7
    %v278 = vsub.s32 1, %v277
    %v279 = vrot.slane %v206, %v278
    %v282 = vmul.f32 %v209, %v275
    %v283 = vmul.f32 %v209, %v279
    %v284 = vmul.f32 %v213, %v275
    %v285 = vmul.f32 %v213, %v279
    %v286 = vmul.f32 %v217, %v275
    %v287 = vmul.f32 %v217, %v279
    %v288 = vmul.f32 %v221, %v275
    %v289 = vmul.f32 %v221, %v279
    %v290 = vmul.f32 %v225, %v275
    %v291 = vmul.f32 %v225, %v279
    %v292 = vmul.f32 %v229, %v275
    %v293 = vmul.f32 %v229, %v279
    %v294 = vmul.f32 %v233, %v275
    %v295 = vmul.f32 %v233, %v279
    %v296 = vmul.f32 %v237, %v275
    %v297 = vmul.f32 %v237, %v279
    %v298 = vmul.f32 %v241, %v275
    %v299 = vmul.f32 %v241, %v279
    %v300 = vmul.f32 %v245, %v275
    %v301 = vmul.f32 %v245, %v279
    %v302 = vmul.f32 %v249, %v275
    %v303 = vmul.f32 %v249, %v279
    %v304 = vmul.f32 %v253, %v275
    %v305 = vmul.f32 %v253, %v279
    %v306 = vmul.f32 %v257, %v275
    %v307 = vmul.f32 %v257, %v279
    %v308 = vmul.f32 %v261, %v275
    %v309 = vmul.f32 %v261, %v279
    %v310 = vmul.f32 %v265, %v275
    %v311 = vmul.f32 %v265, %v279
    %v312 = vmul.f32 %v269, %v275
    %v313 = vmul.f32 %v269, %v279
    %v314 = vadd.f32 %v173, %v282
    %v315 = vadd.f32 %v174, %v283
    %v316 = vadd.f32 %v175, %v284
    %v317 = vadd.f32 %v176, %v285
    %v318 = vadd.f32 %v177, %v286
    %v319 = vadd.f32 %v178, %v287
    %v320 = vadd.f32 %v179, %v288
    %v321 = vadd.f32 %v180, %v289
    %v322 = vadd.f32 %v181, %v290
    %v323 = vadd.f32 %v182, %v291
    %v324 = vadd.f32 %v183, %v292
    %v325 = vadd.f32 %v184, %v293
    %v326 = vadd.f32 %v185, %v294
    %v327 = vadd.f32 %v186, %v295
    %v328 = vadd.f32 %v187, %v296
    %v329 = vadd.f32 %v188, %v297
    %v330 = vadd.f32 %v189, %v298
    %v331 = vadd.f32 %v190, %v299
    %v332 = vadd.f32 %v191, %v300
    %v333 = vadd.f32 %v192, %v301
    %v334 = vadd.f32 %v193, %v302
    %v335 = vadd.f32 %v194, %v303
    %v336 = vadd.f32 %v195, %v304
    %v337 = vadd.f32 %v196, %v305
    %v338 = vadd.f32 %v197, %v306
    %v339 = vadd.f32 %v198, %v307
    %v340 = vadd.f32 %v199, %v308
    %v341 = vadd.f32 %v200, %v309
    %v342 = vadd.f32 %v201, %v310
    %v343 = vadd.f32 %v202, %v311
    %v344 = vadd.f32 %v203, %v312
    %v345 = vadd.f32 %v204, %v313
    %s346 = scalar_lea.vmem %s1, 2
    %v347 = vld [vmem:[%s346] ss:$8 sm:$0x3]
    %348 = vset.pattern.permute.xlu0 2
    %349 = vperm.xlu0 %348, %v65
    %v350 = vpop.permute.xlu0 %349
    %352 = vset.pattern.permute.xlu0 2
    %353 = vperm.xlu0 %352, %v66
    %v354 = vpop.permute.xlu0 %353
    %356 = vset.pattern.permute.xlu0 2
    %357 = vperm.xlu0 %356, %v67
    %v358 = vpop.permute.xlu0 %357
    %360 = vset.pattern.permute.xlu0 2
    %361 = vperm.xlu0 %360, %v68
    %v362 = vpop.permute.xlu0 %361
    %364 = vset.pattern.permute.xlu0 2
    %365 = vperm.xlu0 %364, %v69
    %v366 = vpop.permute.xlu0 %365
    %368 = vset.pattern.permute.xlu0 2
    %369 = vperm.xlu0 %368, %v70
    %v370 = vpop.permute.xlu0 %369
    %372 = vset.pattern.permute.xlu0 2
    %373 = vperm.xlu0 %372, %v71
    %v374 = vpop.permute.xlu0 %373
    %376 = vset.pattern.permute.xlu0 2
    %377 = vperm.xlu0 %376, %v72
    %v378 = vpop.permute.xlu0 %377
    %380 = vset.pattern.permute.xlu0 2
    %381 = vperm.xlu0 %380, %v73
    %v382 = vpop.permute.xlu0 %381
    %384 = vset.pattern.permute.xlu0 2
    %385 = vperm.xlu0 %384, %v74
    %v386 = vpop.permute.xlu0 %385
    %388 = vset.pattern.permute.xlu0 2
    %389 = vperm.xlu0 %388, %v75
    %v390 = vpop.permute.xlu0 %389
    %392 = vset.pattern.permute.xlu0 2
    %393 = vperm.xlu0 %392, %v76
    %v394 = vpop.permute.xlu0 %393
    %396 = vset.pattern.permute.xlu0 2
    %397 = vperm.xlu0 %396, %v77
    %v398 = vpop.permute.xlu0 %397
    %400 = vset.pattern.permute.xlu0 2
    %401 = vperm.xlu0 %400, %v78
    %v402 = vpop.permute.xlu0 %401
    %404 = vset.pattern.permute.xlu0 2
    %405 = vperm.xlu0 %404, %v79
    %v406 = vpop.permute.xlu0 %405
    %408 = vset.pattern.permute.xlu0 2
    %409 = vperm.xlu0 %408, %v80
    %v410 = vpop.permute.xlu0 %409
    %v413 = vlaneseq
    %v414 = vshrl.u32 %v413, 7
    %v415 = vsub.s32 0, %v414
    %v416 = vrot.slane %v347, %v415
    %v417 = vlaneseq
    %v418 = vshrl.u32 %v417, 7
    %v419 = vsub.s32 1, %v418
    %v420 = vrot.slane %v347, %v419
    %v423 = vmul.f32 %v350, %v416
    %v424 = vmul.f32 %v350, %v420
    %v425 = vmul.f32 %v354, %v416
    %v426 = vmul.f32 %v354, %v420
    %v427 = vmul.f32 %v358, %v416
    %v428 = vmul.f32 %v358, %v420
    %v429 = vmul.f32 %v362, %v416
    %v430 = vmul.f32 %v362, %v420
    %v431 = vmul.f32 %v366, %v416
    %v432 = vmul.f32 %v366, %v420
    %v433 = vmul.f32 %v370, %v416
    %v434 = vmul.f32 %v370, %v420
    %v435 = vmul.f32 %v374, %v416
    %v436 = vmul.f32 %v374, %v420
    %v437 = vmul.f32 %v378, %v416
    %v438 = vmul.f32 %v378, %v420
    %v439 = vmul.f32 %v382, %v416
    %v440 = vmul.f32 %v382, %v420
    %v441 = vmul.f32 %v386, %v416
    %v442 = vmul.f32 %v386, %v420
    %v443 = vmul.f32 %v390, %v416
    %v444 = vmul.f32 %v390, %v420
    %v445 = vmul.f32 %v394, %v416
    %v446 = vmul.f32 %v394, %v420
    %v447 = vmul.f32 %v398, %v416
    %v448 = vmul.f32 %v398, %v420
    %v449 = vmul.f32 %v402, %v416
    %v450 = vmul.f32 %v402, %v420
    %v451 = vmul.f32 %v406, %v416
    %v452 = vmul.f32 %v406, %v420
    %v453 = vmul.f32 %v410, %v416
    %v454 = vmul.f32 %v410, %v420
    %v455 = vadd.f32 %v314, %v423
    %v456 = vadd.f32 %v315, %v424
    %v457 = vadd.f32 %v316, %v425
    %v458 = vadd.f32 %v317, %v426
    %v459 = vadd.f32 %v318, %v427
    %v460 = vadd.f32 %v319, %v428
    %v461 = vadd.f32 %v320, %v429
    %v462 = vadd.f32 %v321, %v430
    %v463 = vadd.f32 %v322, %v431
    %v464 = vadd.f32 %v323, %v432
    %v465 = vadd.f32 %v324, %v433
    %v466 = vadd.f32 %v325, %v434
    %v467 = vadd.f32 %v326, %v435
    %v468 = vadd.f32 %v327, %v436
    %v469 = vadd.f32 %v328, %v437
    %v470 = vadd.f32 %v329, %v438
    %v471 = vadd.f32 %v330, %v439
    %v472 = vadd.f32 %v331, %v440
    %v473 = vadd.f32 %v332, %v441
    %v474 = vadd.f32 %v333, %v442
    %v475 = vadd.f32 %v334, %v443
    %v476 = vadd.f32 %v335, %v444
    %v477 = vadd.f32 %v336, %v445
    %v478 = vadd.f32 %v337, %v446
    %v479 = vadd.f32 %v338, %v447
    %v480 = vadd.f32 %v339, %v448
    %v481 = vadd.f32 %v340, %v449
    %v482 = vadd.f32 %v341, %v450
    %v483 = vadd.f32 %v342, %v451
    %v484 = vadd.f32 %v343, %v452
    %v485 = vadd.f32 %v344, %v453
    %v486 = vadd.f32 %v345, %v454
    %v487 = vld [vmem:[#allocation2] sm:$0x3]
    %v489 = vlaneseq
    %v490 = vshrl.u32 %v489, 7
    %v491 = vsub.s32 0, %v490
    %v492 = vrot.slane %v487, %v491
    %v493 = vlaneseq
    %v494 = vshrl.u32 %v493, 7
    %v495 = vsub.s32 1, %v494
    %v496 = vrot.slane %v487, %v495
    %v499 = vadd.f32 %v455, %v492
    %v500 = vadd.f32 %v456, %v496
    %v501 = vadd.f32 %v457, %v492
    %v502 = vadd.f32 %v458, %v496
    %v503 = vadd.f32 %v459, %v492
    %v504 = vadd.f32 %v460, %v496
    %v505 = vadd.f32 %v461, %v492
    %v506 = vadd.f32 %v462, %v496
    %v507 = vadd.f32 %v463, %v492
    %v508 = vadd.f32 %v464, %v496
    %v509 = vadd.f32 %v465, %v492
    %v510 = vadd.f32 %v466, %v496
    %v511 = vadd.f32 %v467, %v492
    %v512 = vadd.f32 %v468, %v496
    %v513 = vadd.f32 %v469, %v492
    %v514 = vadd.f32 %v470, %v496
    %v515 = vadd.f32 %v471, %v492
    %v516 = vadd.f32 %v472, %v496
    %v517 = vadd.f32 %v473, %v492
    %v518 = vadd.f32 %v474, %v496
    %v519 = vadd.f32 %v475, %v492
    %v520 = vadd.f32 %v476, %v496
    %v521 = vadd.f32 %v477, %v492
    %v522 = vadd.f32 %v478, %v496
    %v523 = vadd.f32 %v479, %v492
    %v524 = vadd.f32 %v480, %v496
    %v525 = vadd.f32 %v481, %v492
    %v526 = vadd.f32 %v482, %v496
    %v527 = vadd.f32 %v483, %v492
    %v528 = vadd.f32 %v484, %v496
    %v529 = vadd.f32 %v485, %v492
    %v530 = vadd.f32 %v486, %v496
    %v531 = vtanh.pop %v499
    %v532 = vtanh.pop %v500
    %v533 = vtanh.pop %v501
    %v534 = vtanh.pop %v502
    %v535 = vtanh.pop %v503
    %v536 = vtanh.pop %v504
    %v537 = vtanh.pop %v505
    %v538 = vtanh.pop %v506
    %v539 = vtanh.pop %v507
    %v540 = vtanh.pop %v508
    %v541 = vtanh.pop %v509
    %v542 = vtanh.pop %v510
    %v543 = vtanh.pop %v511
    %v544 = vtanh.pop %v512
    %v545 = vtanh.pop %v513
    %v546 = vtanh.pop %v514
    %v547 = vtanh.pop %v515
    %v548 = vtanh.pop %v516
    %v549 = vtanh.pop %v517
    %v550 = vtanh.pop %v518
    %v551 = vtanh.pop %v519
    %v552 = vtanh.pop %v520
    %v553 = vtanh.pop %v521
    %v554 = vtanh.pop %v522
    %v555 = vtanh.pop %v523
    %v556 = vtanh.pop %v524
    %v557 = vtanh.pop %v525
    %v558 = vtanh.pop %v526
    %v559 = vtanh.pop %v527
    %v560 = vtanh.pop %v528
    %v561 = vtanh.pop %v529
    %v562 = vtanh.pop %v530
    %v563 = vld [vmem:[%s0 + $0x80] sm:$0xff]
    %v564 = vld [vmem:[%s0 + $0x88] sm:$0xff]
    %v565 = vld [vmem:[%s0 + $0x90] sm:$0xff]
    %v566 = vld [vmem:[%s0 + $0x98] sm:$0xff]
    %v567 = vld [vmem:[%s0 + $0xa0] sm:$0xff]
    %v568 = vld [vmem:[%s0 + $0xa8] sm:$0xff]
    %v569 = vld [vmem:[%s0 + $0xb0] sm:$0xff]
    %v570 = vld [vmem:[%s0 + $0xb8] sm:$0xff]
    %v571 = vld [vmem:[%s0 + $0xc0] sm:$0xff]
    %v572 = vld [vmem:[%s0 + $0xc8] sm:$0xff]
    %v573 = vld [vmem:[%s0 + $0xd0] sm:$0xff]
    %v574 = vld [vmem:[%s0 + $0xd8] sm:$0xff]
    %v575 = vld [vmem:[%s0 + $0xe0] sm:$0xff]
    %v576 = vld [vmem:[%s0 + $0xe8] sm:$0xff]
    %v577 = vld [vmem:[%s0 + $0xf0] sm:$0xff]
    %v578 = vld [vmem:[%s0 + $0xf8] sm:$0xff]
    %580 = vset.pattern.permute.xlu0 0
    %581 = vperm.xlu0 %580, %v563
    %v582 = vpop.permute.xlu0 %581
    %585 = vset.pattern.permute.xlu0 0
    %586 = vperm.xlu0 %585, %v564
    %v587 = vpop.permute.xlu0 %586
    %590 = vset.pattern.permute.xlu0 0
    %591 = vperm.xlu0 %590, %v565
    %v592 = vpop.permute.xlu0 %591
    %595 = vset.pattern.permute.xlu0 0
    %596 = vperm.xlu0 %595, %v566
    %v597 = vpop.permute.xlu0 %596
    %600 = vset.pattern.permute.xlu0 0
    %601 = vperm.xlu0 %600, %v567
    %v602 = vpop.permute.xlu0 %601
    %605 = vset.pattern.permute.xlu0 0
    %606 = vperm.xlu0 %605, %v568
    %v607 = vpop.permute.xlu0 %606
    %610 = vset.pattern.permute.xlu0 0
    %611 = vperm.xlu0 %610, %v569
    %v612 = vpop.permute.xlu0 %611
    %615 = vset.pattern.permute.xlu0 0
    %616 = vperm.xlu0 %615, %v570
    %v617 = vpop.permute.xlu0 %616
    %620 = vset.pattern.permute.xlu0 0
    %621 = vperm.xlu0 %620, %v571
    %v622 = vpop.permute.xlu0 %621
    %625 = vset.pattern.permute.xlu0 0
    %626 = vperm.xlu0 %625, %v572
    %v627 = vpop.permute.xlu0 %626
    %630 = vset.pattern.permute.xlu0 0
    %631 = vperm.xlu0 %630, %v573
    %v632 = vpop.permute.xlu0 %631
    %635 = vset.pattern.permute.xlu0 0
    %636 = vperm.xlu0 %635, %v574
    %v637 = vpop.permute.xlu0 %636
    %640 = vset.pattern.permute.xlu0 0
    %641 = vperm.xlu0 %640, %v575
    %v642 = vpop.permute.xlu0 %641
    %645 = vset.pattern.permute.xlu0 0
    %646 = vperm.xlu0 %645, %v576
    %v647 = vpop.permute.xlu0 %646
    %650 = vset.pattern.permute.xlu0 0
    %651 = vperm.xlu0 %650, %v577
    %v652 = vpop.permute.xlu0 %651
    %655 = vset.pattern.permute.xlu0 0
    %656 = vperm.xlu0 %655, %v578
    %v657 = vpop.permute.xlu0 %656
    %v659 = vmul.f32 %v582, %v166
    %v660 = vmul.f32 %v582, %v170
    %v661 = vmul.f32 %v587, %v166
    %v662 = vmul.f32 %v587, %v170
    %v663 = vmul.f32 %v592, %v166
    %v664 = vmul.f32 %v592, %v170
    %v665 = vmul.f32 %v597, %v166
    %v666 = vmul.f32 %v597, %v170
    %v667 = vmul.f32 %v602, %v166
    %v668 = vmul.f32 %v602, %v170
    %v669 = vmul.f32 %v607, %v166
    %v670 = vmul.f32 %v607, %v170
    %v671 = vmul.f32 %v612, %v166
    %v672 = vmul.f32 %v612, %v170
    %v673 = vmul.f32 %v617, %v166
    %v674 = vmul.f32 %v617, %v170
    %v675 = vmul.f32 %v622, %v166
    %v676 = vmul.f32 %v622, %v170
    %v677 = vmul.f32 %v627, %v166
    %v678 = vmul.f32 %v627, %v170
    %v679 = vmul.f32 %v632, %v166
    %v680 = vmul.f32 %v632, %v170
    %v681 = vmul.f32 %v637, %v166
    %v682 = vmul.f32 %v637, %v170
    %v683 = vmul.f32 %v642, %v166
    %v684 = vmul.f32 %v642, %v170
    %v685 = vmul.f32 %v647, %v166
    %v686 = vmul.f32 %v647, %v170
    %v687 = vmul.f32 %v652, %v166
    %v688 = vmul.f32 %v652, %v170
    %v689 = vmul.f32 %v657, %v166
    %v690 = vmul.f32 %v657, %v170
    %691 = vset.pattern.permute.xlu0 1
    %692 = vperm.xlu0 %691, %v563
    %v693 = vpop.permute.xlu0 %692
    %695 = vset.pattern.permute.xlu0 1
    %696 = vperm.xlu0 %695, %v564
    %v697 = vpop.permute.xlu0 %696
    %699 = vset.pattern.permute.xlu0 1
    %700 = vperm.xlu0 %699, %v565
    %v701 = vpop.permute.xlu0 %700
    %703 = vset.pattern.permute.xlu0 1
    %704 = vperm.xlu0 %703, %v566
    %v705 = vpop.permute.xlu0 %704
    %707 = vset.pattern.permute.xlu0 1
    %708 = vperm.xlu0 %707, %v567
    %v709 = vpop.permute.xlu0 %708
    %711 = vset.pattern.permute.xlu0 1
    %712 = vperm.xlu0 %711, %v568
    %v713 = vpop.permute.xlu0 %712
    %715 = vset.pattern.permute.xlu0 1
    %716 = vperm.xlu0 %715, %v569
    %v717 = vpop.permute.xlu0 %716
    %719 = vset.pattern.permute.xlu0 1
    %720 = vperm.xlu0 %719, %v570
    %v721 = vpop.permute.xlu0 %720
    %723 = vset.pattern.permute.xlu0 1
    %724 = vperm.xlu0 %723, %v571
    %v725 = vpop.permute.xlu0 %724
    %727 = vset.pattern.permute.xlu0 1
    %728 = vperm.xlu0 %727, %v572
    %v729 = vpop.permute.xlu0 %728
    %731 = vset.pattern.permute.xlu0 1
    %732 = vperm.xlu0 %731, %v573
    %v733 = vpop.permute.xlu0 %732
    %735 = vset.pattern.permute.xlu0 1
    %736 = vperm.xlu0 %735, %v574
    %v737 = vpop.permute.xlu0 %736
    %739 = vset.pattern.permute.xlu0 1
    %740 = vperm.xlu0 %739, %v575
    %v741 = vpop.permute.xlu0 %740
    %743 = vset.pattern.permute.xlu0 1
    %744 = vperm.xlu0 %743, %v576
    %v745 = vpop.permute.xlu0 %744
    %747 = vset.pattern.permute.xlu0 1
    %748 = vperm.xlu0 %747, %v577
    %v749 = vpop.permute.xlu0 %748
    %751 = vset.pattern.permute.xlu0 1
    %752 = vperm.xlu0 %751, %v578
    %v753 = vpop.permute.xlu0 %752
    %v755 = vmul.f32 %v693, %v275
    %v756 = vmul.f32 %v693, %v279
    %v757 = vmul.f32 %v697, %v275
    %v758 = vmul.f32 %v697, %v279
    %v759 = vmul.f32 %v701, %v275
    %v760 = vmul.f32 %v701, %v279
    %v761 = vmul.f32 %v705, %v275
    %v762 = vmul.f32 %v705, %v279
    %v763 = vmul.f32 %v709, %v275
    %v764 = vmul.f32 %v709, %v279
    %v765 = vmul.f32 %v713, %v275
    %v766 = vmul.f32 %v713, %v279
    %v767 = vmul.f32 %v717, %v275
    %v768 = vmul.f32 %v717, %v279
    %v769 = vmul.f32 %v721, %v275
    %v770 = vmul.f32 %v721, %v279
    %v771 = vmul.f32 %v725, %v275
    %v772 = vmul.f32 %v725, %v279
    %v773 = vmul.f32 %v729, %v275
    %v774 = vmul.f32 %v729, %v279
    %v775 = vmul.f32 %v733, %v275
    %v776 = vmul.f32 %v733, %v279
    %v777 = vmul.f32 %v737, %v275
    %v778 = vmul.f32 %v737, %v279
    %v779 = vmul.f32 %v741, %v275
    %v780 = vmul.f32 %v741, %v279
    %v781 = vmul.f32 %v745, %v275
    %v782 = vmul.f32 %v745, %v279
    %v783 = vmul.f32 %v749, %v275
    %v784 = vmul.f32 %v749, %v279
    %v785 = vmul.f32 %v753, %v275
    %v786 = vmul.f32 %v753, %v279
    %v787 = vadd.f32 %v659, %v755
    %v788 = vadd.f32 %v660, %v756
    %v789 = vadd.f32 %v661, %v757
    %v790 = vadd.f32 %v662, %v758
    %v791 = vadd.f32 %v663, %v759
    %v792 = vadd.f32 %v664, %v760
    %v793 = vadd.f32 %v665, %v761
    %v794 = vadd.f32 %v666, %v762
    %v795 = vadd.f32 %v667, %v763
    %v796 = vadd.f32 %v668, %v764
    %v797 = vadd.f32 %v669, %v765
    %v798 = vadd.f32 %v670, %v766
    %v799 = vadd.f32 %v671, %v767
    %v800 = vadd.f32 %v672, %v768
    %v801 = vadd.f32 %v673, %v769
    %v802 = vadd.f32 %v674, %v770
    %v803 = vadd.f32 %v675, %v771
    %v804 = vadd.f32 %v676, %v772
    %v805 = vadd.f32 %v677, %v773
    %v806 = vadd.f32 %v678, %v774
    %v807 = vadd.f32 %v679, %v775
    %v808 = vadd.f32 %v680, %v776
    %v809 = vadd.f32 %v681, %v777
    %v810 = vadd.f32 %v682, %v778
    %v811 = vadd.f32 %v683, %v779
    %v812 = vadd.f32 %v684, %v780
    %v813 = vadd.f32 %v685, %v781
    %v814 = vadd.f32 %v686, %v782
    %v815 = vadd.f32 %v687, %v783
    %v816 = vadd.f32 %v688, %v784
    %v817 = vadd.f32 %v689, %v785
    %v818 = vadd.f32 %v690, %v786
    %819 = vset.pattern.permute.xlu0 2
    %820 = vperm.xlu0 %819, %v563
    %v821 = vpop.permute.xlu0 %820
    %823 = vset.pattern.permute.xlu0 2
    %824 = vperm.xlu0 %823, %v564
    %v825 = vpop.permute.xlu0 %824
    %827 = vset.pattern.permute.xlu0 2
    %828 = vperm.xlu0 %827, %v565
    %v829 = vpop.permute.xlu0 %828
    %831 = vset.pattern.permute.xlu0 2
    %832 = vperm.xlu0 %831, %v566
    %v833 = vpop.permute.xlu0 %832
    %835 = vset.pattern.permute.xlu0 2
    %836 = vperm.xlu0 %835, %v567
    %v837 = vpop.permute.xlu0 %836
    %839 = vset.pattern.permute.xlu0 2
    %840 = vperm.xlu0 %839, %v568
    %v841 = vpop.permute.xlu0 %840
    %843 = vset.pattern.permute.xlu0 2
    %844 = vperm.xlu0 %843, %v569
    %v845 = vpop.permute.xlu0 %844
    %847 = vset.pattern.permute.xlu0 2
    %848 = vperm.xlu0 %847, %v570
    %v849 = vpop.permute.xlu0 %848
    %851 = vset.pattern.permute.xlu0 2
    %852 = vperm.xlu0 %851, %v571
    %v853 = vpop.permute.xlu0 %852
    %855 = vset.pattern.permute.xlu0 2
    %856 = vperm.xlu0 %855, %v572
    %v857 = vpop.permute.xlu0 %856
    %859 = vset.pattern.permute.xlu0 2
    %860 = vperm.xlu0 %859, %v573
    %v861 = vpop.permute.xlu0 %860
    %863 = vset.pattern.permute.xlu0 2
    %864 = vperm.xlu0 %863, %v574
    %v865 = vpop.permute.xlu0 %864
    %867 = vset.pattern.permute.xlu0 2
    %868 = vperm.xlu0 %867, %v575
    %v869 = vpop.permute.xlu0 %868
    %871 = vset.pattern.permute.xlu0 2
    %872 = vperm.xlu0 %871, %v576
    %v873 = vpop.permute.xlu0 %872
    %875 = vset.pattern.permute.xlu0 2
    %876 = vperm.xlu0 %875, %v577
    %v877 = vpop.permute.xlu0 %876
    %879 = vset.pattern.permute.xlu0 2
    %880 = vperm.xlu0 %879, %v578
    %v881 = vpop.permute.xlu0 %880
    %v883 = vmul.f32 %v821, %v416
    %v884 = vmul.f32 %v821, %v420
    %v885 = vmul.f32 %v825, %v416
    %v886 = vmul.f32 %v825, %v420
    %v887 = vmul.f32 %v829, %v416
    %v888 = vmul.f32 %v829, %v420
    %v889 = vmul.f32 %v833, %v416
    %v890 = vmul.f32 %v833, %v420
    %v891 = vmul.f32 %v837, %v416
    %v892 = vmul.f32 %v837, %v420
    %v893 = vmul.f32 %v841, %v416
    %v894 = vmul.f32 %v841, %v420
    %v895 = vmul.f32 %v845, %v416
    %v896 = vmul.f32 %v845, %v420
    %v897 = vmul.f32 %v849, %v416
    %v898 = vmul.f32 %v849, %v420
    %v899 = vmul.f32 %v853, %v416
    %v900 = vmul.f32 %v853, %v420
    %v901 = vmul.f32 %v857, %v416
    %v902 = vmul.f32 %v857, %v420
    %v903 = vmul.f32 %v861, %v416
    %v904 = vmul.f32 %v861, %v420
    %v905 = vmul.f32 %v865, %v416
    %v906 = vmul.f32 %v865, %v420
    %v907 = vmul.f32 %v869, %v416
    %v908 = vmul.f32 %v869, %v420
    %v909 = vmul.f32 %v873, %v416
    %v910 = vmul.f32 %v873, %v420
    %v911 = vmul.f32 %v877, %v416
    %v912 = vmul.f32 %v877, %v420
    %v913 = vmul.f32 %v881, %v416
    %v914 = vmul.f32 %v881, %v420
    %v915 = vadd.f32 %v787, %v883
    %v916 = vadd.f32 %v788, %v884
    %v917 = vadd.f32 %v789, %v885
    %v918 = vadd.f32 %v790, %v886
    %v919 = vadd.f32 %v791, %v887
    %v920 = vadd.f32 %v792, %v888
    %v921 = vadd.f32 %v793, %v889
    %v922 = vadd.f32 %v794, %v890
    %v923 = vadd.f32 %v795, %v891
    %v924 = vadd.f32 %v796, %v892
    %v925 = vadd.f32 %v797, %v893
    %v926 = vadd.f32 %v798, %v894
    %v927 = vadd.f32 %v799, %v895
    %v928 = vadd.f32 %v800, %v896
    %v929 = vadd.f32 %v801, %v897
    %v930 = vadd.f32 %v802, %v898
    %v931 = vadd.f32 %v803, %v899
    %v932 = vadd.f32 %v804, %v900
    %v933 = vadd.f32 %v805, %v901
    %v934 = vadd.f32 %v806, %v902
    %v935 = vadd.f32 %v807, %v903
    %v936 = vadd.f32 %v808, %v904
    %v937 = vadd.f32 %v809, %v905
    %v938 = vadd.f32 %v810, %v906
    %v939 = vadd.f32 %v811, %v907
    %v940 = vadd.f32 %v812, %v908
    %v941 = vadd.f32 %v813, %v909
    %v942 = vadd.f32 %v814, %v910
    %v943 = vadd.f32 %v815, %v911
    %v944 = vadd.f32 %v816, %v912
    %v945 = vadd.f32 %v817, %v913
    %v946 = vadd.f32 %v818, %v914
    %v947 = vadd.f32 %v915, %v492
    %v948 = vadd.f32 %v916, %v496
    %v949 = vadd.f32 %v917, %v492
    %v950 = vadd.f32 %v918, %v496
    %v951 = vadd.f32 %v919, %v492
    %v952 = vadd.f32 %v920, %v496
    %v953 = vadd.f32 %v921, %v492
    %v954 = vadd.f32 %v922, %v496
    %v955 = vadd.f32 %v923, %v492
    %v956 = vadd.f32 %v924, %v496
    %v957 = vadd.f32 %v925, %v492
    %v958 = vadd.f32 %v926, %v496
    %v959 = vadd.f32 %v927, %v492
    %v960 = vadd.f32 %v928, %v496
    %v961 = vadd.f32 %v929, %v492
    %v962 = vadd.f32 %v930, %v496
    %v963 = vadd.f32 %v931, %v492
    %v964 = vadd.f32 %v932, %v496
    %v965 = vadd.f32 %v933, %v492
    %v966 = vadd.f32 %v934, %v496
    %v967 = vadd.f32 %v935, %v492
    %v968 = vadd.f32 %v936, %v496
    %v969 = vadd.f32 %v937, %v492
    %v970 = vadd.f32 %v938, %v496
    %v971 = vadd.f32 %v939, %v492
    %v972 = vadd.f32 %v940, %v496
    %v973 = vadd.f32 %v941, %v492
    %v974 = vadd.f32 %v942, %v496
    %v975 = vadd.f32 %v943, %v492
    %v976 = vadd.f32 %v944, %v496
    %v977 = vadd.f32 %v945, %v492
    %v978 = vadd.f32 %v946, %v496
    %v979 = vtanh.pop %v947
    %v980 = vtanh.pop %v948
    %v981 = vtanh.pop %v949
    %v982 = vtanh.pop %v950
    %v983 = vtanh.pop %v951
    %v984 = vtanh.pop %v952
    %v985 = vtanh.pop %v953
    %v986 = vtanh.pop %v954
    %v987 = vtanh.pop %v955
    %v988 = vtanh.pop %v956
    %v989 = vtanh.pop %v957
    %v990 = vtanh.pop %v958
    %v991 = vtanh.pop %v959
    %v992 = vtanh.pop %v960
    %v993 = vtanh.pop %v961
    %v994 = vtanh.pop %v962
    %v995 = vtanh.pop %v963
    %v996 = vtanh.pop %v964
    %v997 = vtanh.pop %v965
    %v998 = vtanh.pop %v966
    %v999 = vtanh.pop %v967
    %v1000 = vtanh.pop %v968
    %v1001 = vtanh.pop %v969
    %v1002 = vtanh.pop %v970
    %v1003 = vtanh.pop %v971
    %v1004 = vtanh.pop %v972
    %v1005 = vtanh.pop %v973
    %v1006 = vtanh.pop %v974
    %v1007 = vtanh.pop %v975
    %v1008 = vtanh.pop %v976
    %v1009 = vtanh.pop %v977
    %v1010 = vtanh.pop %v978
    %v1011 = vld [vmem:[#allocation4] sm:$0xff]
    %v1012 = vld [vmem:[#allocation4 + $0x8] sm:$0xff]
    %v1013 = vld [vmem:[#allocation4 + $0x10] sm:$0xff]
    %v1014 = vld [vmem:[#allocation4 + $0x18] sm:$0xff]
    %v1015 = vld [vmem:[#allocation4 + $0x20] sm:$0xff]
    %v1016 = vld [vmem:[#allocation4 + $0x28] sm:$0xff]
    %v1017 = vld [vmem:[#allocation4 + $0x30] sm:$0xff]
    %v1018 = vld [vmem:[#allocation4 + $0x38] sm:$0xff]
    %v1019 = vld [vmem:[#allocation4 + $0x40] sm:$0xff]
    %v1020 = vld [vmem:[#allocation4 + $0x48] sm:$0xff]
    %v1021 = vld [vmem:[#allocation4 + $0x50] sm:$0xff]
    %v1022 = vld [vmem:[#allocation4 + $0x58] sm:$0xff]
    %v1023 = vld [vmem:[#allocation4 + $0x60] sm:$0xff]
    %v1024 = vld [vmem:[#allocation4 + $0x68] sm:$0xff]
    %v1025 = vld [vmem:[#allocation4 + $0x70] sm:$0xff]
    %v1026 = vld [vmem:[#allocation4 + $0x78] sm:$0xff]
    %v1027 = vld [vmem:[#allocation4 + $0x80] sm:$0xff]
    %v1028 = vld [vmem:[#allocation4 + $0x88] sm:$0xff]
    %v1029 = vld [vmem:[#allocation4 + $0x90] sm:$0xff]
    %v1030 = vld [vmem:[#allocation4 + $0x98] sm:$0xff]
    %v1031 = vld [vmem:[#allocation4 + $0xa0] sm:$0xff]
    %v1032 = vld [vmem:[#allocation4 + $0xa8] sm:$0xff]
    %v1033 = vld [vmem:[#allocation4 + $0xb0] sm:$0xff]
    %v1034 = vld [vmem:[#allocation4 + $0xb8] sm:$0xff]
    %v1035 = vld [vmem:[#allocation4 + $0xc0] sm:$0xff]
    %v1036 = vld [vmem:[#allocation4 + $0xc8] sm:$0xff]
    %v1037 = vld [vmem:[#allocation4 + $0xd0] sm:$0xff]
    %v1038 = vld [vmem:[#allocation4 + $0xd8] sm:$0xff]
    %v1039 = vld [vmem:[#allocation4 + $0xe0] sm:$0xff]
    %v1040 = vld [vmem:[#allocation4 + $0xe8] sm:$0xff]
    %v1041 = vld [vmem:[#allocation4 + $0xf0] sm:$0xff]
    %v1042 = vld [vmem:[#allocation4 + $0xf8] sm:$0xff]
    %v1043 = vld [vmem:[#allocation4 + $0x100] sm:$0xff]
    %v1044 = vld [vmem:[#allocation4 + $0x108] sm:$0xff]
    %v1045 = vld [vmem:[#allocation4 + $0x110] sm:$0xff]
    %v1046 = vld [vmem:[#allocation4 + $0x118] sm:$0xff]
    %v1047 = vld [vmem:[#allocation4 + $0x120] sm:$0xff]
    %v1048 = vld [vmem:[#allocation4 + $0x128] sm:$0xff]
    %v1049 = vld [vmem:[#allocation4 + $0x130] sm:$0xff]
    %v1050 = vld [vmem:[#allocation4 + $0x138] sm:$0xff]
    %v1051 = vld [vmem:[#allocation4 + $0x140] sm:$0xff]
    %v1052 = vld [vmem:[#allocation4 + $0x148] sm:$0xff]
    %v1053 = vld [vmem:[#allocation4 + $0x150] sm:$0xff]
    %v1054 = vld [vmem:[#allocation4 + $0x158] sm:$0xff]
    %v1055 = vld [vmem:[#allocation4 + $0x160] sm:$0xff]
    %v1056 = vld [vmem:[#allocation4 + $0x168] sm:$0xff]
    %v1057 = vld [vmem:[#allocation4 + $0x170] sm:$0xff]
    %v1058 = vld [vmem:[#allocation4 + $0x178] sm:$0xff]
    %v1059 = vld [vmem:[#allocation4 + $0x180] sm:$0xff]
    %v1060 = vld [vmem:[#allocation4 + $0x188] sm:$0xff]
    %v1061 = vld [vmem:[#allocation4 + $0x190] sm:$0xff]
    %v1062 = vld [vmem:[#allocation4 + $0x198] sm:$0xff]
    %v1063 = vld [vmem:[#allocation4 + $0x1a0] sm:$0xff]
    %v1064 = vld [vmem:[#allocation4 + $0x1a8] sm:$0xff]
    %v1065 = vld [vmem:[#allocation4 + $0x1b0] sm:$0xff]
    %v1066 = vld [vmem:[#allocation4 + $0x1b8] sm:$0xff]
    %v1067 = vld [vmem:[#allocation4 + $0x1c0] sm:$0xff]
    %v1068 = vld [vmem:[#allocation4 + $0x1c8] sm:$0xff]
    %v1069 = vld [vmem:[#allocation4 + $0x1d0] sm:$0xff]
    %v1070 = vld [vmem:[#allocation4 + $0x1d8] sm:$0xff]
    %v1071 = vld [vmem:[#allocation4 + $0x1e0] sm:$0xff]
    %v1072 = vld [vmem:[#allocation4 + $0x1e8] sm:$0xff]
    %v1073 = vld [vmem:[#allocation4 + $0x1f0] sm:$0xff]
    %v1074 = vld [vmem:[#allocation4 + $0x1f8] sm:$0xff]
    %v1075 = vld [vmem:[#allocation6] sm:$0x3]
    %v1077 = vlaneseq
    %v1078 = vshrl.u32 %v1077, 7
    %v1079 = vsub.s32 0, %v1078
    %v1080 = vrot.slane %v1075, %v1079
    %v1081 = vlaneseq
    %v1082 = vshrl.u32 %v1081, 7
    %v1083 = vsub.s32 1, %v1082
    %v1084 = vrot.slane %v1075, %v1083
    %1087 = vmatprep.subr.mxu0 %v1012
    %1088 = vmatpush1.msra.mxu0 %v1011
    %1089 = vmatprep.subr.mxu0 %v1014
    %1090 = vmatpush1.msra.mxu0 %v1013
    %1091 = vmatprep.subr.mxu0 %v1016
    %1092 = vmatpush1.msra.mxu0 %v1015
    %1093 = vmatprep.subr.mxu0 %v1018
    %1094 = vmatpush1.msra.mxu0 %v1017
    %1095 = vmatprep.subr.mxu0 %v1020
    %1096 = vmatpush1.msra.mxu0 %v1019
    %1097 = vmatprep.subr.mxu0 %v1022
    %1098 = vmatpush1.msra.mxu0 %v1021
    %1099 = vmatprep.subr.mxu0 %v1024
    %1100 = vmatpush1.msra.mxu0 %v1023
    %1101 = vmatprep.subr.mxu0 %v1026
    %1102 = vmatpush1.msra.mxu0 %v1025
    %1103 = vmatprep.subr.mxu0 %v1028
    %1104 = vmatpush1.msra.mxu0 %v1027
    %1105 = vmatprep.subr.mxu0 %v1030
    %1106 = vmatpush1.msra.mxu0 %v1029
    %1107 = vmatprep.subr.mxu0 %v1032
    %1108 = vmatpush1.msra.mxu0 %v1031
    %1109 = vmatprep.subr.mxu0 %v1034
    %1110 = vmatpush1.msra.mxu0 %v1033
    %1111 = vmatprep.subr.mxu0 %v1036
    %1112 = vmatpush1.msra.mxu0 %v1035
    %1113 = vmatprep.subr.mxu0 %v1038
    %1114 = vmatpush1.msra.mxu0 %v1037
    %1115 = vmatprep.subr.mxu0 %v1040
    %1116 = vmatpush1.msra.mxu0 %v1039
    %1117 = vmatprep.subr.mxu0 %v1042
    %1118 = vmatpush1.msra.mxu0 %v1041
    %1119 = vmatprep.subr.mxu0 %v1044
    %1120 = vmatpush1.msra.mxu0 %v1043
    %1121 = vmatprep.subr.mxu0 %v1046
    %1122 = vmatpush1.msra.mxu0 %v1045
    %1123 = vmatprep.subr.mxu0 %v1048
    %1124 = vmatpush1.msra.mxu0 %v1047
    %1125 = vmatprep.subr.mxu0 %v1050
    %1126 = vmatpush1.msra.mxu0 %v1049
    %1127 = vmatprep.subr.mxu0 %v1052
    %1128 = vmatpush1.msra.mxu0 %v1051
    %1129 = vmatprep.subr.mxu0 %v1054
    %1130 = vmatpush1.msra.mxu0 %v1053
    %1131 = vmatprep.subr.mxu0 %v1056
    %1132 = vmatpush1.msra.mxu0 %v1055
    %1133 = vmatprep.subr.mxu0 %v1058
    %1134 = vmatpush1.msra.mxu0 %v1057
    %1135 = vmatprep.subr.mxu0 %v1060
    %1136 = vmatpush1.msra.mxu0 %v1059
    %1137 = vmatprep.subr.mxu0 %v1062
    %1138 = vmatpush1.msra.mxu0 %v1061
    %1139 = vmatprep.subr.mxu0 %v1064
    %1140 = vmatpush1.msra.mxu0 %v1063
    %1141 = vmatprep.subr.mxu0 %v1066
    %1142 = vmatpush1.msra.mxu0 %v1065
    %1143 = vmatprep.subr.mxu0 %v1068
    %1144 = vmatpush1.msra.mxu0 %v1067
    %1145 = vmatprep.subr.mxu0 %v1070
    %1146 = vmatpush1.msra.mxu0 %v1069
    %1147 = vmatprep.subr.mxu0 %v1072
    %1148 = vmatpush1.msra.mxu0 %v1071
    %1149 = vmatprep.subr.mxu0 %v1074
    %1150 = vmatpush1.msra.mxu0 %v1073
    %1151 = vmatprep.mubr.f32.mxu0 %v532
    %1152 = vmatmul.mubr.f32.gmra.mrb[0].mxu0 %v531
    %v1153 = vpop.f32.mrb[0].mxu0
    %v1154 = vadd.f32 %v1080, %v1153
    %v1155 = vpop.f32.mrb[0].mxu0
    %v1156 = vadd.f32 %v1084, %v1155
    %1157 = vmatprep.mubr.f32.mxu0 %v534
    %1158 = vmatmul.mubr.f32.gmra.mrb[0].mxu0 %v533
    %v1159 = vpop.f32.mrb[0].mxu0
    %v1160 = vadd.f32 %v1080, %v1159
    %v1161 = vpop.f32.mrb[0].mxu0
    %v1162 = vadd.f32 %v1084, %v1161
    %1163 = vmatprep.mubr.f32.mxu0 %v536
    %1164 = vmatmul.mubr.f32.gmra.mrb[0].mxu0 %v535
    %v1165 = vpop.f32.mrb[0].mxu0
    %v1166 = vadd.f32 %v1080, %v1165
    %v1167 = vpop.f32.mrb[0].mxu0
    %v1168 = vadd.f32 %v1084, %v1167
    %1169 = vmatprep.mubr.f32.mxu0 %v538
    %1170 = vmatmul.mubr.f32.gmra.mrb[0].mxu0 %v537
    %v1171 = vpop.f32.mrb[0].mxu0
    %v1172 = vadd.f32 %v1080, %v1171
    %v1173 = vpop.f32.mrb[0].mxu0
    %v1174 = vadd.f32 %v1084, %v1173
    %1175 = vmatprep.mubr.f32.mxu0 %v540
    %1176 = vmatmul.mubr.f32.gmra.mrb[0].mxu0 %v539
    %v1177 = vpop.f32.mrb[0].mxu0
    %v1178 = vadd.f32 %v1080, %v1177
    %v1179 = vpop.f32.mrb[0].mxu0
    %v1180 = vadd.f32 %v1084, %v1179
    %1181 = vmatprep.mubr.f32.mxu0 %v542
    %1182 = vmatmul.mubr.f32.gmra.mrb[0].mxu0 %v541
    %v1183 = vpop.f32.mrb[0].mxu0
    %v1184 = vadd.f32 %v1080, %v1183
    %v1185 = vpop.f32.mrb[0].mxu0
    %v1186 = vadd.f32 %v1084, %v1185
    %1187 = vmatprep.mubr.f32.mxu0 %v544
    %1188 = vmatmul.mubr.f32.gmra.mrb[0].mxu0 %v543
    %v1189 = vpop.f32.mrb[0].mxu0
    %v1190 = vadd.f32 %v1080, %v1189
    %v1191 = vpop.f32.mrb[0].mxu0
    %v1192 = vadd.f32 %v1084, %v1191
    %1193 = vmatprep.mubr.f32.mxu0 %v546
    %1194 = vmatmul.mubr.f32.gmra.mrb[0].mxu0 %v545
    %v1195 = vpop.f32.mrb[0].mxu0
    %v1196 = vadd.f32 %v1080, %v1195
    %v1197 = vpop.f32.mrb[0].mxu0
    %v1198 = vadd.f32 %v1084, %v1197
    %1199 = vmatprep.mubr.f32.mxu0 %v548
    %1200 = vmatmul.mubr.f32.gmra.mrb[0].mxu0 %v547
    %v1201 = vpop.f32.mrb[0].mxu0
    %v1202 = vadd.f32 %v1080, %v1201
    %v1203 = vpop.f32.mrb[0].mxu0
    %v1204 = vadd.f32 %v1084, %v1203
    %1205 = vmatprep.mubr.f32.mxu0 %v550
    %1206 = vmatmul.mubr.f32.gmra.mrb[0].mxu0 %v549
    %v1207 = vpop.f32.mrb[0].mxu0
    %v1208 = vadd.f32 %v1080, %v1207
    %v1209 = vpop.f32.mrb[0].mxu0
    %v1210 = vadd.f32 %v1084, %v1209
    %1211 = vmatprep.mubr.f32.mxu0 %v552
    %1212 = vmatmul.mubr.f32.gmra.mrb[0].mxu0 %v551
    %v1213 = vpop.f32.mrb[0].mxu0
    %v1214 = vadd.f32 %v1080, %v1213
    %v1215 = vpop.f32.mrb[0].mxu0
    %v1216 = vadd.f32 %v1084, %v1215
    %1217 = vmatprep.mubr.f32.mxu0 %v554
    %1218 = vmatmul.mubr.f32.gmra.mrb[0].mxu0 %v553
    %v1219 = vpop.f32.mrb[0].mxu0
    %v1220 = vadd.f32 %v1080, %v1219
    %v1221 = vpop.f32.mrb[0].mxu0
    %v1222 = vadd.f32 %v1084, %v1221
    %1223 = vmatprep.mubr.f32.mxu0 %v556
    %1224 = vmatmul.mubr.f32.gmra.mrb[0].mxu0 %v555
    %v1225 = vpop.f32.mrb[0].mxu0
    %v1226 = vadd.f32 %v1080, %v1225
    %v1227 = vpop.f32.mrb[0].mxu0
    %v1228 = vadd.f32 %v1084, %v1227
    %1229 = vmatprep.mubr.f32.mxu0 %v558
    %1230 = vmatmul.mubr.f32.gmra.mrb[0].mxu0 %v557
    %v1231 = vpop.f32.mrb[0].mxu0
    %v1232 = vadd.f32 %v1080, %v1231
    %v1233 = vpop.f32.mrb[0].mxu0
    %v1234 = vadd.f32 %v1084, %v1233
    %1235 = vmatprep.mubr.f32.mxu0 %v560
    %1236 = vmatmul.mubr.f32.gmra.mrb[0].mxu0 %v559
    %v1237 = vpop.f32.mrb[0].mxu0
    %v1238 = vadd.f32 %v1080, %v1237
    %v1239 = vpop.f32.mrb[0].mxu0
    %v1240 = vadd.f32 %v1084, %v1239
    %1241 = vmatprep.mubr.f32.mxu0 %v562
    %1242 = vmatmul.mubr.f32.gmra.mrb[0].mxu0 %v561
    %v1243 = vpop.f32.mrb[0].mxu0
    %v1244 = vadd.f32 %v1080, %v1243
    %v1245 = vpop.f32.mrb[0].mxu0
    %v1246 = vadd.f32 %v1084, %v1245
    %1247 = vdwg.mxu0
    %v1248 = vtanh.pop %v1154
    %v1249 = vtanh.pop %v1156
    %v1250 = vtanh.pop %v1160
    %v1251 = vtanh.pop %v1162
    %v1252 = vtanh.pop %v1166
    %v1253 = vtanh.pop %v1168
    %v1254 = vtanh.pop %v1172
    %v1255 = vtanh.pop %v1174
    %v1256 = vtanh.pop %v1178
    %v1257 = vtanh.pop %v1180
    %v1258 = vtanh.pop %v1184
    %v1259 = vtanh.pop %v1186
    %v1260 = vtanh.pop %v1190
    %v1261 = vtanh.pop %v1192
    %v1262 = vtanh.pop %v1196
    %v1263 = vtanh.pop %v1198
    %v1264 = vtanh.pop %v1202
    %v1265 = vtanh.pop %v1204
    %v1266 = vtanh.pop %v1208
    %v1267 = vtanh.pop %v1210
    %v1268 = vtanh.pop %v1214
    %v1269 = vtanh.pop %v1216
    %v1270 = vtanh.pop %v1220
    %v1271 = vtanh.pop %v1222
    %v1272 = vtanh.pop %v1226
    %v1273 = vtanh.pop %v1228
    %v1274 = vtanh.pop %v1232
    %v1275 = vtanh.pop %v1234
    %v1276 = vtanh.pop %v1238
    %v1277 = vtanh.pop %v1240
    %v1278 = vtanh.pop %v1244
    %v1279 = vtanh.pop %v1246
    %1280 = vmatprep.subr.mxu0 %v1012
    %1281 = vmatpush1.msra.mxu0 %v1011
    %1282 = vmatprep.subr.mxu0 %v1014
    %1283 = vmatpush1.msra.mxu0 %v1013
    %1284 = vmatprep.subr.mxu0 %v1016
    %1285 = vmatpush1.msra.mxu0 %v1015
    %1286 = vmatprep.subr.mxu0 %v1018
    %1287 = vmatpush1.msra.mxu0 %v1017
    %1288 = vmatprep.subr.mxu0 %v1020
    %1289 = vmatpush1.msra.mxu0 %v1019
    %1290 = vmatprep.subr.mxu0 %v1022
    %1291 = vmatpush1.msra.mxu0 %v1021
    %1292 = vmatprep.subr.mxu0 %v1024
    %1293 = vmatpush1.msra.mxu0 %v1023
    %1294 = vmatprep.subr.mxu0 %v1026
    %1295 = vmatpush1.msra.mxu0 %v1025
    %1296 = vmatprep.subr.mxu0 %v1028
    %1297 = vmatpush1.msra.mxu0 %v1027
    %1298 = vmatprep.subr.mxu0 %v1030
    %1299 = vmatpush1.msra.mxu0 %v1029
    %1300 = vmatprep.subr.mxu0 %v1032
    %1301 = vmatpush1.msra.mxu0 %v1031
    %1302 = vmatprep.subr.mxu0 %v1034
    %1303 = vmatpush1.msra.mxu0 %v1033
    %1304 = vmatprep.subr.mxu0 %v1036
    %1305 = vmatpush1.msra.mxu0 %v1035
    %1306 = vmatprep.subr.mxu0 %v1038
    %1307 = vmatpush1.msra.mxu0 %v1037
    %1308 = vmatprep.subr.mxu0 %v1040
    %1309 = vmatpush1.msra.mxu0 %v1039
    %1310 = vmatprep.subr.mxu0 %v1042
    %1311 = vmatpush1.msra.mxu0 %v1041
    %1312 = vmatprep.subr.mxu0 %v1044
    %1313 = vmatpush1.msra.mxu0 %v1043
    %1314 = vmatprep.subr.mxu0 %v1046
    %1315 = vmatpush1.msra.mxu0 %v1045
    %1316 = vmatprep.subr.mxu0 %v1048
    %1317 = vmatpush1.msra.mxu0 %v1047
    %1318 = vmatprep.subr.mxu0 %v1050
    %1319 = vmatpush1.msra.mxu0 %v1049
    %1320 = vmatprep.subr.mxu0 %v1052
    %1321 = vmatpush1.msra.mxu0 %v1051
    %1322 = vmatprep.subr.mxu0 %v1054
    %1323 = vmatpush1.msra.mxu0 %v1053
    %1324 = vmatprep.subr.mxu0 %v1056
    %1325 = vmatpush1.msra.mxu0 %v1055
    %1326 = vmatprep.subr.mxu0 %v1058
    %1327 = vmatpush1.msra.mxu0 %v1057
    %1328 = vmatprep.subr.mxu0 %v1060
    %1329 = vmatpush1.msra.mxu0 %v1059
    %1330 = vmatprep.subr.mxu0 %v1062
    %1331 = vmatpush1.msra.mxu0 %v1061
    %1332 = vmatprep.subr.mxu0 %v1064
    %1333 = vmatpush1.msra.mxu0 %v1063
    %1334 = vmatprep.subr.mxu0 %v1066
    %1335 = vmatpush1.msra.mxu0 %v1065
    %1336 = vmatprep.subr.mxu0 %v1068
    %1337 = vmatpush1.msra.mxu0 %v1067
    %1338 = vmatprep.subr.mxu0 %v1070
    %1339 = vmatpush1.msra.mxu0 %v1069
    %1340 = vmatprep.subr.mxu0 %v1072
    %1341 = vmatpush1.msra.mxu0 %v1071
    %1342 = vmatprep.subr.mxu0 %v1074
    %1343 = vmatpush1.msra.mxu0 %v1073
    %1344 = vmatprep.mubr.f32.mxu0 %v980
    %1345 = vmatmul.mubr.f32.gmra.mrb[0].mxu0 %v979
    %v1346 = vpop.f32.mrb[0].mxu0
    %v1347 = vadd.f32 %v1080, %v1346
    %v1348 = vpop.f32.mrb[0].mxu0
    %v1349 = vadd.f32 %v1084, %v1348
    %1350 = vmatprep.mubr.f32.mxu0 %v982
    %1351 = vmatmul.mubr.f32.gmra.mrb[0].mxu0 %v981
    %v1352 = vpop.f32.mrb[0].mxu0
    %v1353 = vadd.f32 %v1080, %v1352
    %v1354 = vpop.f32.mrb[0].mxu0
    %v1355 = vadd.f32 %v1084, %v1354
    %1356 = vmatprep.mubr.f32.mxu0 %v984
    %1357 = vmatmul.mubr.f32.gmra.mrb[0].mxu0 %v983
    %v1358 = vpop.f32.mrb[0].mxu0
    %v1359 = vadd.f32 %v1080, %v1358
    %v1360 = vpop.f32.mrb[0].mxu0
    %v1361 = vadd.f32 %v1084, %v1360
    %1362 = vmatprep.mubr.f32.mxu0 %v986
    %1363 = vmatmul.mubr.f32.gmra.mrb[0].mxu0 %v985
    %v1364 = vpop.f32.mrb[0].mxu0
    %v1365 = vadd.f32 %v1080, %v1364
    %v1366 = vpop.f32.mrb[0].mxu0
    %v1367 = vadd.f32 %v1084, %v1366
    %1368 = vmatprep.mubr.f32.mxu0 %v988
    %1369 = vmatmul.mubr.f32.gmra.mrb[0].mxu0 %v987
    %v1370 = vpop.f32.mrb[0].mxu0
    %v1371 = vadd.f32 %v1080, %v1370
    %v1372 = vpop.f32.mrb[0].mxu0
    %v1373 = vadd.f32 %v1084, %v1372
    %1374 = vmatprep.mubr.f32.mxu0 %v990
    %1375 = vmatmul.mubr.f32.gmra.mrb[0].mxu0 %v989
    %v1376 = vpop.f32.mrb[0].mxu0
    %v1377 = vadd.f32 %v1080, %v1376
    %v1378 = vpop.f32.mrb[0].mxu0
    %v1379 = vadd.f32 %v1084, %v1378
    %1380 = vmatprep.mubr.f32.mxu0 %v992
    %1381 = vmatmul.mubr.f32.gmra.mrb[0].mxu0 %v991
    %v1382 = vpop.f32.mrb[0].mxu0
    %v1383 = vadd.f32 %v1080, %v1382
    %v1384 = vpop.f32.mrb[0].mxu0
    %v1385 = vadd.f32 %v1084, %v1384
    %1386 = vmatprep.mubr.f32.mxu0 %v994
    %1387 = vmatmul.mubr.f32.gmra.mrb[0].mxu0 %v993
    %v1388 = vpop.f32.mrb[0].mxu0
    %v1389 = vadd.f32 %v1080, %v1388
    %v1390 = vpop.f32.mrb[0].mxu0
    %v1391 = vadd.f32 %v1084, %v1390
    %1392 = vmatprep.mubr.f32.mxu0 %v996
    %1393 = vmatmul.mubr.f32.gmra.mrb[0].mxu0 %v995
    %v1394 = vpop.f32.mrb[0].mxu0
    %v1395 = vadd.f32 %v1080, %v1394
    %v1396 = vpop.f32.mrb[0].mxu0
    %v1397 = vadd.f32 %v1084, %v1396
    %1398 = vmatprep.mubr.f32.mxu0 %v998
    %1399 = vmatmul.mubr.f32.gmra.mrb[0].mxu0 %v997
    %v1400 = vpop.f32.mrb[0].mxu0
    %v1401 = vadd.f32 %v1080, %v1400
    %v1402 = vpop.f32.mrb[0].mxu0
    %v1403 = vadd.f32 %v1084, %v1402
    %1404 = vmatprep.mubr.f32.mxu0 %v1000
    %1405 = vmatmul.mubr.f32.gmra.mrb[0].mxu0 %v999
    %v1406 = vpop.f32.mrb[0].mxu0
    %v1407 = vadd.f32 %v1080, %v1406
    %v1408 = vpop.f32.mrb[0].mxu0
    %v1409 = vadd.f32 %v1084, %v1408
    %1410 = vmatprep.mubr.f32.mxu0 %v1002
    %1411 = vmatmul.mubr.f32.gmra.mrb[0].mxu0 %v1001
    %v1412 = vpop.f32.mrb[0].mxu0
    %v1413 = vadd.f32 %v1080, %v1412
    %v1414 = vpop.f32.mrb[0].mxu0
    %v1415 = vadd.f32 %v1084, %v1414
    %1416 = vmatprep.mubr.f32.mxu0 %v1004
    %1417 = vmatmul.mubr.f32.gmra.mrb[0].mxu0 %v1003
    %v1418 = vpop.f32.mrb[0].mxu0
    %v1419 = vadd.f32 %v1080, %v1418
    %v1420 = vpop.f32.mrb[0].mxu0
    %v1421 = vadd.f32 %v1084, %v1420
    %1422 = vmatprep.mubr.f32.mxu0 %v1006
    %1423 = vmatmul.mubr.f32.gmra.mrb[0].mxu0 %v1005
    %v1424 = vpop.f32.mrb[0].mxu0
    %v1425 = vadd.f32 %v1080, %v1424
    %v1426 = vpop.f32.mrb[0].mxu0
    %v1427 = vadd.f32 %v1084, %v1426
    %1428 = vmatprep.mubr.f32.mxu0 %v1008
    %1429 = vmatmul.mubr.f32.gmra.mrb[0].mxu0 %v1007
    %v1430 = vpop.f32.mrb[0].mxu0
    %v1431 = vadd.f32 %v1080, %v1430
    %v1432 = vpop.f32.mrb[0].mxu0
    %v1433 = vadd.f32 %v1084, %v1432
    %1434 = vmatprep.mubr.f32.mxu0 %v1010
    %1435 = vmatmul.mubr.f32.gmra.mrb[0].mxu0 %v1009
    %v1436 = vpop.f32.mrb[0].mxu0
    %v1437 = vadd.f32 %v1080, %v1436
    %v1438 = vpop.f32.mrb[0].mxu0
    %v1439 = vadd.f32 %v1084, %v1438
    %1440 = vdwg.mxu0
    %v1441 = vtanh.pop %v1347
    %v1442 = vtanh.pop %v1349
    %v1443 = vtanh.pop %v1353
    %v1444 = vtanh.pop %v1355
    %v1445 = vtanh.pop %v1359
    %v1446 = vtanh.pop %v1361
    %v1447 = vtanh.pop %v1365
    %v1448 = vtanh.pop %v1367
    %v1449 = vtanh.pop %v1371
    %v1450 = vtanh.pop %v1373
    %v1451 = vtanh.pop %v1377
    %v1452 = vtanh.pop %v1379
    %v1453 = vtanh.pop %v1383
    %v1454 = vtanh.pop %v1385
    %v1455 = vtanh.pop %v1389
    %v1456 = vtanh.pop %v1391
    %v1457 = vtanh.pop %v1395
    %v1458 = vtanh.pop %v1397
    %v1459 = vtanh.pop %v1401
    %v1460 = vtanh.pop %v1403
    %v1461 = vtanh.pop %v1407
    %v1462 = vtanh.pop %v1409
    %v1463 = vtanh.pop %v1413
    %v1464 = vtanh.pop %v1415
    %v1465 = vtanh.pop %v1419
    %v1466 = vtanh.pop %v1421
    %v1467 = vtanh.pop %v1425
    %v1468 = vtanh.pop %v1427
    %v1469 = vtanh.pop %v1431
    %v1470 = vtanh.pop %v1433
    %v1471 = vtanh.pop %v1437
    %v1472 = vtanh.pop %v1439
    %s1473 = scalar_lea.vmem [#allocation4], 512
    %v1474 = vld [vmem:[%s1473] sm:$0xff]
    %v1475 = vld [vmem:[%s1473 + $0x8] sm:$0xff]
    %v1476 = vld [vmem:[%s1473 + $0x10] sm:$0xff]
    %v1477 = vld [vmem:[%s1473 + $0x18] sm:$0xff]
    %v1478 = vld [vmem:[%s1473 + $0x20] sm:$0xff]
    %v1479 = vld [vmem:[%s1473 + $0x28] sm:$0xff]
    %v1480 = vld [vmem:[%s1473 + $0x30] sm:$0xff]
    %v1481 = vld [vmem:[%s1473 + $0x38] sm:$0xff]
    %v1482 = vld [vmem:[%s1473 + $0x40] sm:$0xff]
    %v1483 = vld [vmem:[%s1473 + $0x48] sm:$0xff]
    %v1484 = vld [vmem:[%s1473 + $0x50] sm:$0xff]
    %v1485 = vld [vmem:[%s1473 + $0x58] sm:$0xff]
    %v1486 = vld [vmem:[%s1473 + $0x60] sm:$0xff]
    %v1487 = vld [vmem:[%s1473 + $0x68] sm:$0xff]
    %v1488 = vld [vmem:[%s1473 + $0x70] sm:$0xff]
    %v1489 = vld [vmem:[%s1473 + $0x78] sm:$0xff]
    %v1490 = vld [vmem:[%s1473 + $0x80] sm:$0xff]
    %v1491 = vld [vmem:[%s1473 + $0x88] sm:$0xff]
    %v1492 = vld [vmem:[%s1473 + $0x90] sm:$0xff]
    %v1493 = vld [vmem:[%s1473 + $0x98] sm:$0xff]
    %v1494 = vld [vmem:[%s1473 + $0xa0] sm:$0xff]
    %v1495 = vld [vmem:[%s1473 + $0xa8] sm:$0xff]
    %v1496 = vld [vmem:[%s1473 + $0xb0] sm:$0xff]
    %v1497 = vld [vmem:[%s1473 + $0xb8] sm:$0xff]
    %v1498 = vld [vmem:[%s1473 + $0xc0] sm:$0xff]
    %v1499 = vld [vmem:[%s1473 + $0xc8] sm:$0xff]
    %v1500 = vld [vmem:[%s1473 + $0xd0] sm:$0xff]
    %v1501 = vld [vmem:[%s1473 + $0xd8] sm:$0xff]
    %v1502 = vld [vmem:[%s1473 + $0xe0] sm:$0xff]
    %v1503 = vld [vmem:[%s1473 + $0xe8] sm:$0xff]
    %v1504 = vld [vmem:[%s1473 + $0xf0] sm:$0xff]
    %v1505 = vld [vmem:[%s1473 + $0xf8] sm:$0xff]
    %v1506 = vld [vmem:[%s1473 + $0x100] sm:$0xff]
    %v1507 = vld [vmem:[%s1473 + $0x108] sm:$0xff]
    %v1508 = vld [vmem:[%s1473 + $0x110] sm:$0xff]
    %v1509 = vld [vmem:[%s1473 + $0x118] sm:$0xff]
    %v1510 = vld [vmem:[%s1473 + $0x120] sm:$0xff]
    %v1511 = vld [vmem:[%s1473 + $0x128] sm:$0xff]
    %v1512 = vld [vmem:[%s1473 + $0x130] sm:$0xff]
    %v1513 = vld [vmem:[%s1473 + $0x138] sm:$0xff]
    %v1514 = vld [vmem:[%s1473 + $0x140] sm:$0xff]
    %v1515 = vld [vmem:[%s1473 + $0x148] sm:$0xff]
    %v1516 = vld [vmem:[%s1473 + $0x150] sm:$0xff]
    %v1517 = vld [vmem:[%s1473 + $0x158] sm:$0xff]
    %v1518 = vld [vmem:[%s1473 + $0x160] sm:$0xff]
    %v1519 = vld [vmem:[%s1473 + $0x168] sm:$0xff]
    %v1520 = vld [vmem:[%s1473 + $0x170] sm:$0xff]
    %v1521 = vld [vmem:[%s1473 + $0x178] sm:$0xff]
    %v1522 = vld [vmem:[%s1473 + $0x180] sm:$0xff]
    %v1523 = vld [vmem:[%s1473 + $0x188] sm:$0xff]
    %v1524 = vld [vmem:[%s1473 + $0x190] sm:$0xff]
    %v1525 = vld [vmem:[%s1473 + $0x198] sm:$0xff]
    %v1526 = vld [vmem:[%s1473 + $0x1a0] sm:$0xff]
    %v1527 = vld [vmem:[%s1473 + $0x1a8] sm:$0xff]
    %v1528 = vld [vmem:[%s1473 + $0x1b0] sm:$0xff]
    %v1529 = vld [vmem:[%s1473 + $0x1b8] sm:$0xff]
    %v1530 = vld [vmem:[%s1473 + $0x1c0] sm:$0xff]
    %v1531 = vld [vmem:[%s1473 + $0x1c8] sm:$0xff]
    %v1532 = vld [vmem:[%s1473 + $0x1d0] sm:$0xff]
    %v1533 = vld [vmem:[%s1473 + $0x1d8] sm:$0xff]
    %v1534 = vld [vmem:[%s1473 + $0x1e0] sm:$0xff]
    %v1535 = vld [vmem:[%s1473 + $0x1e8] sm:$0xff]
    %v1536 = vld [vmem:[%s1473 + $0x1f0] sm:$0xff]
    %v1537 = vld [vmem:[%s1473 + $0x1f8] sm:$0xff]
    %s1538 = scalar_lea.vmem [#allocation6], 2
    %v1539 = vld [vmem:[%s1538] sm:$0x3]
    %v1541 = vlaneseq
    %v1542 = vshrl.u32 %v1541, 7
    %v1543 = vsub.s32 0, %v1542
    %v1544 = vrot.slane %v1539, %v1543
    %v1545 = vlaneseq
    %v1546 = vshrl.u32 %v1545, 7
    %v1547 = vsub.s32 1, %v1546
    %v1548 = vrot.slane %v1539, %v1547
    %1551 = vmatprep.subr.mxu0 %v1475
    %1552 = vmatpush1.msra.mxu0 %v1474
    %1553 = vmatprep.subr.mxu0 %v1477
    %1554 = vmatpush1.msra.mxu0 %v1476
    %1555 = vmatprep.subr.mxu0 %v1479
    %1556 = vmatpush1.msra.mxu0 %v1478
    %1557 = vmatprep.subr.mxu0 %v1481
    %1558 = vmatpush1.msra.mxu0 %v1480
    %1559 = vmatprep.subr.mxu0 %v1483
    %1560 = vmatpush1.msra.mxu0 %v1482
    %1561 = vmatprep.subr.mxu0 %v1485
    %1562 = vmatpush1.msra.mxu0 %v1484
    %1563 = vmatprep.subr.mxu0 %v1487
    %1564 = vmatpush1.msra.mxu0 %v1486
    %1565 = vmatprep.subr.mxu0 %v1489
    %1566 = vmatpush1.msra.mxu0 %v1488
    %1567 = vmatprep.subr.mxu0 %v1491
    %1568 = vmatpush1.msra.mxu0 %v1490
    %1569 = vmatprep.subr.mxu0 %v1493
    %1570 = vmatpush1.msra.mxu0 %v1492
    %1571 = vmatprep.subr.mxu0 %v1495
    %1572 = vmatpush1.msra.mxu0 %v1494
    %1573 = vmatprep.subr.mxu0 %v1497
    %1574 = vmatpush1.msra.mxu0 %v1496
    %1575 = vmatprep.subr.mxu0 %v1499
    %1576 = vmatpush1.msra.mxu0 %v1498
    %1577 = vmatprep.subr.mxu0 %v1501
    %1578 = vmatpush1.msra.mxu0 %v1500
    %1579 = vmatprep.subr.mxu0 %v1503
    %1580 = vmatpush1.msra.mxu0 %v1502
    %1581 = vmatprep.subr.mxu0 %v1505
    %1582 = vmatpush1.msra.mxu0 %v1504
    %1583 = vmatprep.subr.mxu0 %v1507
    %1584 = vmatpush1.msra.mxu0 %v1506
    %1585 = vmatprep.subr.mxu0 %v1509
    %1586 = vmatpush1.msra.mxu0 %v1508
    %1587 = vmatprep.subr.mxu0 %v1511
    %1588 = vmatpush1.msra.mxu0 %v1510
    %1589 = vmatprep.subr.mxu0 %v1513
    %1590 = vmatpush1.msra.mxu0 %v1512
    %1591 = vmatprep.subr.mxu0 %v1515
    %1592 = vmatpush1.msra.mxu0 %v1514
    %1593 = vmatprep.subr.mxu0 %v1517
    %1594 = vmatpush1.msra.mxu0 %v1516
    %1595 = vmatprep.subr.mxu0 %v1519
    %1596 = vmatpush1.msra.mxu0 %v1518
    %1597 = vmatprep.subr.mxu0 %v1521
    %1598 = vmatpush1.msra.mxu0 %v1520
    %1599 = vmatprep.subr.mxu0 %v1523
    %1600 = vmatpush1.msra.mxu0 %v1522
    %1601 = vmatprep.subr.mxu0 %v1525
    %1602 = vmatpush1.msra.mxu0 %v1524
    %1603 = vmatprep.subr.mxu0 %v1527
    %1604 = vmatpush1.msra.mxu0 %v1526
    %1605 = vmatprep.subr.mxu0 %v1529
    %1606 = vmatpush1.msra.mxu0 %v1528
    %1607 = vmatprep.subr.mxu0 %v1531
    %1608 = vmatpush1.msra.mxu0 %v1530
    %1609 = vmatprep.subr.mxu0 %v1533
    %1610 = vmatpush1.msra.mxu0 %v1532
    %1611 = vmatprep.subr.mxu0 %v1535
    %1612 = vmatpush1.msra.mxu0 %v1534
    %1613 = vmatprep.subr.mxu0 %v1537
    %1614 = vmatpush1.msra.mxu0 %v1536
    %1615 = vmatprep.mubr.f32.mxu0 %v1249
    %1616 = vmatmul.mubr.f32.gmra.mrb[0].mxu0 %v1248
    %v1617 = vpop.f32.mrb[0].mxu0
    %v1618 = vadd.f32 %v1544, %v1617
    %v1619 = vpop.f32.mrb[0].mxu0
    %v1620 = vadd.f32 %v1548, %v1619
    %1621 = vmatprep.mubr.f32.mxu0 %v1251
    %1622 = vmatmul.mubr.f32.gmra.mrb[0].mxu0 %v1250
    %v1623 = vpop.f32.mrb[0].mxu0
    %v1624 = vadd.f32 %v1544, %v1623
    %v1625 = vpop.f32.mrb[0].mxu0
    %v1626 = vadd.f32 %v1548, %v1625
    %1627 = vmatprep.mubr.f32.mxu0 %v1253
    %1628 = vmatmul.mubr.f32.gmra.mrb[0].mxu0 %v1252
    %v1629 = vpop.f32.mrb[0].mxu0
    %v1630 = vadd.f32 %v1544, %v1629
    %v1631 = vpop.f32.mrb[0].mxu0
    %v1632 = vadd.f32 %v1548, %v1631
    %1633 = vmatprep.mubr.f32.mxu0 %v1255
    %1634 = vmatmul.mubr.f32.gmra.mrb[0].mxu0 %v1254
    %v1635 = vpop.f32.mrb[0].mxu0
    %v1636 = vadd.f32 %v1544, %v1635
    %v1637 = vpop.f32.mrb[0].mxu0
    %v1638 = vadd.f32 %v1548, %v1637
    %1639 = vmatprep.mubr.f32.mxu0 %v1257
    %1640 = vmatmul.mubr.f32.gmra.mrb[0].mxu0 %v1256
    %v1641 = vpop.f32.mrb[0].mxu0
    %v1642 = vadd.f32 %v1544, %v1641
    %v1643 = vpop.f32.mrb[0].mxu0
    %v1644 = vadd.f32 %v1548, %v1643
    %1645 = vmatprep.mubr.f32.mxu0 %v1259
    %1646 = vmatmul.mubr.f32.gmra.mrb[0].mxu0 %v1258
    %v1647 = vpop.f32.mrb[0].mxu0
    %v1648 = vadd.f32 %v1544, %v1647
    %v1649 = vpop.f32.mrb[0].mxu0
    %v1650 = vadd.f32 %v1548, %v1649
    %1651 = vmatprep.mubr.f32.mxu0 %v1261
    %1652 = vmatmul.mubr.f32.gmra.mrb[0].mxu0 %v1260
    %v1653 = vpop.f32.mrb[0].mxu0
    %v1654 = vadd.f32 %v1544, %v1653
    %v1655 = vpop.f32.mrb[0].mxu0
    %v1656 = vadd.f32 %v1548, %v1655
    %1657 = vmatprep.mubr.f32.mxu0 %v1263
    %1658 = vmatmul.mubr.f32.gmra.mrb[0].mxu0 %v1262
    %v1659 = vpop.f32.mrb[0].mxu0
    %v1660 = vadd.f32 %v1544, %v1659
    %v1661 = vpop.f32.mrb[0].mxu0
    %v1662 = vadd.f32 %v1548, %v1661
    %1663 = vmatprep.mubr.f32.mxu0 %v1265
    %1664 = vmatmul.mubr.f32.gmra.mrb[0].mxu0 %v1264
    %v1665 = vpop.f32.mrb[0].mxu0
    %v1666 = vadd.f32 %v1544, %v1665
    %v1667 = vpop.f32.mrb[0].mxu0
    %v1668 = vadd.f32 %v1548, %v1667
    %1669 = vmatprep.mubr.f32.mxu0 %v1267
    %1670 = vmatmul.mubr.f32.gmra.mrb[0].mxu0 %v1266
    %v1671 = vpop.f32.mrb[0].mxu0
    %v1672 = vadd.f32 %v1544, %v1671
    %v1673 = vpop.f32.mrb[0].mxu0
    %v1674 = vadd.f32 %v1548, %v1673
    %1675 = vmatprep.mubr.f32.mxu0 %v1269
    %1676 = vmatmul.mubr.f32.gmra.mrb[0].mxu0 %v1268
    %v1677 = vpop.f32.mrb[0].mxu0
    %v1678 = vadd.f32 %v1544, %v1677
    %v1679 = vpop.f32.mrb[0].mxu0
    %v1680 = vadd.f32 %v1548, %v1679
    %1681 = vmatprep.mubr.f32.mxu0 %v1271
    %1682 = vmatmul.mubr.f32.gmra.mrb[0].mxu0 %v1270
    %v1683 = vpop.f32.mrb[0].mxu0
    %v1684 = vadd.f32 %v1544, %v1683
    %v1685 = vpop.f32.mrb[0].mxu0
    %v1686 = vadd.f32 %v1548, %v1685
    %1687 = vmatprep.mubr.f32.mxu0 %v1273
    %1688 = vmatmul.mubr.f32.gmra.mrb[0].mxu0 %v1272
    %v1689 = vpop.f32.mrb[0].mxu0
    %v1690 = vadd.f32 %v1544, %v1689
    %v1691 = vpop.f32.mrb[0].mxu0
    %v1692 = vadd.f32 %v1548, %v1691
    %1693 = vmatprep.mubr.f32.mxu0 %v1275
    %1694 = vmatmul.mubr.f32.gmra.mrb[0].mxu0 %v1274
    %v1695 = vpop.f32.mrb[0].mxu0
    %v1696 = vadd.f32 %v1544, %v1695
    %v1697 = vpop.f32.mrb[0].mxu0
    %v1698 = vadd.f32 %v1548, %v1697
    %1699 = vmatprep.mubr.f32.mxu0 %v1277
    %1700 = vmatmul.mubr.f32.gmra.mrb[0].mxu0 %v1276
    %v1701 = vpop.f32.mrb[0].mxu0
    %v1702 = vadd.f32 %v1544, %v1701
    %v1703 = vpop.f32.mrb[0].mxu0
    %v1704 = vadd.f32 %v1548, %v1703
    %1705 = vmatprep.mubr.f32.mxu0 %v1279
    %1706 = vmatmul.mubr.f32.gmra.mrb[0].mxu0 %v1278
    %v1707 = vpop.f32.mrb[0].mxu0
    %v1708 = vadd.f32 %v1544, %v1707
    %v1709 = vpop.f32.mrb[0].mxu0
    %v1710 = vadd.f32 %v1548, %v1709
    %1711 = vdwg.mxu0
    %v1712 = vtanh.pop %v1618
    %v1713 = vtanh.pop %v1620
    %v1714 = vtanh.pop %v1624
    %v1715 = vtanh.pop %v1626
    %v1716 = vtanh.pop %v1630
    %v1717 = vtanh.pop %v1632
    %v1718 = vtanh.pop %v1636
    %v1719 = vtanh.pop %v1638
    %v1720 = vtanh.pop %v1642
    %v1721 = vtanh.pop %v1644
    %v1722 = vtanh.pop %v1648
    %v1723 = vtanh.pop %v1650
    %v1724 = vtanh.pop %v1654
    %v1725 = vtanh.pop %v1656
    %v1726 = vtanh.pop %v1660
    %v1727 = vtanh.pop %v1662
    %v1728 = vtanh.pop %v1666
    %v1729 = vtanh.pop %v1668
    %v1730 = vtanh.pop %v1672
    %v1731 = vtanh.pop %v1674
    %v1732 = vtanh.pop %v1678
    %v1733 = vtanh.pop %v1680
    %v1734 = vtanh.pop %v1684
    %v1735 = vtanh.pop %v1686
    %v1736 = vtanh.pop %v1690
    %v1737 = vtanh.pop %v1692
    %v1738 = vtanh.pop %v1696
    %v1739 = vtanh.pop %v1698
    %v1740 = vtanh.pop %v1702
    %v1741 = vtanh.pop %v1704
    %v1742 = vtanh.pop %v1708
    %v1743 = vtanh.pop %v1710
    %1744 = vmatprep.subr.mxu0 %v1475
    %1745 = vmatpush1.msra.mxu0 %v1474
    %1746 = vmatprep.subr.mxu0 %v1477
    %1747 = vmatpush1.msra.mxu0 %v1476
    %1748 = vmatprep.subr.mxu0 %v1479
    %1749 = vmatpush1.msra.mxu0 %v1478
    %1750 = vmatprep.subr.mxu0 %v1481
    %1751 = vmatpush1.msra.mxu0 %v1480
    %1752 = vmatprep.subr.mxu0 %v1483
    %1753 = vmatpush1.msra.mxu0 %v1482
    %1754 = vmatprep.subr.mxu0 %v1485
    %1755 = vmatpush1.msra.mxu0 %v1484
    %1756 = vmatprep.subr.mxu0 %v1487
    %1757 = vmatpush1.msra.mxu0 %v1486
    %1758 = vmatprep.subr.mxu0 %v1489
    %1759 = vmatpush1.msra.mxu0 %v1488
    %1760 = vmatprep.subr.mxu0 %v1491
    %1761 = vmatpush1.msra.mxu0 %v1490
    %1762 = vmatprep.subr.mxu0 %v1493
    %1763 = vmatpush1.msra.mxu0 %v1492
    %1764 = vmatprep.subr.mxu0 %v1495
    %1765 = vmatpush1.msra.mxu0 %v1494
    %1766 = vmatprep.subr.mxu0 %v1497
    %1767 = vmatpush1.msra.mxu0 %v1496
    %1768 = vmatprep.subr.mxu0 %v1499
    %1769 = vmatpush1.msra.mxu0 %v1498
    %1770 = vmatprep.subr.mxu0 %v1501
    %1771 = vmatpush1.msra.mxu0 %v1500
    %1772 = vmatprep.subr.mxu0 %v1503
    %1773 = vmatpush1.msra.mxu0 %v1502
    %1774 = vmatprep.subr.mxu0 %v1505
    %1775 = vmatpush1.msra.mxu0 %v1504
    %1776 = vmatprep.subr.mxu0 %v1507
    %1777 = vmatpush1.msra.mxu0 %v1506
    %1778 = vmatprep.subr.mxu0 %v1509
    %1779 = vmatpush1.msra.mxu0 %v1508
    %1780 = vmatprep.subr.mxu0 %v1511
    %1781 = vmatpush1.msra.mxu0 %v1510
    %1782 = vmatprep.subr.mxu0 %v1513
    %1783 = vmatpush1.msra.mxu0 %v1512
    %1784 = vmatprep.subr.mxu0 %v1515
    %1785 = vmatpush1.msra.mxu0 %v1514
    %1786 = vmatprep.subr.mxu0 %v1517
    %1787 = vmatpush1.msra.mxu0 %v1516
    %1788 = vmatprep.subr.mxu0 %v1519
    %1789 = vmatpush1.msra.mxu0 %v1518
    %1790 = vmatprep.subr.mxu0 %v1521
    %1791 = vmatpush1.msra.mxu0 %v1520
    %1792 = vmatprep.subr.mxu0 %v1523
    %1793 = vmatpush1.msra.mxu0 %v1522
    %1794 = vmatprep.subr.mxu0 %v1525
    %1795 = vmatpush1.msra.mxu0 %v1524
    %1796 = vmatprep.subr.mxu0 %v1527
    %1797 = vmatpush1.msra.mxu0 %v1526
    %1798 = vmatprep.subr.mxu0 %v1529
    %1799 = vmatpush1.msra.mxu0 %v1528
    %1800 = vmatprep.subr.mxu0 %v1531
    %1801 = vmatpush1.msra.mxu0 %v1530
    %1802 = vmatprep.subr.mxu0 %v1533
    %1803 = vmatpush1.msra.mxu0 %v1532
    %1804 = vmatprep.subr.mxu0 %v1535
    %1805 = vmatpush1.msra.mxu0 %v1534
    %1806 = vmatprep.subr.mxu0 %v1537
    %1807 = vmatpush1.msra.mxu0 %v1536
    %1808 = vmatprep.mubr.f32.mxu0 %v1442
    %1809 = vmatmul.mubr.f32.gmra.mrb[0].mxu0 %v1441
    %v1810 = vpop.f32.mrb[0].mxu0
    %v1811 = vadd.f32 %v1544, %v1810
    %v1812 = vpop.f32.mrb[0].mxu0
    %v1813 = vadd.f32 %v1548, %v1812
    %1814 = vmatprep.mubr.f32.mxu0 %v1444
    %1815 = vmatmul.mubr.f32.gmra.mrb[0].mxu0 %v1443
    %v1816 = vpop.f32.mrb[0].mxu0
    %v1817 = vadd.f32 %v1544, %v1816
    %v1818 = vpop.f32.mrb[0].mxu0
    %v1819 = vadd.f32 %v1548, %v1818
    %1820 = vmatprep.mubr.f32.mxu0 %v1446
    %1821 = vmatmul.mubr.f32.gmra.mrb[0].mxu0 %v1445
    %v1822 = vpop.f32.mrb[0].mxu0
    %v1823 = vadd.f32 %v1544, %v1822
    %v1824 = vpop.f32.mrb[0].mxu0
    %v1825 = vadd.f32 %v1548, %v1824
    %1826 = vmatprep.mubr.f32.mxu0 %v1448
    %1827 = vmatmul.mubr.f32.gmra.mrb[0].mxu0 %v1447
    %v1828 = vpop.f32.mrb[0].mxu0
    %v1829 = vadd.f32 %v1544, %v1828
    %v1830 = vpop.f32.mrb[0].mxu0
    %v1831 = vadd.f32 %v1548, %v1830
    %1832 = vmatprep.mubr.f32.mxu0 %v1450
    %1833 = vmatmul.mubr.f32.gmra.mrb[0].mxu0 %v1449
    %v1834 = vpop.f32.mrb[0].mxu0
    %v1835 = vadd.f32 %v1544, %v1834
    %v1836 = vpop.f32.mrb[0].mxu0
    %v1837 = vadd.f32 %v1548, %v1836
    %1838 = vmatprep.mubr.f32.mxu0 %v1452
    %1839 = vmatmul.mubr.f32.gmra.mrb[0].mxu0 %v1451
    %v1840 = vpop.f32.mrb[0].mxu0
    %v1841 = vadd.f32 %v1544, %v1840
    %v1842 = vpop.f32.mrb[0].mxu0
    %v1843 = vadd.f32 %v1548, %v1842
    %1844 = vmatprep.mubr.f32.mxu0 %v1454
    %1845 = vmatmul.mubr.f32.gmra.mrb[0].mxu0 %v1453
    %v1846 = vpop.f32.mrb[0].mxu0
    %v1847 = vadd.f32 %v1544, %v1846
    %v1848 = vpop.f32.mrb[0].mxu0
    %v1849 = vadd.f32 %v1548, %v1848
    %1850 = vmatprep.mubr.f32.mxu0 %v1456
    %1851 = vmatmul.mubr.f32.gmra.mrb[0].mxu0 %v1455
    %v1852 = vpop.f32.mrb[0].mxu0
    %v1853 = vadd.f32 %v1544, %v1852
    %v1854 = vpop.f32.mrb[0].mxu0
    %v1855 = vadd.f32 %v1548, %v1854
    %1856 = vmatprep.mubr.f32.mxu0 %v1458
    %1857 = vmatmul.mubr.f32.gmra.mrb[0].mxu0 %v1457
    %v1858 = vpop.f32.mrb[0].mxu0
    %v1859 = vadd.f32 %v1544, %v1858
    %v1860 = vpop.f32.mrb[0].mxu0
    %v1861 = vadd.f32 %v1548, %v1860
    %1862 = vmatprep.mubr.f32.mxu0 %v1460
    %1863 = vmatmul.mubr.f32.gmra.mrb[0].mxu0 %v1459
    %v1864 = vpop.f32.mrb[0].mxu0
    %v1865 = vadd.f32 %v1544, %v1864
    %v1866 = vpop.f32.mrb[0].mxu0
    %v1867 = vadd.f32 %v1548, %v1866
    %1868 = vmatprep.mubr.f32.mxu0 %v1462
    %1869 = vmatmul.mubr.f32.gmra.mrb[0].mxu0 %v1461
    %v1870 = vpop.f32.mrb[0].mxu0
    %v1871 = vadd.f32 %v1544, %v1870
    %v1872 = vpop.f32.mrb[0].mxu0
    %v1873 = vadd.f32 %v1548, %v1872
    %1874 = vmatprep.mubr.f32.mxu0 %v1464
    %1875 = vmatmul.mubr.f32.gmra.mrb[0].mxu0 %v1463
    %v1876 = vpop.f32.mrb[0].mxu0
    %v1877 = vadd.f32 %v1544, %v1876
    %v1878 = vpop.f32.mrb[0].mxu0
    %v1879 = vadd.f32 %v1548, %v1878
    %1880 = vmatprep.mubr.f32.mxu0 %v1466
    %1881 = vmatmul.mubr.f32.gmra.mrb[0].mxu0 %v1465
    %v1882 = vpop.f32.mrb[0].mxu0
    %v1883 = vadd.f32 %v1544, %v1882
    %v1884 = vpop.f32.mrb[0].mxu0
    %v1885 = vadd.f32 %v1548, %v1884
    %1886 = vmatprep.mubr.f32.mxu0 %v1468
    %1887 = vmatmul.mubr.f32.gmra.mrb[0].mxu0 %v1467
    %v1888 = vpop.f32.mrb[0].mxu0
    %v1889 = vadd.f32 %v1544, %v1888
    %v1890 = vpop.f32.mrb[0].mxu0
    %v1891 = vadd.f32 %v1548, %v1890
    %1892 = vmatprep.mubr.f32.mxu0 %v1470
    %1893 = vmatmul.mubr.f32.gmra.mrb[0].mxu0 %v1469
    %v1894 = vpop.f32.mrb[0].mxu0
    %v1895 = vadd.f32 %v1544, %v1894
    %v1896 = vpop.f32.mrb[0].mxu0
    %v1897 = vadd.f32 %v1548, %v1896
    %1898 = vmatprep.mubr.f32.mxu0 %v1472
    %1899 = vmatmul.mubr.f32.gmra.mrb[0].mxu0 %v1471
    %v1900 = vpop.f32.mrb[0].mxu0
    %v1901 = vadd.f32 %v1544, %v1900
    %v1902 = vpop.f32.mrb[0].mxu0
    %v1903 = vadd.f32 %v1548, %v1902
    %1904 = vdwg.mxu0
    %v1905 = vtanh.pop %v1811
    %v1906 = vtanh.pop %v1813
    %v1907 = vtanh.pop %v1817
    %v1908 = vtanh.pop %v1819
    %v1909 = vtanh.pop %v1823
    %v1910 = vtanh.pop %v1825
    %v1911 = vtanh.pop %v1829
    %v1912 = vtanh.pop %v1831
    %v1913 = vtanh.pop %v1835
    %v1914 = vtanh.pop %v1837
    %v1915 = vtanh.pop %v1841
    %v1916 = vtanh.pop %v1843
    %v1917 = vtanh.pop %v1847
    %v1918 = vtanh.pop %v1849
    %v1919 = vtanh.pop %v1853
    %v1920 = vtanh.pop %v1855
    %v1921 = vtanh.pop %v1859
    %v1922 = vtanh.pop %v1861
    %v1923 = vtanh.pop %v1865
    %v1924 = vtanh.pop %v1867
    %v1925 = vtanh.pop %v1871
    %v1926 = vtanh.pop %v1873
    %v1927 = vtanh.pop %v1877
    %v1928 = vtanh.pop %v1879
    %v1929 = vtanh.pop %v1883
    %v1930 = vtanh.pop %v1885
    %v1931 = vtanh.pop %v1889
    %v1932 = vtanh.pop %v1891
    %v1933 = vtanh.pop %v1895
    %v1934 = vtanh.pop %v1897
    %v1935 = vtanh.pop %v1901
    %v1936 = vtanh.pop %v1903
    %s1937 = scalar_lea.vmem [#allocation4], 1024
    %v1938 = vld [vmem:[%s1937] sm:$0xff]
    %v1939 = vld [vmem:[%s1937 + $0x8] sm:$0xff]
    %v1940 = vld [vmem:[%s1937 + $0x10] sm:$0xff]
    %v1941 = vld [vmem:[%s1937 + $0x18] sm:$0xff]
    %v1942 = vld [vmem:[%s1937 + $0x20] sm:$0xff]
    %v1943 = vld [vmem:[%s1937 + $0x28] sm:$0xff]
    %v1944 = vld [vmem:[%s1937 + $0x30] sm:$0xff]
    %v1945 = vld [vmem:[%s1937 + $0x38] sm:$0xff]
    %v1946 = vld [vmem:[%s1937 + $0x40] sm:$0xff]
    %v1947 = vld [vmem:[%s1937 + $0x48] sm:$0xff]
    %v1948 = vld [vmem:[%s1937 + $0x50] sm:$0xff]
    %v1949 = vld [vmem:[%s1937 + $0x58] sm:$0xff]
    %v1950 = vld [vmem:[%s1937 + $0x60] sm:$0xff]
    %v1951 = vld [vmem:[%s1937 + $0x68] sm:$0xff]
    %v1952 = vld [vmem:[%s1937 + $0x70] sm:$0xff]
    %v1953 = vld [vmem:[%s1937 + $0x78] sm:$0xff]
    %v1954 = vld [vmem:[%s1937 + $0x80] sm:$0xff]
    %v1955 = vld [vmem:[%s1937 + $0x88] sm:$0xff]
    %v1956 = vld [vmem:[%s1937 + $0x90] sm:$0xff]
    %v1957 = vld [vmem:[%s1937 + $0x98] sm:$0xff]
    %v1958 = vld [vmem:[%s1937 + $0xa0] sm:$0xff]
    %v1959 = vld [vmem:[%s1937 + $0xa8] sm:$0xff]
    %v1960 = vld [vmem:[%s1937 + $0xb0] sm:$0xff]
    %v1961 = vld [vmem:[%s1937 + $0xb8] sm:$0xff]
    %v1962 = vld [vmem:[%s1937 + $0xc0] sm:$0xff]
    %v1963 = vld [vmem:[%s1937 + $0xc8] sm:$0xff]
    %v1964 = vld [vmem:[%s1937 + $0xd0] sm:$0xff]
    %v1965 = vld [vmem:[%s1937 + $0xd8] sm:$0xff]
    %v1966 = vld [vmem:[%s1937 + $0xe0] sm:$0xff]
    %v1967 = vld [vmem:[%s1937 + $0xe8] sm:$0xff]
    %v1968 = vld [vmem:[%s1937 + $0xf0] sm:$0xff]
    %v1969 = vld [vmem:[%s1937 + $0xf8] sm:$0xff]
    %v1970 = vld [vmem:[%s1937 + $0x100] sm:$0xff]
    %v1971 = vld [vmem:[%s1937 + $0x108] sm:$0xff]
    %v1972 = vld [vmem:[%s1937 + $0x110] sm:$0xff]
    %v1973 = vld [vmem:[%s1937 + $0x118] sm:$0xff]
    %v1974 = vld [vmem:[%s1937 + $0x120] sm:$0xff]
    %v1975 = vld [vmem:[%s1937 + $0x128] sm:$0xff]
    %v1976 = vld [vmem:[%s1937 + $0x130] sm:$0xff]
    %v1977 = vld [vmem:[%s1937 + $0x138] sm:$0xff]
    %v1978 = vld [vmem:[%s1937 + $0x140] sm:$0xff]
    %v1979 = vld [vmem:[%s1937 + $0x148] sm:$0xff]
    %v1980 = vld [vmem:[%s1937 + $0x150] sm:$0xff]
    %v1981 = vld [vmem:[%s1937 + $0x158] sm:$0xff]
    %v1982 = vld [vmem:[%s1937 + $0x160] sm:$0xff]
    %v1983 = vld [vmem:[%s1937 + $0x168] sm:$0xff]
    %v1984 = vld [vmem:[%s1937 + $0x170] sm:$0xff]
    %v1985 = vld [vmem:[%s1937 + $0x178] sm:$0xff]
    %v1986 = vld [vmem:[%s1937 + $0x180] sm:$0xff]
    %v1987 = vld [vmem:[%s1937 + $0x188] sm:$0xff]
    %v1988 = vld [vmem:[%s1937 + $0x190] sm:$0xff]
    %v1989 = vld [vmem:[%s1937 + $0x198] sm:$0xff]
    %v1990 = vld [vmem:[%s1937 + $0x1a0] sm:$0xff]
    %v1991 = vld [vmem:[%s1937 + $0x1a8] sm:$0xff]
    %v1992 = vld [vmem:[%s1937 + $0x1b0] sm:$0xff]
    %v1993 = vld [vmem:[%s1937 + $0x1b8] sm:$0xff]
    %v1994 = vld [vmem:[%s1937 + $0x1c0] sm:$0xff]
    %v1995 = vld [vmem:[%s1937 + $0x1c8] sm:$0xff]
    %v1996 = vld [vmem:[%s1937 + $0x1d0] sm:$0xff]
    %v1997 = vld [vmem:[%s1937 + $0x1d8] sm:$0xff]
    %v1998 = vld [vmem:[%s1937 + $0x1e0] sm:$0xff]
    %v1999 = vld [vmem:[%s1937 + $0x1e8] sm:$0xff]
    %v2000 = vld [vmem:[%s1937 + $0x1f0] sm:$0xff]
    %v2001 = vld [vmem:[%s1937 + $0x1f8] sm:$0xff]
    %s2002 = scalar_lea.vmem [#allocation6], 4
    %v2003 = vld [vmem:[%s2002] sm:$0x3]
    %v2005 = vlaneseq
    %v2006 = vshrl.u32 %v2005, 7
    %v2007 = vsub.s32 0, %v2006
    %v2008 = vrot.slane %v2003, %v2007
    %v2009 = vlaneseq
    %v2010 = vshrl.u32 %v2009, 7
    %v2011 = vsub.s32 1, %v2010
    %v2012 = vrot.slane %v2003, %v2011
    %2015 = vmatprep.subr.mxu0 %v1939
    %2016 = vmatpush1.msra.mxu0 %v1938
    %2017 = vmatprep.subr.mxu0 %v1941
    %2018 = vmatpush1.msra.mxu0 %v1940
    %2019 = vmatprep.subr.mxu0 %v1943
    %2020 = vmatpush1.msra.mxu0 %v1942
    %2021 = vmatprep.subr.mxu0 %v1945
    %2022 = vmatpush1.msra.mxu0 %v1944
    %2023 = vmatprep.subr.mxu0 %v1947
    %2024 = vmatpush1.msra.mxu0 %v1946
    %2025 = vmatprep.subr.mxu0 %v1949
    %2026 = vmatpush1.msra.mxu0 %v1948
    %2027 = vmatprep.subr.mxu0 %v1951
    %2028 = vmatpush1.msra.mxu0 %v1950
    %2029 = vmatprep.subr.mxu0 %v1953
    %2030 = vmatpush1.msra.mxu0 %v1952
    %2031 = vmatprep.subr.mxu0 %v1955
    %2032 = vmatpush1.msra.mxu0 %v1954
    %2033 = vmatprep.subr.mxu0 %v1957
    %2034 = vmatpush1.msra.mxu0 %v1956
    %2035 = vmatprep.subr.mxu0 %v1959
    %2036 = vmatpush1.msra.mxu0 %v1958
    %2037 = vmatprep.subr.mxu0 %v1961
    %2038 = vmatpush1.msra.mxu0 %v1960
    %2039 = vmatprep.subr.mxu0 %v1963
    %2040 = vmatpush1.msra.mxu0 %v1962
    %2041 = vmatprep.subr.mxu0 %v1965
    %2042 = vmatpush1.msra.mxu0 %v1964
    %2043 = vmatprep.subr.mxu0 %v1967
    %2044 = vmatpush1.msra.mxu0 %v1966
    %2045 = vmatprep.subr.mxu0 %v1969
    %2046 = vmatpush1.msra.mxu0 %v1968
    %2047 = vmatprep.subr.mxu0 %v1971
    %2048 = vmatpush1.msra.mxu0 %v1970
    %2049 = vmatprep.subr.mxu0 %v1973
    %2050 = vmatpush1.msra.mxu0 %v1972
    %2051 = vmatprep.subr.mxu0 %v1975
    %2052 = vmatpush1.msra.mxu0 %v1974
    %2053 = vmatprep.subr.mxu0 %v1977
    %2054 = vmatpush1.msra.mxu0 %v1976
    %2055 = vmatprep.subr.mxu0 %v1979
    %2056 = vmatpush1.msra.mxu0 %v1978
    %2057 = vmatprep.subr.mxu0 %v1981
    %2058 = vmatpush1.msra.mxu0 %v1980
    %2059 = vmatprep.subr.mxu0 %v1983
    %2060 = vmatpush1.msra.mxu0 %v1982
    %2061 = vmatprep.subr.mxu0 %v1985
    %2062 = vmatpush1.msra.mxu0 %v1984
    %2063 = vmatprep.subr.mxu0 %v1987
    %2064 = vmatpush1.msra.mxu0 %v1986
    %2065 = vmatprep.subr.mxu0 %v1989
    %2066 = vmatpush1.msra.mxu0 %v1988
    %2067 = vmatprep.subr.mxu0 %v1991
    %2068 = vmatpush1.msra.mxu0 %v1990
    %2069 = vmatprep.subr.mxu0 %v1993
    %2070 = vmatpush1.msra.mxu0 %v1992
    %2071 = vmatprep.subr.mxu0 %v1995
    %2072 = vmatpush1.msra.mxu0 %v1994
    %2073 = vmatprep.subr.mxu0 %v1997
    %2074 = vmatpush1.msra.mxu0 %v1996
    %2075 = vmatprep.subr.mxu0 %v1999
    %2076 = vmatpush1.msra.mxu0 %v1998
    %2077 = vmatprep.subr.mxu0 %v2001
    %2078 = vmatpush1.msra.mxu0 %v2000
    %2079 = vmatprep.mubr.f32.mxu0 %v1713
    %2080 = vmatmul.mubr.f32.gmra.mrb[0].mxu0 %v1712
    %v2081 = vpop.f32.mrb[0].mxu0
    %v2082 = vadd.f32 %v2008, %v2081
    %v2083 = vpop.f32.mrb[0].mxu0
    %v2084 = vadd.f32 %v2012, %v2083
    %2085 = vmatprep.mubr.f32.mxu0 %v1715
    %2086 = vmatmul.mubr.f32.gmra.mrb[0].mxu0 %v1714
    %v2087 = vpop.f32.mrb[0].mxu0
    %v2088 = vadd.f32 %v2008, %v2087
    %v2089 = vpop.f32.mrb[0].mxu0
    %v2090 = vadd.f32 %v2012, %v2089
    %2091 = vmatprep.mubr.f32.mxu0 %v1717
    %2092 = vmatmul.mubr.f32.gmra.mrb[0].mxu0 %v1716
    %v2093 = vpop.f32.mrb[0].mxu0
    %v2094 = vadd.f32 %v2008, %v2093
    %v2095 = vpop.f32.mrb[0].mxu0
    %v2096 = vadd.f32 %v2012, %v2095
    %2097 = vmatprep.mubr.f32.mxu0 %v1719
    %2098 = vmatmul.mubr.f32.gmra.mrb[0].mxu0 %v1718
    %v2099 = vpop.f32.mrb[0].mxu0
    %v2100 = vadd.f32 %v2008, %v2099
    %v2101 = vpop.f32.mrb[0].mxu0
    %v2102 = vadd.f32 %v2012, %v2101
    %2103 = vmatprep.mubr.f32.mxu0 %v1721
    %2104 = vmatmul.mubr.f32.gmra.mrb[0].mxu0 %v1720
    %v2105 = vpop.f32.mrb[0].mxu0
    %v2106 = vadd.f32 %v2008, %v2105
    %v2107 = vpop.f32.mrb[0].mxu0
    %v2108 = vadd.f32 %v2012, %v2107
    %2109 = vmatprep.mubr.f32.mxu0 %v1723
    %2110 = vmatmul.mubr.f32.gmra.mrb[0].mxu0 %v1722
    %v2111 = vpop.f32.mrb[0].mxu0
    %v2112 = vadd.f32 %v2008, %v2111
    %v2113 = vpop.f32.mrb[0].mxu0
    %v2114 = vadd.f32 %v2012, %v2113
    %2115 = vmatprep.mubr.f32.mxu0 %v1725
    %2116 = vmatmul.mubr.f32.gmra.mrb[0].mxu0 %v1724
    %v2117 = vpop.f32.mrb[0].mxu0
    %v2118 = vadd.f32 %v2008, %v2117
    %v2119 = vpop.f32.mrb[0].mxu0
    %v2120 = vadd.f32 %v2012, %v2119
    %2121 = vmatprep.mubr.f32.mxu0 %v1727
    %2122 = vmatmul.mubr.f32.gmra.mrb[0].mxu0 %v1726
    %v2123 = vpop.f32.mrb[0].mxu0
    %v2124 = vadd.f32 %v2008, %v2123
    %v2125 = vpop.f32.mrb[0].mxu0
    %v2126 = vadd.f32 %v2012, %v2125
    %2127 = vmatprep.mubr.f32.mxu0 %v1729
    %2128 = vmatmul.mubr.f32.gmra.mrb[0].mxu0 %v1728
    %v2129 = vpop.f32.mrb[0].mxu0
    %v2130 = vadd.f32 %v2008, %v2129
    %v2131 = vpop.f32.mrb[0].mxu0
    %v2132 = vadd.f32 %v2012, %v2131
    %2133 = vmatprep.mubr.f32.mxu0 %v1731
    %2134 = vmatmul.mubr.f32.gmra.mrb[0].mxu0 %v1730
    %v2135 = vpop.f32.mrb[0].mxu0
    %v2136 = vadd.f32 %v2008, %v2135
    %v2137 = vpop.f32.mrb[0].mxu0
    %v2138 = vadd.f32 %v2012, %v2137
    %2139 = vmatprep.mubr.f32.mxu0 %v1733
    %2140 = vmatmul.mubr.f32.gmra.mrb[0].mxu0 %v1732
    %v2141 = vpop.f32.mrb[0].mxu0
    %v2142 = vadd.f32 %v2008, %v2141
    %v2143 = vpop.f32.mrb[0].mxu0
    %v2144 = vadd.f32 %v2012, %v2143
    %2145 = vmatprep.mubr.f32.mxu0 %v1735
    %2146 = vmatmul.mubr.f32.gmra.mrb[0].mxu0 %v1734
    %v2147 = vpop.f32.mrb[0].mxu0
    %v2148 = vadd.f32 %v2008, %v2147
    %v2149 = vpop.f32.mrb[0].mxu0
    %v2150 = vadd.f32 %v2012, %v2149
    %2151 = vmatprep.mubr.f32.mxu0 %v1737
    %2152 = vmatmul.mubr.f32.gmra.mrb[0].mxu0 %v1736
    %v2153 = vpop.f32.mrb[0].mxu0
    %v2154 = vadd.f32 %v2008, %v2153
    %v2155 = vpop.f32.mrb[0].mxu0
    %v2156 = vadd.f32 %v2012, %v2155
    %2157 = vmatprep.mubr.f32.mxu0 %v1739
    %2158 = vmatmul.mubr.f32.gmra.mrb[0].mxu0 %v1738
    %v2159 = vpop.f32.mrb[0].mxu0
    %v2160 = vadd.f32 %v2008, %v2159
    %v2161 = vpop.f32.mrb[0].mxu0
    %v2162 = vadd.f32 %v2012, %v2161
    %2163 = vmatprep.mubr.f32.mxu0 %v1741
    %2164 = vmatmul.mubr.f32.gmra.mrb[0].mxu0 %v1740
    %v2165 = vpop.f32.mrb[0].mxu0
    %v2166 = vadd.f32 %v2008, %v2165
    %v2167 = vpop.f32.mrb[0].mxu0
    %v2168 = vadd.f32 %v2012, %v2167
    %2169 = vmatprep.mubr.f32.mxu0 %v1743
    %2170 = vmatmul.mubr.f32.gmra.mrb[0].mxu0 %v1742
    %v2171 = vpop.f32.mrb[0].mxu0
    %v2172 = vadd.f32 %v2008, %v2171
    %v2173 = vpop.f32.mrb[0].mxu0
    %v2174 = vadd.f32 %v2012, %v2173
    %2175 = vdwg.mxu0
    %v2176 = vtanh.pop %v2082
    %v2177 = vtanh.pop %v2084
    %v2178 = vtanh.pop %v2088
    %v2179 = vtanh.pop %v2090
    %v2180 = vtanh.pop %v2094
    %v2181 = vtanh.pop %v2096
    %v2182 = vtanh.pop %v2100
    %v2183 = vtanh.pop %v2102
    %v2184 = vtanh.pop %v2106
    %v2185 = vtanh.pop %v2108
    %v2186 = vtanh.pop %v2112
    %v2187 = vtanh.pop %v2114
    %v2188 = vtanh.pop %v2118
    %v2189 = vtanh.pop %v2120
    %v2190 = vtanh.pop %v2124
    %v2191 = vtanh.pop %v2126
    %v2192 = vtanh.pop %v2130
    %v2193 = vtanh.pop %v2132
    %v2194 = vtanh.pop %v2136
    %v2195 = vtanh.pop %v2138
    %v2196 = vtanh.pop %v2142
    %v2197 = vtanh.pop %v2144
    %v2198 = vtanh.pop %v2148
    %v2199 = vtanh.pop %v2150
    %v2200 = vtanh.pop %v2154
    %v2201 = vtanh.pop %v2156
    %v2202 = vtanh.pop %v2160
    %v2203 = vtanh.pop %v2162
    %v2204 = vtanh.pop %v2166
    %v2205 = vtanh.pop %v2168
    %v2206 = vtanh.pop %v2172
    %v2207 = vtanh.pop %v2174
    %2208 = vmatprep.subr.mxu0 %v1939
    %2209 = vmatpush1.msra.mxu0 %v1938
    %2210 = vmatprep.subr.mxu0 %v1941
    %2211 = vmatpush1.msra.mxu0 %v1940
    %2212 = vmatprep.subr.mxu0 %v1943
    %2213 = vmatpush1.msra.mxu0 %v1942
    %2214 = vmatprep.subr.mxu0 %v1945
    %2215 = vmatpush1.msra.mxu0 %v1944
    %2216 = vmatprep.subr.mxu0 %v1947
    %2217 = vmatpush1.msra.mxu0 %v1946
    %2218 = vmatprep.subr.mxu0 %v1949
    %2219 = vmatpush1.msra.mxu0 %v1948
    %2220 = vmatprep.subr.mxu0 %v1951
    %2221 = vmatpush1.msra.mxu0 %v1950
    %2222 = vmatprep.subr.mxu0 %v1953
    %2223 = vmatpush1.msra.mxu0 %v1952
    %2224 = vmatprep.subr.mxu0 %v1955
    %2225 = vmatpush1.msra.mxu0 %v1954
    %2226 = vmatprep.subr.mxu0 %v1957
    %2227 = vmatpush1.msra.mxu0 %v1956
    %2228 = vmatprep.subr.mxu0 %v1959
    %2229 = vmatpush1.msra.mxu0 %v1958
    %2230 = vmatprep.subr.mxu0 %v1961
    %2231 = vmatpush1.msra.mxu0 %v1960
    %2232 = vmatprep.subr.mxu0 %v1963
    %2233 = vmatpush1.msra.mxu0 %v1962
    %2234 = vmatprep.subr.mxu0 %v1965
    %2235 = vmatpush1.msra.mxu0 %v1964
    %2236 = vmatprep.subr.mxu0 %v1967
    %2237 = vmatpush1.msra.mxu0 %v1966
    %2238 = vmatprep.subr.mxu0 %v1969
    %2239 = vmatpush1.msra.mxu0 %v1968
    %2240 = vmatprep.subr.mxu0 %v1971
    %2241 = vmatpush1.msra.mxu0 %v1970
    %2242 = vmatprep.subr.mxu0 %v1973
    %2243 = vmatpush1.msra.mxu0 %v1972
    %2244 = vmatprep.subr.mxu0 %v1975
    %2245 = vmatpush1.msra.mxu0 %v1974
    %2246 = vmatprep.subr.mxu0 %v1977
    %2247 = vmatpush1.msra.mxu0 %v1976
    %2248 = vmatprep.subr.mxu0 %v1979
    %2249 = vmatpush1.msra.mxu0 %v1978
    %2250 = vmatprep.subr.mxu0 %v1981
    %2251 = vmatpush1.msra.mxu0 %v1980
    %2252 = vmatprep.subr.mxu0 %v1983
    %2253 = vmatpush1.msra.mxu0 %v1982
    %2254 = vmatprep.subr.mxu0 %v1985
    %2255 = vmatpush1.msra.mxu0 %v1984
    %2256 = vmatprep.subr.mxu0 %v1987
    %2257 = vmatpush1.msra.mxu0 %v1986
    %2258 = vmatprep.subr.mxu0 %v1989
    %2259 = vmatpush1.msra.mxu0 %v1988
    %2260 = vmatprep.subr.mxu0 %v1991
    %2261 = vmatpush1.msra.mxu0 %v1990
    %2262 = vmatprep.subr.mxu0 %v1993
    %2263 = vmatpush1.msra.mxu0 %v1992
    %2264 = vmatprep.subr.mxu0 %v1995
    %2265 = vmatpush1.msra.mxu0 %v1994
    %2266 = vmatprep.subr.mxu0 %v1997
    %2267 = vmatpush1.msra.mxu0 %v1996
    %2268 = vmatprep.subr.mxu0 %v1999
    %2269 = vmatpush1.msra.mxu0 %v1998
    %2270 = vmatprep.subr.mxu0 %v2001
    %2271 = vmatpush1.msra.mxu0 %v2000
    %2272 = vmatprep.mubr.f32.mxu0 %v1906
    %2273 = vmatmul.mubr.f32.gmra.mrb[0].mxu0 %v1905
    %v2274 = vpop.f32.mrb[0].mxu0
    %v2275 = vadd.f32 %v2008, %v2274
    %v2276 = vpop.f32.mrb[0].mxu0
    %v2277 = vadd.f32 %v2012, %v2276
    %2278 = vmatprep.mubr.f32.mxu0 %v1908
    %2279 = vmatmul.mubr.f32.gmra.mrb[0].mxu0 %v1907
    %v2280 = vpop.f32.mrb[0].mxu0
    %v2281 = vadd.f32 %v2008, %v2280
    %v2282 = vpop.f32.mrb[0].mxu0
    %v2283 = vadd.f32 %v2012, %v2282
    %2284 = vmatprep.mubr.f32.mxu0 %v1910
    %2285 = vmatmul.mubr.f32.gmra.mrb[0].mxu0 %v1909
    %v2286 = vpop.f32.mrb[0].mxu0
    %v2287 = vadd.f32 %v2008, %v2286
    %v2288 = vpop.f32.mrb[0].mxu0
    %v2289 = vadd.f32 %v2012, %v2288
    %2290 = vmatprep.mubr.f32.mxu0 %v1912
    %2291 = vmatmul.mubr.f32.gmra.mrb[0].mxu0 %v1911
    %v2292 = vpop.f32.mrb[0].mxu0
    %v2293 = vadd.f32 %v2008, %v2292
    %v2294 = vpop.f32.mrb[0].mxu0
    %v2295 = vadd.f32 %v2012, %v2294
    %2296 = vmatprep.mubr.f32.mxu0 %v1914
    %2297 = vmatmul.mubr.f32.gmra.mrb[0].mxu0 %v1913
    %v2298 = vpop.f32.mrb[0].mxu0
    %v2299 = vadd.f32 %v2008, %v2298
    %v2300 = vpop.f32.mrb[0].mxu0
    %v2301 = vadd.f32 %v2012, %v2300
    %2302 = vmatprep.mubr.f32.mxu0 %v1916
    %2303 = vmatmul.mubr.f32.gmra.mrb[0].mxu0 %v1915
    %v2304 = vpop.f32.mrb[0].mxu0
    %v2305 = vadd.f32 %v2008, %v2304
    %v2306 = vpop.f32.mrb[0].mxu0
    %v2307 = vadd.f32 %v2012, %v2306
    %2308 = vmatprep.mubr.f32.mxu0 %v1918
    %2309 = vmatmul.mubr.f32.gmra.mrb[0].mxu0 %v1917
    %v2310 = vpop.f32.mrb[0].mxu0
    %v2311 = vadd.f32 %v2008, %v2310
    %v2312 = vpop.f32.mrb[0].mxu0
    %v2313 = vadd.f32 %v2012, %v2312
    %2314 = vmatprep.mubr.f32.mxu0 %v1920
    %2315 = vmatmul.mubr.f32.gmra.mrb[0].mxu0 %v1919
    %v2316 = vpop.f32.mrb[0].mxu0
    %v2317 = vadd.f32 %v2008, %v2316
    %v2318 = vpop.f32.mrb[0].mxu0
    %v2319 = vadd.f32 %v2012, %v2318
    %2320 = vmatprep.mubr.f32.mxu0 %v1922
    %2321 = vmatmul.mubr.f32.gmra.mrb[0].mxu0 %v1921
    %v2322 = vpop.f32.mrb[0].mxu0
    %v2323 = vadd.f32 %v2008, %v2322
    %v2324 = vpop.f32.mrb[0].mxu0
    %v2325 = vadd.f32 %v2012, %v2324
    %2326 = vmatprep.mubr.f32.mxu0 %v1924
    %2327 = vmatmul.mubr.f32.gmra.mrb[0].mxu0 %v1923
    %v2328 = vpop.f32.mrb[0].mxu0
    %v2329 = vadd.f32 %v2008, %v2328
    %v2330 = vpop.f32.mrb[0].mxu0
    %v2331 = vadd.f32 %v2012, %v2330
    %2332 = vmatprep.mubr.f32.mxu0 %v1926
    %2333 = vmatmul.mubr.f32.gmra.mrb[0].mxu0 %v1925
    %v2334 = vpop.f32.mrb[0].mxu0
    %v2335 = vadd.f32 %v2008, %v2334
    %v2336 = vpop.f32.mrb[0].mxu0
    %v2337 = vadd.f32 %v2012, %v2336
    %2338 = vmatprep.mubr.f32.mxu0 %v1928
    %2339 = vmatmul.mubr.f32.gmra.mrb[0].mxu0 %v1927
    %v2340 = vpop.f32.mrb[0].mxu0
    %v2341 = vadd.f32 %v2008, %v2340
    %v2342 = vpop.f32.mrb[0].mxu0
    %v2343 = vadd.f32 %v2012, %v2342
    %2344 = vmatprep.mubr.f32.mxu0 %v1930
    %2345 = vmatmul.mubr.f32.gmra.mrb[0].mxu0 %v1929
    %v2346 = vpop.f32.mrb[0].mxu0
    %v2347 = vadd.f32 %v2008, %v2346
    %v2348 = vpop.f32.mrb[0].mxu0
    %v2349 = vadd.f32 %v2012, %v2348
    %2350 = vmatprep.mubr.f32.mxu0 %v1932
    %2351 = vmatmul.mubr.f32.gmra.mrb[0].mxu0 %v1931
    %v2352 = vpop.f32.mrb[0].mxu0
    %v2353 = vadd.f32 %v2008, %v2352
    %v2354 = vpop.f32.mrb[0].mxu0
    %v2355 = vadd.f32 %v2012, %v2354
    %2356 = vmatprep.mubr.f32.mxu0 %v1934
    %2357 = vmatmul.mubr.f32.gmra.mrb[0].mxu0 %v1933
    %v2358 = vpop.f32.mrb[0].mxu0
    %v2359 = vadd.f32 %v2008, %v2358
    %v2360 = vpop.f32.mrb[0].mxu0
    %v2361 = vadd.f32 %v2012, %v2360
    %2362 = vmatprep.mubr.f32.mxu0 %v1936
    %2363 = vmatmul.mubr.f32.gmra.mrb[0].mxu0 %v1935
    %v2364 = vpop.f32.mrb[0].mxu0
    %v2365 = vadd.f32 %v2008, %v2364
    %v2366 = vpop.f32.mrb[0].mxu0
    %v2367 = vadd.f32 %v2012, %v2366
    %2368 = vdwg.mxu0
    %v2369 = vtanh.pop %v2275
    %v2370 = vtanh.pop %v2277
    %v2371 = vtanh.pop %v2281
    %v2372 = vtanh.pop %v2283
    %v2373 = vtanh.pop %v2287
    %v2374 = vtanh.pop %v2289
    %v2375 = vtanh.pop %v2293
    %v2376 = vtanh.pop %v2295
    %v2377 = vtanh.pop %v2299
    %v2378 = vtanh.pop %v2301
    %v2379 = vtanh.pop %v2305
    %v2380 = vtanh.pop %v2307
    %v2381 = vtanh.pop %v2311
    %v2382 = vtanh.pop %v2313
    %v2383 = vtanh.pop %v2317
    %v2384 = vtanh.pop %v2319
    %v2385 = vtanh.pop %v2323
    %v2386 = vtanh.pop %v2325
    %v2387 = vtanh.pop %v2329
    %v2388 = vtanh.pop %v2331
    %v2389 = vtanh.pop %v2335
    %v2390 = vtanh.pop %v2337
    %v2391 = vtanh.pop %v2341
    %v2392 = vtanh.pop %v2343
    %v2393 = vtanh.pop %v2347
    %v2394 = vtanh.pop %v2349
    %v2395 = vtanh.pop %v2353
    %v2396 = vtanh.pop %v2355
    %v2397 = vtanh.pop %v2359
    %v2398 = vtanh.pop %v2361
    %v2399 = vtanh.pop %v2365
    %v2400 = vtanh.pop %v2367
    %s2401 = scalar_lea.vmem [#allocation4], 1536
    %v2402 = vld [vmem:[%s2401] sm:$0xff]
    %v2403 = vld [vmem:[%s2401 + $0x8] sm:$0xff]
    %v2404 = vld [vmem:[%s2401 + $0x10] sm:$0xff]
    %v2405 = vld [vmem:[%s2401 + $0x18] sm:$0xff]
    %v2406 = vld [vmem:[%s2401 + $0x20] sm:$0xff]
    %v2407 = vld [vmem:[%s2401 + $0x28] sm:$0xff]
    %v2408 = vld [vmem:[%s2401 + $0x30] sm:$0xff]
    %v2409 = vld [vmem:[%s2401 + $0x38] sm:$0xff]
    %v2410 = vld [vmem:[%s2401 + $0x40] sm:$0xff]
    %v2411 = vld [vmem:[%s2401 + $0x48] sm:$0xff]
    %v2412 = vld [vmem:[%s2401 + $0x50] sm:$0xff]
    %v2413 = vld [vmem:[%s2401 + $0x58] sm:$0xff]
    %v2414 = vld [vmem:[%s2401 + $0x60] sm:$0xff]
    %v2415 = vld [vmem:[%s2401 + $0x68] sm:$0xff]
    %v2416 = vld [vmem:[%s2401 + $0x70] sm:$0xff]
    %v2417 = vld [vmem:[%s2401 + $0x78] sm:$0xff]
    %v2418 = vld [vmem:[%s2401 + $0x80] sm:$0xff]
    %v2419 = vld [vmem:[%s2401 + $0x88] sm:$0xff]
    %v2420 = vld [vmem:[%s2401 + $0x90] sm:$0xff]
    %v2421 = vld [vmem:[%s2401 + $0x98] sm:$0xff]
    %v2422 = vld [vmem:[%s2401 + $0xa0] sm:$0xff]
    %v2423 = vld [vmem:[%s2401 + $0xa8] sm:$0xff]
    %v2424 = vld [vmem:[%s2401 + $0xb0] sm:$0xff]
    %v2425 = vld [vmem:[%s2401 + $0xb8] sm:$0xff]
    %v2426 = vld [vmem:[%s2401 + $0xc0] sm:$0xff]
    %v2427 = vld [vmem:[%s2401 + $0xc8] sm:$0xff]
    %v2428 = vld [vmem:[%s2401 + $0xd0] sm:$0xff]
    %v2429 = vld [vmem:[%s2401 + $0xd8] sm:$0xff]
    %v2430 = vld [vmem:[%s2401 + $0xe0] sm:$0xff]
    %v2431 = vld [vmem:[%s2401 + $0xe8] sm:$0xff]
    %v2432 = vld [vmem:[%s2401 + $0xf0] sm:$0xff]
    %v2433 = vld [vmem:[%s2401 + $0xf8] sm:$0xff]
    %v2434 = vld [vmem:[%s2401 + $0x100] sm:$0xff]
    %v2435 = vld [vmem:[%s2401 + $0x108] sm:$0xff]
    %v2436 = vld [vmem:[%s2401 + $0x110] sm:$0xff]
    %v2437 = vld [vmem:[%s2401 + $0x118] sm:$0xff]
    %v2438 = vld [vmem:[%s2401 + $0x120] sm:$0xff]
    %v2439 = vld [vmem:[%s2401 + $0x128] sm:$0xff]
    %v2440 = vld [vmem:[%s2401 + $0x130] sm:$0xff]
    %v2441 = vld [vmem:[%s2401 + $0x138] sm:$0xff]
    %v2442 = vld [vmem:[%s2401 + $0x140] sm:$0xff]
    %v2443 = vld [vmem:[%s2401 + $0x148] sm:$0xff]
    %v2444 = vld [vmem:[%s2401 + $0x150] sm:$0xff]
    %v2445 = vld [vmem:[%s2401 + $0x158] sm:$0xff]
    %v2446 = vld [vmem:[%s2401 + $0x160] sm:$0xff]
    %v2447 = vld [vmem:[%s2401 + $0x168] sm:$0xff]
    %v2448 = vld [vmem:[%s2401 + $0x170] sm:$0xff]
    %v2449 = vld [vmem:[%s2401 + $0x178] sm:$0xff]
    %v2450 = vld [vmem:[%s2401 + $0x180] sm:$0xff]
    %v2451 = vld [vmem:[%s2401 + $0x188] sm:$0xff]
    %v2452 = vld [vmem:[%s2401 + $0x190] sm:$0xff]
    %v2453 = vld [vmem:[%s2401 + $0x198] sm:$0xff]
    %v2454 = vld [vmem:[%s2401 + $0x1a0] sm:$0xff]
    %v2455 = vld [vmem:[%s2401 + $0x1a8] sm:$0xff]
    %v2456 = vld [vmem:[%s2401 + $0x1b0] sm:$0xff]
    %v2457 = vld [vmem:[%s2401 + $0x1b8] sm:$0xff]
    %v2458 = vld [vmem:[%s2401 + $0x1c0] sm:$0xff]
    %v2459 = vld [vmem:[%s2401 + $0x1c8] sm:$0xff]
    %v2460 = vld [vmem:[%s2401 + $0x1d0] sm:$0xff]
    %v2461 = vld [vmem:[%s2401 + $0x1d8] sm:$0xff]
    %v2462 = vld [vmem:[%s2401 + $0x1e0] sm:$0xff]
    %v2463 = vld [vmem:[%s2401 + $0x1e8] sm:$0xff]
    %v2464 = vld [vmem:[%s2401 + $0x1f0] sm:$0xff]
    %v2465 = vld [vmem:[%s2401 + $0x1f8] sm:$0xff]
    %s2466 = scalar_lea.vmem [#allocation6], 6
    %v2467 = vld [vmem:[%s2466] sm:$0x3]
    %v2469 = vlaneseq
    %v2470 = vshrl.u32 %v2469, 7
    %v2471 = vsub.s32 0, %v2470
    %v2472 = vrot.slane %v2467, %v2471
    %v2473 = vlaneseq
    %v2474 = vshrl.u32 %v2473, 7
    %v2475 = vsub.s32 1, %v2474
    %v2476 = vrot.slane %v2467, %v2475
    %2479 = vmatprep.subr.mxu0 %v2403
    %2480 = vmatpush1.msra.mxu0 %v2402
    %2481 = vmatprep.subr.mxu0 %v2405
    %2482 = vmatpush1.msra.mxu0 %v2404
    %2483 = vmatprep.subr.mxu0 %v2407
    %2484 = vmatpush1.msra.mxu0 %v2406
    %2485 = vmatprep.subr.mxu0 %v2409
    %2486 = vmatpush1.msra.mxu0 %v2408
    %2487 = vmatprep.subr.mxu0 %v2411
    %2488 = vmatpush1.msra.mxu0 %v2410
    %2489 = vmatprep.subr.mxu0 %v2413
    %2490 = vmatpush1.msra.mxu0 %v2412
    %2491 = vmatprep.subr.mxu0 %v2415
    %2492 = vmatpush1.msra.mxu0 %v2414
    %2493 = vmatprep.subr.mxu0 %v2417
    %2494 = vmatpush1.msra.mxu0 %v2416
    %2495 = vmatprep.subr.mxu0 %v2419
    %2496 = vmatpush1.msra.mxu0 %v2418
    %2497 = vmatprep.subr.mxu0 %v2421
    %2498 = vmatpush1.msra.mxu0 %v2420
    %2499 = vmatprep.subr.mxu0 %v2423
    %2500 = vmatpush1.msra.mxu0 %v2422
    %2501 = vmatprep.subr.mxu0 %v2425
    %2502 = vmatpush1.msra.mxu0 %v2424
    %2503 = vmatprep.subr.mxu0 %v2427
    %2504 = vmatpush1.msra.mxu0 %v2426
    %2505 = vmatprep.subr.mxu0 %v2429
    %2506 = vmatpush1.msra.mxu0 %v2428
    %2507 = vmatprep.subr.mxu0 %v2431
    %2508 = vmatpush1.msra.mxu0 %v2430
    %2509 = vmatprep.subr.mxu0 %v2433
    %2510 = vmatpush1.msra.mxu0 %v2432
    %2511 = vmatprep.subr.mxu0 %v2435
    %2512 = vmatpush1.msra.mxu0 %v2434
    %2513 = vmatprep.subr.mxu0 %v2437
    %2514 = vmatpush1.msra.mxu0 %v2436
    %2515 = vmatprep.subr.mxu0 %v2439
    %2516 = vmatpush1.msra.mxu0 %v2438
    %2517 = vmatprep.subr.mxu0 %v2441
    %2518 = vmatpush1.msra.mxu0 %v2440
    %2519 = vmatprep.subr.mxu0 %v2443
    %2520 = vmatpush1.msra.mxu0 %v2442
    %2521 = vmatprep.subr.mxu0 %v2445
    %2522 = vmatpush1.msra.mxu0 %v2444
    %2523 = vmatprep.subr.mxu0 %v2447
    %2524 = vmatpush1.msra.mxu0 %v2446
    %2525 = vmatprep.subr.mxu0 %v2449
    %2526 = vmatpush1.msra.mxu0 %v2448
    %2527 = vmatprep.subr.mxu0 %v2451
    %2528 = vmatpush1.msra.mxu0 %v2450
    %2529 = vmatprep.subr.mxu0 %v2453
    %2530 = vmatpush1.msra.mxu0 %v2452
    %2531 = vmatprep.subr.mxu0 %v2455
    %2532 = vmatpush1.msra.mxu0 %v2454
    %2533 = vmatprep.subr.mxu0 %v2457
    %2534 = vmatpush1.msra.mxu0 %v2456
    %2535 = vmatprep.subr.mxu0 %v2459
    %2536 = vmatpush1.msra.mxu0 %v2458
    %2537 = vmatprep.subr.mxu0 %v2461
    %2538 = vmatpush1.msra.mxu0 %v2460
    %2539 = vmatprep.subr.mxu0 %v2463
    %2540 = vmatpush1.msra.mxu0 %v2462
    %2541 = vmatprep.subr.mxu0 %v2465
    %2542 = vmatpush1.msra.mxu0 %v2464
    %2543 = vmatprep.mubr.f32.mxu0 %v2177
    %2544 = vmatmul.mubr.f32.gmra.mrb[0].mxu0 %v2176
    %v2545 = vpop.f32.mrb[0].mxu0
    %v2546 = vadd.f32 %v2472, %v2545
    %v2547 = vpop.f32.mrb[0].mxu0
    %v2548 = vadd.f32 %v2476, %v2547
    %2549 = vmatprep.mubr.f32.mxu0 %v2179
    %2550 = vmatmul.mubr.f32.gmra.mrb[0].mxu0 %v2178
    %v2551 = vpop.f32.mrb[0].mxu0
    %v2552 = vadd.f32 %v2472, %v2551
    %v2553 = vpop.f32.mrb[0].mxu0
    %v2554 = vadd.f32 %v2476, %v2553
    %2555 = vmatprep.mubr.f32.mxu0 %v2181
    %2556 = vmatmul.mubr.f32.gmra.mrb[0].mxu0 %v2180
    %v2557 = vpop.f32.mrb[0].mxu0
    %v2558 = vadd.f32 %v2472, %v2557
    %v2559 = vpop.f32.mrb[0].mxu0
    %v2560 = vadd.f32 %v2476, %v2559
    %2561 = vmatprep.mubr.f32.mxu0 %v2183
    %2562 = vmatmul.mubr.f32.gmra.mrb[0].mxu0 %v2182
    %v2563 = vpop.f32.mrb[0].mxu0
    %v2564 = vadd.f32 %v2472, %v2563
    %v2565 = vpop.f32.mrb[0].mxu0
    %v2566 = vadd.f32 %v2476, %v2565
    %2567 = vmatprep.mubr.f32.mxu0 %v2185
    %2568 = vmatmul.mubr.f32.gmra.mrb[0].mxu0 %v2184
    %v2569 = vpop.f32.mrb[0].mxu0
    %v2570 = vadd.f32 %v2472, %v2569
    %v2571 = vpop.f32.mrb[0].mxu0
    %v2572 = vadd.f32 %v2476, %v2571
    %2573 = vmatprep.mubr.f32.mxu0 %v2187
    %2574 = vmatmul.mubr.f32.gmra.mrb[0].mxu0 %v2186
    %v2575 = vpop.f32.mrb[0].mxu0
    %v2576 = vadd.f32 %v2472, %v2575
    %v2577 = vpop.f32.mrb[0].mxu0
    %v2578 = vadd.f32 %v2476, %v2577
    %2579 = vmatprep.mubr.f32.mxu0 %v2189
    %2580 = vmatmul.mubr.f32.gmra.mrb[0].mxu0 %v2188
    %v2581 = vpop.f32.mrb[0].mxu0
    %v2582 = vadd.f32 %v2472, %v2581
    %v2583 = vpop.f32.mrb[0].mxu0
    %v2584 = vadd.f32 %v2476, %v2583
    %2585 = vmatprep.mubr.f32.mxu0 %v2191
    %2586 = vmatmul.mubr.f32.gmra.mrb[0].mxu0 %v2190
    %v2587 = vpop.f32.mrb[0].mxu0
    %v2588 = vadd.f32 %v2472, %v2587
    %v2589 = vpop.f32.mrb[0].mxu0
    %v2590 = vadd.f32 %v2476, %v2589
    %2591 = vmatprep.mubr.f32.mxu0 %v2193
    %2592 = vmatmul.mubr.f32.gmra.mrb[0].mxu0 %v2192
    %v2593 = vpop.f32.mrb[0].mxu0
    %v2594 = vadd.f32 %v2472, %v2593
    %v2595 = vpop.f32.mrb[0].mxu0
    %v2596 = vadd.f32 %v2476, %v2595
    %2597 = vmatprep.mubr.f32.mxu0 %v2195
    %2598 = vmatmul.mubr.f32.gmra.mrb[0].mxu0 %v2194
    %v2599 = vpop.f32.mrb[0].mxu0
    %v2600 = vadd.f32 %v2472, %v2599
    %v2601 = vpop.f32.mrb[0].mxu0
    %v2602 = vadd.f32 %v2476, %v2601
    %2603 = vmatprep.mubr.f32.mxu0 %v2197
    %2604 = vmatmul.mubr.f32.gmra.mrb[0].mxu0 %v2196
    %v2605 = vpop.f32.mrb[0].mxu0
    %v2606 = vadd.f32 %v2472, %v2605
    %v2607 = vpop.f32.mrb[0].mxu0
    %v2608 = vadd.f32 %v2476, %v2607
    %2609 = vmatprep.mubr.f32.mxu0 %v2199
    %2610 = vmatmul.mubr.f32.gmra.mrb[0].mxu0 %v2198
    %v2611 = vpop.f32.mrb[0].mxu0
    %v2612 = vadd.f32 %v2472, %v2611
    %v2613 = vpop.f32.mrb[0].mxu0
    %v2614 = vadd.f32 %v2476, %v2613
    %2615 = vmatprep.mubr.f32.mxu0 %v2201
    %2616 = vmatmul.mubr.f32.gmra.mrb[0].mxu0 %v2200
    %v2617 = vpop.f32.mrb[0].mxu0
    %v2618 = vadd.f32 %v2472, %v2617
    %v2619 = vpop.f32.mrb[0].mxu0
    %v2620 = vadd.f32 %v2476, %v2619
    %2621 = vmatprep.mubr.f32.mxu0 %v2203
    %2622 = vmatmul.mubr.f32.gmra.mrb[0].mxu0 %v2202
    %v2623 = vpop.f32.mrb[0].mxu0
    %v2624 = vadd.f32 %v2472, %v2623
    %v2625 = vpop.f32.mrb[0].mxu0
    %v2626 = vadd.f32 %v2476, %v2625
    %2627 = vmatprep.mubr.f32.mxu0 %v2205
    %2628 = vmatmul.mubr.f32.gmra.mrb[0].mxu0 %v2204
    %v2629 = vpop.f32.mrb[0].mxu0
    %v2630 = vadd.f32 %v2472, %v2629
    %v2631 = vpop.f32.mrb[0].mxu0
    %v2632 = vadd.f32 %v2476, %v2631
    %2633 = vmatprep.mubr.f32.mxu0 %v2207
    %2634 = vmatmul.mubr.f32.gmra.mrb[0].mxu0 %v2206
    %v2635 = vpop.f32.mrb[0].mxu0
    %v2636 = vadd.f32 %v2472, %v2635
    %v2637 = vpop.f32.mrb[0].mxu0
    %v2638 = vadd.f32 %v2476, %v2637
    %2639 = vdwg.mxu0
    %v2640 = vtanh.pop %v2546
    %v2641 = vtanh.pop %v2548
    %v2642 = vtanh.pop %v2552
    %v2643 = vtanh.pop %v2554
    %v2644 = vtanh.pop %v2558
    %v2645 = vtanh.pop %v2560
    %v2646 = vtanh.pop %v2564
    %v2647 = vtanh.pop %v2566
    %v2648 = vtanh.pop %v2570
    %v2649 = vtanh.pop %v2572
    %v2650 = vtanh.pop %v2576
    %v2651 = vtanh.pop %v2578
    %v2652 = vtanh.pop %v2582
    %v2653 = vtanh.pop %v2584
    %v2654 = vtanh.pop %v2588
    %v2655 = vtanh.pop %v2590
    %v2656 = vtanh.pop %v2594
    %v2657 = vtanh.pop %v2596
    %v2658 = vtanh.pop %v2600
    %v2659 = vtanh.pop %v2602
    %v2660 = vtanh.pop %v2606
    %v2661 = vtanh.pop %v2608
    %v2662 = vtanh.pop %v2612
    %v2663 = vtanh.pop %v2614
    %v2664 = vtanh.pop %v2618
    %v2665 = vtanh.pop %v2620
    %v2666 = vtanh.pop %v2624
    %v2667 = vtanh.pop %v2626
    %v2668 = vtanh.pop %v2630
    %v2669 = vtanh.pop %v2632
    %v2670 = vtanh.pop %v2636
    %v2671 = vtanh.pop %v2638
    %2672 = vmatprep.subr.mxu0 %v2403
    %2673 = vmatpush1.msra.mxu0 %v2402
    %2674 = vmatprep.subr.mxu0 %v2405
    %2675 = vmatpush1.msra.mxu0 %v2404
    %2676 = vmatprep.subr.mxu0 %v2407
    %2677 = vmatpush1.msra.mxu0 %v2406
    %2678 = vmatprep.subr.mxu0 %v2409
    %2679 = vmatpush1.msra.mxu0 %v2408
    %2680 = vmatprep.subr.mxu0 %v2411
    %2681 = vmatpush1.msra.mxu0 %v2410
    %2682 = vmatprep.subr.mxu0 %v2413
    %2683 = vmatpush1.msra.mxu0 %v2412
    %2684 = vmatprep.subr.mxu0 %v2415
    %2685 = vmatpush1.msra.mxu0 %v2414
    %2686 = vmatprep.subr.mxu0 %v2417
    %2687 = vmatpush1.msra.mxu0 %v2416
    %2688 = vmatprep.subr.mxu0 %v2419
    %2689 = vmatpush1.msra.mxu0 %v2418
    %2690 = vmatprep.subr.mxu0 %v2421
    %2691 = vmatpush1.msra.mxu0 %v2420
    %2692 = vmatprep.subr.mxu0 %v2423
    %2693 = vmatpush1.msra.mxu0 %v2422
    %2694 = vmatprep.subr.mxu0 %v2425
    %2695 = vmatpush1.msra.mxu0 %v2424
    %2696 = vmatprep.subr.mxu0 %v2427
    %2697 = vmatpush1.msra.mxu0 %v2426
    %2698 = vmatprep.subr.mxu0 %v2429
    %2699 = vmatpush1.msra.mxu0 %v2428
    %2700 = vmatprep.subr.mxu0 %v2431
    %2701 = vmatpush1.msra.mxu0 %v2430
    %2702 = vmatprep.subr.mxu0 %v2433
    %2703 = vmatpush1.msra.mxu0 %v2432
    %2704 = vmatprep.subr.mxu0 %v2435
    %2705 = vmatpush1.msra.mxu0 %v2434
    %2706 = vmatprep.subr.mxu0 %v2437
    %2707 = vmatpush1.msra.mxu0 %v2436
    %2708 = vmatprep.subr.mxu0 %v2439
    %2709 = vmatpush1.msra.mxu0 %v2438
    %2710 = vmatprep.subr.mxu0 %v2441
    %2711 = vmatpush1.msra.mxu0 %v2440
    %2712 = vmatprep.subr.mxu0 %v2443
    %2713 = vmatpush1.msra.mxu0 %v2442
    %2714 = vmatprep.subr.mxu0 %v2445
    %2715 = vmatpush1.msra.mxu0 %v2444
    %2716 = vmatprep.subr.mxu0 %v2447
    %2717 = vmatpush1.msra.mxu0 %v2446
    %2718 = vmatprep.subr.mxu0 %v2449
    %2719 = vmatpush1.msra.mxu0 %v2448
    %2720 = vmatprep.subr.mxu0 %v2451
    %2721 = vmatpush1.msra.mxu0 %v2450
    %2722 = vmatprep.subr.mxu0 %v2453
    %2723 = vmatpush1.msra.mxu0 %v2452
    %2724 = vmatprep.subr.mxu0 %v2455
    %2725 = vmatpush1.msra.mxu0 %v2454
    %2726 = vmatprep.subr.mxu0 %v2457
    %2727 = vmatpush1.msra.mxu0 %v2456
    %2728 = vmatprep.subr.mxu0 %v2459
    %2729 = vmatpush1.msra.mxu0 %v2458
    %2730 = vmatprep.subr.mxu0 %v2461
    %2731 = vmatpush1.msra.mxu0 %v2460
    %2732 = vmatprep.subr.mxu0 %v2463
    %2733 = vmatpush1.msra.mxu0 %v2462
    %2734 = vmatprep.subr.mxu0 %v2465
    %2735 = vmatpush1.msra.mxu0 %v2464
    %2736 = vmatprep.mubr.f32.mxu0 %v2370
    %2737 = vmatmul.mubr.f32.gmra.mrb[0].mxu0 %v2369
    %v2738 = vpop.f32.mrb[0].mxu0
    %v2739 = vadd.f32 %v2472, %v2738
    %v2740 = vpop.f32.mrb[0].mxu0
    %v2741 = vadd.f32 %v2476, %v2740
    %2742 = vmatprep.mubr.f32.mxu0 %v2372
    %2743 = vmatmul.mubr.f32.gmra.mrb[0].mxu0 %v2371
    %v2744 = vpop.f32.mrb[0].mxu0
    %v2745 = vadd.f32 %v2472, %v2744
    %v2746 = vpop.f32.mrb[0].mxu0
    %v2747 = vadd.f32 %v2476, %v2746
    %2748 = vmatprep.mubr.f32.mxu0 %v2374
    %2749 = vmatmul.mubr.f32.gmra.mrb[0].mxu0 %v2373
    %v2750 = vpop.f32.mrb[0].mxu0
    %v2751 = vadd.f32 %v2472, %v2750
    %v2752 = vpop.f32.mrb[0].mxu0
    %v2753 = vadd.f32 %v2476, %v2752
    %2754 = vmatprep.mubr.f32.mxu0 %v2376
    %2755 = vmatmul.mubr.f32.gmra.mrb[0].mxu0 %v2375
    %v2756 = vpop.f32.mrb[0].mxu0
    %v2757 = vadd.f32 %v2472, %v2756
    %v2758 = vpop.f32.mrb[0].mxu0
    %v2759 = vadd.f32 %v2476, %v2758
    %2760 = vmatprep.mubr.f32.mxu0 %v2378
    %2761 = vmatmul.mubr.f32.gmra.mrb[0].mxu0 %v2377
    %v2762 = vpop.f32.mrb[0].mxu0
    %v2763 = vadd.f32 %v2472, %v2762
    %v2764 = vpop.f32.mrb[0].mxu0
    %v2765 = vadd.f32 %v2476, %v2764
    %2766 = vmatprep.mubr.f32.mxu0 %v2380
    %2767 = vmatmul.mubr.f32.gmra.mrb[0].mxu0 %v2379
    %v2768 = vpop.f32.mrb[0].mxu0
    %v2769 = vadd.f32 %v2472, %v2768
    %v2770 = vpop.f32.mrb[0].mxu0
    %v2771 = vadd.f32 %v2476, %v2770
    %2772 = vmatprep.mubr.f32.mxu0 %v2382
    %2773 = vmatmul.mubr.f32.gmra.mrb[0].mxu0 %v2381
    %v2774 = vpop.f32.mrb[0].mxu0
    %v2775 = vadd.f32 %v2472, %v2774
    %v2776 = vpop.f32.mrb[0].mxu0
    %v2777 = vadd.f32 %v2476, %v2776
    %2778 = vmatprep.mubr.f32.mxu0 %v2384
    %2779 = vmatmul.mubr.f32.gmra.mrb[0].mxu0 %v2383
    %v2780 = vpop.f32.mrb[0].mxu0
    %v2781 = vadd.f32 %v2472, %v2780
    %v2782 = vpop.f32.mrb[0].mxu0
    %v2783 = vadd.f32 %v2476, %v2782
    %2784 = vmatprep.mubr.f32.mxu0 %v2386
    %2785 = vmatmul.mubr.f32.gmra.mrb[0].mxu0 %v2385
    %v2786 = vpop.f32.mrb[0].mxu0
    %v2787 = vadd.f32 %v2472, %v2786
    %v2788 = vpop.f32.mrb[0].mxu0
    %v2789 = vadd.f32 %v2476, %v2788
    %2790 = vmatprep.mubr.f32.mxu0 %v2388
    %2791 = vmatmul.mubr.f32.gmra.mrb[0].mxu0 %v2387
    %v2792 = vpop.f32.mrb[0].mxu0
    %v2793 = vadd.f32 %v2472, %v2792
    %v2794 = vpop.f32.mrb[0].mxu0
    %v2795 = vadd.f32 %v2476, %v2794
    %2796 = vmatprep.mubr.f32.mxu0 %v2390
    %2797 = vmatmul.mubr.f32.gmra.mrb[0].mxu0 %v2389
    %v2798 = vpop.f32.mrb[0].mxu0
    %v2799 = vadd.f32 %v2472, %v2798
    %v2800 = vpop.f32.mrb[0].mxu0
    %v2801 = vadd.f32 %v2476, %v2800
    %2802 = vmatprep.mubr.f32.mxu0 %v2392
    %2803 = vmatmul.mubr.f32.gmra.mrb[0].mxu0 %v2391
    %v2804 = vpop.f32.mrb[0].mxu0
    %v2805 = vadd.f32 %v2472, %v2804
    %v2806 = vpop.f32.mrb[0].mxu0
    %v2807 = vadd.f32 %v2476, %v2806
    %2808 = vmatprep.mubr.f32.mxu0 %v2394
    %2809 = vmatmul.mubr.f32.gmra.mrb[0].mxu0 %v2393
    %v2810 = vpop.f32.mrb[0].mxu0
    %v2811 = vadd.f32 %v2472, %v2810
    %v2812 = vpop.f32.mrb[0].mxu0
    %v2813 = vadd.f32 %v2476, %v2812
    %2814 = vmatprep.mubr.f32.mxu0 %v2396
    %2815 = vmatmul.mubr.f32.gmra.mrb[0].mxu0 %v2395
    %v2816 = vpop.f32.mrb[0].mxu0
    %v2817 = vadd.f32 %v2472, %v2816
    %v2818 = vpop.f32.mrb[0].mxu0
    %v2819 = vadd.f32 %v2476, %v2818
    %2820 = vmatprep.mubr.f32.mxu0 %v2398
    %2821 = vmatmul.mubr.f32.gmra.mrb[0].mxu0 %v2397
    %v2822 = vpop.f32.mrb[0].mxu0
    %v2823 = vadd.f32 %v2472, %v2822
    %v2824 = vpop.f32.mrb[0].mxu0
    %v2825 = vadd.f32 %v2476, %v2824
    %2826 = vmatprep.mubr.f32.mxu0 %v2400
    %2827 = vmatmul.mubr.f32.gmra.mrb[0].mxu0 %v2399
    %v2828 = vpop.f32.mrb[0].mxu0
    %v2829 = vadd.f32 %v2472, %v2828
    %v2830 = vpop.f32.mrb[0].mxu0
    %v2831 = vadd.f32 %v2476, %v2830
    %2832 = vdwg.mxu0
    %v2833 = vtanh.pop %v2739
    %v2834 = vtanh.pop %v2741
    %v2835 = vtanh.pop %v2745
    %v2836 = vtanh.pop %v2747
    %v2837 = vtanh.pop %v2751
    %v2838 = vtanh.pop %v2753
    %v2839 = vtanh.pop %v2757
    %v2840 = vtanh.pop %v2759
    %v2841 = vtanh.pop %v2763
    %v2842 = vtanh.pop %v2765
    %v2843 = vtanh.pop %v2769
    %v2844 = vtanh.pop %v2771
    %v2845 = vtanh.pop %v2775
    %v2846 = vtanh.pop %v2777
    %v2847 = vtanh.pop %v2781
    %v2848 = vtanh.pop %v2783
    %v2849 = vtanh.pop %v2787
    %v2850 = vtanh.pop %v2789
    %v2851 = vtanh.pop %v2793
    %v2852 = vtanh.pop %v2795
    %v2853 = vtanh.pop %v2799
    %v2854 = vtanh.pop %v2801
    %v2855 = vtanh.pop %v2805
    %v2856 = vtanh.pop %v2807
    %v2857 = vtanh.pop %v2811
    %v2858 = vtanh.pop %v2813
    %v2859 = vtanh.pop %v2817
    %v2860 = vtanh.pop %v2819
    %v2861 = vtanh.pop %v2823
    %v2862 = vtanh.pop %v2825
    %v2863 = vtanh.pop %v2829
    %v2864 = vtanh.pop %v2831
    %s2865 = scalar_lea.vmem [#allocation4], 2048
    %v2866 = vld [vmem:[%s2865] sm:$0xff]
    %v2867 = vld [vmem:[%s2865 + $0x8] sm:$0xff]
    %v2868 = vld [vmem:[%s2865 + $0x10] sm:$0xff]
    %v2869 = vld [vmem:[%s2865 + $0x18] sm:$0xff]
    %v2870 = vld [vmem:[%s2865 + $0x20] sm:$0xff]
    %v2871 = vld [vmem:[%s2865 + $0x28] sm:$0xff]
    %v2872 = vld [vmem:[%s2865 + $0x30] sm:$0xff]
    %v2873 = vld [vmem:[%s2865 + $0x38] sm:$0xff]
    %v2874 = vld [vmem:[%s2865 + $0x40] sm:$0xff]
    %v2875 = vld [vmem:[%s2865 + $0x48] sm:$0xff]
    %v2876 = vld [vmem:[%s2865 + $0x50] sm:$0xff]
    %v2877 = vld [vmem:[%s2865 + $0x58] sm:$0xff]
    %v2878 = vld [vmem:[%s2865 + $0x60] sm:$0xff]
    %v2879 = vld [vmem:[%s2865 + $0x68] sm:$0xff]
    %v2880 = vld [vmem:[%s2865 + $0x70] sm:$0xff]
    %v2881 = vld [vmem:[%s2865 + $0x78] sm:$0xff]
    %v2882 = vld [vmem:[%s2865 + $0x80] sm:$0xff]
    %v2883 = vld [vmem:[%s2865 + $0x88] sm:$0xff]
    %v2884 = vld [vmem:[%s2865 + $0x90] sm:$0xff]
    %v2885 = vld [vmem:[%s2865 + $0x98] sm:$0xff]
    %v2886 = vld [vmem:[%s2865 + $0xa0] sm:$0xff]
    %v2887 = vld [vmem:[%s2865 + $0xa8] sm:$0xff]
    %v2888 = vld [vmem:[%s2865 + $0xb0] sm:$0xff]
    %v2889 = vld [vmem:[%s2865 + $0xb8] sm:$0xff]
    %v2890 = vld [vmem:[%s2865 + $0xc0] sm:$0xff]
    %v2891 = vld [vmem:[%s2865 + $0xc8] sm:$0xff]
    %v2892 = vld [vmem:[%s2865 + $0xd0] sm:$0xff]
    %v2893 = vld [vmem:[%s2865 + $0xd8] sm:$0xff]
    %v2894 = vld [vmem:[%s2865 + $0xe0] sm:$0xff]
    %v2895 = vld [vmem:[%s2865 + $0xe8] sm:$0xff]
    %v2896 = vld [vmem:[%s2865 + $0xf0] sm:$0xff]
    %v2897 = vld [vmem:[%s2865 + $0xf8] sm:$0xff]
    %v2898 = vld [vmem:[%s2865 + $0x100] sm:$0xff]
    %v2899 = vld [vmem:[%s2865 + $0x108] sm:$0xff]
    %v2900 = vld [vmem:[%s2865 + $0x110] sm:$0xff]
    %v2901 = vld [vmem:[%s2865 + $0x118] sm:$0xff]
    %v2902 = vld [vmem:[%s2865 + $0x120] sm:$0xff]
    %v2903 = vld [vmem:[%s2865 + $0x128] sm:$0xff]
    %v2904 = vld [vmem:[%s2865 + $0x130] sm:$0xff]
    %v2905 = vld [vmem:[%s2865 + $0x138] sm:$0xff]
    %v2906 = vld [vmem:[%s2865 + $0x140] sm:$0xff]
    %v2907 = vld [vmem:[%s2865 + $0x148] sm:$0xff]
    %v2908 = vld [vmem:[%s2865 + $0x150] sm:$0xff]
    %v2909 = vld [vmem:[%s2865 + $0x158] sm:$0xff]
    %v2910 = vld [vmem:[%s2865 + $0x160] sm:$0xff]
    %v2911 = vld [vmem:[%s2865 + $0x168] sm:$0xff]
    %v2912 = vld [vmem:[%s2865 + $0x170] sm:$0xff]
    %v2913 = vld [vmem:[%s2865 + $0x178] sm:$0xff]
    %v2914 = vld [vmem:[%s2865 + $0x180] sm:$0xff]
    %v2915 = vld [vmem:[%s2865 + $0x188] sm:$0xff]
    %v2916 = vld [vmem:[%s2865 + $0x190] sm:$0xff]
    %v2917 = vld [vmem:[%s2865 + $0x198] sm:$0xff]
    %v2918 = vld [vmem:[%s2865 + $0x1a0] sm:$0xff]
    %v2919 = vld [vmem:[%s2865 + $0x1a8] sm:$0xff]
    %v2920 = vld [vmem:[%s2865 + $0x1b0] sm:$0xff]
    %v2921 = vld [vmem:[%s2865 + $0x1b8] sm:$0xff]
    %v2922 = vld [vmem:[%s2865 + $0x1c0] sm:$0xff]
    %v2923 = vld [vmem:[%s2865 + $0x1c8] sm:$0xff]
    %v2924 = vld [vmem:[%s2865 + $0x1d0] sm:$0xff]
    %v2925 = vld [vmem:[%s2865 + $0x1d8] sm:$0xff]
    %v2926 = vld [vmem:[%s2865 + $0x1e0] sm:$0xff]
    %v2927 = vld [vmem:[%s2865 + $0x1e8] sm:$0xff]
    %v2928 = vld [vmem:[%s2865 + $0x1f0] sm:$0xff]
    %v2929 = vld [vmem:[%s2865 + $0x1f8] sm:$0xff]
    %s2930 = scalar_lea.vmem [#allocation6], 8
    %v2931 = vld [vmem:[%s2930] sm:$0x3]
    %v2933 = vlaneseq
    %v2934 = vshrl.u32 %v2933, 7
    %v2935 = vsub.s32 0, %v2934
    %v2936 = vrot.slane %v2931, %v2935
    %v2937 = vlaneseq
    %v2938 = vshrl.u32 %v2937, 7
    %v2939 = vsub.s32 1, %v2938
    %v2940 = vrot.slane %v2931, %v2939
    %2943 = vmatprep.subr.mxu0 %v2867
    %2944 = vmatpush1.msra.mxu0 %v2866
    %2945 = vmatprep.subr.mxu0 %v2869
    %2946 = vmatpush1.msra.mxu0 %v2868
    %2947 = vmatprep.subr.mxu0 %v2871
    %2948 = vmatpush1.msra.mxu0 %v2870
    %2949 = vmatprep.subr.mxu0 %v2873
    %2950 = vmatpush1.msra.mxu0 %v2872
    %2951 = vmatprep.subr.mxu0 %v2875
    %2952 = vmatpush1.msra.mxu0 %v2874
    %2953 = vmatprep.subr.mxu0 %v2877
    %2954 = vmatpush1.msra.mxu0 %v2876
    %2955 = vmatprep.subr.mxu0 %v2879
    %2956 = vmatpush1.msra.mxu0 %v2878
    %2957 = vmatprep.subr.mxu0 %v2881
    %2958 = vmatpush1.msra.mxu0 %v2880
    %2959 = vmatprep.subr.mxu0 %v2883
    %2960 = vmatpush1.msra.mxu0 %v2882
    %2961 = vmatprep.subr.mxu0 %v2885
    %2962 = vmatpush1.msra.mxu0 %v2884
    %2963 = vmatprep.subr.mxu0 %v2887
    %2964 = vmatpush1.msra.mxu0 %v2886
    %2965 = vmatprep.subr.mxu0 %v2889
    %2966 = vmatpush1.msra.mxu0 %v2888
    %2967 = vmatprep.subr.mxu0 %v2891
    %2968 = vmatpush1.msra.mxu0 %v2890
    %2969 = vmatprep.subr.mxu0 %v2893
    %2970 = vmatpush1.msra.mxu0 %v2892
    %2971 = vmatprep.subr.mxu0 %v2895
    %2972 = vmatpush1.msra.mxu0 %v2894
    %2973 = vmatprep.subr.mxu0 %v2897
    %2974 = vmatpush1.msra.mxu0 %v2896
    %2975 = vmatprep.subr.mxu0 %v2899
    %2976 = vmatpush1.msra.mxu0 %v2898
    %2977 = vmatprep.subr.mxu0 %v2901
    %2978 = vmatpush1.msra.mxu0 %v2900
    %2979 = vmatprep.subr.mxu0 %v2903
    %2980 = vmatpush1.msra.mxu0 %v2902
    %2981 = vmatprep.subr.mxu0 %v2905
    %2982 = vmatpush1.msra.mxu0 %v2904
    %2983 = vmatprep.subr.mxu0 %v2907
    %2984 = vmatpush1.msra.mxu0 %v2906
    %2985 = vmatprep.subr.mxu0 %v2909
    %2986 = vmatpush1.msra.mxu0 %v2908
    %2987 = vmatprep.subr.mxu0 %v2911
    %2988 = vmatpush1.msra.mxu0 %v2910
    %2989 = vmatprep.subr.mxu0 %v2913
    %2990 = vmatpush1.msra.mxu0 %v2912
    %2991 = vmatprep.subr.mxu0 %v2915
    %2992 = vmatpush1.msra.mxu0 %v2914
    %2993 = vmatprep.subr.mxu0 %v2917
    %2994 = vmatpush1.msra.mxu0 %v2916
    %2995 = vmatprep.subr.mxu0 %v2919
    %2996 = vmatpush1.msra.mxu0 %v2918
    %2997 = vmatprep.subr.mxu0 %v2921
    %2998 = vmatpush1.msra.mxu0 %v2920
    %2999 = vmatprep.subr.mxu0 %v2923
    %3000 = vmatpush1.msra.mxu0 %v2922
    %3001 = vmatprep.subr.mxu0 %v2925
    %3002 = vmatpush1.msra.mxu0 %v2924
    %3003 = vmatprep.subr.mxu0 %v2927
    %3004 = vmatpush1.msra.mxu0 %v2926
    %3005 = vmatprep.subr.mxu0 %v2929
    %3006 = vmatpush1.msra.mxu0 %v2928
    %3007 = vmatprep.mubr.f32.mxu0 %v2641
    %3008 = vmatmul.mubr.f32.gmra.mrb[0].mxu0 %v2640
    %v3009 = vpop.f32.mrb[0].mxu0
    %v3010 = vadd.f32 %v2936, %v3009
    %v3011 = vpop.f32.mrb[0].mxu0
    %v3012 = vadd.f32 %v2940, %v3011
    %3013 = vmatprep.mubr.f32.mxu0 %v2643
    %3014 = vmatmul.mubr.f32.gmra.mrb[0].mxu0 %v2642
    %v3015 = vpop.f32.mrb[0].mxu0
    %v3016 = vadd.f32 %v2936, %v3015
    %v3017 = vpop.f32.mrb[0].mxu0
    %v3018 = vadd.f32 %v2940, %v3017
    %3019 = vmatprep.mubr.f32.mxu0 %v2645
    %3020 = vmatmul.mubr.f32.gmra.mrb[0].mxu0 %v2644
    %v3021 = vpop.f32.mrb[0].mxu0
    %v3022 = vadd.f32 %v2936, %v3021
    %v3023 = vpop.f32.mrb[0].mxu0
    %v3024 = vadd.f32 %v2940, %v3023
    %3025 = vmatprep.mubr.f32.mxu0 %v2647
    %3026 = vmatmul.mubr.f32.gmra.mrb[0].mxu0 %v2646
    %v3027 = vpop.f32.mrb[0].mxu0
    %v3028 = vadd.f32 %v2936, %v3027
    %v3029 = vpop.f32.mrb[0].mxu0
    %v3030 = vadd.f32 %v2940, %v3029
    %3031 = vmatprep.mubr.f32.mxu0 %v2649
    %3032 = vmatmul.mubr.f32.gmra.mrb[0].mxu0 %v2648
    %v3033 = vpop.f32.mrb[0].mxu0
    %v3034 = vadd.f32 %v2936, %v3033
    %v3035 = vpop.f32.mrb[0].mxu0
    %v3036 = vadd.f32 %v2940, %v3035
    %3037 = vmatprep.mubr.f32.mxu0 %v2651
    %3038 = vmatmul.mubr.f32.gmra.mrb[0].mxu0 %v2650
    %v3039 = vpop.f32.mrb[0].mxu0
    %v3040 = vadd.f32 %v2936, %v3039
    %v3041 = vpop.f32.mrb[0].mxu0
    %v3042 = vadd.f32 %v2940, %v3041
    %3043 = vmatprep.mubr.f32.mxu0 %v2653
    %3044 = vmatmul.mubr.f32.gmra.mrb[0].mxu0 %v2652
    %v3045 = vpop.f32.mrb[0].mxu0
    %v3046 = vadd.f32 %v2936, %v3045
    %v3047 = vpop.f32.mrb[0].mxu0
    %v3048 = vadd.f32 %v2940, %v3047
    %3049 = vmatprep.mubr.f32.mxu0 %v2655
    %3050 = vmatmul.mubr.f32.gmra.mrb[0].mxu0 %v2654
    %v3051 = vpop.f32.mrb[0].mxu0
    %v3052 = vadd.f32 %v2936, %v3051
    %v3053 = vpop.f32.mrb[0].mxu0
    %v3054 = vadd.f32 %v2940, %v3053
    %3055 = vmatprep.mubr.f32.mxu0 %v2657
    %3056 = vmatmul.mubr.f32.gmra.mrb[0].mxu0 %v2656
    %v3057 = vpop.f32.mrb[0].mxu0
    %v3058 = vadd.f32 %v2936, %v3057
    %v3059 = vpop.f32.mrb[0].mxu0
    %v3060 = vadd.f32 %v2940, %v3059
    %3061 = vmatprep.mubr.f32.mxu0 %v2659
    %3062 = vmatmul.mubr.f32.gmra.mrb[0].mxu0 %v2658
    %v3063 = vpop.f32.mrb[0].mxu0
    %v3064 = vadd.f32 %v2936, %v3063
    %v3065 = vpop.f32.mrb[0].mxu0
    %v3066 = vadd.f32 %v2940, %v3065
    %3067 = vmatprep.mubr.f32.mxu0 %v2661
    %3068 = vmatmul.mubr.f32.gmra.mrb[0].mxu0 %v2660
    %v3069 = vpop.f32.mrb[0].mxu0
    %v3070 = vadd.f32 %v2936, %v3069
    %v3071 = vpop.f32.mrb[0].mxu0
    %v3072 = vadd.f32 %v2940, %v3071
    %3073 = vmatprep.mubr.f32.mxu0 %v2663
    %3074 = vmatmul.mubr.f32.gmra.mrb[0].mxu0 %v2662
    %v3075 = vpop.f32.mrb[0].mxu0
    %v3076 = vadd.f32 %v2936, %v3075
    %v3077 = vpop.f32.mrb[0].mxu0
    %v3078 = vadd.f32 %v2940, %v3077
    %3079 = vmatprep.mubr.f32.mxu0 %v2665
    %3080 = vmatmul.mubr.f32.gmra.mrb[0].mxu0 %v2664
    %v3081 = vpop.f32.mrb[0].mxu0
    %v3082 = vadd.f32 %v2936, %v3081
    %v3083 = vpop.f32.mrb[0].mxu0
    %v3084 = vadd.f32 %v2940, %v3083
    %3085 = vmatprep.mubr.f32.mxu0 %v2667
    %3086 = vmatmul.mubr.f32.gmra.mrb[0].mxu0 %v2666
    %v3087 = vpop.f32.mrb[0].mxu0
    %v3088 = vadd.f32 %v2936, %v3087
    %v3089 = vpop.f32.mrb[0].mxu0
    %v3090 = vadd.f32 %v2940, %v3089
    %3091 = vmatprep.mubr.f32.mxu0 %v2669
    %3092 = vmatmul.mubr.f32.gmra.mrb[0].mxu0 %v2668
    %v3093 = vpop.f32.mrb[0].mxu0
    %v3094 = vadd.f32 %v2936, %v3093
    %v3095 = vpop.f32.mrb[0].mxu0
    %v3096 = vadd.f32 %v2940, %v3095
    %3097 = vmatprep.mubr.f32.mxu0 %v2671
    %3098 = vmatmul.mubr.f32.gmra.mrb[0].mxu0 %v2670
    %v3099 = vpop.f32.mrb[0].mxu0
    %v3100 = vadd.f32 %v2936, %v3099
    %v3101 = vpop.f32.mrb[0].mxu0
    %v3102 = vadd.f32 %v2940, %v3101
    %3103 = vdwg.mxu0
    %v3104 = vtanh.pop %v3010
    %v3105 = vtanh.pop %v3012
    %v3106 = vtanh.pop %v3016
    %v3107 = vtanh.pop %v3018
    %v3108 = vtanh.pop %v3022
    %v3109 = vtanh.pop %v3024
    %v3110 = vtanh.pop %v3028
    %v3111 = vtanh.pop %v3030
    %v3112 = vtanh.pop %v3034
    %v3113 = vtanh.pop %v3036
    %v3114 = vtanh.pop %v3040
    %v3115 = vtanh.pop %v3042
    %v3116 = vtanh.pop %v3046
    %v3117 = vtanh.pop %v3048
    %v3118 = vtanh.pop %v3052
    %v3119 = vtanh.pop %v3054
    %v3120 = vtanh.pop %v3058
    %v3121 = vtanh.pop %v3060
    %v3122 = vtanh.pop %v3064
    %v3123 = vtanh.pop %v3066
    %v3124 = vtanh.pop %v3070
    %v3125 = vtanh.pop %v3072
    %v3126 = vtanh.pop %v3076
    %v3127 = vtanh.pop %v3078
    %v3128 = vtanh.pop %v3082
    %v3129 = vtanh.pop %v3084
    %v3130 = vtanh.pop %v3088
    %v3131 = vtanh.pop %v3090
    %v3132 = vtanh.pop %v3094
    %v3133 = vtanh.pop %v3096
    %v3134 = vtanh.pop %v3100
    %v3135 = vtanh.pop %v3102
    %3136 = vmatprep.subr.mxu0 %v2867
    %3137 = vmatpush1.msra.mxu0 %v2866
    %3138 = vmatprep.subr.mxu0 %v2869
    %3139 = vmatpush1.msra.mxu0 %v2868
    %3140 = vmatprep.subr.mxu0 %v2871
    %3141 = vmatpush1.msra.mxu0 %v2870
    %3142 = vmatprep.subr.mxu0 %v2873
    %3143 = vmatpush1.msra.mxu0 %v2872
    %3144 = vmatprep.subr.mxu0 %v2875
    %3145 = vmatpush1.msra.mxu0 %v2874
    %3146 = vmatprep.subr.mxu0 %v2877
    %3147 = vmatpush1.msra.mxu0 %v2876
    %3148 = vmatprep.subr.mxu0 %v2879
    %3149 = vmatpush1.msra.mxu0 %v2878
    %3150 = vmatprep.subr.mxu0 %v2881
    %3151 = vmatpush1.msra.mxu0 %v2880
    %3152 = vmatprep.subr.mxu0 %v2883
    %3153 = vmatpush1.msra.mxu0 %v2882
    %3154 = vmatprep.subr.mxu0 %v2885
    %3155 = vmatpush1.msra.mxu0 %v2884
    %3156 = vmatprep.subr.mxu0 %v2887
    %3157 = vmatpush1.msra.mxu0 %v2886
    %3158 = vmatprep.subr.mxu0 %v2889
    %3159 = vmatpush1.msra.mxu0 %v2888
    %3160 = vmatprep.subr.mxu0 %v2891
    %3161 = vmatpush1.msra.mxu0 %v2890
    %3162 = vmatprep.subr.mxu0 %v2893
    %3163 = vmatpush1.msra.mxu0 %v2892
    %3164 = vmatprep.subr.mxu0 %v2895
    %3165 = vmatpush1.msra.mxu0 %v2894
    %3166 = vmatprep.subr.mxu0 %v2897
    %3167 = vmatpush1.msra.mxu0 %v2896
    %3168 = vmatprep.subr.mxu0 %v2899
    %3169 = vmatpush1.msra.mxu0 %v2898
    %3170 = vmatprep.subr.mxu0 %v2901
    %3171 = vmatpush1.msra.mxu0 %v2900
    %3172 = vmatprep.subr.mxu0 %v2903
    %3173 = vmatpush1.msra.mxu0 %v2902
    %3174 = vmatprep.subr.mxu0 %v2905
    %3175 = vmatpush1.msra.mxu0 %v2904
    %3176 = vmatprep.subr.mxu0 %v2907
    %3177 = vmatpush1.msra.mxu0 %v2906
    %3178 = vmatprep.subr.mxu0 %v2909
    %3179 = vmatpush1.msra.mxu0 %v2908
    %3180 = vmatprep.subr.mxu0 %v2911
    %3181 = vmatpush1.msra.mxu0 %v2910
    %3182 = vmatprep.subr.mxu0 %v2913
    %3183 = vmatpush1.msra.mxu0 %v2912
    %3184 = vmatprep.subr.mxu0 %v2915
    %3185 = vmatpush1.msra.mxu0 %v2914
    %3186 = vmatprep.subr.mxu0 %v2917
    %3187 = vmatpush1.msra.mxu0 %v2916
    %3188 = vmatprep.subr.mxu0 %v2919
    %3189 = vmatpush1.msra.mxu0 %v2918
    %3190 = vmatprep.subr.mxu0 %v2921
    %3191 = vmatpush1.msra.mxu0 %v2920
    %3192 = vmatprep.subr.mxu0 %v2923
    %3193 = vmatpush1.msra.mxu0 %v2922
    %3194 = vmatprep.subr.mxu0 %v2925
    %3195 = vmatpush1.msra.mxu0 %v2924
    %3196 = vmatprep.subr.mxu0 %v2927
    %3197 = vmatpush1.msra.mxu0 %v2926
    %3198 = vmatprep.subr.mxu0 %v2929
    %3199 = vmatpush1.msra.mxu0 %v2928
    %3200 = vmatprep.mubr.f32.mxu0 %v2834
    %3201 = vmatmul.mubr.f32.gmra.mrb[0].mxu0 %v2833
    %v3202 = vpop.f32.mrb[0].mxu0
    %v3203 = vadd.f32 %v2936, %v3202
    %v3204 = vpop.f32.mrb[0].mxu0
    %v3205 = vadd.f32 %v2940, %v3204
    %3206 = vmatprep.mubr.f32.mxu0 %v2836
    %3207 = vmatmul.mubr.f32.gmra.mrb[0].mxu0 %v2835
    %v3208 = vpop.f32.mrb[0].mxu0
    %v3209 = vadd.f32 %v2936, %v3208
    %v3210 = vpop.f32.mrb[0].mxu0
    %v3211 = vadd.f32 %v2940, %v3210
    %3212 = vmatprep.mubr.f32.mxu0 %v2838
    %3213 = vmatmul.mubr.f32.gmra.mrb[0].mxu0 %v2837
    %v3214 = vpop.f32.mrb[0].mxu0
    %v3215 = vadd.f32 %v2936, %v3214
    %v3216 = vpop.f32.mrb[0].mxu0
    %v3217 = vadd.f32 %v2940, %v3216
    %3218 = vmatprep.mubr.f32.mxu0 %v2840
    %3219 = vmatmul.mubr.f32.gmra.mrb[0].mxu0 %v2839
    %v3220 = vpop.f32.mrb[0].mxu0
    %v3221 = vadd.f32 %v2936, %v3220
    %v3222 = vpop.f32.mrb[0].mxu0
    %v3223 = vadd.f32 %v2940, %v3222
    %3224 = vmatprep.mubr.f32.mxu0 %v2842
    %3225 = vmatmul.mubr.f32.gmra.mrb[0].mxu0 %v2841
    %v3226 = vpop.f32.mrb[0].mxu0
    %v3227 = vadd.f32 %v2936, %v3226
    %v3228 = vpop.f32.mrb[0].mxu0
    %v3229 = vadd.f32 %v2940, %v3228
    %3230 = vmatprep.mubr.f32.mxu0 %v2844
    %3231 = vmatmul.mubr.f32.gmra.mrb[0].mxu0 %v2843
    %v3232 = vpop.f32.mrb[0].mxu0
    %v3233 = vadd.f32 %v2936, %v3232
    %v3234 = vpop.f32.mrb[0].mxu0
    %v3235 = vadd.f32 %v2940, %v3234
    %3236 = vmatprep.mubr.f32.mxu0 %v2846
    %3237 = vmatmul.mubr.f32.gmra.mrb[0].mxu0 %v2845
    %v3238 = vpop.f32.mrb[0].mxu0
    %v3239 = vadd.f32 %v2936, %v3238
    %v3240 = vpop.f32.mrb[0].mxu0
    %v3241 = vadd.f32 %v2940, %v3240
    %3242 = vmatprep.mubr.f32.mxu0 %v2848
    %3243 = vmatmul.mubr.f32.gmra.mrb[0].mxu0 %v2847
    %v3244 = vpop.f32.mrb[0].mxu0
    %v3245 = vadd.f32 %v2936, %v3244
    %v3246 = vpop.f32.mrb[0].mxu0
    %v3247 = vadd.f32 %v2940, %v3246
    %3248 = vmatprep.mubr.f32.mxu0 %v2850
    %3249 = vmatmul.mubr.f32.gmra.mrb[0].mxu0 %v2849
    %v3250 = vpop.f32.mrb[0].mxu0
    %v3251 = vadd.f32 %v2936, %v3250
    %v3252 = vpop.f32.mrb[0].mxu0
    %v3253 = vadd.f32 %v2940, %v3252
    %3254 = vmatprep.mubr.f32.mxu0 %v2852
    %3255 = vmatmul.mubr.f32.gmra.mrb[0].mxu0 %v2851
    %v3256 = vpop.f32.mrb[0].mxu0
    %v3257 = vadd.f32 %v2936, %v3256
    %v3258 = vpop.f32.mrb[0].mxu0
    %v3259 = vadd.f32 %v2940, %v3258
    %3260 = vmatprep.mubr.f32.mxu0 %v2854
    %3261 = vmatmul.mubr.f32.gmra.mrb[0].mxu0 %v2853
    %v3262 = vpop.f32.mrb[0].mxu0
    %v3263 = vadd.f32 %v2936, %v3262
    %v3264 = vpop.f32.mrb[0].mxu0
    %v3265 = vadd.f32 %v2940, %v3264
    %3266 = vmatprep.mubr.f32.mxu0 %v2856
    %3267 = vmatmul.mubr.f32.gmra.mrb[0].mxu0 %v2855
    %v3268 = vpop.f32.mrb[0].mxu0
    %v3269 = vadd.f32 %v2936, %v3268
    %v3270 = vpop.f32.mrb[0].mxu0
    %v3271 = vadd.f32 %v2940, %v3270
    %3272 = vmatprep.mubr.f32.mxu0 %v2858
    %3273 = vmatmul.mubr.f32.gmra.mrb[0].mxu0 %v2857
    %v3274 = vpop.f32.mrb[0].mxu0
    %v3275 = vadd.f32 %v2936, %v3274
    %v3276 = vpop.f32.mrb[0].mxu0
    %v3277 = vadd.f32 %v2940, %v3276
    %3278 = vmatprep.mubr.f32.mxu0 %v2860
    %3279 = vmatmul.mubr.f32.gmra.mrb[0].mxu0 %v2859
    %v3280 = vpop.f32.mrb[0].mxu0
    %v3281 = vadd.f32 %v2936, %v3280
    %v3282 = vpop.f32.mrb[0].mxu0
    %v3283 = vadd.f32 %v2940, %v3282
    %3284 = vmatprep.mubr.f32.mxu0 %v2862
    %3285 = vmatmul.mubr.f32.gmra.mrb[0].mxu0 %v2861
    %v3286 = vpop.f32.mrb[0].mxu0
    %v3287 = vadd.f32 %v2936, %v3286
    %v3288 = vpop.f32.mrb[0].mxu0
    %v3289 = vadd.f32 %v2940, %v3288
    %3290 = vmatprep.mubr.f32.mxu0 %v2864
    %3291 = vmatmul.mubr.f32.gmra.mrb[0].mxu0 %v2863
    %v3292 = vpop.f32.mrb[0].mxu0
    %v3293 = vadd.f32 %v2936, %v3292
    %v3294 = vpop.f32.mrb[0].mxu0
    %v3295 = vadd.f32 %v2940, %v3294
    %3296 = vdwg.mxu0
    %v3297 = vtanh.pop %v3203
    %v3298 = vtanh.pop %v3205
    %v3299 = vtanh.pop %v3209
    %v3300 = vtanh.pop %v3211
    %v3301 = vtanh.pop %v3215
    %v3302 = vtanh.pop %v3217
    %v3303 = vtanh.pop %v3221
    %v3304 = vtanh.pop %v3223
    %v3305 = vtanh.pop %v3227
    %v3306 = vtanh.pop %v3229
    %v3307 = vtanh.pop %v3233
    %v3308 = vtanh.pop %v3235
    %v3309 = vtanh.pop %v3239
    %v3310 = vtanh.pop %v3241
    %v3311 = vtanh.pop %v3245
    %v3312 = vtanh.pop %v3247
    %v3313 = vtanh.pop %v3251
    %v3314 = vtanh.pop %v3253
    %v3315 = vtanh.pop %v3257
    %v3316 = vtanh.pop %v3259
    %v3317 = vtanh.pop %v3263
    %v3318 = vtanh.pop %v3265
    %v3319 = vtanh.pop %v3269
    %v3320 = vtanh.pop %v3271
    %v3321 = vtanh.pop %v3275
    %v3322 = vtanh.pop %v3277
    %v3323 = vtanh.pop %v3281
    %v3324 = vtanh.pop %v3283
    %v3325 = vtanh.pop %v3287
    %v3326 = vtanh.pop %v3289
    %v3327 = vtanh.pop %v3293
    %v3328 = vtanh.pop %v3295
    %s3329 = scalar_lea.vmem [#allocation4], 2560
    %v3330 = vld [vmem:[%s3329] sm:$0xff]
    %v3331 = vld [vmem:[%s3329 + $0x8] sm:$0xff]
    %v3332 = vld [vmem:[%s3329 + $0x10] sm:$0xff]
    %v3333 = vld [vmem:[%s3329 + $0x18] sm:$0xff]
    %v3334 = vld [vmem:[%s3329 + $0x20] sm:$0xff]
    %v3335 = vld [vmem:[%s3329 + $0x28] sm:$0xff]
    %v3336 = vld [vmem:[%s3329 + $0x30] sm:$0xff]
    %v3337 = vld [vmem:[%s3329 + $0x38] sm:$0xff]
    %v3338 = vld [vmem:[%s3329 + $0x40] sm:$0xff]
    %v3339 = vld [vmem:[%s3329 + $0x48] sm:$0xff]
    %v3340 = vld [vmem:[%s3329 + $0x50] sm:$0xff]
    %v3341 = vld [vmem:[%s3329 + $0x58] sm:$0xff]
    %v3342 = vld [vmem:[%s3329 + $0x60] sm:$0xff]
    %v3343 = vld [vmem:[%s3329 + $0x68] sm:$0xff]
    %v3344 = vld [vmem:[%s3329 + $0x70] sm:$0xff]
    %v3345 = vld [vmem:[%s3329 + $0x78] sm:$0xff]
    %v3346 = vld [vmem:[%s3329 + $0x80] sm:$0xff]
    %v3347 = vld [vmem:[%s3329 + $0x88] sm:$0xff]
    %v3348 = vld [vmem:[%s3329 + $0x90] sm:$0xff]
    %v3349 = vld [vmem:[%s3329 + $0x98] sm:$0xff]
    %v3350 = vld [vmem:[%s3329 + $0xa0] sm:$0xff]
    %v3351 = vld [vmem:[%s3329 + $0xa8] sm:$0xff]
    %v3352 = vld [vmem:[%s3329 + $0xb0] sm:$0xff]
    %v3353 = vld [vmem:[%s3329 + $0xb8] sm:$0xff]
    %v3354 = vld [vmem:[%s3329 + $0xc0] sm:$0xff]
    %v3355 = vld [vmem:[%s3329 + $0xc8] sm:$0xff]
    %v3356 = vld [vmem:[%s3329 + $0xd0] sm:$0xff]
    %v3357 = vld [vmem:[%s3329 + $0xd8] sm:$0xff]
    %v3358 = vld [vmem:[%s3329 + $0xe0] sm:$0xff]
    %v3359 = vld [vmem:[%s3329 + $0xe8] sm:$0xff]
    %v3360 = vld [vmem:[%s3329 + $0xf0] sm:$0xff]
    %v3361 = vld [vmem:[%s3329 + $0xf8] sm:$0xff]
    %v3362 = vld [vmem:[%s3329 + $0x100] sm:$0xff]
    %v3363 = vld [vmem:[%s3329 + $0x108] sm:$0xff]
    %v3364 = vld [vmem:[%s3329 + $0x110] sm:$0xff]
    %v3365 = vld [vmem:[%s3329 + $0x118] sm:$0xff]
    %v3366 = vld [vmem:[%s3329 + $0x120] sm:$0xff]
    %v3367 = vld [vmem:[%s3329 + $0x128] sm:$0xff]
    %v3368 = vld [vmem:[%s3329 + $0x130] sm:$0xff]
    %v3369 = vld [vmem:[%s3329 + $0x138] sm:$0xff]
    %v3370 = vld [vmem:[%s3329 + $0x140] sm:$0xff]
    %v3371 = vld [vmem:[%s3329 + $0x148] sm:$0xff]
    %v3372 = vld [vmem:[%s3329 + $0x150] sm:$0xff]
    %v3373 = vld [vmem:[%s3329 + $0x158] sm:$0xff]
    %v3374 = vld [vmem:[%s3329 + $0x160] sm:$0xff]
    %v3375 = vld [vmem:[%s3329 + $0x168] sm:$0xff]
    %v3376 = vld [vmem:[%s3329 + $0x170] sm:$0xff]
    %v3377 = vld [vmem:[%s3329 + $0x178] sm:$0xff]
    %v3378 = vld [vmem:[%s3329 + $0x180] sm:$0xff]
    %v3379 = vld [vmem:[%s3329 + $0x188] sm:$0xff]
    %v3380 = vld [vmem:[%s3329 + $0x190] sm:$0xff]
    %v3381 = vld [vmem:[%s3329 + $0x198] sm:$0xff]
    %v3382 = vld [vmem:[%s3329 + $0x1a0] sm:$0xff]
    %v3383 = vld [vmem:[%s3329 + $0x1a8] sm:$0xff]
    %v3384 = vld [vmem:[%s3329 + $0x1b0] sm:$0xff]
    %v3385 = vld [vmem:[%s3329 + $0x1b8] sm:$0xff]
    %v3386 = vld [vmem:[%s3329 + $0x1c0] sm:$0xff]
    %v3387 = vld [vmem:[%s3329 + $0x1c8] sm:$0xff]
    %v3388 = vld [vmem:[%s3329 + $0x1d0] sm:$0xff]
    %v3389 = vld [vmem:[%s3329 + $0x1d8] sm:$0xff]
    %v3390 = vld [vmem:[%s3329 + $0x1e0] sm:$0xff]
    %v3391 = vld [vmem:[%s3329 + $0x1e8] sm:$0xff]
    %v3392 = vld [vmem:[%s3329 + $0x1f0] sm:$0xff]
    %v3393 = vld [vmem:[%s3329 + $0x1f8] sm:$0xff]
    %s3394 = scalar_lea.vmem [#allocation6], 10
    %v3395 = vld [vmem:[%s3394] sm:$0x3]
    %v3397 = vlaneseq
    %v3398 = vshrl.u32 %v3397, 7
    %v3399 = vsub.s32 0, %v3398
    %v3400 = vrot.slane %v3395, %v3399
    %v3401 = vlaneseq
    %v3402 = vshrl.u32 %v3401, 7
    %v3403 = vsub.s32 1, %v3402
    %v3404 = vrot.slane %v3395, %v3403
    %3407 = vmatprep.subr.mxu0 %v3331
    %3408 = vmatpush1.msra.mxu0 %v3330
    %3409 = vmatprep.subr.mxu0 %v3333
    %3410 = vmatpush1.msra.mxu0 %v3332
    %3411 = vmatprep.subr.mxu0 %v3335
    %3412 = vmatpush1.msra.mxu0 %v3334
    %3413 = vmatprep.subr.mxu0 %v3337
    %3414 = vmatpush1.msra.mxu0 %v3336
    %3415 = vmatprep.subr.mxu0 %v3339
    %3416 = vmatpush1.msra.mxu0 %v3338
    %3417 = vmatprep.subr.mxu0 %v3341
    %3418 = vmatpush1.msra.mxu0 %v3340
    %3419 = vmatprep.subr.mxu0 %v3343
    %3420 = vmatpush1.msra.mxu0 %v3342
    %3421 = vmatprep.subr.mxu0 %v3345
    %3422 = vmatpush1.msra.mxu0 %v3344
    %3423 = vmatprep.subr.mxu0 %v3347
    %3424 = vmatpush1.msra.mxu0 %v3346
    %3425 = vmatprep.subr.mxu0 %v3349
    %3426 = vmatpush1.msra.mxu0 %v3348
    %3427 = vmatprep.subr.mxu0 %v3351
    %3428 = vmatpush1.msra.mxu0 %v3350
    %3429 = vmatprep.subr.mxu0 %v3353
    %3430 = vmatpush1.msra.mxu0 %v3352
    %3431 = vmatprep.subr.mxu0 %v3355
    %3432 = vmatpush1.msra.mxu0 %v3354
    %3433 = vmatprep.subr.mxu0 %v3357
    %3434 = vmatpush1.msra.mxu0 %v3356
    %3435 = vmatprep.subr.mxu0 %v3359
    %3436 = vmatpush1.msra.mxu0 %v3358
    %3437 = vmatprep.subr.mxu0 %v3361
    %3438 = vmatpush1.msra.mxu0 %v3360
    %3439 = vmatprep.subr.mxu0 %v3363
    %3440 = vmatpush1.msra.mxu0 %v3362
    %3441 = vmatprep.subr.mxu0 %v3365
    %3442 = vmatpush1.msra.mxu0 %v3364
    %3443 = vmatprep.subr.mxu0 %v3367
    %3444 = vmatpush1.msra.mxu0 %v3366
    %3445 = vmatprep.subr.mxu0 %v3369
    %3446 = vmatpush1.msra.mxu0 %v3368
    %3447 = vmatprep.subr.mxu0 %v3371
    %3448 = vmatpush1.msra.mxu0 %v3370
    %3449 = vmatprep.subr.mxu0 %v3373
    %3450 = vmatpush1.msra.mxu0 %v3372
    %3451 = vmatprep.subr.mxu0 %v3375
    %3452 = vmatpush1.msra.mxu0 %v3374
    %3453 = vmatprep.subr.mxu0 %v3377
    %3454 = vmatpush1.msra.mxu0 %v3376
    %3455 = vmatprep.subr.mxu0 %v3379
    %3456 = vmatpush1.msra.mxu0 %v3378
    %3457 = vmatprep.subr.mxu0 %v3381
    %3458 = vmatpush1.msra.mxu0 %v3380
    %3459 = vmatprep.subr.mxu0 %v3383
    %3460 = vmatpush1.msra.mxu0 %v3382
    %3461 = vmatprep.subr.mxu0 %v3385
    %3462 = vmatpush1.msra.mxu0 %v3384
    %3463 = vmatprep.subr.mxu0 %v3387
    %3464 = vmatpush1.msra.mxu0 %v3386
    %3465 = vmatprep.subr.mxu0 %v3389
    %3466 = vmatpush1.msra.mxu0 %v3388
    %3467 = vmatprep.subr.mxu0 %v3391
    %3468 = vmatpush1.msra.mxu0 %v3390
    %3469 = vmatprep.subr.mxu0 %v3393
    %3470 = vmatpush1.msra.mxu0 %v3392
    %3471 = vmatprep.mubr.f32.mxu0 %v3105
    %3472 = vmatmul.mubr.f32.gmra.mrb[0].mxu0 %v3104
    %v3473 = vpop.f32.mrb[0].mxu0
    %v3474 = vadd.f32 %v3400, %v3473
    %v3475 = vpop.f32.mrb[0].mxu0
    %v3476 = vadd.f32 %v3404, %v3475
    %3477 = vmatprep.mubr.f32.mxu0 %v3107
    %3478 = vmatmul.mubr.f32.gmra.mrb[0].mxu0 %v3106
    %v3479 = vpop.f32.mrb[0].mxu0
    %v3480 = vadd.f32 %v3400, %v3479
    %v3481 = vpop.f32.mrb[0].mxu0
    %v3482 = vadd.f32 %v3404, %v3481
    %3483 = vmatprep.mubr.f32.mxu0 %v3109
    %3484 = vmatmul.mubr.f32.gmra.mrb[0].mxu0 %v3108
    %v3485 = vpop.f32.mrb[0].mxu0
    %v3486 = vadd.f32 %v3400, %v3485
    %v3487 = vpop.f32.mrb[0].mxu0
    %v3488 = vadd.f32 %v3404, %v3487
    %3489 = vmatprep.mubr.f32.mxu0 %v3111
    %3490 = vmatmul.mubr.f32.gmra.mrb[0].mxu0 %v3110
    %v3491 = vpop.f32.mrb[0].mxu0
    %v3492 = vadd.f32 %v3400, %v3491
    %v3493 = vpop.f32.mrb[0].mxu0
    %v3494 = vadd.f32 %v3404, %v3493
    %3495 = vmatprep.mubr.f32.mxu0 %v3113
    %3496 = vmatmul.mubr.f32.gmra.mrb[0].mxu0 %v3112
    %v3497 = vpop.f32.mrb[0].mxu0
    %v3498 = vadd.f32 %v3400, %v3497
    %v3499 = vpop.f32.mrb[0].mxu0
    %v3500 = vadd.f32 %v3404, %v3499
    %3501 = vmatprep.mubr.f32.mxu0 %v3115
    %3502 = vmatmul.mubr.f32.gmra.mrb[0].mxu0 %v3114
    %v3503 = vpop.f32.mrb[0].mxu0
    %v3504 = vadd.f32 %v3400, %v3503
    %v3505 = vpop.f32.mrb[0].mxu0
    %v3506 = vadd.f32 %v3404, %v3505
    %3507 = vmatprep.mubr.f32.mxu0 %v3117
    %3508 = vmatmul.mubr.f32.gmra.mrb[0].mxu0 %v3116
    %v3509 = vpop.f32.mrb[0].mxu0
    %v3510 = vadd.f32 %v3400, %v3509
    %v3511 = vpop.f32.mrb[0].mxu0
    %v3512 = vadd.f32 %v3404, %v3511
    %3513 = vmatprep.mubr.f32.mxu0 %v3119
    %3514 = vmatmul.mubr.f32.gmra.mrb[0].mxu0 %v3118
    %v3515 = vpop.f32.mrb[0].mxu0
    %v3516 = vadd.f32 %v3400, %v3515
    %v3517 = vpop.f32.mrb[0].mxu0
    %v3518 = vadd.f32 %v3404, %v3517
    %3519 = vmatprep.mubr.f32.mxu0 %v3121
    %3520 = vmatmul.mubr.f32.gmra.mrb[0].mxu0 %v3120
    %v3521 = vpop.f32.mrb[0].mxu0
    %v3522 = vadd.f32 %v3400, %v3521
    %v3523 = vpop.f32.mrb[0].mxu0
    %v3524 = vadd.f32 %v3404, %v3523
    %3525 = vmatprep.mubr.f32.mxu0 %v3123
    %3526 = vmatmul.mubr.f32.gmra.mrb[0].mxu0 %v3122
    %v3527 = vpop.f32.mrb[0].mxu0
    %v3528 = vadd.f32 %v3400, %v3527
    %v3529 = vpop.f32.mrb[0].mxu0
    %v3530 = vadd.f32 %v3404, %v3529
    %3531 = vmatprep.mubr.f32.mxu0 %v3125
    %3532 = vmatmul.mubr.f32.gmra.mrb[0].mxu0 %v3124
    %v3533 = vpop.f32.mrb[0].mxu0
    %v3534 = vadd.f32 %v3400, %v3533
    %v3535 = vpop.f32.mrb[0].mxu0
    %v3536 = vadd.f32 %v3404, %v3535
    %3537 = vmatprep.mubr.f32.mxu0 %v3127
    %3538 = vmatmul.mubr.f32.gmra.mrb[0].mxu0 %v3126
    %v3539 = vpop.f32.mrb[0].mxu0
    %v3540 = vadd.f32 %v3400, %v3539
    %v3541 = vpop.f32.mrb[0].mxu0
    %v3542 = vadd.f32 %v3404, %v3541
    %3543 = vmatprep.mubr.f32.mxu0 %v3129
    %3544 = vmatmul.mubr.f32.gmra.mrb[0].mxu0 %v3128
    %v3545 = vpop.f32.mrb[0].mxu0
    %v3546 = vadd.f32 %v3400, %v3545
    %v3547 = vpop.f32.mrb[0].mxu0
    %v3548 = vadd.f32 %v3404, %v3547
    %3549 = vmatprep.mubr.f32.mxu0 %v3131
    %3550 = vmatmul.mubr.f32.gmra.mrb[0].mxu0 %v3130
    %v3551 = vpop.f32.mrb[0].mxu0
    %v3552 = vadd.f32 %v3400, %v3551
    %v3553 = vpop.f32.mrb[0].mxu0
    %v3554 = vadd.f32 %v3404, %v3553
    %3555 = vmatprep.mubr.f32.mxu0 %v3133
    %3556 = vmatmul.mubr.f32.gmra.mrb[0].mxu0 %v3132
    %v3557 = vpop.f32.mrb[0].mxu0
    %v3558 = vadd.f32 %v3400, %v3557
    %v3559 = vpop.f32.mrb[0].mxu0
    %v3560 = vadd.f32 %v3404, %v3559
    %3561 = vmatprep.mubr.f32.mxu0 %v3135
    %3562 = vmatmul.mubr.f32.gmra.mrb[0].mxu0 %v3134
    %v3563 = vpop.f32.mrb[0].mxu0
    %v3564 = vadd.f32 %v3400, %v3563
    %v3565 = vpop.f32.mrb[0].mxu0
    %v3566 = vadd.f32 %v3404, %v3565
    %3567 = vdwg.mxu0
    %v3568 = vtanh.pop %v3474
    %v3569 = vtanh.pop %v3476
    %v3570 = vtanh.pop %v3480
    %v3571 = vtanh.pop %v3482
    %v3572 = vtanh.pop %v3486
    %v3573 = vtanh.pop %v3488
    %v3574 = vtanh.pop %v3492
    %v3575 = vtanh.pop %v3494
    %v3576 = vtanh.pop %v3498
    %v3577 = vtanh.pop %v3500
    %v3578 = vtanh.pop %v3504
    %v3579 = vtanh.pop %v3506
    %v3580 = vtanh.pop %v3510
    %v3581 = vtanh.pop %v3512
    %v3582 = vtanh.pop %v3516
    %v3583 = vtanh.pop %v3518
    %v3584 = vtanh.pop %v3522
    %v3585 = vtanh.pop %v3524
    %v3586 = vtanh.pop %v3528
    %v3587 = vtanh.pop %v3530
    %v3588 = vtanh.pop %v3534
    %v3589 = vtanh.pop %v3536
    %v3590 = vtanh.pop %v3540
    %v3591 = vtanh.pop %v3542
    %v3592 = vtanh.pop %v3546
    %v3593 = vtanh.pop %v3548
    %v3594 = vtanh.pop %v3552
    %v3595 = vtanh.pop %v3554
    %v3596 = vtanh.pop %v3558
    %v3597 = vtanh.pop %v3560
    %v3598 = vtanh.pop %v3564
    %v3599 = vtanh.pop %v3566
    %3600 = vmatprep.subr.mxu0 %v3331
    %3601 = vmatpush1.msra.mxu0 %v3330
    %3602 = vmatprep.subr.mxu0 %v3333
    %3603 = vmatpush1.msra.mxu0 %v3332
    %3604 = vmatprep.subr.mxu0 %v3335
    %3605 = vmatpush1.msra.mxu0 %v3334
    %3606 = vmatprep.subr.mxu0 %v3337
    %3607 = vmatpush1.msra.mxu0 %v3336
    %3608 = vmatprep.subr.mxu0 %v3339
    %3609 = vmatpush1.msra.mxu0 %v3338
    %3610 = vmatprep.subr.mxu0 %v3341
    %3611 = vmatpush1.msra.mxu0 %v3340
    %3612 = vmatprep.subr.mxu0 %v3343
    %3613 = vmatpush1.msra.mxu0 %v3342
    %3614 = vmatprep.subr.mxu0 %v3345
    %3615 = vmatpush1.msra.mxu0 %v3344
    %3616 = vmatprep.subr.mxu0 %v3347
    %3617 = vmatpush1.msra.mxu0 %v3346
    %3618 = vmatprep.subr.mxu0 %v3349
    %3619 = vmatpush1.msra.mxu0 %v3348
    %3620 = vmatprep.subr.mxu0 %v3351
    %3621 = vmatpush1.msra.mxu0 %v3350
    %3622 = vmatprep.subr.mxu0 %v3353
    %3623 = vmatpush1.msra.mxu0 %v3352
    %3624 = vmatprep.subr.mxu0 %v3355
    %3625 = vmatpush1.msra.mxu0 %v3354
    %3626 = vmatprep.subr.mxu0 %v3357
    %3627 = vmatpush1.msra.mxu0 %v3356
    %3628 = vmatprep.subr.mxu0 %v3359
    %3629 = vmatpush1.msra.mxu0 %v3358
    %3630 = vmatprep.subr.mxu0 %v3361
    %3631 = vmatpush1.msra.mxu0 %v3360
    %3632 = vmatprep.subr.mxu0 %v3363
    %3633 = vmatpush1.msra.mxu0 %v3362
    %3634 = vmatprep.subr.mxu0 %v3365
    %3635 = vmatpush1.msra.mxu0 %v3364
    %3636 = vmatprep.subr.mxu0 %v3367
    %3637 = vmatpush1.msra.mxu0 %v3366
    %3638 = vmatprep.subr.mxu0 %v3369
    %3639 = vmatpush1.msra.mxu0 %v3368
    %3640 = vmatprep.subr.mxu0 %v3371
    %3641 = vmatpush1.msra.mxu0 %v3370
    %3642 = vmatprep.subr.mxu0 %v3373
    %3643 = vmatpush1.msra.mxu0 %v3372
    %3644 = vmatprep.subr.mxu0 %v3375
    %3645 = vmatpush1.msra.mxu0 %v3374
    %3646 = vmatprep.subr.mxu0 %v3377
    %3647 = vmatpush1.msra.mxu0 %v3376
    %3648 = vmatprep.subr.mxu0 %v3379
    %3649 = vmatpush1.msra.mxu0 %v3378
    %3650 = vmatprep.subr.mxu0 %v3381
    %3651 = vmatpush1.msra.mxu0 %v3380
    %3652 = vmatprep.subr.mxu0 %v3383
    %3653 = vmatpush1.msra.mxu0 %v3382
    %3654 = vmatprep.subr.mxu0 %v3385
    %3655 = vmatpush1.msra.mxu0 %v3384
    %3656 = vmatprep.subr.mxu0 %v3387
    %3657 = vmatpush1.msra.mxu0 %v3386
    %3658 = vmatprep.subr.mxu0 %v3389
    %3659 = vmatpush1.msra.mxu0 %v3388
    %3660 = vmatprep.subr.mxu0 %v3391
    %3661 = vmatpush1.msra.mxu0 %v3390
    %3662 = vmatprep.subr.mxu0 %v3393
    %3663 = vmatpush1.msra.mxu0 %v3392
    %3664 = vmatprep.mubr.f32.mxu0 %v3298
    %3665 = vmatmul.mubr.f32.gmra.mrb[0].mxu0 %v3297
    %v3666 = vpop.f32.mrb[0].mxu0
    %v3667 = vadd.f32 %v3400, %v3666
    %v3668 = vpop.f32.mrb[0].mxu0
    %v3669 = vadd.f32 %v3404, %v3668
    %3670 = vmatprep.mubr.f32.mxu0 %v3300
    %3671 = vmatmul.mubr.f32.gmra.mrb[0].mxu0 %v3299
    %v3672 = vpop.f32.mrb[0].mxu0
    %v3673 = vadd.f32 %v3400, %v3672
    %v3674 = vpop.f32.mrb[0].mxu0
    %v3675 = vadd.f32 %v3404, %v3674
    %3676 = vmatprep.mubr.f32.mxu0 %v3302
    %3677 = vmatmul.mubr.f32.gmra.mrb[0].mxu0 %v3301
    %v3678 = vpop.f32.mrb[0].mxu0
    %v3679 = vadd.f32 %v3400, %v3678
    %v3680 = vpop.f32.mrb[0].mxu0
    %v3681 = vadd.f32 %v3404, %v3680
    %3682 = vmatprep.mubr.f32.mxu0 %v3304
    %3683 = vmatmul.mubr.f32.gmra.mrb[0].mxu0 %v3303
    %v3684 = vpop.f32.mrb[0].mxu0
    %v3685 = vadd.f32 %v3400, %v3684
    %v3686 = vpop.f32.mrb[0].mxu0
    %v3687 = vadd.f32 %v3404, %v3686
    %3688 = vmatprep.mubr.f32.mxu0 %v3306
    %3689 = vmatmul.mubr.f32.gmra.mrb[0].mxu0 %v3305
    %v3690 = vpop.f32.mrb[0].mxu0
    %v3691 = vadd.f32 %v3400, %v3690
    %v3692 = vpop.f32.mrb[0].mxu0
    %v3693 = vadd.f32 %v3404, %v3692
    %3694 = vmatprep.mubr.f32.mxu0 %v3308
    %3695 = vmatmul.mubr.f32.gmra.mrb[0].mxu0 %v3307
    %v3696 = vpop.f32.mrb[0].mxu0
    %v3697 = vadd.f32 %v3400, %v3696
    %v3698 = vpop.f32.mrb[0].mxu0
    %v3699 = vadd.f32 %v3404, %v3698
    %3700 = vmatprep.mubr.f32.mxu0 %v3310
    %3701 = vmatmul.mubr.f32.gmra.mrb[0].mxu0 %v3309
    %v3702 = vpop.f32.mrb[0].mxu0
    %v3703 = vadd.f32 %v3400, %v3702
    %v3704 = vpop.f32.mrb[0].mxu0
    %v3705 = vadd.f32 %v3404, %v3704
    %3706 = vmatprep.mubr.f32.mxu0 %v3312
    %3707 = vmatmul.mubr.f32.gmra.mrb[0].mxu0 %v3311
    %v3708 = vpop.f32.mrb[0].mxu0
    %v3709 = vadd.f32 %v3400, %v3708
    %v3710 = vpop.f32.mrb[0].mxu0
    %v3711 = vadd.f32 %v3404, %v3710
    %3712 = vmatprep.mubr.f32.mxu0 %v3314
    %3713 = vmatmul.mubr.f32.gmra.mrb[0].mxu0 %v3313
    %v3714 = vpop.f32.mrb[0].mxu0
    %v3715 = vadd.f32 %v3400, %v3714
    %v3716 = vpop.f32.mrb[0].mxu0
    %v3717 = vadd.f32 %v3404, %v3716
    %3718 = vmatprep.mubr.f32.mxu0 %v3316
    %3719 = vmatmul.mubr.f32.gmra.mrb[0].mxu0 %v3315
    %v3720 = vpop.f32.mrb[0].mxu0
    %v3721 = vadd.f32 %v3400, %v3720
    %v3722 = vpop.f32.mrb[0].mxu0
    %v3723 = vadd.f32 %v3404, %v3722
    %3724 = vmatprep.mubr.f32.mxu0 %v3318
    %3725 = vmatmul.mubr.f32.gmra.mrb[0].mxu0 %v3317
    %v3726 = vpop.f32.mrb[0].mxu0
    %v3727 = vadd.f32 %v3400, %v3726
    %v3728 = vpop.f32.mrb[0].mxu0
    %v3729 = vadd.f32 %v3404, %v3728
    %3730 = vmatprep.mubr.f32.mxu0 %v3320
    %3731 = vmatmul.mubr.f32.gmra.mrb[0].mxu0 %v3319
    %v3732 = vpop.f32.mrb[0].mxu0
    %v3733 = vadd.f32 %v3400, %v3732
    %v3734 = vpop.f32.mrb[0].mxu0
    %v3735 = vadd.f32 %v3404, %v3734
    %3736 = vmatprep.mubr.f32.mxu0 %v3322
    %3737 = vmatmul.mubr.f32.gmra.mrb[0].mxu0 %v3321
    %v3738 = vpop.f32.mrb[0].mxu0
    %v3739 = vadd.f32 %v3400, %v3738
    %v3740 = vpop.f32.mrb[0].mxu0
    %v3741 = vadd.f32 %v3404, %v3740
    %3742 = vmatprep.mubr.f32.mxu0 %v3324
    %3743 = vmatmul.mubr.f32.gmra.mrb[0].mxu0 %v3323
    %v3744 = vpop.f32.mrb[0].mxu0
    %v3745 = vadd.f32 %v3400, %v3744
    %v3746 = vpop.f32.mrb[0].mxu0
    %v3747 = vadd.f32 %v3404, %v3746
    %3748 = vmatprep.mubr.f32.mxu0 %v3326
    %3749 = vmatmul.mubr.f32.gmra.mrb[0].mxu0 %v3325
    %v3750 = vpop.f32.mrb[0].mxu0
    %v3751 = vadd.f32 %v3400, %v3750
    %v3752 = vpop.f32.mrb[0].mxu0
    %v3753 = vadd.f32 %v3404, %v3752
    %3754 = vmatprep.mubr.f32.mxu0 %v3328
    %3755 = vmatmul.mubr.f32.gmra.mrb[0].mxu0 %v3327
    %v3756 = vpop.f32.mrb[0].mxu0
    %v3757 = vadd.f32 %v3400, %v3756
    %v3758 = vpop.f32.mrb[0].mxu0
    %v3759 = vadd.f32 %v3404, %v3758
    %3760 = vdwg.mxu0
    %v3761 = vtanh.pop %v3667
    %v3762 = vtanh.pop %v3669
    %v3763 = vtanh.pop %v3673
    %v3764 = vtanh.pop %v3675
    %v3765 = vtanh.pop %v3679
    %v3766 = vtanh.pop %v3681
    %v3767 = vtanh.pop %v3685
    %v3768 = vtanh.pop %v3687
    %v3769 = vtanh.pop %v3691
    %v3770 = vtanh.pop %v3693
    %v3771 = vtanh.pop %v3697
    %v3772 = vtanh.pop %v3699
    %v3773 = vtanh.pop %v3703
    %v3774 = vtanh.pop %v3705
    %v3775 = vtanh.pop %v3709
    %v3776 = vtanh.pop %v3711
    %v3777 = vtanh.pop %v3715
    %v3778 = vtanh.pop %v3717
    %v3779 = vtanh.pop %v3721
    %v3780 = vtanh.pop %v3723
    %v3781 = vtanh.pop %v3727
    %v3782 = vtanh.pop %v3729
    %v3783 = vtanh.pop %v3733
    %v3784 = vtanh.pop %v3735
    %v3785 = vtanh.pop %v3739
    %v3786 = vtanh.pop %v3741
    %v3787 = vtanh.pop %v3745
    %v3788 = vtanh.pop %v3747
    %v3789 = vtanh.pop %v3751
    %v3790 = vtanh.pop %v3753
    %v3791 = vtanh.pop %v3757
    %v3792 = vtanh.pop %v3759
    %s3793 = scalar_lea.vmem [#allocation4], 3072
    %v3794 = vld [vmem:[%s3793] sm:$0xff]
    %v3795 = vld [vmem:[%s3793 + $0x8] sm:$0xff]
    %v3796 = vld [vmem:[%s3793 + $0x10] sm:$0xff]
    %v3797 = vld [vmem:[%s3793 + $0x18] sm:$0xff]
    %v3798 = vld [vmem:[%s3793 + $0x20] sm:$0xff]
    %v3799 = vld [vmem:[%s3793 + $0x28] sm:$0xff]
    %v3800 = vld [vmem:[%s3793 + $0x30] sm:$0xff]
    %v3801 = vld [vmem:[%s3793 + $0x38] sm:$0xff]
    %v3802 = vld [vmem:[%s3793 + $0x40] sm:$0xff]
    %v3803 = vld [vmem:[%s3793 + $0x48] sm:$0xff]
    %v3804 = vld [vmem:[%s3793 + $0x50] sm:$0xff]
    %v3805 = vld [vmem:[%s3793 + $0x58] sm:$0xff]
    %v3806 = vld [vmem:[%s3793 + $0x60] sm:$0xff]
    %v3807 = vld [vmem:[%s3793 + $0x68] sm:$0xff]
    %v3808 = vld [vmem:[%s3793 + $0x70] sm:$0xff]
    %v3809 = vld [vmem:[%s3793 + $0x78] sm:$0xff]
    %v3810 = vld [vmem:[%s3793 + $0x80] sm:$0xff]
    %v3811 = vld [vmem:[%s3793 + $0x88] sm:$0xff]
    %v3812 = vld [vmem:[%s3793 + $0x90] sm:$0xff]
    %v3813 = vld [vmem:[%s3793 + $0x98] sm:$0xff]
    %v3814 = vld [vmem:[%s3793 + $0xa0] sm:$0xff]
    %v3815 = vld [vmem:[%s3793 + $0xa8] sm:$0xff]
    %v3816 = vld [vmem:[%s3793 + $0xb0] sm:$0xff]
    %v3817 = vld [vmem:[%s3793 + $0xb8] sm:$0xff]
    %v3818 = vld [vmem:[%s3793 + $0xc0] sm:$0xff]
    %v3819 = vld [vmem:[%s3793 + $0xc8] sm:$0xff]
    %v3820 = vld [vmem:[%s3793 + $0xd0] sm:$0xff]
    %v3821 = vld [vmem:[%s3793 + $0xd8] sm:$0xff]
    %v3822 = vld [vmem:[%s3793 + $0xe0] sm:$0xff]
    %v3823 = vld [vmem:[%s3793 + $0xe8] sm:$0xff]
    %v3824 = vld [vmem:[%s3793 + $0xf0] sm:$0xff]
    %v3825 = vld [vmem:[%s3793 + $0xf8] sm:$0xff]
    %v3826 = vld [vmem:[%s3793 + $0x100] sm:$0xff]
    %v3827 = vld [vmem:[%s3793 + $0x108] sm:$0xff]
    %v3828 = vld [vmem:[%s3793 + $0x110] sm:$0xff]
    %v3829 = vld [vmem:[%s3793 + $0x118] sm:$0xff]
    %v3830 = vld [vmem:[%s3793 + $0x120] sm:$0xff]
    %v3831 = vld [vmem:[%s3793 + $0x128] sm:$0xff]
    %v3832 = vld [vmem:[%s3793 + $0x130] sm:$0xff]
    %v3833 = vld [vmem:[%s3793 + $0x138] sm:$0xff]
    %v3834 = vld [vmem:[%s3793 + $0x140] sm:$0xff]
    %v3835 = vld [vmem:[%s3793 + $0x148] sm:$0xff]
    %v3836 = vld [vmem:[%s3793 + $0x150] sm:$0xff]
    %v3837 = vld [vmem:[%s3793 + $0x158] sm:$0xff]
    %v3838 = vld [vmem:[%s3793 + $0x160] sm:$0xff]
    %v3839 = vld [vmem:[%s3793 + $0x168] sm:$0xff]
    %v3840 = vld [vmem:[%s3793 + $0x170] sm:$0xff]
    %v3841 = vld [vmem:[%s3793 + $0x178] sm:$0xff]
    %v3842 = vld [vmem:[%s3793 + $0x180] sm:$0xff]
    %v3843 = vld [vmem:[%s3793 + $0x188] sm:$0xff]
    %v3844 = vld [vmem:[%s3793 + $0x190] sm:$0xff]
    %v3845 = vld [vmem:[%s3793 + $0x198] sm:$0xff]
    %v3846 = vld [vmem:[%s3793 + $0x1a0] sm:$0xff]
    %v3847 = vld [vmem:[%s3793 + $0x1a8] sm:$0xff]
    %v3848 = vld [vmem:[%s3793 + $0x1b0] sm:$0xff]
    %v3849 = vld [vmem:[%s3793 + $0x1b8] sm:$0xff]
    %v3850 = vld [vmem:[%s3793 + $0x1c0] sm:$0xff]
    %v3851 = vld [vmem:[%s3793 + $0x1c8] sm:$0xff]
    %v3852 = vld [vmem:[%s3793 + $0x1d0] sm:$0xff]
    %v3853 = vld [vmem:[%s3793 + $0x1d8] sm:$0xff]
    %v3854 = vld [vmem:[%s3793 + $0x1e0] sm:$0xff]
    %v3855 = vld [vmem:[%s3793 + $0x1e8] sm:$0xff]
    %v3856 = vld [vmem:[%s3793 + $0x1f0] sm:$0xff]
    %v3857 = vld [vmem:[%s3793 + $0x1f8] sm:$0xff]
    %s3858 = scalar_lea.vmem [#allocation6], 12
    %v3859 = vld [vmem:[%s3858] sm:$0x3]
    %v3861 = vlaneseq
    %v3862 = vshrl.u32 %v3861, 7
    %v3863 = vsub.s32 0, %v3862
    %v3864 = vrot.slane %v3859, %v3863
    %v3865 = vlaneseq
    %v3866 = vshrl.u32 %v3865, 7
    %v3867 = vsub.s32 1, %v3866
    %v3868 = vrot.slane %v3859, %v3867
    %3871 = vmatprep.subr.mxu0 %v3795
    %3872 = vmatpush1.msra.mxu0 %v3794
    %3873 = vmatprep.subr.mxu0 %v3797
    %3874 = vmatpush1.msra.mxu0 %v3796
    %3875 = vmatprep.subr.mxu0 %v3799
    %3876 = vmatpush1.msra.mxu0 %v3798
    %3877 = vmatprep.subr.mxu0 %v3801
    %3878 = vmatpush1.msra.mxu0 %v3800
    %3879 = vmatprep.subr.mxu0 %v3803
    %3880 = vmatpush1.msra.mxu0 %v3802
    %3881 = vmatprep.subr.mxu0 %v3805
    %3882 = vmatpush1.msra.mxu0 %v3804
    %3883 = vmatprep.subr.mxu0 %v3807
    %3884 = vmatpush1.msra.mxu0 %v3806
    %3885 = vmatprep.subr.mxu0 %v3809
    %3886 = vmatpush1.msra.mxu0 %v3808
    %3887 = vmatprep.subr.mxu0 %v3811
    %3888 = vmatpush1.msra.mxu0 %v3810
    %3889 = vmatprep.subr.mxu0 %v3813
    %3890 = vmatpush1.msra.mxu0 %v3812
    %3891 = vmatprep.subr.mxu0 %v3815
    %3892 = vmatpush1.msra.mxu0 %v3814
    %3893 = vmatprep.subr.mxu0 %v3817
    %3894 = vmatpush1.msra.mxu0 %v3816
    %3895 = vmatprep.subr.mxu0 %v3819
    %3896 = vmatpush1.msra.mxu0 %v3818
    %3897 = vmatprep.subr.mxu0 %v3821
    %3898 = vmatpush1.msra.mxu0 %v3820
    %3899 = vmatprep.subr.mxu0 %v3823
    %3900 = vmatpush1.msra.mxu0 %v3822
    %3901 = vmatprep.subr.mxu0 %v3825
    %3902 = vmatpush1.msra.mxu0 %v3824
    %3903 = vmatprep.subr.mxu0 %v3827
    %3904 = vmatpush1.msra.mxu0 %v3826
    %3905 = vmatprep.subr.mxu0 %v3829
    %3906 = vmatpush1.msra.mxu0 %v3828
    %3907 = vmatprep.subr.mxu0 %v3831
    %3908 = vmatpush1.msra.mxu0 %v3830
    %3909 = vmatprep.subr.mxu0 %v3833
    %3910 = vmatpush1.msra.mxu0 %v3832
    %3911 = vmatprep.subr.mxu0 %v3835
    %3912 = vmatpush1.msra.mxu0 %v3834
    %3913 = vmatprep.subr.mxu0 %v3837
    %3914 = vmatpush1.msra.mxu0 %v3836
    %3915 = vmatprep.subr.mxu0 %v3839
    %3916 = vmatpush1.msra.mxu0 %v3838
    %3917 = vmatprep.subr.mxu0 %v3841
    %3918 = vmatpush1.msra.mxu0 %v3840
    %3919 = vmatprep.subr.mxu0 %v3843
    %3920 = vmatpush1.msra.mxu0 %v3842
    %3921 = vmatprep.subr.mxu0 %v3845
    %3922 = vmatpush1.msra.mxu0 %v3844
    %3923 = vmatprep.subr.mxu0 %v3847
    %3924 = vmatpush1.msra.mxu0 %v3846
    %3925 = vmatprep.subr.mxu0 %v3849
    %3926 = vmatpush1.msra.mxu0 %v3848
    %3927 = vmatprep.subr.mxu0 %v3851
    %3928 = vmatpush1.msra.mxu0 %v3850
    %3929 = vmatprep.subr.mxu0 %v3853
    %3930 = vmatpush1.msra.mxu0 %v3852
    %3931 = vmatprep.subr.mxu0 %v3855
    %3932 = vmatpush1.msra.mxu0 %v3854
    %3933 = vmatprep.subr.mxu0 %v3857
    %3934 = vmatpush1.msra.mxu0 %v3856
    %3935 = vmatprep.mubr.f32.mxu0 %v3569
    %3936 = vmatmul.mubr.f32.gmra.mrb[0].mxu0 %v3568
    %v3937 = vpop.f32.mrb[0].mxu0
    %v3938 = vadd.f32 %v3864, %v3937
    %v3939 = vpop.f32.mrb[0].mxu0
    %v3940 = vadd.f32 %v3868, %v3939
    %3941 = vmatprep.mubr.f32.mxu0 %v3571
    %3942 = vmatmul.mubr.f32.gmra.mrb[0].mxu0 %v3570
    %v3943 = vpop.f32.mrb[0].mxu0
    %v3944 = vadd.f32 %v3864, %v3943
    %v3945 = vpop.f32.mrb[0].mxu0
    %v3946 = vadd.f32 %v3868, %v3945
    %3947 = vmatprep.mubr.f32.mxu0 %v3573
    %3948 = vmatmul.mubr.f32.gmra.mrb[0].mxu0 %v3572
    %v3949 = vpop.f32.mrb[0].mxu0
    %v3950 = vadd.f32 %v3864, %v3949
    %v3951 = vpop.f32.mrb[0].mxu0
    %v3952 = vadd.f32 %v3868, %v3951
    %3953 = vmatprep.mubr.f32.mxu0 %v3575
    %3954 = vmatmul.mubr.f32.gmra.mrb[0].mxu0 %v3574
    %v3955 = vpop.f32.mrb[0].mxu0
    %v3956 = vadd.f32 %v3864, %v3955
    %v3957 = vpop.f32.mrb[0].mxu0
    %v3958 = vadd.f32 %v3868, %v3957
    %3959 = vmatprep.mubr.f32.mxu0 %v3577
    %3960 = vmatmul.mubr.f32.gmra.mrb[0].mxu0 %v3576
    %v3961 = vpop.f32.mrb[0].mxu0
    %v3962 = vadd.f32 %v3864, %v3961
    %v3963 = vpop.f32.mrb[0].mxu0
    %v3964 = vadd.f32 %v3868, %v3963
    %3965 = vmatprep.mubr.f32.mxu0 %v3579
    %3966 = vmatmul.mubr.f32.gmra.mrb[0].mxu0 %v3578
    %v3967 = vpop.f32.mrb[0].mxu0
    %v3968 = vadd.f32 %v3864, %v3967
    %v3969 = vpop.f32.mrb[0].mxu0
    %v3970 = vadd.f32 %v3868, %v3969
    %3971 = vmatprep.mubr.f32.mxu0 %v3581
    %3972 = vmatmul.mubr.f32.gmra.mrb[0].mxu0 %v3580
    %v3973 = vpop.f32.mrb[0].mxu0
    %v3974 = vadd.f32 %v3864, %v3973
    %v3975 = vpop.f32.mrb[0].mxu0
    %v3976 = vadd.f32 %v3868, %v3975
    %3977 = vmatprep.mubr.f32.mxu0 %v3583
    %3978 = vmatmul.mubr.f32.gmra.mrb[0].mxu0 %v3582
    %v3979 = vpop.f32.mrb[0].mxu0
    %v3980 = vadd.f32 %v3864, %v3979
    %v3981 = vpop.f32.mrb[0].mxu0
    %v3982 = vadd.f32 %v3868, %v3981
    %3983 = vmatprep.mubr.f32.mxu0 %v3585
    %3984 = vmatmul.mubr.f32.gmra.mrb[0].mxu0 %v3584
    %v3985 = vpop.f32.mrb[0].mxu0
    %v3986 = vadd.f32 %v3864, %v3985
    %v3987 = vpop.f32.mrb[0].mxu0
    %v3988 = vadd.f32 %v3868, %v3987
    %3989 = vmatprep.mubr.f32.mxu0 %v3587
    %3990 = vmatmul.mubr.f32.gmra.mrb[0].mxu0 %v3586
    %v3991 = vpop.f32.mrb[0].mxu0
    %v3992 = vadd.f32 %v3864, %v3991
    %v3993 = vpop.f32.mrb[0].mxu0
    %v3994 = vadd.f32 %v3868, %v3993
    %3995 = vmatprep.mubr.f32.mxu0 %v3589
    %3996 = vmatmul.mubr.f32.gmra.mrb[0].mxu0 %v3588
    %v3997 = vpop.f32.mrb[0].mxu0
    %v3998 = vadd.f32 %v3864, %v3997
    %v3999 = vpop.f32.mrb[0].mxu0
    %v4000 = vadd.f32 %v3868, %v3999
    %4001 = vmatprep.mubr.f32.mxu0 %v3591
    %4002 = vmatmul.mubr.f32.gmra.mrb[0].mxu0 %v3590
    %v4003 = vpop.f32.mrb[0].mxu0
    %v4004 = vadd.f32 %v3864, %v4003
    %v4005 = vpop.f32.mrb[0].mxu0
    %v4006 = vadd.f32 %v3868, %v4005
    %4007 = vmatprep.mubr.f32.mxu0 %v3593
    %4008 = vmatmul.mubr.f32.gmra.mrb[0].mxu0 %v3592
    %v4009 = vpop.f32.mrb[0].mxu0
    %v4010 = vadd.f32 %v3864, %v4009
    %v4011 = vpop.f32.mrb[0].mxu0
    %v4012 = vadd.f32 %v3868, %v4011
    %4013 = vmatprep.mubr.f32.mxu0 %v3595
    %4014 = vmatmul.mubr.f32.gmra.mrb[0].mxu0 %v3594
    %v4015 = vpop.f32.mrb[0].mxu0
    %v4016 = vadd.f32 %v3864, %v4015
    %v4017 = vpop.f32.mrb[0].mxu0
    %v4018 = vadd.f32 %v3868, %v4017
    %4019 = vmatprep.mubr.f32.mxu0 %v3597
    %4020 = vmatmul.mubr.f32.gmra.mrb[0].mxu0 %v3596
    %v4021 = vpop.f32.mrb[0].mxu0
    %v4022 = vadd.f32 %v3864, %v4021
    %v4023 = vpop.f32.mrb[0].mxu0
    %v4024 = vadd.f32 %v3868, %v4023
    %4025 = vmatprep.mubr.f32.mxu0 %v3599
    %4026 = vmatmul.mubr.f32.gmra.mrb[0].mxu0 %v3598
    %v4027 = vpop.f32.mrb[0].mxu0
    %v4028 = vadd.f32 %v3864, %v4027
    %v4029 = vpop.f32.mrb[0].mxu0
    %v4030 = vadd.f32 %v3868, %v4029
    %4031 = vdwg.mxu0
    %v4032 = vtanh.pop %v3938
    %v4033 = vtanh.pop %v3940
    %v4034 = vtanh.pop %v3944
    %v4035 = vtanh.pop %v3946
    %v4036 = vtanh.pop %v3950
    %v4037 = vtanh.pop %v3952
    %v4038 = vtanh.pop %v3956
    %v4039 = vtanh.pop %v3958
    %v4040 = vtanh.pop %v3962
    %v4041 = vtanh.pop %v3964
    %v4042 = vtanh.pop %v3968
    %v4043 = vtanh.pop %v3970
    %v4044 = vtanh.pop %v3974
    %v4045 = vtanh.pop %v3976
    %v4046 = vtanh.pop %v3980
    %v4047 = vtanh.pop %v3982
    %v4048 = vtanh.pop %v3986
    %v4049 = vtanh.pop %v3988
    %v4050 = vtanh.pop %v3992
    %v4051 = vtanh.pop %v3994
    %v4052 = vtanh.pop %v3998
    %v4053 = vtanh.pop %v4000
    %v4054 = vtanh.pop %v4004
    %v4055 = vtanh.pop %v4006
    %v4056 = vtanh.pop %v4010
    %v4057 = vtanh.pop %v4012
    %v4058 = vtanh.pop %v4016
    %v4059 = vtanh.pop %v4018
    %v4060 = vtanh.pop %v4022
    %v4061 = vtanh.pop %v4024
    %v4062 = vtanh.pop %v4028
    %v4063 = vtanh.pop %v4030
    %4064 = vmatprep.subr.mxu0 %v3795
    %4065 = vmatpush1.msra.mxu0 %v3794
    %4066 = vmatprep.subr.mxu0 %v3797
    %4067 = vmatpush1.msra.mxu0 %v3796
    %4068 = vmatprep.subr.mxu0 %v3799
    %4069 = vmatpush1.msra.mxu0 %v3798
    %4070 = vmatprep.subr.mxu0 %v3801
    %4071 = vmatpush1.msra.mxu0 %v3800
    %4072 = vmatprep.subr.mxu0 %v3803
    %4073 = vmatpush1.msra.mxu0 %v3802
    %4074 = vmatprep.subr.mxu0 %v3805
    %4075 = vmatpush1.msra.mxu0 %v3804
    %4076 = vmatprep.subr.mxu0 %v3807
    %4077 = vmatpush1.msra.mxu0 %v3806
    %4078 = vmatprep.subr.mxu0 %v3809
    %4079 = vmatpush1.msra.mxu0 %v3808
    %4080 = vmatprep.subr.mxu0 %v3811
    %4081 = vmatpush1.msra.mxu0 %v3810
    %4082 = vmatprep.subr.mxu0 %v3813
    %4083 = vmatpush1.msra.mxu0 %v3812
    %4084 = vmatprep.subr.mxu0 %v3815
    %4085 = vmatpush1.msra.mxu0 %v3814
    %4086 = vmatprep.subr.mxu0 %v3817
    %4087 = vmatpush1.msra.mxu0 %v3816
    %4088 = vmatprep.subr.mxu0 %v3819
    %4089 = vmatpush1.msra.mxu0 %v3818
    %4090 = vmatprep.subr.mxu0 %v3821
    %4091 = vmatpush1.msra.mxu0 %v3820
    %4092 = vmatprep.subr.mxu0 %v3823
    %4093 = vmatpush1.msra.mxu0 %v3822
    %4094 = vmatprep.subr.mxu0 %v3825
    %4095 = vmatpush1.msra.mxu0 %v3824
    %4096 = vmatprep.subr.mxu0 %v3827
    %4097 = vmatpush1.msra.mxu0 %v3826
    %4098 = vmatprep.subr.mxu0 %v3829
    %4099 = vmatpush1.msra.mxu0 %v3828
    %4100 = vmatprep.subr.mxu0 %v3831
    %4101 = vmatpush1.msra.mxu0 %v3830
    %4102 = vmatprep.subr.mxu0 %v3833
    %4103 = vmatpush1.msra.mxu0 %v3832
    %4104 = vmatprep.subr.mxu0 %v3835
    %4105 = vmatpush1.msra.mxu0 %v3834
    %4106 = vmatprep.subr.mxu0 %v3837
    %4107 = vmatpush1.msra.mxu0 %v3836
    %4108 = vmatprep.subr.mxu0 %v3839
    %4109 = vmatpush1.msra.mxu0 %v3838
    %4110 = vmatprep.subr.mxu0 %v3841
    %4111 = vmatpush1.msra.mxu0 %v3840
    %4112 = vmatprep.subr.mxu0 %v3843
    %4113 = vmatpush1.msra.mxu0 %v3842
    %4114 = vmatprep.subr.mxu0 %v3845
    %4115 = vmatpush1.msra.mxu0 %v3844
    %4116 = vmatprep.subr.mxu0 %v3847
    %4117 = vmatpush1.msra.mxu0 %v3846
    %4118 = vmatprep.subr.mxu0 %v3849
    %4119 = vmatpush1.msra.mxu0 %v3848
    %4120 = vmatprep.subr.mxu0 %v3851
    %4121 = vmatpush1.msra.mxu0 %v3850
    %4122 = vmatprep.subr.mxu0 %v3853
    %4123 = vmatpush1.msra.mxu0 %v3852
    %4124 = vmatprep.subr.mxu0 %v3855
    %4125 = vmatpush1.msra.mxu0 %v3854
    %4126 = vmatprep.subr.mxu0 %v3857
    %4127 = vmatpush1.msra.mxu0 %v3856
    %4128 = vmatprep.mubr.f32.mxu0 %v3762
    %4129 = vmatmul.mubr.f32.gmra.mrb[0].mxu0 %v3761
    %v4130 = vpop.f32.mrb[0].mxu0
    %v4131 = vadd.f32 %v3864, %v4130
    %v4132 = vpop.f32.mrb[0].mxu0
    %v4133 = vadd.f32 %v3868, %v4132
    %4134 = vmatprep.mubr.f32.mxu0 %v3764
    %4135 = vmatmul.mubr.f32.gmra.mrb[0].mxu0 %v3763
    %v4136 = vpop.f32.mrb[0].mxu0
    %v4137 = vadd.f32 %v3864, %v4136
    %v4138 = vpop.f32.mrb[0].mxu0
    %v4139 = vadd.f32 %v3868, %v4138
    %4140 = vmatprep.mubr.f32.mxu0 %v3766
    %4141 = vmatmul.mubr.f32.gmra.mrb[0].mxu0 %v3765
    %v4142 = vpop.f32.mrb[0].mxu0
    %v4143 = vadd.f32 %v3864, %v4142
    %v4144 = vpop.f32.mrb[0].mxu0
    %v4145 = vadd.f32 %v3868, %v4144
    %4146 = vmatprep.mubr.f32.mxu0 %v3768
    %4147 = vmatmul.mubr.f32.gmra.mrb[0].mxu0 %v3767
    %v4148 = vpop.f32.mrb[0].mxu0
    %v4149 = vadd.f32 %v3864, %v4148
    %v4150 = vpop.f32.mrb[0].mxu0
    %v4151 = vadd.f32 %v3868, %v4150
    %4152 = vmatprep.mubr.f32.mxu0 %v3770
    %4153 = vmatmul.mubr.f32.gmra.mrb[0].mxu0 %v3769
    %v4154 = vpop.f32.mrb[0].mxu0
    %v4155 = vadd.f32 %v3864, %v4154
    %v4156 = vpop.f32.mrb[0].mxu0
    %v4157 = vadd.f32 %v3868, %v4156
    %4158 = vmatprep.mubr.f32.mxu0 %v3772
    %4159 = vmatmul.mubr.f32.gmra.mrb[0].mxu0 %v3771
    %v4160 = vpop.f32.mrb[0].mxu0
    %v4161 = vadd.f32 %v3864, %v4160
    %v4162 = vpop.f32.mrb[0].mxu0
    %v4163 = vadd.f32 %v3868, %v4162
    %4164 = vmatprep.mubr.f32.mxu0 %v3774
    %4165 = vmatmul.mubr.f32.gmra.mrb[0].mxu0 %v3773
    %v4166 = vpop.f32.mrb[0].mxu0
    %v4167 = vadd.f32 %v3864, %v4166
    %v4168 = vpop.f32.mrb[0].mxu0
    %v4169 = vadd.f32 %v3868, %v4168
    %4170 = vmatprep.mubr.f32.mxu0 %v3776
    %4171 = vmatmul.mubr.f32.gmra.mrb[0].mxu0 %v3775
    %v4172 = vpop.f32.mrb[0].mxu0
    %v4173 = vadd.f32 %v3864, %v4172
    %v4174 = vpop.f32.mrb[0].mxu0
    %v4175 = vadd.f32 %v3868, %v4174
    %4176 = vmatprep.mubr.f32.mxu0 %v3778
    %4177 = vmatmul.mubr.f32.gmra.mrb[0].mxu0 %v3777
    %v4178 = vpop.f32.mrb[0].mxu0
    %v4179 = vadd.f32 %v3864, %v4178
    %v4180 = vpop.f32.mrb[0].mxu0
    %v4181 = vadd.f32 %v3868, %v4180
    %4182 = vmatprep.mubr.f32.mxu0 %v3780
    %4183 = vmatmul.mubr.f32.gmra.mrb[0].mxu0 %v3779
    %v4184 = vpop.f32.mrb[0].mxu0
    %v4185 = vadd.f32 %v3864, %v4184
    %v4186 = vpop.f32.mrb[0].mxu0
    %v4187 = vadd.f32 %v3868, %v4186
    %4188 = vmatprep.mubr.f32.mxu0 %v3782
    %4189 = vmatmul.mubr.f32.gmra.mrb[0].mxu0 %v3781
    %v4190 = vpop.f32.mrb[0].mxu0
    %v4191 = vadd.f32 %v3864, %v4190
    %v4192 = vpop.f32.mrb[0].mxu0
    %v4193 = vadd.f32 %v3868, %v4192
    %4194 = vmatprep.mubr.f32.mxu0 %v3784
    %4195 = vmatmul.mubr.f32.gmra.mrb[0].mxu0 %v3783
    %v4196 = vpop.f32.mrb[0].mxu0
    %v4197 = vadd.f32 %v3864, %v4196
    %v4198 = vpop.f32.mrb[0].mxu0
    %v4199 = vadd.f32 %v3868, %v4198
    %4200 = vmatprep.mubr.f32.mxu0 %v3786
    %4201 = vmatmul.mubr.f32.gmra.mrb[0].mxu0 %v3785
    %v4202 = vpop.f32.mrb[0].mxu0
    %v4203 = vadd.f32 %v3864, %v4202
    %v4204 = vpop.f32.mrb[0].mxu0
    %v4205 = vadd.f32 %v3868, %v4204
    %4206 = vmatprep.mubr.f32.mxu0 %v3788
    %4207 = vmatmul.mubr.f32.gmra.mrb[0].mxu0 %v3787
    %v4208 = vpop.f32.mrb[0].mxu0
    %v4209 = vadd.f32 %v3864, %v4208
    %v4210 = vpop.f32.mrb[0].mxu0
    %v4211 = vadd.f32 %v3868, %v4210
    %4212 = vmatprep.mubr.f32.mxu0 %v3790
    %4213 = vmatmul.mubr.f32.gmra.mrb[0].mxu0 %v3789
    %v4214 = vpop.f32.mrb[0].mxu0
    %v4215 = vadd.f32 %v3864, %v4214
    %v4216 = vpop.f32.mrb[0].mxu0
    %v4217 = vadd.f32 %v3868, %v4216
    %4218 = vmatprep.mubr.f32.mxu0 %v3792
    %4219 = vmatmul.mubr.f32.gmra.mrb[0].mxu0 %v3791
    %v4220 = vpop.f32.mrb[0].mxu0
    %v4221 = vadd.f32 %v3864, %v4220
    %v4222 = vpop.f32.mrb[0].mxu0
    %v4223 = vadd.f32 %v3868, %v4222
    %4224 = vdwg.mxu0
    %v4225 = vtanh.pop %v4131
    %v4226 = vtanh.pop %v4133
    %v4227 = vtanh.pop %v4137
    %v4228 = vtanh.pop %v4139
    %v4229 = vtanh.pop %v4143
    %v4230 = vtanh.pop %v4145
    %v4231 = vtanh.pop %v4149
    %v4232 = vtanh.pop %v4151
    %v4233 = vtanh.pop %v4155
    %v4234 = vtanh.pop %v4157
    %v4235 = vtanh.pop %v4161
    %v4236 = vtanh.pop %v4163
    %v4237 = vtanh.pop %v4167
    %v4238 = vtanh.pop %v4169
    %v4239 = vtanh.pop %v4173
    %v4240 = vtanh.pop %v4175
    %v4241 = vtanh.pop %v4179
    %v4242 = vtanh.pop %v4181
    %v4243 = vtanh.pop %v4185
    %v4244 = vtanh.pop %v4187
    %v4245 = vtanh.pop %v4191
    %v4246 = vtanh.pop %v4193
    %v4247 = vtanh.pop %v4197
    %v4248 = vtanh.pop %v4199
    %v4249 = vtanh.pop %v4203
    %v4250 = vtanh.pop %v4205
    %v4251 = vtanh.pop %v4209
    %v4252 = vtanh.pop %v4211
    %v4253 = vtanh.pop %v4215
    %v4254 = vtanh.pop %v4217
    %v4255 = vtanh.pop %v4221
    %v4256 = vtanh.pop %v4223
    %s4257 = scalar_lea.vmem [#allocation4], 3584
    %v4258 = vld [vmem:[%s4257] sm:$0xff]
    %v4259 = vld [vmem:[%s4257 + $0x8] sm:$0xff]
    %v4260 = vld [vmem:[%s4257 + $0x10] sm:$0xff]
    %v4261 = vld [vmem:[%s4257 + $0x18] sm:$0xff]
    %v4262 = vld [vmem:[%s4257 + $0x20] sm:$0xff]
    %v4263 = vld [vmem:[%s4257 + $0x28] sm:$0xff]
    %v4264 = vld [vmem:[%s4257 + $0x30] sm:$0xff]
    %v4265 = vld [vmem:[%s4257 + $0x38] sm:$0xff]
    %v4266 = vld [vmem:[%s4257 + $0x40] sm:$0xff]
    %v4267 = vld [vmem:[%s4257 + $0x48] sm:$0xff]
    %v4268 = vld [vmem:[%s4257 + $0x50] sm:$0xff]
    %v4269 = vld [vmem:[%s4257 + $0x58] sm:$0xff]
    %v4270 = vld [vmem:[%s4257 + $0x60] sm:$0xff]
    %v4271 = vld [vmem:[%s4257 + $0x68] sm:$0xff]
    %v4272 = vld [vmem:[%s4257 + $0x70] sm:$0xff]
    %v4273 = vld [vmem:[%s4257 + $0x78] sm:$0xff]
    %v4274 = vld [vmem:[%s4257 + $0x80] sm:$0xff]
    %v4275 = vld [vmem:[%s4257 + $0x88] sm:$0xff]
    %v4276 = vld [vmem:[%s4257 + $0x90] sm:$0xff]
    %v4277 = vld [vmem:[%s4257 + $0x98] sm:$0xff]
    %v4278 = vld [vmem:[%s4257 + $0xa0] sm:$0xff]
    %v4279 = vld [vmem:[%s4257 + $0xa8] sm:$0xff]
    %v4280 = vld [vmem:[%s4257 + $0xb0] sm:$0xff]
    %v4281 = vld [vmem:[%s4257 + $0xb8] sm:$0xff]
    %v4282 = vld [vmem:[%s4257 + $0xc0] sm:$0xff]
    %v4283 = vld [vmem:[%s4257 + $0xc8] sm:$0xff]
    %v4284 = vld [vmem:[%s4257 + $0xd0] sm:$0xff]
    %v4285 = vld [vmem:[%s4257 + $0xd8] sm:$0xff]
    %v4286 = vld [vmem:[%s4257 + $0xe0] sm:$0xff]
    %v4287 = vld [vmem:[%s4257 + $0xe8] sm:$0xff]
    %v4288 = vld [vmem:[%s4257 + $0xf0] sm:$0xff]
    %v4289 = vld [vmem:[%s4257 + $0xf8] sm:$0xff]
    %v4290 = vld [vmem:[%s4257 + $0x100] sm:$0xff]
    %v4291 = vld [vmem:[%s4257 + $0x108] sm:$0xff]
    %v4292 = vld [vmem:[%s4257 + $0x110] sm:$0xff]
    %v4293 = vld [vmem:[%s4257 + $0x118] sm:$0xff]
    %v4294 = vld [vmem:[%s4257 + $0x120] sm:$0xff]
    %v4295 = vld [vmem:[%s4257 + $0x128] sm:$0xff]
    %v4296 = vld [vmem:[%s4257 + $0x130] sm:$0xff]
    %v4297 = vld [vmem:[%s4257 + $0x138] sm:$0xff]
    %v4298 = vld [vmem:[%s4257 + $0x140] sm:$0xff]
    %v4299 = vld [vmem:[%s4257 + $0x148] sm:$0xff]
    %v4300 = vld [vmem:[%s4257 + $0x150] sm:$0xff]
    %v4301 = vld [vmem:[%s4257 + $0x158] sm:$0xff]
    %v4302 = vld [vmem:[%s4257 + $0x160] sm:$0xff]
    %v4303 = vld [vmem:[%s4257 + $0x168] sm:$0xff]
    %v4304 = vld [vmem:[%s4257 + $0x170] sm:$0xff]
    %v4305 = vld [vmem:[%s4257 + $0x178] sm:$0xff]
    %v4306 = vld [vmem:[%s4257 + $0x180] sm:$0xff]
    %v4307 = vld [vmem:[%s4257 + $0x188] sm:$0xff]
    %v4308 = vld [vmem:[%s4257 + $0x190] sm:$0xff]
    %v4309 = vld [vmem:[%s4257 + $0x198] sm:$0xff]
    %v4310 = vld [vmem:[%s4257 + $0x1a0] sm:$0xff]
    %v4311 = vld [vmem:[%s4257 + $0x1a8] sm:$0xff]
    %v4312 = vld [vmem:[%s4257 + $0x1b0] sm:$0xff]
    %v4313 = vld [vmem:[%s4257 + $0x1b8] sm:$0xff]
    %v4314 = vld [vmem:[%s4257 + $0x1c0] sm:$0xff]
    %v4315 = vld [vmem:[%s4257 + $0x1c8] sm:$0xff]
    %v4316 = vld [vmem:[%s4257 + $0x1d0] sm:$0xff]
    %v4317 = vld [vmem:[%s4257 + $0x1d8] sm:$0xff]
    %v4318 = vld [vmem:[%s4257 + $0x1e0] sm:$0xff]
    %v4319 = vld [vmem:[%s4257 + $0x1e8] sm:$0xff]
    %v4320 = vld [vmem:[%s4257 + $0x1f0] sm:$0xff]
    %v4321 = vld [vmem:[%s4257 + $0x1f8] sm:$0xff]
    %s4322 = scalar_lea.vmem [#allocation6], 14
    %v4323 = vld [vmem:[%s4322] sm:$0x3]
    %v4325 = vlaneseq
    %v4326 = vshrl.u32 %v4325, 7
    %v4327 = vsub.s32 0, %v4326
    %v4328 = vrot.slane %v4323, %v4327
    %v4329 = vlaneseq
    %v4330 = vshrl.u32 %v4329, 7
    %v4331 = vsub.s32 1, %v4330
    %v4332 = vrot.slane %v4323, %v4331
    %4335 = vmatprep.subr.mxu0 %v4259
    %4336 = vmatpush1.msra.mxu0 %v4258
    %4337 = vmatprep.subr.mxu0 %v4261
    %4338 = vmatpush1.msra.mxu0 %v4260
    %4339 = vmatprep.subr.mxu0 %v4263
    %4340 = vmatpush1.msra.mxu0 %v4262
    %4341 = vmatprep.subr.mxu0 %v4265
    %4342 = vmatpush1.msra.mxu0 %v4264
    %4343 = vmatprep.subr.mxu0 %v4267
    %4344 = vmatpush1.msra.mxu0 %v4266
    %4345 = vmatprep.subr.mxu0 %v4269
    %4346 = vmatpush1.msra.mxu0 %v4268
    %4347 = vmatprep.subr.mxu0 %v4271
    %4348 = vmatpush1.msra.mxu0 %v4270
    %4349 = vmatprep.subr.mxu0 %v4273
    %4350 = vmatpush1.msra.mxu0 %v4272
    %4351 = vmatprep.subr.mxu0 %v4275
    %4352 = vmatpush1.msra.mxu0 %v4274
    %4353 = vmatprep.subr.mxu0 %v4277
    %4354 = vmatpush1.msra.mxu0 %v4276
    %4355 = vmatprep.subr.mxu0 %v4279
    %4356 = vmatpush1.msra.mxu0 %v4278
    %4357 = vmatprep.subr.mxu0 %v4281
    %4358 = vmatpush1.msra.mxu0 %v4280
    %4359 = vmatprep.subr.mxu0 %v4283
    %4360 = vmatpush1.msra.mxu0 %v4282
    %4361 = vmatprep.subr.mxu0 %v4285
    %4362 = vmatpush1.msra.mxu0 %v4284
    %4363 = vmatprep.subr.mxu0 %v4287
    %4364 = vmatpush1.msra.mxu0 %v4286
    %4365 = vmatprep.subr.mxu0 %v4289
    %4366 = vmatpush1.msra.mxu0 %v4288
    %4367 = vmatprep.subr.mxu0 %v4291
    %4368 = vmatpush1.msra.mxu0 %v4290
    %4369 = vmatprep.subr.mxu0 %v4293
    %4370 = vmatpush1.msra.mxu0 %v4292
    %4371 = vmatprep.subr.mxu0 %v4295
    %4372 = vmatpush1.msra.mxu0 %v4294
    %4373 = vmatprep.subr.mxu0 %v4297
    %4374 = vmatpush1.msra.mxu0 %v4296
    %4375 = vmatprep.subr.mxu0 %v4299
    %4376 = vmatpush1.msra.mxu0 %v4298
    %4377 = vmatprep.subr.mxu0 %v4301
    %4378 = vmatpush1.msra.mxu0 %v4300
    %4379 = vmatprep.subr.mxu0 %v4303
    %4380 = vmatpush1.msra.mxu0 %v4302
    %4381 = vmatprep.subr.mxu0 %v4305
    %4382 = vmatpush1.msra.mxu0 %v4304
    %4383 = vmatprep.subr.mxu0 %v4307
    %4384 = vmatpush1.msra.mxu0 %v4306
    %4385 = vmatprep.subr.mxu0 %v4309
    %4386 = vmatpush1.msra.mxu0 %v4308
    %4387 = vmatprep.subr.mxu0 %v4311
    %4388 = vmatpush1.msra.mxu0 %v4310
    %4389 = vmatprep.subr.mxu0 %v4313
    %4390 = vmatpush1.msra.mxu0 %v4312
    %4391 = vmatprep.subr.mxu0 %v4315
    %4392 = vmatpush1.msra.mxu0 %v4314
    %4393 = vmatprep.subr.mxu0 %v4317
    %4394 = vmatpush1.msra.mxu0 %v4316
    %4395 = vmatprep.subr.mxu0 %v4319
    %4396 = vmatpush1.msra.mxu0 %v4318
    %4397 = vmatprep.subr.mxu0 %v4321
    %4398 = vmatpush1.msra.mxu0 %v4320
    %4399 = vmatprep.mubr.f32.mxu0 %v4033
    %4400 = vmatmul.mubr.f32.gmra.mrb[0].mxu0 %v4032
    %v4401 = vpop.f32.mrb[0].mxu0
    %v4402 = vadd.f32 %v4328, %v4401
    %v4403 = vpop.f32.mrb[0].mxu0
    %v4404 = vadd.f32 %v4332, %v4403
    %4405 = vmatprep.mubr.f32.mxu0 %v4035
    %4406 = vmatmul.mubr.f32.gmra.mrb[0].mxu0 %v4034
    %v4407 = vpop.f32.mrb[0].mxu0
    %v4408 = vadd.f32 %v4328, %v4407
    %v4409 = vpop.f32.mrb[0].mxu0
    %v4410 = vadd.f32 %v4332, %v4409
    %4411 = vmatprep.mubr.f32.mxu0 %v4037
    %4412 = vmatmul.mubr.f32.gmra.mrb[0].mxu0 %v4036
    %v4413 = vpop.f32.mrb[0].mxu0
    %v4414 = vadd.f32 %v4328, %v4413
    %v4415 = vpop.f32.mrb[0].mxu0
    %v4416 = vadd.f32 %v4332, %v4415
    %4417 = vmatprep.mubr.f32.mxu0 %v4039
    %4418 = vmatmul.mubr.f32.gmra.mrb[0].mxu0 %v4038
    %v4419 = vpop.f32.mrb[0].mxu0
    %v4420 = vadd.f32 %v4328, %v4419
    %v4421 = vpop.f32.mrb[0].mxu0
    %v4422 = vadd.f32 %v4332, %v4421
    %4423 = vmatprep.mubr.f32.mxu0 %v4041
    %4424 = vmatmul.mubr.f32.gmra.mrb[0].mxu0 %v4040
    %v4425 = vpop.f32.mrb[0].mxu0
    %v4426 = vadd.f32 %v4328, %v4425
    %v4427 = vpop.f32.mrb[0].mxu0
    %v4428 = vadd.f32 %v4332, %v4427
    %4429 = vmatprep.mubr.f32.mxu0 %v4043
    %4430 = vmatmul.mubr.f32.gmra.mrb[0].mxu0 %v4042
    %v4431 = vpop.f32.mrb[0].mxu0
    %v4432 = vadd.f32 %v4328, %v4431
    %v4433 = vpop.f32.mrb[0].mxu0
    %v4434 = vadd.f32 %v4332, %v4433
    %4435 = vmatprep.mubr.f32.mxu0 %v4045
    %4436 = vmatmul.mubr.f32.gmra.mrb[0].mxu0 %v4044
    %v4437 = vpop.f32.mrb[0].mxu0
    %v4438 = vadd.f32 %v4328, %v4437
    %v4439 = vpop.f32.mrb[0].mxu0
    %v4440 = vadd.f32 %v4332, %v4439
    %4441 = vmatprep.mubr.f32.mxu0 %v4047
    %4442 = vmatmul.mubr.f32.gmra.mrb[0].mxu0 %v4046
    %v4443 = vpop.f32.mrb[0].mxu0
    %v4444 = vadd.f32 %v4328, %v4443
    %v4445 = vpop.f32.mrb[0].mxu0
    %v4446 = vadd.f32 %v4332, %v4445
    %4447 = vmatprep.mubr.f32.mxu0 %v4049
    %4448 = vmatmul.mubr.f32.gmra.mrb[0].mxu0 %v4048
    %v4449 = vpop.f32.mrb[0].mxu0
    %v4450 = vadd.f32 %v4328, %v4449
    %v4451 = vpop.f32.mrb[0].mxu0
    %v4452 = vadd.f32 %v4332, %v4451
    %4453 = vmatprep.mubr.f32.mxu0 %v4051
    %4454 = vmatmul.mubr.f32.gmra.mrb[0].mxu0 %v4050
    %v4455 = vpop.f32.mrb[0].mxu0
    %v4456 = vadd.f32 %v4328, %v4455
    %v4457 = vpop.f32.mrb[0].mxu0
    %v4458 = vadd.f32 %v4332, %v4457
    %4459 = vmatprep.mubr.f32.mxu0 %v4053
    %4460 = vmatmul.mubr.f32.gmra.mrb[0].mxu0 %v4052
    %v4461 = vpop.f32.mrb[0].mxu0
    %v4462 = vadd.f32 %v4328, %v4461
    %v4463 = vpop.f32.mrb[0].mxu0
    %v4464 = vadd.f32 %v4332, %v4463
    %4465 = vmatprep.mubr.f32.mxu0 %v4055
    %4466 = vmatmul.mubr.f32.gmra.mrb[0].mxu0 %v4054
    %v4467 = vpop.f32.mrb[0].mxu0
    %v4468 = vadd.f32 %v4328, %v4467
    %v4469 = vpop.f32.mrb[0].mxu0
    %v4470 = vadd.f32 %v4332, %v4469
    %4471 = vmatprep.mubr.f32.mxu0 %v4057
    %4472 = vmatmul.mubr.f32.gmra.mrb[0].mxu0 %v4056
    %v4473 = vpop.f32.mrb[0].mxu0
    %v4474 = vadd.f32 %v4328, %v4473
    %v4475 = vpop.f32.mrb[0].mxu0
    %v4476 = vadd.f32 %v4332, %v4475
    %4477 = vmatprep.mubr.f32.mxu0 %v4059
    %4478 = vmatmul.mubr.f32.gmra.mrb[0].mxu0 %v4058
    %v4479 = vpop.f32.mrb[0].mxu0
    %v4480 = vadd.f32 %v4328, %v4479
    %v4481 = vpop.f32.mrb[0].mxu0
    %v4482 = vadd.f32 %v4332, %v4481
    %4483 = vmatprep.mubr.f32.mxu0 %v4061
    %4484 = vmatmul.mubr.f32.gmra.mrb[0].mxu0 %v4060
    %v4485 = vpop.f32.mrb[0].mxu0
    %v4486 = vadd.f32 %v4328, %v4485
    %v4487 = vpop.f32.mrb[0].mxu0
    %v4488 = vadd.f32 %v4332, %v4487
    %4489 = vmatprep.mubr.f32.mxu0 %v4063
    %4490 = vmatmul.mubr.f32.gmra.mrb[0].mxu0 %v4062
    %v4491 = vpop.f32.mrb[0].mxu0
    %v4492 = vadd.f32 %v4328, %v4491
    %v4493 = vpop.f32.mrb[0].mxu0
    %v4494 = vadd.f32 %v4332, %v4493
    %4495 = vdwg.mxu0
    %v4496 = vtanh.pop %v4402
    %v4497 = vtanh.pop %v4404
    %v4498 = vtanh.pop %v4408
    %v4499 = vtanh.pop %v4410
    %v4500 = vtanh.pop %v4414
    %v4501 = vtanh.pop %v4416
    %v4502 = vtanh.pop %v4420
    %v4503 = vtanh.pop %v4422
    %v4504 = vtanh.pop %v4426
    %v4505 = vtanh.pop %v4428
    %v4506 = vtanh.pop %v4432
    %v4507 = vtanh.pop %v4434
    %v4508 = vtanh.pop %v4438
    %v4509 = vtanh.pop %v4440
    %v4510 = vtanh.pop %v4444
    %v4511 = vtanh.pop %v4446
    %v4512 = vtanh.pop %v4450
    %v4513 = vtanh.pop %v4452
    %v4514 = vtanh.pop %v4456
    %v4515 = vtanh.pop %v4458
    %v4516 = vtanh.pop %v4462
    %v4517 = vtanh.pop %v4464
    %v4518 = vtanh.pop %v4468
    %v4519 = vtanh.pop %v4470
    %v4520 = vtanh.pop %v4474
    %v4521 = vtanh.pop %v4476
    %v4522 = vtanh.pop %v4480
    %v4523 = vtanh.pop %v4482
    %v4524 = vtanh.pop %v4486
    %v4525 = vtanh.pop %v4488
    %v4526 = vtanh.pop %v4492
    %v4527 = vtanh.pop %v4494
    %4528 = vmatprep.subr.mxu0 %v4259
    %4529 = vmatpush1.msra.mxu0 %v4258
    %4530 = vmatprep.subr.mxu0 %v4261
    %4531 = vmatpush1.msra.mxu0 %v4260
    %4532 = vmatprep.subr.mxu0 %v4263
    %4533 = vmatpush1.msra.mxu0 %v4262
    %4534 = vmatprep.subr.mxu0 %v4265
    %4535 = vmatpush1.msra.mxu0 %v4264
    %4536 = vmatprep.subr.mxu0 %v4267
    %4537 = vmatpush1.msra.mxu0 %v4266
    %4538 = vmatprep.subr.mxu0 %v4269
    %4539 = vmatpush1.msra.mxu0 %v4268
    %4540 = vmatprep.subr.mxu0 %v4271
    %4541 = vmatpush1.msra.mxu0 %v4270
    %4542 = vmatprep.subr.mxu0 %v4273
    %4543 = vmatpush1.msra.mxu0 %v4272
    %4544 = vmatprep.subr.mxu0 %v4275
    %4545 = vmatpush1.msra.mxu0 %v4274
    %4546 = vmatprep.subr.mxu0 %v4277
    %4547 = vmatpush1.msra.mxu0 %v4276
    %4548 = vmatprep.subr.mxu0 %v4279
    %4549 = vmatpush1.msra.mxu0 %v4278
    %4550 = vmatprep.subr.mxu0 %v4281
    %4551 = vmatpush1.msra.mxu0 %v4280
    %4552 = vmatprep.subr.mxu0 %v4283
    %4553 = vmatpush1.msra.mxu0 %v4282
    %4554 = vmatprep.subr.mxu0 %v4285
    %4555 = vmatpush1.msra.mxu0 %v4284
    %4556 = vmatprep.subr.mxu0 %v4287
    %4557 = vmatpush1.msra.mxu0 %v4286
    %4558 = vmatprep.subr.mxu0 %v4289
    %4559 = vmatpush1.msra.mxu0 %v4288
    %4560 = vmatprep.subr.mxu0 %v4291
    %4561 = vmatpush1.msra.mxu0 %v4290
    %4562 = vmatprep.subr.mxu0 %v4293
    %4563 = vmatpush1.msra.mxu0 %v4292
    %4564 = vmatprep.subr.mxu0 %v4295
    %4565 = vmatpush1.msra.mxu0 %v4294
    %4566 = vmatprep.subr.mxu0 %v4297
    %4567 = vmatpush1.msra.mxu0 %v4296
    %4568 = vmatprep.subr.mxu0 %v4299
    %4569 = vmatpush1.msra.mxu0 %v4298
    %4570 = vmatprep.subr.mxu0 %v4301
    %4571 = vmatpush1.msra.mxu0 %v4300
    %4572 = vmatprep.subr.mxu0 %v4303
    %4573 = vmatpush1.msra.mxu0 %v4302
    %4574 = vmatprep.subr.mxu0 %v4305
    %4575 = vmatpush1.msra.mxu0 %v4304
    %4576 = vmatprep.subr.mxu0 %v4307
    %4577 = vmatpush1.msra.mxu0 %v4306
    %4578 = vmatprep.subr.mxu0 %v4309
    %4579 = vmatpush1.msra.mxu0 %v4308
    %4580 = vmatprep.subr.mxu0 %v4311
    %4581 = vmatpush1.msra.mxu0 %v4310
    %4582 = vmatprep.subr.mxu0 %v4313
    %4583 = vmatpush1.msra.mxu0 %v4312
    %4584 = vmatprep.subr.mxu0 %v4315
    %4585 = vmatpush1.msra.mxu0 %v4314
    %4586 = vmatprep.subr.mxu0 %v4317
    %4587 = vmatpush1.msra.mxu0 %v4316
    %4588 = vmatprep.subr.mxu0 %v4319
    %4589 = vmatpush1.msra.mxu0 %v4318
    %4590 = vmatprep.subr.mxu0 %v4321
    %4591 = vmatpush1.msra.mxu0 %v4320
    %4592 = vmatprep.mubr.f32.mxu0 %v4226
    %4593 = vmatmul.mubr.f32.gmra.mrb[0].mxu0 %v4225
    %v4594 = vpop.f32.mrb[0].mxu0
    %v4595 = vadd.f32 %v4328, %v4594
    %v4596 = vpop.f32.mrb[0].mxu0
    %v4597 = vadd.f32 %v4332, %v4596
    %4598 = vmatprep.mubr.f32.mxu0 %v4228
    %4599 = vmatmul.mubr.f32.gmra.mrb[0].mxu0 %v4227
    %v4600 = vpop.f32.mrb[0].mxu0
    %v4601 = vadd.f32 %v4328, %v4600
    %v4602 = vpop.f32.mrb[0].mxu0
    %v4603 = vadd.f32 %v4332, %v4602
    %4604 = vmatprep.mubr.f32.mxu0 %v4230
    %4605 = vmatmul.mubr.f32.gmra.mrb[0].mxu0 %v4229
    %v4606 = vpop.f32.mrb[0].mxu0
    %v4607 = vadd.f32 %v4328, %v4606
    %v4608 = vpop.f32.mrb[0].mxu0
    %v4609 = vadd.f32 %v4332, %v4608
    %4610 = vmatprep.mubr.f32.mxu0 %v4232
    %4611 = vmatmul.mubr.f32.gmra.mrb[0].mxu0 %v4231
    %v4612 = vpop.f32.mrb[0].mxu0
    %v4613 = vadd.f32 %v4328, %v4612
    %v4614 = vpop.f32.mrb[0].mxu0
    %v4615 = vadd.f32 %v4332, %v4614
    %4616 = vmatprep.mubr.f32.mxu0 %v4234
    %4617 = vmatmul.mubr.f32.gmra.mrb[0].mxu0 %v4233
    %v4618 = vpop.f32.mrb[0].mxu0
    %v4619 = vadd.f32 %v4328, %v4618
    %v4620 = vpop.f32.mrb[0].mxu0
    %v4621 = vadd.f32 %v4332, %v4620
    %4622 = vmatprep.mubr.f32.mxu0 %v4236
    %4623 = vmatmul.mubr.f32.gmra.mrb[0].mxu0 %v4235
    %v4624 = vpop.f32.mrb[0].mxu0
    %v4625 = vadd.f32 %v4328, %v4624
    %v4626 = vpop.f32.mrb[0].mxu0
    %v4627 = vadd.f32 %v4332, %v4626
    %4628 = vmatprep.mubr.f32.mxu0 %v4238
    %4629 = vmatmul.mubr.f32.gmra.mrb[0].mxu0 %v4237
    %v4630 = vpop.f32.mrb[0].mxu0
    %v4631 = vadd.f32 %v4328, %v4630
    %v4632 = vpop.f32.mrb[0].mxu0
    %v4633 = vadd.f32 %v4332, %v4632
    %4634 = vmatprep.mubr.f32.mxu0 %v4240
    %4635 = vmatmul.mubr.f32.gmra.mrb[0].mxu0 %v4239
    %v4636 = vpop.f32.mrb[0].mxu0
    %v4637 = vadd.f32 %v4328, %v4636
    %v4638 = vpop.f32.mrb[0].mxu0
    %v4639 = vadd.f32 %v4332, %v4638
    %4640 = vmatprep.mubr.f32.mxu0 %v4242
    %4641 = vmatmul.mubr.f32.gmra.mrb[0].mxu0 %v4241
    %v4642 = vpop.f32.mrb[0].mxu0
    %v4643 = vadd.f32 %v4328, %v4642
    %v4644 = vpop.f32.mrb[0].mxu0
    %v4645 = vadd.f32 %v4332, %v4644
    %4646 = vmatprep.mubr.f32.mxu0 %v4244
    %4647 = vmatmul.mubr.f32.gmra.mrb[0].mxu0 %v4243
    %v4648 = vpop.f32.mrb[0].mxu0
    %v4649 = vadd.f32 %v4328, %v4648
    %v4650 = vpop.f32.mrb[0].mxu0
    %v4651 = vadd.f32 %v4332, %v4650
    %4652 = vmatprep.mubr.f32.mxu0 %v4246
    %4653 = vmatmul.mubr.f32.gmra.mrb[0].mxu0 %v4245
    %v4654 = vpop.f32.mrb[0].mxu0
    %v4655 = vadd.f32 %v4328, %v4654
    %v4656 = vpop.f32.mrb[0].mxu0
    %v4657 = vadd.f32 %v4332, %v4656
    %4658 = vmatprep.mubr.f32.mxu0 %v4248
    %4659 = vmatmul.mubr.f32.gmra.mrb[0].mxu0 %v4247
    %v4660 = vpop.f32.mrb[0].mxu0
    %v4661 = vadd.f32 %v4328, %v4660
    %v4662 = vpop.f32.mrb[0].mxu0
    %v4663 = vadd.f32 %v4332, %v4662
    %4664 = vmatprep.mubr.f32.mxu0 %v4250
    %4665 = vmatmul.mubr.f32.gmra.mrb[0].mxu0 %v4249
    %v4666 = vpop.f32.mrb[0].mxu0
    %v4667 = vadd.f32 %v4328, %v4666
    %v4668 = vpop.f32.mrb[0].mxu0
    %v4669 = vadd.f32 %v4332, %v4668
    %4670 = vmatprep.mubr.f32.mxu0 %v4252
    %4671 = vmatmul.mubr.f32.gmra.mrb[0].mxu0 %v4251
    %v4672 = vpop.f32.mrb[0].mxu0
    %v4673 = vadd.f32 %v4328, %v4672
    %v4674 = vpop.f32.mrb[0].mxu0
    %v4675 = vadd.f32 %v4332, %v4674
    %4676 = vmatprep.mubr.f32.mxu0 %v4254
    %4677 = vmatmul.mubr.f32.gmra.mrb[0].mxu0 %v4253
    %v4678 = vpop.f32.mrb[0].mxu0
    %v4679 = vadd.f32 %v4328, %v4678
    %v4680 = vpop.f32.mrb[0].mxu0
    %v4681 = vadd.f32 %v4332, %v4680
    %4682 = vmatprep.mubr.f32.mxu0 %v4256
    %4683 = vmatmul.mubr.f32.gmra.mrb[0].mxu0 %v4255
    %v4684 = vpop.f32.mrb[0].mxu0
    %v4685 = vadd.f32 %v4328, %v4684
    %v4686 = vpop.f32.mrb[0].mxu0
    %v4687 = vadd.f32 %v4332, %v4686
    %4688 = vdwg.mxu0
    %v4689 = vtanh.pop %v4595
    %v4690 = vtanh.pop %v4597
    %v4691 = vtanh.pop %v4601
    %v4692 = vtanh.pop %v4603
    %v4693 = vtanh.pop %v4607
    %v4694 = vtanh.pop %v4609
    %v4695 = vtanh.pop %v4613
    %v4696 = vtanh.pop %v4615
    %v4697 = vtanh.pop %v4619
    %v4698 = vtanh.pop %v4621
    %v4699 = vtanh.pop %v4625
    %v4700 = vtanh.pop %v4627
    %v4701 = vtanh.pop %v4631
    %v4702 = vtanh.pop %v4633
    %v4703 = vtanh.pop %v4637
    %v4704 = vtanh.pop %v4639
    %v4705 = vtanh.pop %v4643
    %v4706 = vtanh.pop %v4645
    %v4707 = vtanh.pop %v4649
    %v4708 = vtanh.pop %v4651
    %v4709 = vtanh.pop %v4655
    %v4710 = vtanh.pop %v4657
    %v4711 = vtanh.pop %v4661
    %v4712 = vtanh.pop %v4663
    %v4713 = vtanh.pop %v4667
    %v4714 = vtanh.pop %v4669
    %v4715 = vtanh.pop %v4673
    %v4716 = vtanh.pop %v4675
    %v4717 = vtanh.pop %v4679
    %v4718 = vtanh.pop %v4681
    %v4719 = vtanh.pop %v4685
    %v4720 = vtanh.pop %v4687
    %s4721 = scalar_lea.vmem [#allocation4], 4096
    %v4722 = vld [vmem:[%s4721] sm:$0xff]
    %v4723 = vld [vmem:[%s4721 + $0x8] sm:$0xff]
    %v4724 = vld [vmem:[%s4721 + $0x10] sm:$0xff]
    %v4725 = vld [vmem:[%s4721 + $0x18] sm:$0xff]
    %v4726 = vld [vmem:[%s4721 + $0x20] sm:$0xff]
    %v4727 = vld [vmem:[%s4721 + $0x28] sm:$0xff]
    %v4728 = vld [vmem:[%s4721 + $0x30] sm:$0xff]
    %v4729 = vld [vmem:[%s4721 + $0x38] sm:$0xff]
    %v4730 = vld [vmem:[%s4721 + $0x40] sm:$0xff]
    %v4731 = vld [vmem:[%s4721 + $0x48] sm:$0xff]
    %v4732 = vld [vmem:[%s4721 + $0x50] sm:$0xff]
    %v4733 = vld [vmem:[%s4721 + $0x58] sm:$0xff]
    %v4734 = vld [vmem:[%s4721 + $0x60] sm:$0xff]
    %v4735 = vld [vmem:[%s4721 + $0x68] sm:$0xff]
    %v4736 = vld [vmem:[%s4721 + $0x70] sm:$0xff]
    %v4737 = vld [vmem:[%s4721 + $0x78] sm:$0xff]
    %v4738 = vld [vmem:[%s4721 + $0x80] sm:$0xff]
    %v4739 = vld [vmem:[%s4721 + $0x88] sm:$0xff]
    %v4740 = vld [vmem:[%s4721 + $0x90] sm:$0xff]
    %v4741 = vld [vmem:[%s4721 + $0x98] sm:$0xff]
    %v4742 = vld [vmem:[%s4721 + $0xa0] sm:$0xff]
    %v4743 = vld [vmem:[%s4721 + $0xa8] sm:$0xff]
    %v4744 = vld [vmem:[%s4721 + $0xb0] sm:$0xff]
    %v4745 = vld [vmem:[%s4721 + $0xb8] sm:$0xff]
    %v4746 = vld [vmem:[%s4721 + $0xc0] sm:$0xff]
    %v4747 = vld [vmem:[%s4721 + $0xc8] sm:$0xff]
    %v4748 = vld [vmem:[%s4721 + $0xd0] sm:$0xff]
    %v4749 = vld [vmem:[%s4721 + $0xd8] sm:$0xff]
    %v4750 = vld [vmem:[%s4721 + $0xe0] sm:$0xff]
    %v4751 = vld [vmem:[%s4721 + $0xe8] sm:$0xff]
    %v4752 = vld [vmem:[%s4721 + $0xf0] sm:$0xff]
    %v4753 = vld [vmem:[%s4721 + $0xf8] sm:$0xff]
    %v4754 = vld [vmem:[%s4721 + $0x100] sm:$0xff]
    %v4755 = vld [vmem:[%s4721 + $0x108] sm:$0xff]
    %v4756 = vld [vmem:[%s4721 + $0x110] sm:$0xff]
    %v4757 = vld [vmem:[%s4721 + $0x118] sm:$0xff]
    %v4758 = vld [vmem:[%s4721 + $0x120] sm:$0xff]
    %v4759 = vld [vmem:[%s4721 + $0x128] sm:$0xff]
    %v4760 = vld [vmem:[%s4721 + $0x130] sm:$0xff]
    %v4761 = vld [vmem:[%s4721 + $0x138] sm:$0xff]
    %v4762 = vld [vmem:[%s4721 + $0x140] sm:$0xff]
    %v4763 = vld [vmem:[%s4721 + $0x148] sm:$0xff]
    %v4764 = vld [vmem:[%s4721 + $0x150] sm:$0xff]
    %v4765 = vld [vmem:[%s4721 + $0x158] sm:$0xff]
    %v4766 = vld [vmem:[%s4721 + $0x160] sm:$0xff]
    %v4767 = vld [vmem:[%s4721 + $0x168] sm:$0xff]
    %v4768 = vld [vmem:[%s4721 + $0x170] sm:$0xff]
    %v4769 = vld [vmem:[%s4721 + $0x178] sm:$0xff]
    %v4770 = vld [vmem:[%s4721 + $0x180] sm:$0xff]
    %v4771 = vld [vmem:[%s4721 + $0x188] sm:$0xff]
    %v4772 = vld [vmem:[%s4721 + $0x190] sm:$0xff]
    %v4773 = vld [vmem:[%s4721 + $0x198] sm:$0xff]
    %v4774 = vld [vmem:[%s4721 + $0x1a0] sm:$0xff]
    %v4775 = vld [vmem:[%s4721 + $0x1a8] sm:$0xff]
    %v4776 = vld [vmem:[%s4721 + $0x1b0] sm:$0xff]
    %v4777 = vld [vmem:[%s4721 + $0x1b8] sm:$0xff]
    %v4778 = vld [vmem:[%s4721 + $0x1c0] sm:$0xff]
    %v4779 = vld [vmem:[%s4721 + $0x1c8] sm:$0xff]
    %v4780 = vld [vmem:[%s4721 + $0x1d0] sm:$0xff]
    %v4781 = vld [vmem:[%s4721 + $0x1d8] sm:$0xff]
    %v4782 = vld [vmem:[%s4721 + $0x1e0] sm:$0xff]
    %v4783 = vld [vmem:[%s4721 + $0x1e8] sm:$0xff]
    %v4784 = vld [vmem:[%s4721 + $0x1f0] sm:$0xff]
    %v4785 = vld [vmem:[%s4721 + $0x1f8] sm:$0xff]
    %s4786 = scalar_lea.vmem [#allocation6], 16
    %v4787 = vld [vmem:[%s4786] sm:$0x3]
    %v4789 = vlaneseq
    %v4790 = vshrl.u32 %v4789, 7
    %v4791 = vsub.s32 0, %v4790
    %v4792 = vrot.slane %v4787, %v4791
    %v4793 = vlaneseq
    %v4794 = vshrl.u32 %v4793, 7
    %v4795 = vsub.s32 1, %v4794
    %v4796 = vrot.slane %v4787, %v4795
    %4799 = vmatprep.subr.mxu0 %v4723
    %4800 = vmatpush1.msra.mxu0 %v4722
    %4801 = vmatprep.subr.mxu0 %v4725
    %4802 = vmatpush1.msra.mxu0 %v4724
    %4803 = vmatprep.subr.mxu0 %v4727
    %4804 = vmatpush1.msra.mxu0 %v4726
    %4805 = vmatprep.subr.mxu0 %v4729
    %4806 = vmatpush1.msra.mxu0 %v4728
    %4807 = vmatprep.subr.mxu0 %v4731
    %4808 = vmatpush1.msra.mxu0 %v4730
    %4809 = vmatprep.subr.mxu0 %v4733
    %4810 = vmatpush1.msra.mxu0 %v4732
    %4811 = vmatprep.subr.mxu0 %v4735
    %4812 = vmatpush1.msra.mxu0 %v4734
    %4813 = vmatprep.subr.mxu0 %v4737
    %4814 = vmatpush1.msra.mxu0 %v4736
    %4815 = vmatprep.subr.mxu0 %v4739
    %4816 = vmatpush1.msra.mxu0 %v4738
    %4817 = vmatprep.subr.mxu0 %v4741
    %4818 = vmatpush1.msra.mxu0 %v4740
    %4819 = vmatprep.subr.mxu0 %v4743
    %4820 = vmatpush1.msra.mxu0 %v4742
    %4821 = vmatprep.subr.mxu0 %v4745
    %4822 = vmatpush1.msra.mxu0 %v4744
    %4823 = vmatprep.subr.mxu0 %v4747
    %4824 = vmatpush1.msra.mxu0 %v4746
    %4825 = vmatprep.subr.mxu0 %v4749
    %4826 = vmatpush1.msra.mxu0 %v4748
    %4827 = vmatprep.subr.mxu0 %v4751
    %4828 = vmatpush1.msra.mxu0 %v4750
    %4829 = vmatprep.subr.mxu0 %v4753
    %4830 = vmatpush1.msra.mxu0 %v4752
    %4831 = vmatprep.subr.mxu0 %v4755
    %4832 = vmatpush1.msra.mxu0 %v4754
    %4833 = vmatprep.subr.mxu0 %v4757
    %4834 = vmatpush1.msra.mxu0 %v4756
    %4835 = vmatprep.subr.mxu0 %v4759
    %4836 = vmatpush1.msra.mxu0 %v4758
    %4837 = vmatprep.subr.mxu0 %v4761
    %4838 = vmatpush1.msra.mxu0 %v4760
    %4839 = vmatprep.subr.mxu0 %v4763
    %4840 = vmatpush1.msra.mxu0 %v4762
    %4841 = vmatprep.subr.mxu0 %v4765
    %4842 = vmatpush1.msra.mxu0 %v4764
    %4843 = vmatprep.subr.mxu0 %v4767
    %4844 = vmatpush1.msra.mxu0 %v4766
    %4845 = vmatprep.subr.mxu0 %v4769
    %4846 = vmatpush1.msra.mxu0 %v4768
    %4847 = vmatprep.subr.mxu0 %v4771
    %4848 = vmatpush1.msra.mxu0 %v4770
    %4849 = vmatprep.subr.mxu0 %v4773
    %4850 = vmatpush1.msra.mxu0 %v4772
    %4851 = vmatprep.subr.mxu0 %v4775
    %4852 = vmatpush1.msra.mxu0 %v4774
    %4853 = vmatprep.subr.mxu0 %v4777
    %4854 = vmatpush1.msra.mxu0 %v4776
    %4855 = vmatprep.subr.mxu0 %v4779
    %4856 = vmatpush1.msra.mxu0 %v4778
    %4857 = vmatprep.subr.mxu0 %v4781
    %4858 = vmatpush1.msra.mxu0 %v4780
    %4859 = vmatprep.subr.mxu0 %v4783
    %4860 = vmatpush1.msra.mxu0 %v4782
    %4861 = vmatprep.subr.mxu0 %v4785
    %4862 = vmatpush1.msra.mxu0 %v4784
    %4863 = vmatprep.mubr.f32.mxu0 %v4497
    %4864 = vmatmul.mubr.f32.gmra.mrb[0].mxu0 %v4496
    %v4865 = vpop.f32.mrb[0].mxu0
    %v4866 = vadd.f32 %v4792, %v4865
    %v4867 = vpop.f32.mrb[0].mxu0
    %v4868 = vadd.f32 %v4796, %v4867
    %4869 = vmatprep.mubr.f32.mxu0 %v4499
    %4870 = vmatmul.mubr.f32.gmra.mrb[0].mxu0 %v4498
    %v4871 = vpop.f32.mrb[0].mxu0
    %v4872 = vadd.f32 %v4792, %v4871
    %v4873 = vpop.f32.mrb[0].mxu0
    %v4874 = vadd.f32 %v4796, %v4873
    %4875 = vmatprep.mubr.f32.mxu0 %v4501
    %4876 = vmatmul.mubr.f32.gmra.mrb[0].mxu0 %v4500
    %v4877 = vpop.f32.mrb[0].mxu0
    %v4878 = vadd.f32 %v4792, %v4877
    %v4879 = vpop.f32.mrb[0].mxu0
    %v4880 = vadd.f32 %v4796, %v4879
    %4881 = vmatprep.mubr.f32.mxu0 %v4503
    %4882 = vmatmul.mubr.f32.gmra.mrb[0].mxu0 %v4502
    %v4883 = vpop.f32.mrb[0].mxu0
    %v4884 = vadd.f32 %v4792, %v4883
    %v4885 = vpop.f32.mrb[0].mxu0
    %v4886 = vadd.f32 %v4796, %v4885
    %4887 = vmatprep.mubr.f32.mxu0 %v4505
    %4888 = vmatmul.mubr.f32.gmra.mrb[0].mxu0 %v4504
    %v4889 = vpop.f32.mrb[0].mxu0
    %v4890 = vadd.f32 %v4792, %v4889
    %v4891 = vpop.f32.mrb[0].mxu0
    %v4892 = vadd.f32 %v4796, %v4891
    %4893 = vmatprep.mubr.f32.mxu0 %v4507
    %4894 = vmatmul.mubr.f32.gmra.mrb[0].mxu0 %v4506
    %v4895 = vpop.f32.mrb[0].mxu0
    %v4896 = vadd.f32 %v4792, %v4895
    %v4897 = vpop.f32.mrb[0].mxu0
    %v4898 = vadd.f32 %v4796, %v4897
    %4899 = vmatprep.mubr.f32.mxu0 %v4509
    %4900 = vmatmul.mubr.f32.gmra.mrb[0].mxu0 %v4508
    %v4901 = vpop.f32.mrb[0].mxu0
    %v4902 = vadd.f32 %v4792, %v4901
    %v4903 = vpop.f32.mrb[0].mxu0
    %v4904 = vadd.f32 %v4796, %v4903
    %4905 = vmatprep.mubr.f32.mxu0 %v4511
    %4906 = vmatmul.mubr.f32.gmra.mrb[0].mxu0 %v4510
    %v4907 = vpop.f32.mrb[0].mxu0
    %v4908 = vadd.f32 %v4792, %v4907
    %v4909 = vpop.f32.mrb[0].mxu0
    %v4910 = vadd.f32 %v4796, %v4909
    %4911 = vmatprep.mubr.f32.mxu0 %v4513
    %4912 = vmatmul.mubr.f32.gmra.mrb[0].mxu0 %v4512
    %v4913 = vpop.f32.mrb[0].mxu0
    %v4914 = vadd.f32 %v4792, %v4913
    %v4915 = vpop.f32.mrb[0].mxu0
    %v4916 = vadd.f32 %v4796, %v4915
    %4917 = vmatprep.mubr.f32.mxu0 %v4515
    %4918 = vmatmul.mubr.f32.gmra.mrb[0].mxu0 %v4514
    %v4919 = vpop.f32.mrb[0].mxu0
    %v4920 = vadd.f32 %v4792, %v4919
    %v4921 = vpop.f32.mrb[0].mxu0
    %v4922 = vadd.f32 %v4796, %v4921
    %4923 = vmatprep.mubr.f32.mxu0 %v4517
    %4924 = vmatmul.mubr.f32.gmra.mrb[0].mxu0 %v4516
    %v4925 = vpop.f32.mrb[0].mxu0
    %v4926 = vadd.f32 %v4792, %v4925
    %v4927 = vpop.f32.mrb[0].mxu0
    %v4928 = vadd.f32 %v4796, %v4927
    %4929 = vmatprep.mubr.f32.mxu0 %v4519
    %4930 = vmatmul.mubr.f32.gmra.mrb[0].mxu0 %v4518
    %v4931 = vpop.f32.mrb[0].mxu0
    %v4932 = vadd.f32 %v4792, %v4931
    %v4933 = vpop.f32.mrb[0].mxu0
    %v4934 = vadd.f32 %v4796, %v4933
    %4935 = vmatprep.mubr.f32.mxu0 %v4521
    %4936 = vmatmul.mubr.f32.gmra.mrb[0].mxu0 %v4520
    %v4937 = vpop.f32.mrb[0].mxu0
    %v4938 = vadd.f32 %v4792, %v4937
    %v4939 = vpop.f32.mrb[0].mxu0
    %v4940 = vadd.f32 %v4796, %v4939
    %4941 = vmatprep.mubr.f32.mxu0 %v4523
    %4942 = vmatmul.mubr.f32.gmra.mrb[0].mxu0 %v4522
    %v4943 = vpop.f32.mrb[0].mxu0
    %v4944 = vadd.f32 %v4792, %v4943
    %v4945 = vpop.f32.mrb[0].mxu0
    %v4946 = vadd.f32 %v4796, %v4945
    %4947 = vmatprep.mubr.f32.mxu0 %v4525
    %4948 = vmatmul.mubr.f32.gmra.mrb[0].mxu0 %v4524
    %v4949 = vpop.f32.mrb[0].mxu0
    %v4950 = vadd.f32 %v4792, %v4949
    %v4951 = vpop.f32.mrb[0].mxu0
    %v4952 = vadd.f32 %v4796, %v4951
    %4953 = vmatprep.mubr.f32.mxu0 %v4527
    %4954 = vmatmul.mubr.f32.gmra.mrb[0].mxu0 %v4526
    %v4955 = vpop.f32.mrb[0].mxu0
    %v4956 = vadd.f32 %v4792, %v4955
    %v4957 = vpop.f32.mrb[0].mxu0
    %v4958 = vadd.f32 %v4796, %v4957
    %4959 = vdwg.mxu0
    %v4960 = vtanh.pop %v4866
    %v4961 = vtanh.pop %v4868
    %v4962 = vtanh.pop %v4872
    %v4963 = vtanh.pop %v4874
    %v4964 = vtanh.pop %v4878
    %v4965 = vtanh.pop %v4880
    %v4966 = vtanh.pop %v4884
    %v4967 = vtanh.pop %v4886
    %v4968 = vtanh.pop %v4890
    %v4969 = vtanh.pop %v4892
    %v4970 = vtanh.pop %v4896
    %v4971 = vtanh.pop %v4898
    %v4972 = vtanh.pop %v4902
    %v4973 = vtanh.pop %v4904
    %v4974 = vtanh.pop %v4908
    %v4975 = vtanh.pop %v4910
    %v4976 = vtanh.pop %v4914
    %v4977 = vtanh.pop %v4916
    %v4978 = vtanh.pop %v4920
    %v4979 = vtanh.pop %v4922
    %v4980 = vtanh.pop %v4926
    %v4981 = vtanh.pop %v4928
    %v4982 = vtanh.pop %v4932
    %v4983 = vtanh.pop %v4934
    %v4984 = vtanh.pop %v4938
    %v4985 = vtanh.pop %v4940
    %v4986 = vtanh.pop %v4944
    %v4987 = vtanh.pop %v4946
    %v4988 = vtanh.pop %v4950
    %v4989 = vtanh.pop %v4952
    %v4990 = vtanh.pop %v4956
    %v4991 = vtanh.pop %v4958
    %4992 = vmatprep.subr.mxu0 %v4723
    %4993 = vmatpush1.msra.mxu0 %v4722
    %4994 = vmatprep.subr.mxu0 %v4725
    %4995 = vmatpush1.msra.mxu0 %v4724
    %4996 = vmatprep.subr.mxu0 %v4727
    %4997 = vmatpush1.msra.mxu0 %v4726
    %4998 = vmatprep.subr.mxu0 %v4729
    %4999 = vmatpush1.msra.mxu0 %v4728
    %5000 = vmatprep.subr.mxu0 %v4731
    %5001 = vmatpush1.msra.mxu0 %v4730
    %5002 = vmatprep.subr.mxu0 %v4733
    %5003 = vmatpush1.msra.mxu0 %v4732
    %5004 = vmatprep.subr.mxu0 %v4735
    %5005 = vmatpush1.msra.mxu0 %v4734
    %5006 = vmatprep.subr.mxu0 %v4737
    %5007 = vmatpush1.msra.mxu0 %v4736
    %5008 = vmatprep.subr.mxu0 %v4739
    %5009 = vmatpush1.msra.mxu0 %v4738
    %5010 = vmatprep.subr.mxu0 %v4741
    %5011 = vmatpush1.msra.mxu0 %v4740
    %5012 = vmatprep.subr.mxu0 %v4743
    %5013 = vmatpush1.msra.mxu0 %v4742
    %5014 = vmatprep.subr.mxu0 %v4745
    %5015 = vmatpush1.msra.mxu0 %v4744
    %5016 = vmatprep.subr.mxu0 %v4747
    %5017 = vmatpush1.msra.mxu0 %v4746
    %5018 = vmatprep.subr.mxu0 %v4749
    %5019 = vmatpush1.msra.mxu0 %v4748
    %5020 = vmatprep.subr.mxu0 %v4751
    %5021 = vmatpush1.msra.mxu0 %v4750
    %5022 = vmatprep.subr.mxu0 %v4753
    %5023 = vmatpush1.msra.mxu0 %v4752
    %5024 = vmatprep.subr.mxu0 %v4755
    %5025 = vmatpush1.msra.mxu0 %v4754
    %5026 = vmatprep.subr.mxu0 %v4757
    %5027 = vmatpush1.msra.mxu0 %v4756
    %5028 = vmatprep.subr.mxu0 %v4759
    %5029 = vmatpush1.msra.mxu0 %v4758
    %5030 = vmatprep.subr.mxu0 %v4761
    %5031 = vmatpush1.msra.mxu0 %v4760
    %5032 = vmatprep.subr.mxu0 %v4763
    %5033 = vmatpush1.msra.mxu0 %v4762
    %5034 = vmatprep.subr.mxu0 %v4765
    %5035 = vmatpush1.msra.mxu0 %v4764
    %5036 = vmatprep.subr.mxu0 %v4767
    %5037 = vmatpush1.msra.mxu0 %v4766
    %5038 = vmatprep.subr.mxu0 %v4769
    %5039 = vmatpush1.msra.mxu0 %v4768
    %5040 = vmatprep.subr.mxu0 %v4771
    %5041 = vmatpush1.msra.mxu0 %v4770
    %5042 = vmatprep.subr.mxu0 %v4773
    %5043 = vmatpush1.msra.mxu0 %v4772
    %5044 = vmatprep.subr.mxu0 %v4775
    %5045 = vmatpush1.msra.mxu0 %v4774
    %5046 = vmatprep.subr.mxu0 %v4777
    %5047 = vmatpush1.msra.mxu0 %v4776
    %5048 = vmatprep.subr.mxu0 %v4779
    %5049 = vmatpush1.msra.mxu0 %v4778
    %5050 = vmatprep.subr.mxu0 %v4781
    %5051 = vmatpush1.msra.mxu0 %v4780
    %5052 = vmatprep.subr.mxu0 %v4783
    %5053 = vmatpush1.msra.mxu0 %v4782
    %5054 = vmatprep.subr.mxu0 %v4785
    %5055 = vmatpush1.msra.mxu0 %v4784
    %5056 = vmatprep.mubr.f32.mxu0 %v4690
    %5057 = vmatmul.mubr.f32.gmra.mrb[0].mxu0 %v4689
    %v5058 = vpop.f32.mrb[0].mxu0
    %v5059 = vadd.f32 %v4792, %v5058
    %v5060 = vpop.f32.mrb[0].mxu0
    %v5061 = vadd.f32 %v4796, %v5060
    %5062 = vmatprep.mubr.f32.mxu0 %v4692
    %5063 = vmatmul.mubr.f32.gmra.mrb[0].mxu0 %v4691
    %v5064 = vpop.f32.mrb[0].mxu0
    %v5065 = vadd.f32 %v4792, %v5064
    %v5066 = vpop.f32.mrb[0].mxu0
    %v5067 = vadd.f32 %v4796, %v5066
    %5068 = vmatprep.mubr.f32.mxu0 %v4694
    %5069 = vmatmul.mubr.f32.gmra.mrb[0].mxu0 %v4693
    %v5070 = vpop.f32.mrb[0].mxu0
    %v5071 = vadd.f32 %v4792, %v5070
    %v5072 = vpop.f32.mrb[0].mxu0
    %v5073 = vadd.f32 %v4796, %v5072
    %5074 = vmatprep.mubr.f32.mxu0 %v4696
    %5075 = vmatmul.mubr.f32.gmra.mrb[0].mxu0 %v4695
    %v5076 = vpop.f32.mrb[0].mxu0
    %v5077 = vadd.f32 %v4792, %v5076
    %v5078 = vpop.f32.mrb[0].mxu0
    %v5079 = vadd.f32 %v4796, %v5078
    %5080 = vmatprep.mubr.f32.mxu0 %v4698
    %5081 = vmatmul.mubr.f32.gmra.mrb[0].mxu0 %v4697
    %v5082 = vpop.f32.mrb[0].mxu0
    %v5083 = vadd.f32 %v4792, %v5082
    %v5084 = vpop.f32.mrb[0].mxu0
    %v5085 = vadd.f32 %v4796, %v5084
    %5086 = vmatprep.mubr.f32.mxu0 %v4700
    %5087 = vmatmul.mubr.f32.gmra.mrb[0].mxu0 %v4699
    %v5088 = vpop.f32.mrb[0].mxu0
    %v5089 = vadd.f32 %v4792, %v5088
    %v5090 = vpop.f32.mrb[0].mxu0
    %v5091 = vadd.f32 %v4796, %v5090
    %5092 = vmatprep.mubr.f32.mxu0 %v4702
    %5093 = vmatmul.mubr.f32.gmra.mrb[0].mxu0 %v4701
    %v5094 = vpop.f32.mrb[0].mxu0
    %v5095 = vadd.f32 %v4792, %v5094
    %v5096 = vpop.f32.mrb[0].mxu0
    %v5097 = vadd.f32 %v4796, %v5096
    %5098 = vmatprep.mubr.f32.mxu0 %v4704
    %5099 = vmatmul.mubr.f32.gmra.mrb[0].mxu0 %v4703
    %v5100 = vpop.f32.mrb[0].mxu0
    %v5101 = vadd.f32 %v4792, %v5100
    %v5102 = vpop.f32.mrb[0].mxu0
    %v5103 = vadd.f32 %v4796, %v5102
    %5104 = vmatprep.mubr.f32.mxu0 %v4706
    %5105 = vmatmul.mubr.f32.gmra.mrb[0].mxu0 %v4705
    %v5106 = vpop.f32.mrb[0].mxu0
    %v5107 = vadd.f32 %v4792, %v5106
    %v5108 = vpop.f32.mrb[0].mxu0
    %v5109 = vadd.f32 %v4796, %v5108
    %5110 = vmatprep.mubr.f32.mxu0 %v4708
    %5111 = vmatmul.mubr.f32.gmra.mrb[0].mxu0 %v4707
    %v5112 = vpop.f32.mrb[0].mxu0
    %v5113 = vadd.f32 %v4792, %v5112
    %v5114 = vpop.f32.mrb[0].mxu0
    %v5115 = vadd.f32 %v4796, %v5114
    %5116 = vmatprep.mubr.f32.mxu0 %v4710
    %5117 = vmatmul.mubr.f32.gmra.mrb[0].mxu0 %v4709
    %v5118 = vpop.f32.mrb[0].mxu0
    %v5119 = vadd.f32 %v4792, %v5118
    %v5120 = vpop.f32.mrb[0].mxu0
    %v5121 = vadd.f32 %v4796, %v5120
    %5122 = vmatprep.mubr.f32.mxu0 %v4712
    %5123 = vmatmul.mubr.f32.gmra.mrb[0].mxu0 %v4711
    %v5124 = vpop.f32.mrb[0].mxu0
    %v5125 = vadd.f32 %v4792, %v5124
    %v5126 = vpop.f32.mrb[0].mxu0
    %v5127 = vadd.f32 %v4796, %v5126
    %5128 = vmatprep.mubr.f32.mxu0 %v4714
    %5129 = vmatmul.mubr.f32.gmra.mrb[0].mxu0 %v4713
    %v5130 = vpop.f32.mrb[0].mxu0
    %v5131 = vadd.f32 %v4792, %v5130
    %v5132 = vpop.f32.mrb[0].mxu0
    %v5133 = vadd.f32 %v4796, %v5132
    %5134 = vmatprep.mubr.f32.mxu0 %v4716
    %5135 = vmatmul.mubr.f32.gmra.mrb[0].mxu0 %v4715
    %v5136 = vpop.f32.mrb[0].mxu0
    %v5137 = vadd.f32 %v4792, %v5136
    %v5138 = vpop.f32.mrb[0].mxu0
    %v5139 = vadd.f32 %v4796, %v5138
    %5140 = vmatprep.mubr.f32.mxu0 %v4718
    %5141 = vmatmul.mubr.f32.gmra.mrb[0].mxu0 %v4717
    %v5142 = vpop.f32.mrb[0].mxu0
    %v5143 = vadd.f32 %v4792, %v5142
    %v5144 = vpop.f32.mrb[0].mxu0
    %v5145 = vadd.f32 %v4796, %v5144
    %5146 = vmatprep.mubr.f32.mxu0 %v4720
    %5147 = vmatmul.mubr.f32.gmra.mrb[0].mxu0 %v4719
    %v5148 = vpop.f32.mrb[0].mxu0
    %v5149 = vadd.f32 %v4792, %v5148
    %v5150 = vpop.f32.mrb[0].mxu0
    %v5151 = vadd.f32 %v4796, %v5150
    %5152 = vdwg.mxu0
    %v5153 = vtanh.pop %v5059
    %v5154 = vtanh.pop %v5061
    %v5155 = vtanh.pop %v5065
    %v5156 = vtanh.pop %v5067
    %v5157 = vtanh.pop %v5071
    %v5158 = vtanh.pop %v5073
    %v5159 = vtanh.pop %v5077
    %v5160 = vtanh.pop %v5079
    %v5161 = vtanh.pop %v5083
    %v5162 = vtanh.pop %v5085
    %v5163 = vtanh.pop %v5089
    %v5164 = vtanh.pop %v5091
    %v5165 = vtanh.pop %v5095
    %v5166 = vtanh.pop %v5097
    %v5167 = vtanh.pop %v5101
    %v5168 = vtanh.pop %v5103
    %v5169 = vtanh.pop %v5107
    %v5170 = vtanh.pop %v5109
    %v5171 = vtanh.pop %v5113
    %v5172 = vtanh.pop %v5115
    %v5173 = vtanh.pop %v5119
    %v5174 = vtanh.pop %v5121
    %v5175 = vtanh.pop %v5125
    %v5176 = vtanh.pop %v5127
    %v5177 = vtanh.pop %v5131
    %v5178 = vtanh.pop %v5133
    %v5179 = vtanh.pop %v5137
    %v5180 = vtanh.pop %v5139
    %v5181 = vtanh.pop %v5143
    %v5182 = vtanh.pop %v5145
    %v5183 = vtanh.pop %v5149
    %v5184 = vtanh.pop %v5151
    %s5185 = scalar_lea.vmem [#allocation4], 4608
    %v5186 = vld [vmem:[%s5185] sm:$0xff]
    %v5187 = vld [vmem:[%s5185 + $0x8] sm:$0xff]
    %v5188 = vld [vmem:[%s5185 + $0x10] sm:$0xff]
    %v5189 = vld [vmem:[%s5185 + $0x18] sm:$0xff]
    %v5190 = vld [vmem:[%s5185 + $0x20] sm:$0xff]
    %v5191 = vld [vmem:[%s5185 + $0x28] sm:$0xff]
    %v5192 = vld [vmem:[%s5185 + $0x30] sm:$0xff]
    %v5193 = vld [vmem:[%s5185 + $0x38] sm:$0xff]
    %v5194 = vld [vmem:[%s5185 + $0x40] sm:$0xff]
    %v5195 = vld [vmem:[%s5185 + $0x48] sm:$0xff]
    %v5196 = vld [vmem:[%s5185 + $0x50] sm:$0xff]
    %v5197 = vld [vmem:[%s5185 + $0x58] sm:$0xff]
    %v5198 = vld [vmem:[%s5185 + $0x60] sm:$0xff]
    %v5199 = vld [vmem:[%s5185 + $0x68] sm:$0xff]
    %v5200 = vld [vmem:[%s5185 + $0x70] sm:$0xff]
    %v5201 = vld [vmem:[%s5185 + $0x78] sm:$0xff]
    %v5202 = vld [vmem:[%s5185 + $0x80] sm:$0xff]
    %v5203 = vld [vmem:[%s5185 + $0x88] sm:$0xff]
    %v5204 = vld [vmem:[%s5185 + $0x90] sm:$0xff]
    %v5205 = vld [vmem:[%s5185 + $0x98] sm:$0xff]
    %v5206 = vld [vmem:[%s5185 + $0xa0] sm:$0xff]
    %v5207 = vld [vmem:[%s5185 + $0xa8] sm:$0xff]
    %v5208 = vld [vmem:[%s5185 + $0xb0] sm:$0xff]
    %v5209 = vld [vmem:[%s5185 + $0xb8] sm:$0xff]
    %v5210 = vld [vmem:[%s5185 + $0xc0] sm:$0xff]
    %v5211 = vld [vmem:[%s5185 + $0xc8] sm:$0xff]
    %v5212 = vld [vmem:[%s5185 + $0xd0] sm:$0xff]
    %v5213 = vld [vmem:[%s5185 + $0xd8] sm:$0xff]
    %v5214 = vld [vmem:[%s5185 + $0xe0] sm:$0xff]
    %v5215 = vld [vmem:[%s5185 + $0xe8] sm:$0xff]
    %v5216 = vld [vmem:[%s5185 + $0xf0] sm:$0xff]
    %v5217 = vld [vmem:[%s5185 + $0xf8] sm:$0xff]
    %v5218 = vld [vmem:[%s5185 + $0x100] sm:$0xff]
    %v5219 = vld [vmem:[%s5185 + $0x108] sm:$0xff]
    %v5220 = vld [vmem:[%s5185 + $0x110] sm:$0xff]
    %v5221 = vld [vmem:[%s5185 + $0x118] sm:$0xff]
    %v5222 = vld [vmem:[%s5185 + $0x120] sm:$0xff]
    %v5223 = vld [vmem:[%s5185 + $0x128] sm:$0xff]
    %v5224 = vld [vmem:[%s5185 + $0x130] sm:$0xff]
    %v5225 = vld [vmem:[%s5185 + $0x138] sm:$0xff]
    %v5226 = vld [vmem:[%s5185 + $0x140] sm:$0xff]
    %v5227 = vld [vmem:[%s5185 + $0x148] sm:$0xff]
    %v5228 = vld [vmem:[%s5185 + $0x150] sm:$0xff]
    %v5229 = vld [vmem:[%s5185 + $0x158] sm:$0xff]
    %v5230 = vld [vmem:[%s5185 + $0x160] sm:$0xff]
    %v5231 = vld [vmem:[%s5185 + $0x168] sm:$0xff]
    %v5232 = vld [vmem:[%s5185 + $0x170] sm:$0xff]
    %v5233 = vld [vmem:[%s5185 + $0x178] sm:$0xff]
    %v5234 = vld [vmem:[%s5185 + $0x180] sm:$0xff]
    %v5235 = vld [vmem:[%s5185 + $0x188] sm:$0xff]
    %v5236 = vld [vmem:[%s5185 + $0x190] sm:$0xff]
    %v5237 = vld [vmem:[%s5185 + $0x198] sm:$0xff]
    %v5238 = vld [vmem:[%s5185 + $0x1a0] sm:$0xff]
    %v5239 = vld [vmem:[%s5185 + $0x1a8] sm:$0xff]
    %v5240 = vld [vmem:[%s5185 + $0x1b0] sm:$0xff]
    %v5241 = vld [vmem:[%s5185 + $0x1b8] sm:$0xff]
    %v5242 = vld [vmem:[%s5185 + $0x1c0] sm:$0xff]
    %v5243 = vld [vmem:[%s5185 + $0x1c8] sm:$0xff]
    %v5244 = vld [vmem:[%s5185 + $0x1d0] sm:$0xff]
    %v5245 = vld [vmem:[%s5185 + $0x1d8] sm:$0xff]
    %v5246 = vld [vmem:[%s5185 + $0x1e0] sm:$0xff]
    %v5247 = vld [vmem:[%s5185 + $0x1e8] sm:$0xff]
    %v5248 = vld [vmem:[%s5185 + $0x1f0] sm:$0xff]
    %v5249 = vld [vmem:[%s5185 + $0x1f8] sm:$0xff]
    %s5250 = scalar_lea.vmem [#allocation6], 18
    %v5251 = vld [vmem:[%s5250] sm:$0x3]
    %v5253 = vlaneseq
    %v5254 = vshrl.u32 %v5253, 7
    %v5255 = vsub.s32 0, %v5254
    %v5256 = vrot.slane %v5251, %v5255
    %v5257 = vlaneseq
    %v5258 = vshrl.u32 %v5257, 7
    %v5259 = vsub.s32 1, %v5258
    %v5260 = vrot.slane %v5251, %v5259
    %5263 = vmatprep.subr.mxu0 %v5187
    %5264 = vmatpush1.msra.mxu0 %v5186
    %5265 = vmatprep.subr.mxu0 %v5189
    %5266 = vmatpush1.msra.mxu0 %v5188
    %5267 = vmatprep.subr.mxu0 %v5191
    %5268 = vmatpush1.msra.mxu0 %v5190
    %5269 = vmatprep.subr.mxu0 %v5193
    %5270 = vmatpush1.msra.mxu0 %v5192
    %5271 = vmatprep.subr.mxu0 %v5195
    %5272 = vmatpush1.msra.mxu0 %v5194
    %5273 = vmatprep.subr.mxu0 %v5197
    %5274 = vmatpush1.msra.mxu0 %v5196
    %5275 = vmatprep.subr.mxu0 %v5199
    %5276 = vmatpush1.msra.mxu0 %v5198
    %5277 = vmatprep.subr.mxu0 %v5201
    %5278 = vmatpush1.msra.mxu0 %v5200
    %5279 = vmatprep.subr.mxu0 %v5203
    %5280 = vmatpush1.msra.mxu0 %v5202
    %5281 = vmatprep.subr.mxu0 %v5205
    %5282 = vmatpush1.msra.mxu0 %v5204
    %5283 = vmatprep.subr.mxu0 %v5207
    %5284 = vmatpush1.msra.mxu0 %v5206
    %5285 = vmatprep.subr.mxu0 %v5209
    %5286 = vmatpush1.msra.mxu0 %v5208
    %5287 = vmatprep.subr.mxu0 %v5211
    %5288 = vmatpush1.msra.mxu0 %v5210
    %5289 = vmatprep.subr.mxu0 %v5213
    %5290 = vmatpush1.msra.mxu0 %v5212
    %5291 = vmatprep.subr.mxu0 %v5215
    %5292 = vmatpush1.msra.mxu0 %v5214
    %5293 = vmatprep.subr.mxu0 %v5217
    %5294 = vmatpush1.msra.mxu0 %v5216
    %5295 = vmatprep.subr.mxu0 %v5219
    %5296 = vmatpush1.msra.mxu0 %v5218
    %5297 = vmatprep.subr.mxu0 %v5221
    %5298 = vmatpush1.msra.mxu0 %v5220
    %5299 = vmatprep.subr.mxu0 %v5223
    %5300 = vmatpush1.msra.mxu0 %v5222
    %5301 = vmatprep.subr.mxu0 %v5225
    %5302 = vmatpush1.msra.mxu0 %v5224
    %5303 = vmatprep.subr.mxu0 %v5227
    %5304 = vmatpush1.msra.mxu0 %v5226
    %5305 = vmatprep.subr.mxu0 %v5229
    %5306 = vmatpush1.msra.mxu0 %v5228
    %5307 = vmatprep.subr.mxu0 %v5231
    %5308 = vmatpush1.msra.mxu0 %v5230
    %5309 = vmatprep.subr.mxu0 %v5233
    %5310 = vmatpush1.msra.mxu0 %v5232
    %5311 = vmatprep.subr.mxu0 %v5235
    %5312 = vmatpush1.msra.mxu0 %v5234
    %5313 = vmatprep.subr.mxu0 %v5237
    %5314 = vmatpush1.msra.mxu0 %v5236
    %5315 = vmatprep.subr.mxu0 %v5239
    %5316 = vmatpush1.msra.mxu0 %v5238
    %5317 = vmatprep.subr.mxu0 %v5241
    %5318 = vmatpush1.msra.mxu0 %v5240
    %5319 = vmatprep.subr.mxu0 %v5243
    %5320 = vmatpush1.msra.mxu0 %v5242
    %5321 = vmatprep.subr.mxu0 %v5245
    %5322 = vmatpush1.msra.mxu0 %v5244
    %5323 = vmatprep.subr.mxu0 %v5247
    %5324 = vmatpush1.msra.mxu0 %v5246
    %5325 = vmatprep.subr.mxu0 %v5249
    %5326 = vmatpush1.msra.mxu0 %v5248
    %5327 = vmatprep.mubr.f32.mxu0 %v4961
    %5328 = vmatmul.mubr.f32.gmra.mrb[0].mxu0 %v4960
    %v5329 = vpop.f32.mrb[0].mxu0
    %v5330 = vadd.f32 %v5256, %v5329
    %v5331 = vpop.f32.mrb[0].mxu0
    %v5332 = vadd.f32 %v5260, %v5331
    %5333 = vmatprep.mubr.f32.mxu0 %v4963
    %5334 = vmatmul.mubr.f32.gmra.mrb[0].mxu0 %v4962
    %v5335 = vpop.f32.mrb[0].mxu0
    %v5336 = vadd.f32 %v5256, %v5335
    %v5337 = vpop.f32.mrb[0].mxu0
    %v5338 = vadd.f32 %v5260, %v5337
    %5339 = vmatprep.mubr.f32.mxu0 %v4965
    %5340 = vmatmul.mubr.f32.gmra.mrb[0].mxu0 %v4964
    %v5341 = vpop.f32.mrb[0].mxu0
    %v5342 = vadd.f32 %v5256, %v5341
    %v5343 = vpop.f32.mrb[0].mxu0
    %v5344 = vadd.f32 %v5260, %v5343
    %5345 = vmatprep.mubr.f32.mxu0 %v4967
    %5346 = vmatmul.mubr.f32.gmra.mrb[0].mxu0 %v4966
    %v5347 = vpop.f32.mrb[0].mxu0
    %v5348 = vadd.f32 %v5256, %v5347
    %v5349 = vpop.f32.mrb[0].mxu0
    %v5350 = vadd.f32 %v5260, %v5349
    %5351 = vmatprep.mubr.f32.mxu0 %v4969
    %5352 = vmatmul.mubr.f32.gmra.mrb[0].mxu0 %v4968
    %v5353 = vpop.f32.mrb[0].mxu0
    %v5354 = vadd.f32 %v5256, %v5353
    %v5355 = vpop.f32.mrb[0].mxu0
    %v5356 = vadd.f32 %v5260, %v5355
    %5357 = vmatprep.mubr.f32.mxu0 %v4971
    %5358 = vmatmul.mubr.f32.gmra.mrb[0].mxu0 %v4970
    %v5359 = vpop.f32.mrb[0].mxu0
    %v5360 = vadd.f32 %v5256, %v5359
    %v5361 = vpop.f32.mrb[0].mxu0
    %v5362 = vadd.f32 %v5260, %v5361
    %5363 = vmatprep.mubr.f32.mxu0 %v4973
    %5364 = vmatmul.mubr.f32.gmra.mrb[0].mxu0 %v4972
    %v5365 = vpop.f32.mrb[0].mxu0
    %v5366 = vadd.f32 %v5256, %v5365
    %v5367 = vpop.f32.mrb[0].mxu0
    %v5368 = vadd.f32 %v5260, %v5367
    %5369 = vmatprep.mubr.f32.mxu0 %v4975
    %5370 = vmatmul.mubr.f32.gmra.mrb[0].mxu0 %v4974
    %v5371 = vpop.f32.mrb[0].mxu0
    %v5372 = vadd.f32 %v5256, %v5371
    %v5373 = vpop.f32.mrb[0].mxu0
    %v5374 = vadd.f32 %v5260, %v5373
    %5375 = vmatprep.mubr.f32.mxu0 %v4977
    %5376 = vmatmul.mubr.f32.gmra.mrb[0].mxu0 %v4976
    %v5377 = vpop.f32.mrb[0].mxu0
    %v5378 = vadd.f32 %v5256, %v5377
    %v5379 = vpop.f32.mrb[0].mxu0
    %v5380 = vadd.f32 %v5260, %v5379
    %5381 = vmatprep.mubr.f32.mxu0 %v4979
    %5382 = vmatmul.mubr.f32.gmra.mrb[0].mxu0 %v4978
    %v5383 = vpop.f32.mrb[0].mxu0
    %v5384 = vadd.f32 %v5256, %v5383
    %v5385 = vpop.f32.mrb[0].mxu0
    %v5386 = vadd.f32 %v5260, %v5385
    %5387 = vmatprep.mubr.f32.mxu0 %v4981
    %5388 = vmatmul.mubr.f32.gmra.mrb[0].mxu0 %v4980
    %v5389 = vpop.f32.mrb[0].mxu0
    %v5390 = vadd.f32 %v5256, %v5389
    %v5391 = vpop.f32.mrb[0].mxu0
    %v5392 = vadd.f32 %v5260, %v5391
    %5393 = vmatprep.mubr.f32.mxu0 %v4983
    %5394 = vmatmul.mubr.f32.gmra.mrb[0].mxu0 %v4982
    %v5395 = vpop.f32.mrb[0].mxu0
    %v5396 = vadd.f32 %v5256, %v5395
    %v5397 = vpop.f32.mrb[0].mxu0
    %v5398 = vadd.f32 %v5260, %v5397
    %5399 = vmatprep.mubr.f32.mxu0 %v4985
    %5400 = vmatmul.mubr.f32.gmra.mrb[0].mxu0 %v4984
    %v5401 = vpop.f32.mrb[0].mxu0
    %v5402 = vadd.f32 %v5256, %v5401
    %v5403 = vpop.f32.mrb[0].mxu0
    %v5404 = vadd.f32 %v5260, %v5403
    %5405 = vmatprep.mubr.f32.mxu0 %v4987
    %5406 = vmatmul.mubr.f32.gmra.mrb[0].mxu0 %v4986
    %v5407 = vpop.f32.mrb[0].mxu0
    %v5408 = vadd.f32 %v5256, %v5407
    %v5409 = vpop.f32.mrb[0].mxu0
    %v5410 = vadd.f32 %v5260, %v5409
    %5411 = vmatprep.mubr.f32.mxu0 %v4989
    %5412 = vmatmul.mubr.f32.gmra.mrb[0].mxu0 %v4988
    %v5413 = vpop.f32.mrb[0].mxu0
    %v5414 = vadd.f32 %v5256, %v5413
    %v5415 = vpop.f32.mrb[0].mxu0
    %v5416 = vadd.f32 %v5260, %v5415
    %5417 = vmatprep.mubr.f32.mxu0 %v4991
    %5418 = vmatmul.mubr.f32.gmra.mrb[0].mxu0 %v4990
    %v5419 = vpop.f32.mrb[0].mxu0
    %v5420 = vadd.f32 %v5256, %v5419
    %v5421 = vpop.f32.mrb[0].mxu0
    %v5422 = vadd.f32 %v5260, %v5421
    %5423 = vdwg.mxu0
    %v5424 = vtanh.pop %v5330
    %v5425 = vtanh.pop %v5332
    %v5426 = vtanh.pop %v5336
    %v5427 = vtanh.pop %v5338
    %v5428 = vtanh.pop %v5342
    %v5429 = vtanh.pop %v5344
    %v5430 = vtanh.pop %v5348
    %v5431 = vtanh.pop %v5350
    %v5432 = vtanh.pop %v5354
    %v5433 = vtanh.pop %v5356
    %v5434 = vtanh.pop %v5360
    %v5435 = vtanh.pop %v5362
    %v5436 = vtanh.pop %v5366
    %v5437 = vtanh.pop %v5368
    %v5438 = vtanh.pop %v5372
    %v5439 = vtanh.pop %v5374
    %v5440 = vtanh.pop %v5378
    %v5441 = vtanh.pop %v5380
    %v5442 = vtanh.pop %v5384
    %v5443 = vtanh.pop %v5386
    %v5444 = vtanh.pop %v5390
    %v5445 = vtanh.pop %v5392
    %v5446 = vtanh.pop %v5396
    %v5447 = vtanh.pop %v5398
    %v5448 = vtanh.pop %v5402
    %v5449 = vtanh.pop %v5404
    %v5450 = vtanh.pop %v5408
    %v5451 = vtanh.pop %v5410
    %v5452 = vtanh.pop %v5414
    %v5453 = vtanh.pop %v5416
    %v5454 = vtanh.pop %v5420
    %v5455 = vtanh.pop %v5422
    %5456 = vmatprep.subr.mxu0 %v5187
    %5457 = vmatpush1.msra.mxu0 %v5186
    %5458 = vmatprep.subr.mxu0 %v5189
    %5459 = vmatpush1.msra.mxu0 %v5188
    %5460 = vmatprep.subr.mxu0 %v5191
    %5461 = vmatpush1.msra.mxu0 %v5190
    %5462 = vmatprep.subr.mxu0 %v5193
    %5463 = vmatpush1.msra.mxu0 %v5192
    %5464 = vmatprep.subr.mxu0 %v5195
    %5465 = vmatpush1.msra.mxu0 %v5194
    %5466 = vmatprep.subr.mxu0 %v5197
    %5467 = vmatpush1.msra.mxu0 %v5196
    %5468 = vmatprep.subr.mxu0 %v5199
    %5469 = vmatpush1.msra.mxu0 %v5198
    %5470 = vmatprep.subr.mxu0 %v5201
    %5471 = vmatpush1.msra.mxu0 %v5200
    %5472 = vmatprep.subr.mxu0 %v5203
    %5473 = vmatpush1.msra.mxu0 %v5202
    %5474 = vmatprep.subr.mxu0 %v5205
    %5475 = vmatpush1.msra.mxu0 %v5204
    %5476 = vmatprep.subr.mxu0 %v5207
    %5477 = vmatpush1.msra.mxu0 %v5206
    %5478 = vmatprep.subr.mxu0 %v5209
    %5479 = vmatpush1.msra.mxu0 %v5208
    %5480 = vmatprep.subr.mxu0 %v5211
    %5481 = vmatpush1.msra.mxu0 %v5210
    %5482 = vmatprep.subr.mxu0 %v5213
    %5483 = vmatpush1.msra.mxu0 %v5212
    %5484 = vmatprep.subr.mxu0 %v5215
    %5485 = vmatpush1.msra.mxu0 %v5214
    %5486 = vmatprep.subr.mxu0 %v5217
    %5487 = vmatpush1.msra.mxu0 %v5216
    %5488 = vmatprep.subr.mxu0 %v5219
    %5489 = vmatpush1.msra.mxu0 %v5218
    %5490 = vmatprep.subr.mxu0 %v5221
    %5491 = vmatpush1.msra.mxu0 %v5220
    %5492 = vmatprep.subr.mxu0 %v5223
    %5493 = vmatpush1.msra.mxu0 %v5222
    %5494 = vmatprep.subr.mxu0 %v5225
    %5495 = vmatpush1.msra.mxu0 %v5224
    %5496 = vmatprep.subr.mxu0 %v5227
    %5497 = vmatpush1.msra.mxu0 %v5226
    %5498 = vmatprep.subr.mxu0 %v5229
    %5499 = vmatpush1.msra.mxu0 %v5228
    %5500 = vmatprep.subr.mxu0 %v5231
    %5501 = vmatpush1.msra.mxu0 %v5230
    %5502 = vmatprep.subr.mxu0 %v5233
    %5503 = vmatpush1.msra.mxu0 %v5232
    %5504 = vmatprep.subr.mxu0 %v5235
    %5505 = vmatpush1.msra.mxu0 %v5234
    %5506 = vmatprep.subr.mxu0 %v5237
    %5507 = vmatpush1.msra.mxu0 %v5236
    %5508 = vmatprep.subr.mxu0 %v5239
    %5509 = vmatpush1.msra.mxu0 %v5238
    %5510 = vmatprep.subr.mxu0 %v5241
    %5511 = vmatpush1.msra.mxu0 %v5240
    %5512 = vmatprep.subr.mxu0 %v5243
    %5513 = vmatpush1.msra.mxu0 %v5242
    %5514 = vmatprep.subr.mxu0 %v5245
    %5515 = vmatpush1.msra.mxu0 %v5244
    %5516 = vmatprep.subr.mxu0 %v5247
    %5517 = vmatpush1.msra.mxu0 %v5246
    %5518 = vmatprep.subr.mxu0 %v5249
    %5519 = vmatpush1.msra.mxu0 %v5248
    %5520 = vmatprep.mubr.f32.mxu0 %v5154
    %5521 = vmatmul.mubr.f32.gmra.mrb[0].mxu0 %v5153
    %v5522 = vpop.f32.mrb[0].mxu0
    %v5523 = vadd.f32 %v5256, %v5522
    %v5524 = vpop.f32.mrb[0].mxu0
    %v5525 = vadd.f32 %v5260, %v5524
    %5526 = vmatprep.mubr.f32.mxu0 %v5156
    %5527 = vmatmul.mubr.f32.gmra.mrb[0].mxu0 %v5155
    %v5528 = vpop.f32.mrb[0].mxu0
    %v5529 = vadd.f32 %v5256, %v5528
    %v5530 = vpop.f32.mrb[0].mxu0
    %v5531 = vadd.f32 %v5260, %v5530
    %5532 = vmatprep.mubr.f32.mxu0 %v5158
    %5533 = vmatmul.mubr.f32.gmra.mrb[0].mxu0 %v5157
    %v5534 = vpop.f32.mrb[0].mxu0
    %v5535 = vadd.f32 %v5256, %v5534
    %v5536 = vpop.f32.mrb[0].mxu0
    %v5537 = vadd.f32 %v5260, %v5536
    %5538 = vmatprep.mubr.f32.mxu0 %v5160
    %5539 = vmatmul.mubr.f32.gmra.mrb[0].mxu0 %v5159
    %v5540 = vpop.f32.mrb[0].mxu0
    %v5541 = vadd.f32 %v5256, %v5540
    %v5542 = vpop.f32.mrb[0].mxu0
    %v5543 = vadd.f32 %v5260, %v5542
    %5544 = vmatprep.mubr.f32.mxu0 %v5162
    %5545 = vmatmul.mubr.f32.gmra.mrb[0].mxu0 %v5161
    %v5546 = vpop.f32.mrb[0].mxu0
    %v5547 = vadd.f32 %v5256, %v5546
    %v5548 = vpop.f32.mrb[0].mxu0
    %v5549 = vadd.f32 %v5260, %v5548
    %5550 = vmatprep.mubr.f32.mxu0 %v5164
    %5551 = vmatmul.mubr.f32.gmra.mrb[0].mxu0 %v5163
    %v5552 = vpop.f32.mrb[0].mxu0
    %v5553 = vadd.f32 %v5256, %v5552
    %v5554 = vpop.f32.mrb[0].mxu0
    %v5555 = vadd.f32 %v5260, %v5554
    %5556 = vmatprep.mubr.f32.mxu0 %v5166
    %5557 = vmatmul.mubr.f32.gmra.mrb[0].mxu0 %v5165
    %v5558 = vpop.f32.mrb[0].mxu0
    %v5559 = vadd.f32 %v5256, %v5558
    %v5560 = vpop.f32.mrb[0].mxu0
    %v5561 = vadd.f32 %v5260, %v5560
    %5562 = vmatprep.mubr.f32.mxu0 %v5168
    %5563 = vmatmul.mubr.f32.gmra.mrb[0].mxu0 %v5167
    %v5564 = vpop.f32.mrb[0].mxu0
    %v5565 = vadd.f32 %v5256, %v5564
    %v5566 = vpop.f32.mrb[0].mxu0
    %v5567 = vadd.f32 %v5260, %v5566
    %5568 = vmatprep.mubr.f32.mxu0 %v5170
    %5569 = vmatmul.mubr.f32.gmra.mrb[0].mxu0 %v5169
    %v5570 = vpop.f32.mrb[0].mxu0
    %v5571 = vadd.f32 %v5256, %v5570
    %v5572 = vpop.f32.mrb[0].mxu0
    %v5573 = vadd.f32 %v5260, %v5572
    %5574 = vmatprep.mubr.f32.mxu0 %v5172
    %5575 = vmatmul.mubr.f32.gmra.mrb[0].mxu0 %v5171
    %v5576 = vpop.f32.mrb[0].mxu0
    %v5577 = vadd.f32 %v5256, %v5576
    %v5578 = vpop.f32.mrb[0].mxu0
    %v5579 = vadd.f32 %v5260, %v5578
    %5580 = vmatprep.mubr.f32.mxu0 %v5174
    %5581 = vmatmul.mubr.f32.gmra.mrb[0].mxu0 %v5173
    %v5582 = vpop.f32.mrb[0].mxu0
    %v5583 = vadd.f32 %v5256, %v5582
    %v5584 = vpop.f32.mrb[0].mxu0
    %v5585 = vadd.f32 %v5260, %v5584
    %5586 = vmatprep.mubr.f32.mxu0 %v5176
    %5587 = vmatmul.mubr.f32.gmra.mrb[0].mxu0 %v5175
    %v5588 = vpop.f32.mrb[0].mxu0
    %v5589 = vadd.f32 %v5256, %v5588
    %v5590 = vpop.f32.mrb[0].mxu0
    %v5591 = vadd.f32 %v5260, %v5590
    %5592 = vmatprep.mubr.f32.mxu0 %v5178
    %5593 = vmatmul.mubr.f32.gmra.mrb[0].mxu0 %v5177
    %v5594 = vpop.f32.mrb[0].mxu0
    %v5595 = vadd.f32 %v5256, %v5594
    %v5596 = vpop.f32.mrb[0].mxu0
    %v5597 = vadd.f32 %v5260, %v5596
    %5598 = vmatprep.mubr.f32.mxu0 %v5180
    %5599 = vmatmul.mubr.f32.gmra.mrb[0].mxu0 %v5179
    %v5600 = vpop.f32.mrb[0].mxu0
    %v5601 = vadd.f32 %v5256, %v5600
    %v5602 = vpop.f32.mrb[0].mxu0
    %v5603 = vadd.f32 %v5260, %v5602
    %5604 = vmatprep.mubr.f32.mxu0 %v5182
    %5605 = vmatmul.mubr.f32.gmra.mrb[0].mxu0 %v5181
    %v5606 = vpop.f32.mrb[0].mxu0
    %v5607 = vadd.f32 %v5256, %v5606
    %v5608 = vpop.f32.mrb[0].mxu0
    %v5609 = vadd.f32 %v5260, %v5608
    %5610 = vmatprep.mubr.f32.mxu0 %v5184
    %5611 = vmatmul.mubr.f32.gmra.mrb[0].mxu0 %v5183
    %v5612 = vpop.f32.mrb[0].mxu0
    %v5613 = vadd.f32 %v5256, %v5612
    %v5614 = vpop.f32.mrb[0].mxu0
    %v5615 = vadd.f32 %v5260, %v5614
    %5616 = vdwg.mxu0
    %v5617 = vtanh.pop %v5523
    %v5618 = vtanh.pop %v5525
    %v5619 = vtanh.pop %v5529
    %v5620 = vtanh.pop %v5531
    %v5621 = vtanh.pop %v5535
    %v5622 = vtanh.pop %v5537
    %v5623 = vtanh.pop %v5541
    %v5624 = vtanh.pop %v5543
    %v5625 = vtanh.pop %v5547
    %v5626 = vtanh.pop %v5549
    %v5627 = vtanh.pop %v5553
    %v5628 = vtanh.pop %v5555
    %v5629 = vtanh.pop %v5559
    %v5630 = vtanh.pop %v5561
    %v5631 = vtanh.pop %v5565
    %v5632 = vtanh.pop %v5567
    %v5633 = vtanh.pop %v5571
    %v5634 = vtanh.pop %v5573
    %v5635 = vtanh.pop %v5577
    %v5636 = vtanh.pop %v5579
    %v5637 = vtanh.pop %v5583
    %v5638 = vtanh.pop %v5585
    %v5639 = vtanh.pop %v5589
    %v5640 = vtanh.pop %v5591
    %v5641 = vtanh.pop %v5595
    %v5642 = vtanh.pop %v5597
    %v5643 = vtanh.pop %v5601
    %v5644 = vtanh.pop %v5603
    %v5645 = vtanh.pop %v5607
    %v5646 = vtanh.pop %v5609
    %v5647 = vtanh.pop %v5613
    %v5648 = vtanh.pop %v5615
    %v5649 = vld [vmem:[%s5] sm:$0xff]
    %v5650 = vld [vmem:[%s5 + $0x8] sm:$0xff]
    %v5651 = vld [vmem:[%s5 + $0x10] sm:$0xff]
    %v5652 = vld [vmem:[%s5 + $0x18] sm:$0xff]
    %v5653 = vld [vmem:[%s5 + $0x20] sm:$0xff]
    %v5654 = vld [vmem:[%s5 + $0x28] sm:$0xff]
    %v5655 = vld [vmem:[%s5 + $0x30] sm:$0xff]
    %v5656 = vld [vmem:[%s5 + $0x38] sm:$0xff]
    %v5657 = vld [vmem:[%s5 + $0x40] sm:$0xff]
    %v5658 = vld [vmem:[%s5 + $0x48] sm:$0xff]
    %v5659 = vld [vmem:[%s5 + $0x50] sm:$0xff]
    %v5660 = vld [vmem:[%s5 + $0x58] sm:$0xff]
    %v5661 = vld [vmem:[%s5 + $0x60] sm:$0xff]
    %v5662 = vld [vmem:[%s5 + $0x68] sm:$0xff]
    %v5663 = vld [vmem:[%s5 + $0x70] sm:$0xff]
    %v5664 = vld [vmem:[%s5 + $0x78] sm:$0xff]
    %v5665 = vld [vmem:[%s5 + $0x80] sm:$0xff]
    %v5666 = vld [vmem:[%s5 + $0x88] sm:$0xff]
    %v5667 = vld [vmem:[%s5 + $0x90] sm:$0xff]
    %v5668 = vld [vmem:[%s5 + $0x98] sm:$0xff]
    %v5669 = vld [vmem:[%s5 + $0xa0] sm:$0xff]
    %v5670 = vld [vmem:[%s5 + $0xa8] sm:$0xff]
    %v5671 = vld [vmem:[%s5 + $0xb0] sm:$0xff]
    %v5672 = vld [vmem:[%s5 + $0xb8] sm:$0xff]
    %v5673 = vld [vmem:[%s5 + $0xc0] sm:$0xff]
    %v5674 = vld [vmem:[%s5 + $0xc8] sm:$0xff]
    %v5675 = vld [vmem:[%s5 + $0xd0] sm:$0xff]
    %v5676 = vld [vmem:[%s5 + $0xd8] sm:$0xff]
    %v5677 = vld [vmem:[%s5 + $0xe0] sm:$0xff]
    %v5678 = vld [vmem:[%s5 + $0xe8] sm:$0xff]
    %v5679 = vld [vmem:[%s5 + $0xf0] sm:$0xff]
    %v5680 = vld [vmem:[%s5 + $0xf8] sm:$0xff]
    %v5681 = vld [vmem:[%s6] sm:$0x1]
    %v5683 = vlaneseq
    %v5684 = vshrl.u32 %v5683, 7
    %v5685 = vsub.s32 0, %v5684
    %v5686 = vrot.slane %v5681, %v5685
    %5688 = vmatprep.subr.mxu0 0.0
    %5689 = vmatpush1.msra.mxu0 %v5649
    %5690 = vmatprep.subr.mxu0 0.0
    %5691 = vmatpush1.msra.mxu0 %v5650
    %5692 = vmatprep.subr.mxu0 0.0
    %5693 = vmatpush1.msra.mxu0 %v5651
    %5694 = vmatprep.subr.mxu0 0.0
    %5695 = vmatpush1.msra.mxu0 %v5652
    %5696 = vmatprep.subr.mxu0 0.0
    %5697 = vmatpush1.msra.mxu0 %v5653
    %5698 = vmatprep.subr.mxu0 0.0
    %5699 = vmatpush1.msra.mxu0 %v5654
    %5700 = vmatprep.subr.mxu0 0.0
    %5701 = vmatpush1.msra.mxu0 %v5655
    %5702 = vmatprep.subr.mxu0 0.0
    %5703 = vmatpush1.msra.mxu0 %v5656
    %5704 = vmatprep.subr.mxu0 0.0
    %5705 = vmatpush1.msra.mxu0 %v5657
    %5706 = vmatprep.subr.mxu0 0.0
    %5707 = vmatpush1.msra.mxu0 %v5658
    %5708 = vmatprep.subr.mxu0 0.0
    %5709 = vmatpush1.msra.mxu0 %v5659
    %5710 = vmatprep.subr.mxu0 0.0
    %5711 = vmatpush1.msra.mxu0 %v5660
    %5712 = vmatprep.subr.mxu0 0.0
    %5713 = vmatpush1.msra.mxu0 %v5661
    %5714 = vmatprep.subr.mxu0 0.0
    %5715 = vmatpush1.msra.mxu0 %v5662
    %5716 = vmatprep.subr.mxu0 0.0
    %5717 = vmatpush1.msra.mxu0 %v5663
    %5718 = vmatprep.subr.mxu0 0.0
    %5719 = vmatpush1.msra.mxu0 %v5664
    %5720 = vmatprep.subr.mxu0 0.0
    %5721 = vmatpush1.msra.mxu0 %v5665
    %5722 = vmatprep.subr.mxu0 0.0
    %5723 = vmatpush1.msra.mxu0 %v5666
    %5724 = vmatprep.subr.mxu0 0.0
    %5725 = vmatpush1.msra.mxu0 %v5667
    %5726 = vmatprep.subr.mxu0 0.0
    %5727 = vmatpush1.msra.mxu0 %v5668
    %5728 = vmatprep.subr.mxu0 0.0
    %5729 = vmatpush1.msra.mxu0 %v5669
    %5730 = vmatprep.subr.mxu0 0.0
    %5731 = vmatpush1.msra.mxu0 %v5670
    %5732 = vmatprep.subr.mxu0 0.0
    %5733 = vmatpush1.msra.mxu0 %v5671
    %5734 = vmatprep.subr.mxu0 0.0
    %5735 = vmatpush1.msra.mxu0 %v5672
    %5736 = vmatprep.subr.mxu0 0.0
    %5737 = vmatpush1.msra.mxu0 %v5673
    %5738 = vmatprep.subr.mxu0 0.0
    %5739 = vmatpush1.msra.mxu0 %v5674
    %5740 = vmatprep.subr.mxu0 0.0
    %5741 = vmatpush1.msra.mxu0 %v5675
    %5742 = vmatprep.subr.mxu0 0.0
    %5743 = vmatpush1.msra.mxu0 %v5676
    %5744 = vmatprep.subr.mxu0 0.0
    %5745 = vmatpush1.msra.mxu0 %v5677
    %5746 = vmatprep.subr.mxu0 0.0
    %5747 = vmatpush1.msra.mxu0 %v5678
    %5748 = vmatprep.subr.mxu0 0.0
    %5749 = vmatpush1.msra.mxu0 %v5679
    %5750 = vmatprep.subr.mxu0 0.0
    %5751 = vmatpush1.msra.mxu0 %v5680
    %5752 = vmatprep.mubr.f32.mxu0 %v5425
    %5753 = vmatmul.mubr.f32.gmra.mrb[0].mxu0 %v5424
    %v5754 = vpop.f32.mrb[0].mxu0
    %v5755 = vadd.f32 %v5686, %v5754
    %v5756 = vpop.f32.mrb[0].mxu0
    %5757 = vmatprep.mubr.f32.mxu0 %v5427
    %5758 = vmatmul.mubr.f32.gmra.mrb[0].mxu0 %v5426
    %v5759 = vpop.f32.mrb[0].mxu0
    %v5760 = vadd.f32 %v5686, %v5759
    %v5761 = vpop.f32.mrb[0].mxu0
    %5762 = vmatprep.mubr.f32.mxu0 %v5429
    %5763 = vmatmul.mubr.f32.gmra.mrb[0].mxu0 %v5428
    %v5764 = vpop.f32.mrb[0].mxu0
    %v5765 = vadd.f32 %v5686, %v5764
    %v5766 = vpop.f32.mrb[0].mxu0
    %5767 = vmatprep.mubr.f32.mxu0 %v5431
    %5768 = vmatmul.mubr.f32.gmra.mrb[0].mxu0 %v5430
    %v5769 = vpop.f32.mrb[0].mxu0
    %v5770 = vadd.f32 %v5686, %v5769
    %v5771 = vpop.f32.mrb[0].mxu0
    %5772 = vmatprep.mubr.f32.mxu0 %v5433
    %5773 = vmatmul.mubr.f32.gmra.mrb[0].mxu0 %v5432
    %v5774 = vpop.f32.mrb[0].mxu0
    %v5775 = vadd.f32 %v5686, %v5774
    %v5776 = vpop.f32.mrb[0].mxu0
    %5777 = vmatprep.mubr.f32.mxu0 %v5435
    %5778 = vmatmul.mubr.f32.gmra.mrb[0].mxu0 %v5434
    %v5779 = vpop.f32.mrb[0].mxu0
    %v5780 = vadd.f32 %v5686, %v5779
    %v5781 = vpop.f32.mrb[0].mxu0
    %5782 = vmatprep.mubr.f32.mxu0 %v5437
    %5783 = vmatmul.mubr.f32.gmra.mrb[0].mxu0 %v5436
    %v5784 = vpop.f32.mrb[0].mxu0
    %v5785 = vadd.f32 %v5686, %v5784
    %v5786 = vpop.f32.mrb[0].mxu0
    %5787 = vmatprep.mubr.f32.mxu0 %v5439
    %5788 = vmatmul.mubr.f32.gmra.mrb[0].mxu0 %v5438
    %v5789 = vpop.f32.mrb[0].mxu0
    %v5790 = vadd.f32 %v5686, %v5789
    %v5791 = vpop.f32.mrb[0].mxu0
    %5792 = vmatprep.mubr.f32.mxu0 %v5441
    %5793 = vmatmul.mubr.f32.gmra.mrb[0].mxu0 %v5440
    %v5794 = vpop.f32.mrb[0].mxu0
    %v5795 = vadd.f32 %v5686, %v5794
    %v5796 = vpop.f32.mrb[0].mxu0
    %5797 = vmatprep.mubr.f32.mxu0 %v5443
    %5798 = vmatmul.mubr.f32.gmra.mrb[0].mxu0 %v5442
    %v5799 = vpop.f32.mrb[0].mxu0
    %v5800 = vadd.f32 %v5686, %v5799
    %v5801 = vpop.f32.mrb[0].mxu0
    %5802 = vmatprep.mubr.f32.mxu0 %v5445
    %5803 = vmatmul.mubr.f32.gmra.mrb[0].mxu0 %v5444
    %v5804 = vpop.f32.mrb[0].mxu0
    %v5805 = vadd.f32 %v5686, %v5804
    %v5806 = vpop.f32.mrb[0].mxu0
    %5807 = vmatprep.mubr.f32.mxu0 %v5447
    %5808 = vmatmul.mubr.f32.gmra.mrb[0].mxu0 %v5446
    %v5809 = vpop.f32.mrb[0].mxu0
    %v5810 = vadd.f32 %v5686, %v5809
    %v5811 = vpop.f32.mrb[0].mxu0
    %5812 = vmatprep.mubr.f32.mxu0 %v5449
    %5813 = vmatmul.mubr.f32.gmra.mrb[0].mxu0 %v5448
    %v5814 = vpop.f32.mrb[0].mxu0
    %v5815 = vadd.f32 %v5686, %v5814
    %v5816 = vpop.f32.mrb[0].mxu0
    %5817 = vmatprep.mubr.f32.mxu0 %v5451
    %5818 = vmatmul.mubr.f32.gmra.mrb[0].mxu0 %v5450
    %v5819 = vpop.f32.mrb[0].mxu0
    %v5820 = vadd.f32 %v5686, %v5819
    %v5821 = vpop.f32.mrb[0].mxu0
    %5822 = vmatprep.mubr.f32.mxu0 %v5453
    %5823 = vmatmul.mubr.f32.gmra.mrb[0].mxu0 %v5452
    %v5824 = vpop.f32.mrb[0].mxu0
    %v5825 = vadd.f32 %v5686, %v5824
    %v5826 = vpop.f32.mrb[0].mxu0
    %5827 = vmatprep.mubr.f32.mxu0 %v5455
    %5828 = vmatmul.mubr.f32.gmra.mrb[0].mxu0 %v5454
    %v5829 = vpop.f32.mrb[0].mxu0
    %v5830 = vadd.f32 %v5686, %v5829
    %v5831 = vpop.f32.mrb[0].mxu0
    %5832 = vdwg.mxu0
    %5833 = vst [vmem:[%s7] sm:$0xff] %v5755
    %5834 = vst [vmem:[%s7 + $0x8] sm:$0xff] %v5760
    %5835 = vst [vmem:[%s7 + $0x10] sm:$0xff] %v5765
    %5836 = vst [vmem:[%s7 + $0x18] sm:$0xff] %v5770
    %5837 = vst [vmem:[%s7 + $0x20] sm:$0xff] %v5775
    %5838 = vst [vmem:[%s7 + $0x28] sm:$0xff] %v5780
    %5839 = vst [vmem:[%s7 + $0x30] sm:$0xff] %v5785
    %5840 = vst [vmem:[%s7 + $0x38] sm:$0xff] %v5790
    %5841 = vst [vmem:[%s7 + $0x40] sm:$0xff] %v5795
    %5842 = vst [vmem:[%s7 + $0x48] sm:$0xff] %v5800
    %5843 = vst [vmem:[%s7 + $0x50] sm:$0xff] %v5805
    %5844 = vst [vmem:[%s7 + $0x58] sm:$0xff] %v5810
    %5845 = vst [vmem:[%s7 + $0x60] sm:$0xff] %v5815
    %5846 = vst [vmem:[%s7 + $0x68] sm:$0xff] %v5820
    %5847 = vst [vmem:[%s7 + $0x70] sm:$0xff] %v5825
    %5848 = vst [vmem:[%s7 + $0x78] sm:$0xff] %v5830
    %5849 = vmatprep.subr.mxu0 0.0
    %5850 = vmatpush1.msra.mxu0 %v5649
    %5851 = vmatprep.subr.mxu0 0.0
    %5852 = vmatpush1.msra.mxu0 %v5650
    %5853 = vmatprep.subr.mxu0 0.0
    %5854 = vmatpush1.msra.mxu0 %v5651
    %5855 = vmatprep.subr.mxu0 0.0
    %5856 = vmatpush1.msra.mxu0 %v5652
    %5857 = vmatprep.subr.mxu0 0.0
    %5858 = vmatpush1.msra.mxu0 %v5653
    %5859 = vmatprep.subr.mxu0 0.0
    %5860 = vmatpush1.msra.mxu0 %v5654
    %5861 = vmatprep.subr.mxu0 0.0
    %5862 = vmatpush1.msra.mxu0 %v5655
    %5863 = vmatprep.subr.mxu0 0.0
    %5864 = vmatpush1.msra.mxu0 %v5656
    %5865 = vmatprep.subr.mxu0 0.0
    %5866 = vmatpush1.msra.mxu0 %v5657
    %5867 = vmatprep.subr.mxu0 0.0
    %5868 = vmatpush1.msra.mxu0 %v5658
    %5869 = vmatprep.subr.mxu0 0.0
    %5870 = vmatpush1.msra.mxu0 %v5659
    %5871 = vmatprep.subr.mxu0 0.0
    %5872 = vmatpush1.msra.mxu0 %v5660
    %5873 = vmatprep.subr.mxu0 0.0
    %5874 = vmatpush1.msra.mxu0 %v5661
    %5875 = vmatprep.subr.mxu0 0.0
    %5876 = vmatpush1.msra.mxu0 %v5662
    %5877 = vmatprep.subr.mxu0 0.0
    %5878 = vmatpush1.msra.mxu0 %v5663
    %5879 = vmatprep.subr.mxu0 0.0
    %5880 = vmatpush1.msra.mxu0 %v5664
    %5881 = vmatprep.subr.mxu0 0.0
    %5882 = vmatpush1.msra.mxu0 %v5665
    %5883 = vmatprep.subr.mxu0 0.0
    %5884 = vmatpush1.msra.mxu0 %v5666
    %5885 = vmatprep.subr.mxu0 0.0
    %5886 = vmatpush1.msra.mxu0 %v5667
    %5887 = vmatprep.subr.mxu0 0.0
    %5888 = vmatpush1.msra.mxu0 %v5668
    %5889 = vmatprep.subr.mxu0 0.0
    %5890 = vmatpush1.msra.mxu0 %v5669
    %5891 = vmatprep.subr.mxu0 0.0
    %5892 = vmatpush1.msra.mxu0 %v5670
    %5893 = vmatprep.subr.mxu0 0.0
    %5894 = vmatpush1.msra.mxu0 %v5671
    %5895 = vmatprep.subr.mxu0 0.0
    %5896 = vmatpush1.msra.mxu0 %v5672
    %5897 = vmatprep.subr.mxu0 0.0
    %5898 = vmatpush1.msra.mxu0 %v5673
    %5899 = vmatprep.subr.mxu0 0.0
    %5900 = vmatpush1.msra.mxu0 %v5674
    %5901 = vmatprep.subr.mxu0 0.0
    %5902 = vmatpush1.msra.mxu0 %v5675
    %5903 = vmatprep.subr.mxu0 0.0
    %5904 = vmatpush1.msra.mxu0 %v5676
    %5905 = vmatprep.subr.mxu0 0.0
    %5906 = vmatpush1.msra.mxu0 %v5677
    %5907 = vmatprep.subr.mxu0 0.0
    %5908 = vmatpush1.msra.mxu0 %v5678
    %5909 = vmatprep.subr.mxu0 0.0
    %5910 = vmatpush1.msra.mxu0 %v5679
    %5911 = vmatprep.subr.mxu0 0.0
    %5912 = vmatpush1.msra.mxu0 %v5680
    %5913 = vmatprep.mubr.f32.mxu0 %v5618
    %5914 = vmatmul.mubr.f32.gmra.mrb[0].mxu0 %v5617
    %v5915 = vpop.f32.mrb[0].mxu0
    %v5916 = vadd.f32 %v5686, %v5915
    %v5917 = vpop.f32.mrb[0].mxu0
    %5918 = vmatprep.mubr.f32.mxu0 %v5620
    %5919 = vmatmul.mubr.f32.gmra.mrb[0].mxu0 %v5619
    %v5920 = vpop.f32.mrb[0].mxu0
    %v5921 = vadd.f32 %v5686, %v5920
    %v5922 = vpop.f32.mrb[0].mxu0
    %5923 = vmatprep.mubr.f32.mxu0 %v5622
    %5924 = vmatmul.mubr.f32.gmra.mrb[0].mxu0 %v5621
    %v5925 = vpop.f32.mrb[0].mxu0
    %v5926 = vadd.f32 %v5686, %v5925
    %v5927 = vpop.f32.mrb[0].mxu0
    %5928 = vmatprep.mubr.f32.mxu0 %v5624
    %5929 = vmatmul.mubr.f32.gmra.mrb[0].mxu0 %v5623
    %v5930 = vpop.f32.mrb[0].mxu0
    %v5931 = vadd.f32 %v5686, %v5930
    %v5932 = vpop.f32.mrb[0].mxu0
    %5933 = vmatprep.mubr.f32.mxu0 %v5626
    %5934 = vmatmul.mubr.f32.gmra.mrb[0].mxu0 %v5625
    %v5935 = vpop.f32.mrb[0].mxu0
    %v5936 = vadd.f32 %v5686, %v5935
    %v5937 = vpop.f32.mrb[0].mxu0
    %5938 = vmatprep.mubr.f32.mxu0 %v5628
    %5939 = vmatmul.mubr.f32.gmra.mrb[0].mxu0 %v5627
    %v5940 = vpop.f32.mrb[0].mxu0
    %v5941 = vadd.f32 %v5686, %v5940
    %v5942 = vpop.f32.mrb[0].mxu0
    %5943 = vmatprep.mubr.f32.mxu0 %v5630
    %5944 = vmatmul.mubr.f32.gmra.mrb[0].mxu0 %v5629
    %v5945 = vpop.f32.mrb[0].mxu0
    %v5946 = vadd.f32 %v5686, %v5945
    %v5947 = vpop.f32.mrb[0].mxu0
    %5948 = vmatprep.mubr.f32.mxu0 %v5632
    %5949 = vmatmul.mubr.f32.gmra.mrb[0].mxu0 %v5631
    %v5950 = vpop.f32.mrb[0].mxu0
    %v5951 = vadd.f32 %v5686, %v5950
    %v5952 = vpop.f32.mrb[0].mxu0
    %5953 = vmatprep.mubr.f32.mxu0 %v5634
    %5954 = vmatmul.mubr.f32.gmra.mrb[0].mxu0 %v5633
    %v5955 = vpop.f32.mrb[0].mxu0
    %v5956 = vadd.f32 %v5686, %v5955
    %v5957 = vpop.f32.mrb[0].mxu0
    %5958 = vmatprep.mubr.f32.mxu0 %v5636
    %5959 = vmatmul.mubr.f32.gmra.mrb[0].mxu0 %v5635
    %v5960 = vpop.f32.mrb[0].mxu0
    %v5961 = vadd.f32 %v5686, %v5960
    %v5962 = vpop.f32.mrb[0].mxu0
    %5963 = vmatprep.mubr.f32.mxu0 %v5638
    %5964 = vmatmul.mubr.f32.gmra.mrb[0].mxu0 %v5637
    %v5965 = vpop.f32.mrb[0].mxu0
    %v5966 = vadd.f32 %v5686, %v5965
    %v5967 = vpop.f32.mrb[0].mxu0
    %5968 = vmatprep.mubr.f32.mxu0 %v5640
    %5969 = vmatmul.mubr.f32.gmra.mrb[0].mxu0 %v5639
    %v5970 = vpop.f32.mrb[0].mxu0
    %v5971 = vadd.f32 %v5686, %v5970
    %v5972 = vpop.f32.mrb[0].mxu0
    %5973 = vmatprep.mubr.f32.mxu0 %v5642
    %5974 = vmatmul.mubr.f32.gmra.mrb[0].mxu0 %v5641
    %v5975 = vpop.f32.mrb[0].mxu0
    %v5976 = vadd.f32 %v5686, %v5975
    %v5977 = vpop.f32.mrb[0].mxu0
    %5978 = vmatprep.mubr.f32.mxu0 %v5644
    %5979 = vmatmul.mubr.f32.gmra.mrb[0].mxu0 %v5643
    %v5980 = vpop.f32.mrb[0].mxu0
    %v5981 = vadd.f32 %v5686, %v5980
    %v5982 = vpop.f32.mrb[0].mxu0
    %5983 = vmatprep.mubr.f32.mxu0 %v5646
    %5984 = vmatmul.mubr.f32.gmra.mrb[0].mxu0 %v5645
    %v5985 = vpop.f32.mrb[0].mxu0
    %v5986 = vadd.f32 %v5686, %v5985
    %v5987 = vpop.f32.mrb[0].mxu0
    %5988 = vmatprep.mubr.f32.mxu0 %v5648
    %5989 = vmatmul.mubr.f32.gmra.mrb[0].mxu0 %v5647
    %v5990 = vpop.f32.mrb[0].mxu0
    %v5991 = vadd.f32 %v5686, %v5990
    %v5992 = vpop.f32.mrb[0].mxu0
    %5993 = vdwg.mxu0
    %5994 = vst [vmem:[%s7 + $0x80] sm:$0xff] %v5916
    %5995 = vst [vmem:[%s7 + $0x88] sm:$0xff] %v5921
    %5996 = vst [vmem:[%s7 + $0x90] sm:$0xff] %v5926
    %5997 = vst [vmem:[%s7 + $0x98] sm:$0xff] %v5931
    %5998 = vst [vmem:[%s7 + $0xa0] sm:$0xff] %v5936
    %5999 = vst [vmem:[%s7 + $0xa8] sm:$0xff] %v5941
    %6000 = vst [vmem:[%s7 + $0xb0] sm:$0xff] %v5946
    %6001 = vst [vmem:[%s7 + $0xb8] sm:$0xff] %v5951
    %6002 = vst [vmem:[%s7 + $0xc0] sm:$0xff] %v5956
    %6003 = vst [vmem:[%s7 + $0xc8] sm:$0xff] %v5961
    %6004 = vst [vmem:[%s7 + $0xd0] sm:$0xff] %v5966
    %6005 = vst [vmem:[%s7 + $0xd8] sm:$0xff] %v5971
    %6006 = vst [vmem:[%s7 + $0xe0] sm:$0xff] %v5976
    %6007 = vst [vmem:[%s7 + $0xe8] sm:$0xff] %v5981
    %6008 = vst [vmem:[%s7 + $0xf0] sm:$0xff] %v5986
    %6009 = vst [vmem:[%s7 + $0xf8] sm:$0xff] %v5991
    // Predicated region
    $region42: #{mlp_forward.1} parent=1 // pred_check
      _
    $region43: #{mlp_forward.1} parent=1 // pred_check_branch
      %6011 = sbr.rel (0) target = $region45
    $region44: #{mlp_forward.1} parent=1 // pred_region
      _
    $region45: #{mlp_forward.1} parent=1 // pred_fallthru
      _
    // Predicated region
    $region46: #{mlp_forward.1} parent=1 // pred_check
      _
    $region47: #{mlp_forward.1} parent=1 // pred_check_branch
      %6013 = sbr.rel (0) target = $region49
    $region48: #{mlp_forward.1} parent=1 // pred_region
      _
    $region49: #{mlp_forward.1} parent=1 // pred_fallthru
      _
    %6014 = vsyncpa [#allocation3], 1
    %6015 = vsyncpa [#allocation5], 1

</llo_original>
